<compile_context>
chip_gen: v6e
topology: v6e:2x2x1
jax: 0.10.0
libtpu: 0.0.40
codegen_flags: <defaults>
</compile_context>

<pallas_src>
import math

import jax
import jax.numpy as jnp
from jax import lax
from jax.experimental import pallas as pl
from jax.experimental.pallas import tpu as pltpu


# ---------------------------------------------------------------------------
# In-kernel helpers (operate on values / scratch refs).
# ---------------------------------------------------------------------------
def _maxpool2x2(x_flat, h, w, c):
    """2x2 / stride-2 max pool of a row-major (h*w, c) value -> (h//2, w//2, c)."""
    x = x_flat.reshape(h // 2, 2, w, c)            # clean sublane-group split
    x = jnp.maximum(x[:, 0], x[:, 1])              # pool H pairs (leading axis, VPU max)
    x = x.reshape(h // 2, w // 2, 2, c)
    return jnp.max(x, axis=2)                      # pool W pairs (sublane reduce)


def _store_padded(pref, interior, pad=2):
    """Write `interior` into the centre of padded scratch `pref`; zero only the borders."""
    hp, wp, c = pref.shape
    f32 = jnp.float32
    zrow = jnp.zeros((pad, wp, c), f32)
    pref[0:pad, :, :] = zrow
    pref[hp - pad:hp, :, :] = zrow
    zcol = jnp.zeros((hp - 2 * pad, pad, c), f32)
    pref[pad:hp - pad, 0:pad, :] = zcol
    pref[pad:hp - pad, wp - pad:wp, :] = zcol
    pref[pad:hp - pad, pad:wp - pad, :] = interior


def _dilated3x3(pref, w_ref, b_ref, ho, wo, cin):
    """3x3 dilation-2 'same' conv over a zero-padded scratch; returns relu(conv+b)
    as a (ho*wo, cout) value.  9 whole-output tap matmuls with f32 accumulation."""
    f32 = jnp.float32
    acc = None
    for i in range(3):
        for j in range(3):
            patch = pref[2 * i:2 * i + ho, 2 * j:2 * j + wo, :]          # (ho, wo, cin)
            t = jnp.dot(patch.reshape(ho * wo, cin), w_ref[3 * i + j],
                        preferred_element_type=f32)
            acc = t if acc is None else acc + t
    return jnp.maximum(acc + b_ref[...], 0.0)


# ---------------------------------------------------------------------------
# Fused forward kernel: one batch element per grid step.
# ---------------------------------------------------------------------------
def _bigtail7_kernel(im_ref,                      # (1, 256, 256)  im2col of padded image
                     wrgb_ref, brgb_ref,          # (256, 40), (1, 40)   fused branch conv
                     w0_ref, b0_ref,              # (9, 40, 60), (1, 60)
                     w1_ref, b1_ref,              # (9, 60, 60), (1, 60)
                     w2_ref, b2_ref,              # (9, 60, 40), (1, 40)
                     w3_ref, b3_ref,              # (9, 40, 20), (1, 20)
                     w4_ref, b4_ref,              # (9, 20, 10), (1, 10)
                     wout_ref, bout_ref,          # (1, 10), (1, 1)
                     o_ref,                       # (1, 2, 2, 1)
                     p0, p1, p2, p3, p4):         # padded VMEM scratch activations
    f32 = jnp.float32

    # ---- fused red/green/blue 9x9 conv: ONE matmul, M=256 K=256 N=40 (+bias, ReLU) ----
    acc = jnp.dot(im_ref[0], wrgb_ref[...], preferred_element_type=f32)
    acc = jnp.maximum(acc + brgb_ref[...], 0.0)                       # (256, 40)

    # ---- 2x2 maxpool 16x16 -> 8x8, one interior store (zero-padded by 2 for c0) ------
    _store_padded(p0, _maxpool2x2(acc, 16, 16, 40))

    # ---- c0, c1, c2: dilated 3x3 convs on the 8x8 map (M=64 tap matmuls) --------------
    y = _dilated3x3(p0, w0_ref, b0_ref, 8, 8, 40)                     # (64, 60)
    _store_padded(p1, y.reshape(8, 8, 60))

    y = _dilated3x3(p1, w1_ref, b1_ref, 8, 8, 60)                     # (64, 60)
    _store_padded(p2, y.reshape(8, 8, 60))

    y = _dilated3x3(p2, w2_ref, b2_ref, 8, 8, 60)                     # (64, 40)

    # ---- 2x2 maxpool 8x8 -> 4x4, then c3 as whole-output tap matmuls (M=16) -----------
    _store_padded(p3, _maxpool2x2(y, 8, 8, 40))
    y = _dilated3x3(p3, w3_ref, b3_ref, 4, 4, 40)                     # (16, 20)

    # ---- 2x2 maxpool 4x4 -> 2x2, then c4 as whole-output tap matmuls (M=4) ------------
    _store_padded(p4, _maxpool2x2(y, 4, 4, 20))
    y = _dilated3x3(p4, w4_ref, b4_ref, 2, 2, 20)                     # (4, 10)

    # ---- fused 1x1 output conv (VPU multiply + lane reduce), single output store ------
    dens = jnp.sum(y * wout_ref[...], axis=-1, keepdims=True) + bout_ref[...]   # (4, 1)
    o_ref[...] = dens.reshape(1, 2, 2, 1).astype(o_ref.dtype)


# ---------------------------------------------------------------------------
# Parameter handling.
# ---------------------------------------------------------------------------
def _init_conv(key, cin, cout, k):
    """PyTorch-default-style uniform init; weight stored as (k*k, Cin, Cout)."""
    kw, kb = jax.random.split(key)
    bound = 1.0 / math.sqrt(cin * k * k)
    w = jax.random.uniform(kw, (k * k, cin, cout), jnp.float32, -bound, bound)
    b = jax.random.uniform(kb, (cout,), jnp.float32, -bound, bound)
    return w, b


def init_params(key):
    specs = {
        "red":   (3, 10, 9),
        "green": (3, 14, 7),
        "blue":  (3, 16, 5),
        "c0":    (40, 60, 3),
        "c1":    (60, 60, 3),
        "c2":    (60, 40, 3),
        "c3":    (40, 20, 3),
        "c4":    (20, 10, 3),
        "out":   (10, 1, 1),
    }
    keys = jax.random.split(key, len(specs))
    return {name: _init_conv(k, *spec) for k, (name, spec) in zip(keys, specs.items())}
    # NOTE: real PyTorch Conv2d weights are (Cout, Cin, kH, kW); importing a checkpoint
    # requires transposing to this (k*k, Cin, Cout) layout.


def _fuse_branch_weights(params):
    """Zero-pad 7x7/5x5 branch kernels to 9x9, concat along Cout -> (81,3,40), (1,40)."""
    ws, bs = [], []
    for name, k in (("red", 9), ("green", 7), ("blue", 5)):
        w, b = params[name]                                   # (k*k, 3, cout), (cout,)
        cout = w.shape[-1]
        off = (9 - k) // 2
        w9 = jnp.zeros((9, 9, 3, cout), jnp.float32)
        w9 = w9.at[off:off + k, off:off + k].set(w.reshape(k, k, 3, cout))
        ws.append(w9.reshape(81, 3, cout))
        bs.append(b)
    return jnp.concatenate(ws, axis=-1), jnp.concatenate(bs).reshape(1, -1)


def prepare_params(params):
    wrgb, brgb = _fuse_branch_weights(params)                 # (81,3,40), (1,40)
    # Repack for the single big-K matmul: (81,3,40) -> (243,40) -> K padded to 256.
    wrgb = jnp.pad(wrgb.reshape(243, 40), ((0, 13), (0, 0)))  # (256, 40)
    flat = [wrgb, brgb]
    for name in ("c0", "c1", "c2", "c3", "c4"):
        w, b = params[name]
        flat += [w, b.reshape(1, -1)]
    w, b = params["out"]                                      # (1, 10, 1), (1,)
    flat += [w.reshape(1, 10), b.reshape(1, 1)]
    return tuple(flat)


# ---------------------------------------------------------------------------
# Forward wrapper (NCHW in / NCHW out, like PyTorch).
# ---------------------------------------------------------------------------
def big_tail7_forward(x_nchw, kparams):
    assert x_nchw.shape[1:] == (3, 16, 16), "kernel is specialized to 3x16x16 inputs"
    n = x_nchw.shape[0]
    x = jnp.transpose(x_nchw, (0, 2, 3, 1)).astype(jnp.float32)   # NCHW -> NHWC
    xp = jnp.pad(x, ((0, 0), (4, 4), (4, 4), (0, 0)))             # pad once for 9x9 conv

    # im2col slab for the fused 9x9 branch conv (layout plumbing done once in XLA):
    # (n, 16, 16, 81 taps, 3 ch) -> (n, 256, 243) -> K padded to 256.
    patches = jnp.stack([xp[:, i:i + 16, j:j + 16, :]
                         for i in range(9) for j in range(9)], axis=3)
    im = jnp.pad(patches.reshape(n, 256, 243), ((0, 0), (0, 0), (0, 13)))

    (wrgb, brgb, w0, b0, w1, b1, w2, b2, w3, b3, w4, b4, wout, bout) = kparams

    def whole(a):
        zeros = (0,) * a.ndim
        return pl.BlockSpec(a.shape, lambda nn, _z=zeros: _z)

    out = pl.pallas_call(
        _bigtail7_kernel,
        out_shape=jax.ShapeDtypeStruct((n, 2, 2, 1), jnp.float32),
        grid=(n,),
        in_specs=[
            pl.BlockSpec((1, 256, 256), lambda nn: (nn, 0, 0)),
            whole(wrgb), whole(brgb),
            whole(w0), whole(b0),
            whole(w1), whole(b1),
            whole(w2), whole(b2),
            whole(w3), whole(b3),
            whole(w4), whole(b4),
            whole(wout), whole(bout),
        ],
        out_specs=pl.BlockSpec((1, 2, 2, 1), lambda nn: (nn, 0, 0, 0)),
        scratch_shapes=[
            pltpu.VMEM((12, 12, 40), jnp.float32),   # padded input to c0
            pltpu.VMEM((12, 12, 60), jnp.float32),   # padded input to c1
            pltpu.VMEM((12, 12, 60), jnp.float32),   # padded input to c2
            pltpu.VMEM((8, 8, 40), jnp.float32),     # padded input to c3 (post-pool)
            pltpu.VMEM((6, 6, 20), jnp.float32),     # padded input to c4 (post-pool)
        ],
        compiler_params=pltpu.CompilerParams(dimension_semantics=("parallel",)),
    )(im, wrgb, brgb, w0, b0, w1, b1, w2, b2, w3, b3, w4, b4, wout, bout)

    return jnp.transpose(out, (0, 3, 1, 2))                   # NHWC -> NCHW


# ---------------------------------------------------------------------------
# Plain-XLA reference (correctness sanity check).
# ---------------------------------------------------------------------------
def _reference_forward(x_nchw, params):
    x = jnp.transpose(x_nchw, (0, 2, 3, 1)).astype(jnp.float32)

    def conv(z, w, b, k, pad, dil):
        w4 = w.reshape(k, k, w.shape[1], w.shape[2])          # HWIO
        y = lax.conv_general_dilated(
            z, w4, window_strides=(1, 1), padding=[(pad, pad), (pad, pad)],
            rhs_dilation=(dil, dil), dimension_numbers=("NHWC", "HWIO", "NHWC"))
        return y + b.reshape(1, 1, 1, -1)

    def pool(z):
        return lax.reduce_window(z, -jnp.inf, lax.max,
                                 (1, 2, 2, 1), (1, 2, 2, 1), "VALID")

    relu = jax.nn.relu
    red = relu(conv(x, *params["red"], 9, 4, 1))
    green = relu(conv(x, *params["green"], 7, 3, 1))
    blue = relu(conv(x, *params["blue"], 5, 2, 1))
    y = jnp.concatenate([red, green, blue], axis=-1)
    y = pool(y)
    y = relu(conv(y, *params["c0"], 3, 2, 2))
    y = relu(conv(y, *params["c1"], 3, 2, 2))
    y = relu(conv(y, *params["c2"], 3, 2, 2))
    y = pool(y)
    y = relu(conv(y, *params["c3"], 3, 2, 2))
    y = pool(y)
    y = relu(conv(y, *params["c4"], 3, 2, 2))
    y = conv(y, *params["out"], 1, 0, 1)
    return jnp.transpose(y, (0, 3, 1, 2))


if __name__ == "__main__":
    key = jax.random.PRNGKey(0)
    pkey, xkey = jax.random.split(key)
    params = init_params(pkey)
    kparams = prepare_params(params)

    x = jax.random.normal(xkey, (2, 3, 16, 16), jnp.float32)  # NCHW, like PyTorch

    out = jax.jit(big_tail7_forward)(x, kparams)
    out = jax.block_until_ready(out)
    assert out.shape == (2, 1, 2, 2), out.shape

    ref = _reference_forward(x, params)
    err = float(jnp.max(jnp.abs(out - ref)))
    assert err < 1e-3, f"kernel/reference mismatch: max abs err = {err}"

    print("KERNEL_OK")
</pallas_src>

<mosaic_0001>
module attributes {stable_mosaic.version = 11 : i64} {
  func.func @_bigtail7_kernel(%arg0: i32, %arg1: memref<1x256x256xf32, #tpu.memory_space<vmem>>, %arg2: memref<256x40xf32, #tpu.memory_space<vmem>>, %arg3: memref<1x40xf32, #tpu.memory_space<vmem>>, %arg4: memref<9x40x60xf32, #tpu.memory_space<vmem>>, %arg5: memref<1x60xf32, #tpu.memory_space<vmem>>, %arg6: memref<9x60x60xf32, #tpu.memory_space<vmem>>, %arg7: memref<1x60xf32, #tpu.memory_space<vmem>>, %arg8: memref<9x60x40xf32, #tpu.memory_space<vmem>>, %arg9: memref<1x40xf32, #tpu.memory_space<vmem>>, %arg10: memref<9x40x20xf32, #tpu.memory_space<vmem>>, %arg11: memref<1x20xf32, #tpu.memory_space<vmem>>, %arg12: memref<9x20x10xf32, #tpu.memory_space<vmem>>, %arg13: memref<1x10xf32, #tpu.memory_space<vmem>>, %arg14: memref<1x10xf32, #tpu.memory_space<vmem>>, %arg15: memref<1x1xf32, #tpu.memory_space<vmem>>, %arg16: memref<1x2x2x1xf32, #tpu.memory_space<vmem>>, %arg17: memref<12x12x40xf32, #tpu.memory_space<vmem>>, %arg18: memref<12x12x60xf32, #tpu.memory_space<vmem>>, %arg19: memref<12x12x60xf32, #tpu.memory_space<vmem>>, %arg20: memref<8x8x40xf32, #tpu.memory_space<vmem>>, %arg21: memref<6x6x20xf32, #tpu.memory_space<vmem>>) attributes {dimension_semantics = [#tpu.dimension_semantics<parallel>], iteration_bounds = array<i64: 2>, scalar_prefetch = 0 : i64, scratch_operands = 5 : i64, tpu.core_type = #tpu.core_type<tc>, window_params = [{transform_indices = @transform_0, window_bounds = array<i64: 1, 256, 256>}, {pipeline_mode = #tpu.pipeline_mode<synchronous>, transform_indices = @transform_1, window_bounds = array<i64: 256, 40>}, {pipeline_mode = #tpu.pipeline_mode<synchronous>, transform_indices = @transform_2, window_bounds = array<i64: 1, 40>}, {pipeline_mode = #tpu.pipeline_mode<synchronous>, transform_indices = @transform_3, window_bounds = array<i64: 9, 40, 60>}, {pipeline_mode = #tpu.pipeline_mode<synchronous>, transform_indices = @transform_4, window_bounds = array<i64: 1, 60>}, {pipeline_mode = #tpu.pipeline_mode<synchronous>, transform_indices = @transform_5, window_bounds = array<i64: 9, 60, 60>}, {pipeline_mode = #tpu.pipeline_mode<synchronous>, transform_indices = @transform_6, window_bounds = array<i64: 1, 60>}, {pipeline_mode = #tpu.pipeline_mode<synchronous>, transform_indices = @transform_7, window_bounds = array<i64: 9, 60, 40>}, {pipeline_mode = #tpu.pipeline_mode<synchronous>, transform_indices = @transform_8, window_bounds = array<i64: 1, 40>}, {pipeline_mode = #tpu.pipeline_mode<synchronous>, transform_indices = @transform_9, window_bounds = array<i64: 9, 40, 20>}, {pipeline_mode = #tpu.pipeline_mode<synchronous>, transform_indices = @transform_10, window_bounds = array<i64: 1, 20>}, {pipeline_mode = #tpu.pipeline_mode<synchronous>, transform_indices = @transform_11, window_bounds = array<i64: 9, 20, 10>}, {pipeline_mode = #tpu.pipeline_mode<synchronous>, transform_indices = @transform_12, window_bounds = array<i64: 1, 10>}, {pipeline_mode = #tpu.pipeline_mode<synchronous>, transform_indices = @transform_13, window_bounds = array<i64: 1, 10>}, {pipeline_mode = #tpu.pipeline_mode<synchronous>, transform_indices = @transform_14, window_bounds = array<i64: 1, 1>}, {transform_indices = @transform_15, window_bounds = array<i64: 1, 2, 2, 1>}]} {
    %c0 = arith.constant 0 : index
    %c0_0 = arith.constant 0 : index
    %c0_1 = arith.constant 0 : index
    %0 = vector.load %arg1[%c0, %c0_0, %c0_1] : memref<1x256x256xf32, #tpu.memory_space<vmem>>, vector<1x256x256xf32>
    %1 = vector.shape_cast %0 : vector<1x256x256xf32> to vector<256x256xf32>
    %c0_2 = arith.constant 0 : index
    %c0_3 = arith.constant 0 : index
    %2 = vector.load %arg2[%c0_2, %c0_3] : memref<256x40xf32, #tpu.memory_space<vmem>>, vector<256x40xf32>
    %cst = arith.constant dense<0.000000e+00> : vector<256x40xf32>
    %3 = tpu.matmul %1, %2, %cst {dimension_numbers = #tpu.dot_dimension_numbers<[1], [0], [0], [1], [0, 0, 1, 1], [], []>} : vector<256x256xf32>, vector<256x40xf32>, vector<256x40xf32> -> vector<256x40xf32>
    %c0_4 = arith.constant 0 : index
    %c0_5 = arith.constant 0 : index
    %4 = vector.load %arg3[%c0_4, %c0_5] : memref<1x40xf32, #tpu.memory_space<vmem>>, vector<1x40xf32>
    %5 = vector.broadcast %4 : vector<1x40xf32> to vector<256x40xf32>
    %6 = arith.addf %3, %5 : vector<256x40xf32>
    %cst_6 = arith.constant 0.000000e+00 : f32
    %7 = vector.broadcast %cst_6 : f32 to vector<256x40xf32>
    %8 = arith.maximumf %6, %7 : vector<256x40xf32>
    %9 = vector.shape_cast %8 : vector<256x40xf32> to vector<8x2x16x40xf32>
    %10 = vector.extract_strided_slice %9 {offsets = [0, 0, 0, 0], sizes = [8, 1, 16, 40], strides = [1, 1, 1, 1]} : vector<8x2x16x40xf32> to vector<8x1x16x40xf32>
    %11 = vector.shape_cast %10 : vector<8x1x16x40xf32> to vector<8x16x40xf32>
    %12 = vector.extract_strided_slice %9 {offsets = [0, 1, 0, 0], sizes = [8, 1, 16, 40], strides = [1, 1, 1, 1]} : vector<8x2x16x40xf32> to vector<8x1x16x40xf32>
    %13 = vector.shape_cast %12 : vector<8x1x16x40xf32> to vector<8x16x40xf32>
    %14 = arith.maximumf %11, %13 : vector<8x16x40xf32>
    %15 = vector.shape_cast %14 : vector<8x16x40xf32> to vector<8x8x2x40xf32>
    %cst_7 = arith.constant dense<0xFF800000> : vector<8x8x40xf32>
    %16 = vector.multi_reduction <maximumf>, %15, %cst_7 [2] : vector<8x8x2x40xf32> to vector<8x8x40xf32>
    %cst_8 = arith.constant 0.000000e+00 : f32
    %17 = vector.broadcast %cst_8 : f32 to vector<2x12x40xf32>
    %c0_9 = arith.constant 0 : index
    %c0_10 = arith.constant 0 : index
    %c0_11 = arith.constant 0 : index
    %18 = vector.load %arg17[%c0_9, %c0_10, %c0_11] : memref<12x12x40xf32, #tpu.memory_space<vmem>>, vector<2x12x40xf32>
    tpu.vector_store %arg17[%c0_9, %c0_10, %c0_11], %17 {strides = array<i32>} : memref<12x12x40xf32, #tpu.memory_space<vmem>>, vector<2x12x40xf32>,
    %c10 = arith.constant 10 : index
    %c0_12 = arith.constant 0 : index
    %c0_13 = arith.constant 0 : index
    %19 = vector.load %arg17[%c10, %c0_12, %c0_13] : memref<12x12x40xf32, #tpu.memory_space<vmem>>, vector<2x12x40xf32>
    tpu.vector_store %arg17[%c10, %c0_12, %c0_13], %17 {strides = array<i32>} : memref<12x12x40xf32, #tpu.memory_space<vmem>>, vector<2x12x40xf32>,
    %cst_14 = arith.constant 0.000000e+00 : f32
    %20 = vector.broadcast %cst_14 : f32 to vector<8x2x40xf32>
    %c2 = arith.constant 2 : index
    %c0_15 = arith.constant 0 : index
    %c0_16 = arith.constant 0 : index
    %21 = vector.load %arg17[%c2, %c0_15, %c0_16] : memref<12x12x40xf32, #tpu.memory_space<vmem>>, vector<8x2x40xf32>
    tpu.vector_store %arg17[%c2, %c0_15, %c0_16], %20 {strides = array<i32>} : memref<12x12x40xf32, #tpu.memory_space<vmem>>, vector<8x2x40xf32>,
    %c2_17 = arith.constant 2 : index
    %c10_18 = arith.constant 10 : index
    %c0_19 = arith.constant 0 : index
    %22 = vector.load %arg17[%c2_17, %c10_18, %c0_19] : memref<12x12x40xf32, #tpu.memory_space<vmem>>, vector<8x2x40xf32>
    tpu.vector_store %arg17[%c2_17, %c10_18, %c0_19], %20 {strides = array<i32>} : memref<12x12x40xf32, #tpu.memory_space<vmem>>, vector<8x2x40xf32>,
    %c2_20 = arith.constant 2 : index
    %c2_21 = arith.constant 2 : index
    %c0_22 = arith.constant 0 : index
    %23 = vector.load %arg17[%c2_20, %c2_21, %c0_22] : memref<12x12x40xf32, #tpu.memory_space<vmem>>, vector<8x8x40xf32>
    tpu.vector_store %arg17[%c2_20, %c2_21, %c0_22], %16 {strides = array<i32>} : memref<12x12x40xf32, #tpu.memory_space<vmem>>, vector<8x8x40xf32>,
    %c0_23 = arith.constant 0 : index
    %c0_24 = arith.constant 0 : index
    %c0_25 = arith.constant 0 : index
    %24 = vector.load %arg17[%c0_23, %c0_24, %c0_25] : memref<12x12x40xf32, #tpu.memory_space<vmem>>, vector<8x8x40xf32>
    %25 = vector.shape_cast %24 : vector<8x8x40xf32> to vector<64x40xf32>
    %c0_26 = arith.constant 0 : index
    %c0_27 = arith.constant 0 : index
    %c0_28 = arith.constant 0 : index
    %26 = vector.load %arg4[%c0_26, %c0_27, %c0_28] : memref<9x40x60xf32, #tpu.memory_space<vmem>>, vector<1x40x60xf32>
    %27 = vector.shape_cast %26 : vector<1x40x60xf32> to vector<40x60xf32>
    %cst_29 = arith.constant dense<0.000000e+00> : vector<64x60xf32>
    %28 = tpu.matmul %25, %27, %cst_29 {dimension_numbers = #tpu.dot_dimension_numbers<[1], [0], [0], [1], [0, 0, 1, 1], [], []>} : vector<64x40xf32>, vector<40x60xf32>, vector<64x60xf32> -> vector<64x60xf32>
    %c0_30 = arith.constant 0 : index
    %c2_31 = arith.constant 2 : index
    %c0_32 = arith.constant 0 : index
    %29 = vector.load %arg17[%c0_30, %c2_31, %c0_32] : memref<12x12x40xf32, #tpu.memory_space<vmem>>, vector<8x8x40xf32>
    %30 = vector.shape_cast %29 : vector<8x8x40xf32> to vector<64x40xf32>
    %c1 = arith.constant 1 : index
    %c0_33 = arith.constant 0 : index
    %c0_34 = arith.constant 0 : index
    %31 = vector.load %arg4[%c1, %c0_33, %c0_34] : memref<9x40x60xf32, #tpu.memory_space<vmem>>, vector<1x40x60xf32>
    %32 = vector.shape_cast %31 : vector<1x40x60xf32> to vector<40x60xf32>
    %cst_35 = arith.constant dense<0.000000e+00> : vector<64x60xf32>
    %33 = tpu.matmul %30, %32, %cst_35 {dimension_numbers = #tpu.dot_dimension_numbers<[1], [0], [0], [1], [0, 0, 1, 1], [], []>} : vector<64x40xf32>, vector<40x60xf32>, vector<64x60xf32> -> vector<64x60xf32>
    %34 = arith.addf %28, %33 : vector<64x60xf32>
    %c0_36 = arith.constant 0 : index
    %c4 = arith.constant 4 : index
    %c0_37 = arith.constant 0 : index
    %35 = vector.load %arg17[%c0_36, %c4, %c0_37] : memref<12x12x40xf32, #tpu.memory_space<vmem>>, vector<8x8x40xf32>
    %36 = vector.shape_cast %35 : vector<8x8x40xf32> to vector<64x40xf32>
    %c2_38 = arith.constant 2 : index
    %c0_39 = arith.constant 0 : index
    %c0_40 = arith.constant 0 : index
    %37 = vector.load %arg4[%c2_38, %c0_39, %c0_40] : memref<9x40x60xf32, #tpu.memory_space<vmem>>, vector<1x40x60xf32>
    %38 = vector.shape_cast %37 : vector<1x40x60xf32> to vector<40x60xf32>
    %cst_41 = arith.constant dense<0.000000e+00> : vector<64x60xf32>
    %39 = tpu.matmul %36, %38, %cst_41 {dimension_numbers = #tpu.dot_dimension_numbers<[1], [0], [0], [1], [0, 0, 1, 1], [], []>} : vector<64x40xf32>, vector<40x60xf32>, vector<64x60xf32> -> vector<64x60xf32>
    %40 = arith.addf %34, %39 : vector<64x60xf32>
    %c2_42 = arith.constant 2 : index
    %c0_43 = arith.constant 0 : index
    %c0_44 = arith.constant 0 : index
    %41 = vector.load %arg17[%c2_42, %c0_43, %c0_44] : memref<12x12x40xf32, #tpu.memory_space<vmem>>, vector<8x8x40xf32>
    %42 = vector.shape_cast %41 : vector<8x8x40xf32> to vector<64x40xf32>
    %c3 = arith.constant 3 : index
    %c0_45 = arith.constant 0 : index
    %c0_46 = arith.constant 0 : index
    %43 = vector.load %arg4[%c3, %c0_45, %c0_46] : memref<9x40x60xf32, #tpu.memory_space<vmem>>, vector<1x40x60xf32>
    %44 = vector.shape_cast %43 : vector<1x40x60xf32> to vector<40x60xf32>
    %cst_47 = arith.constant dense<0.000000e+00> : vector<64x60xf32>
    %45 = tpu.matmul %42, %44, %cst_47 {dimension_numbers = #tpu.dot_dimension_numbers<[1], [0], [0], [1], [0, 0, 1, 1], [], []>} : vector<64x40xf32>, vector<40x60xf32>, vector<64x60xf32> -> vector<64x60xf32>
    %46 = arith.addf %40, %45 : vector<64x60xf32>
    %c2_48 = arith.constant 2 : index
    %c2_49 = arith.constant 2 : index
    %c0_50 = arith.constant 0 : index
    %47 = vector.load %arg17[%c2_48, %c2_49, %c0_50] : memref<12x12x40xf32, #tpu.memory_space<vmem>>, vector<8x8x40xf32>
    %48 = vector.shape_cast %47 : vector<8x8x40xf32> to vector<64x40xf32>
    %c4_51 = arith.constant 4 : index
    %c0_52 = arith.constant 0 : index
    %c0_53 = arith.constant 0 : index
    %49 = vector.load %arg4[%c4_51, %c0_52, %c0_53] : memref<9x40x60xf32, #tpu.memory_space<vmem>>, vector<1x40x60xf32>
    %50 = vector.shape_cast %49 : vector<1x40x60xf32> to vector<40x60xf32>
    %cst_54 = arith.constant dense<0.000000e+00> : vector<64x60xf32>
    %51 = tpu.matmul %48, %50, %cst_54 {dimension_numbers = #tpu.dot_dimension_numbers<[1], [0], [0], [1], [0, 0, 1, 1], [], []>} : vector<64x40xf32>, vector<40x60xf32>, vector<64x60xf32> -> vector<64x60xf32>
    %52 = arith.addf %46, %51 : vector<64x60xf32>
    %c2_55 = arith.constant 2 : index
    %c4_56 = arith.constant 4 : index
    %c0_57 = arith.constant 0 : index
    %53 = vector.load %arg17[%c2_55, %c4_56, %c0_57] : memref<12x12x40xf32, #tpu.memory_space<vmem>>, vector<8x8x40xf32>
    %54 = vector.shape_cast %53 : vector<8x8x40xf32> to vector<64x40xf32>
    %c5 = arith.constant 5 : index
    %c0_58 = arith.constant 0 : index
    %c0_59 = arith.constant 0 : index
    %55 = vector.load %arg4[%c5, %c0_58, %c0_59] : memref<9x40x60xf32, #tpu.memory_space<vmem>>, vector<1x40x60xf32>
    %56 = vector.shape_cast %55 : vector<1x40x60xf32> to vector<40x60xf32>
    %cst_60 = arith.constant dense<0.000000e+00> : vector<64x60xf32>
    %57 = tpu.matmul %54, %56, %cst_60 {dimension_numbers = #tpu.dot_dimension_numbers<[1], [0], [0], [1], [0, 0, 1, 1], [], []>} : vector<64x40xf32>, vector<40x60xf32>, vector<64x60xf32> -> vector<64x60xf32>
    %58 = arith.addf %52, %57 : vector<64x60xf32>
    %c4_61 = arith.constant 4 : index
    %c0_62 = arith.constant 0 : index
    %c0_63 = arith.constant 0 : index
    %59 = vector.load %arg17[%c4_61, %c0_62, %c0_63] : memref<12x12x40xf32, #tpu.memory_space<vmem>>, vector<8x8x40xf32>
    %60 = vector.shape_cast %59 : vector<8x8x40xf32> to vector<64x40xf32>
    %c6 = arith.constant 6 : index
    %c0_64 = arith.constant 0 : index
    %c0_65 = arith.constant 0 : index
    %61 = vector.load %arg4[%c6, %c0_64, %c0_65] : memref<9x40x60xf32, #tpu.memory_space<vmem>>, vector<1x40x60xf32>
    %62 = vector.shape_cast %61 : vector<1x40x60xf32> to vector<40x60xf32>
    %cst_66 = arith.constant dense<0.000000e+00> : vector<64x60xf32>
    %63 = tpu.matmul %60, %62, %cst_66 {dimension_numbers = #tpu.dot_dimension_numbers<[1], [0], [0], [1], [0, 0, 1, 1], [], []>} : vector<64x40xf32>, vector<40x60xf32>, vector<64x60xf32> -> vector<64x60xf32>
    %64 = arith.addf %58, %63 : vector<64x60xf32>
    %c4_67 = arith.constant 4 : index
    %c2_68 = arith.constant 2 : index
    %c0_69 = arith.constant 0 : index
    %65 = vector.load %arg17[%c4_67, %c2_68, %c0_69] : memref<12x12x40xf32, #tpu.memory_space<vmem>>, vector<8x8x40xf32>
    %66 = vector.shape_cast %65 : vector<8x8x40xf32> to vector<64x40xf32>
    %c7 = arith.constant 7 : index
    %c0_70 = arith.constant 0 : index
    %c0_71 = arith.constant 0 : index
    %67 = vector.load %arg4[%c7, %c0_70, %c0_71] : memref<9x40x60xf32, #tpu.memory_space<vmem>>, vector<1x40x60xf32>
    %68 = vector.shape_cast %67 : vector<1x40x60xf32> to vector<40x60xf32>
    %cst_72 = arith.constant dense<0.000000e+00> : vector<64x60xf32>
    %69 = tpu.matmul %66, %68, %cst_72 {dimension_numbers = #tpu.dot_dimension_numbers<[1], [0], [0], [1], [0, 0, 1, 1], [], []>} : vector<64x40xf32>, vector<40x60xf32>, vector<64x60xf32> -> vector<64x60xf32>
    %70 = arith.addf %64, %69 : vector<64x60xf32>
    %c4_73 = arith.constant 4 : index
    %c4_74 = arith.constant 4 : index
    %c0_75 = arith.constant 0 : index
    %71 = vector.load %arg17[%c4_73, %c4_74, %c0_75] : memref<12x12x40xf32, #tpu.memory_space<vmem>>, vector<8x8x40xf32>
    %72 = vector.shape_cast %71 : vector<8x8x40xf32> to vector<64x40xf32>
    %c8 = arith.constant 8 : index
    %c0_76 = arith.constant 0 : index
    %c0_77 = arith.constant 0 : index
    %73 = vector.load %arg4[%c8, %c0_76, %c0_77] : memref<9x40x60xf32, #tpu.memory_space<vmem>>, vector<1x40x60xf32>
    %74 = vector.shape_cast %73 : vector<1x40x60xf32> to vector<40x60xf32>
    %cst_78 = arith.constant dense<0.000000e+00> : vector<64x60xf32>
    %75 = tpu.matmul %72, %74, %cst_78 {dimension_numbers = #tpu.dot_dimension_numbers<[1], [0], [0], [1], [0, 0, 1, 1], [], []>} : vector<64x40xf32>, vector<40x60xf32>, vector<64x60xf32> -> vector<64x60xf32>
    %76 = arith.addf %70, %75 : vector<64x60xf32>
    %c0_79 = arith.constant 0 : index
    %c0_80 = arith.constant 0 : index
    %77 = vector.load %arg5[%c0_79, %c0_80] : memref<1x60xf32, #tpu.memory_space<vmem>>, vector<1x60xf32>
    %78 = vector.broadcast %77 : vector<1x60xf32> to vector<64x60xf32>
    %79 = arith.addf %76, %78 : vector<64x60xf32>
    %cst_81 = arith.constant 0.000000e+00 : f32
    %80 = vector.broadcast %cst_81 : f32 to vector<64x60xf32>
    %81 = arith.maximumf %79, %80 : vector<64x60xf32>
    %82 = vector.shape_cast %81 : vector<64x60xf32> to vector<8x8x60xf32>
    %cst_82 = arith.constant 0.000000e+00 : f32
    %83 = vector.broadcast %cst_82 : f32 to vector<2x12x60xf32>
    %c0_83 = arith.constant 0 : index
    %c0_84 = arith.constant 0 : index
    %c0_85 = arith.constant 0 : index
    %84 = vector.load %arg18[%c0_83, %c0_84, %c0_85] : memref<12x12x60xf32, #tpu.memory_space<vmem>>, vector<2x12x60xf32>
    tpu.vector_store %arg18[%c0_83, %c0_84, %c0_85], %83 {strides = array<i32>} : memref<12x12x60xf32, #tpu.memory_space<vmem>>, vector<2x12x60xf32>,
    %c10_86 = arith.constant 10 : index
    %c0_87 = arith.constant 0 : index
    %c0_88 = arith.constant 0 : index
    %85 = vector.load %arg18[%c10_86, %c0_87, %c0_88] : memref<12x12x60xf32, #tpu.memory_space<vmem>>, vector<2x12x60xf32>
    tpu.vector_store %arg18[%c10_86, %c0_87, %c0_88], %83 {strides = array<i32>} : memref<12x12x60xf32, #tpu.memory_space<vmem>>, vector<2x12x60xf32>,
    %cst_89 = arith.constant 0.000000e+00 : f32
    %86 = vector.broadcast %cst_89 : f32 to vector<8x2x60xf32>
    %c2_90 = arith.constant 2 : index
    %c0_91 = arith.constant 0 : index
    %c0_92 = arith.constant 0 : index
    %87 = vector.load %arg18[%c2_90, %c0_91, %c0_92] : memref<12x12x60xf32, #tpu.memory_space<vmem>>, vector<8x2x60xf32>
    tpu.vector_store %arg18[%c2_90, %c0_91, %c0_92], %86 {strides = array<i32>} : memref<12x12x60xf32, #tpu.memory_space<vmem>>, vector<8x2x60xf32>,
    %c2_93 = arith.constant 2 : index
    %c10_94 = arith.constant 10 : index
    %c0_95 = arith.constant 0 : index
    %88 = vector.load %arg18[%c2_93, %c10_94, %c0_95] : memref<12x12x60xf32, #tpu.memory_space<vmem>>, vector<8x2x60xf32>
    tpu.vector_store %arg18[%c2_93, %c10_94, %c0_95], %86 {strides = array<i32>} : memref<12x12x60xf32, #tpu.memory_space<vmem>>, vector<8x2x60xf32>,
    %c2_96 = arith.constant 2 : index
    %c2_97 = arith.constant 2 : index
    %c0_98 = arith.constant 0 : index
    %89 = vector.load %arg18[%c2_96, %c2_97, %c0_98] : memref<12x12x60xf32, #tpu.memory_space<vmem>>, vector<8x8x60xf32>
    tpu.vector_store %arg18[%c2_96, %c2_97, %c0_98], %82 {strides = array<i32>} : memref<12x12x60xf32, #tpu.memory_space<vmem>>, vector<8x8x60xf32>,
    %c0_99 = arith.constant 0 : index
    %c0_100 = arith.constant 0 : index
    %c0_101 = arith.constant 0 : index
    %90 = vector.load %arg18[%c0_99, %c0_100, %c0_101] : memref<12x12x60xf32, #tpu.memory_space<vmem>>, vector<8x8x60xf32>
    %91 = vector.shape_cast %90 : vector<8x8x60xf32> to vector<64x60xf32>
    %c0_102 = arith.constant 0 : index
    %c0_103 = arith.constant 0 : index
    %c0_104 = arith.constant 0 : index
    %92 = vector.load %arg6[%c0_102, %c0_103, %c0_104] : memref<9x60x60xf32, #tpu.memory_space<vmem>>, vector<1x60x60xf32>
    %93 = vector.shape_cast %92 : vector<1x60x60xf32> to vector<60x60xf32>
    %cst_105 = arith.constant dense<0.000000e+00> : vector<64x60xf32>
    %94 = tpu.matmul %91, %93, %cst_105 {dimension_numbers = #tpu.dot_dimension_numbers<[1], [0], [0], [1], [0, 0, 1, 1], [], []>} : vector<64x60xf32>, vector<60x60xf32>, vector<64x60xf32> -> vector<64x60xf32>
    %c0_106 = arith.constant 0 : index
    %c2_107 = arith.constant 2 : index
    %c0_108 = arith.constant 0 : index
    %95 = vector.load %arg18[%c0_106, %c2_107, %c0_108] : memref<12x12x60xf32, #tpu.memory_space<vmem>>, vector<8x8x60xf32>
    %96 = vector.shape_cast %95 : vector<8x8x60xf32> to vector<64x60xf32>
    %c1_109 = arith.constant 1 : index
    %c0_110 = arith.constant 0 : index
    %c0_111 = arith.constant 0 : index
    %97 = vector.load %arg6[%c1_109, %c0_110, %c0_111] : memref<9x60x60xf32, #tpu.memory_space<vmem>>, vector<1x60x60xf32>
    %98 = vector.shape_cast %97 : vector<1x60x60xf32> to vector<60x60xf32>
    %cst_112 = arith.constant dense<0.000000e+00> : vector<64x60xf32>
    %99 = tpu.matmul %96, %98, %cst_112 {dimension_numbers = #tpu.dot_dimension_numbers<[1], [0], [0], [1], [0, 0, 1, 1], [], []>} : vector<64x60xf32>, vector<60x60xf32>, vector<64x60xf32> -> vector<64x60xf32>
    %100 = arith.addf %94, %99 : vector<64x60xf32>
    %c0_113 = arith.constant 0 : index
    %c4_114 = arith.constant 4 : index
    %c0_115 = arith.constant 0 : index
    %101 = vector.load %arg18[%c0_113, %c4_114, %c0_115] : memref<12x12x60xf32, #tpu.memory_space<vmem>>, vector<8x8x60xf32>
    %102 = vector.shape_cast %101 : vector<8x8x60xf32> to vector<64x60xf32>
    %c2_116 = arith.constant 2 : index
    %c0_117 = arith.constant 0 : index
    %c0_118 = arith.constant 0 : index
    %103 = vector.load %arg6[%c2_116, %c0_117, %c0_118] : memref<9x60x60xf32, #tpu.memory_space<vmem>>, vector<1x60x60xf32>
    %104 = vector.shape_cast %103 : vector<1x60x60xf32> to vector<60x60xf32>
    %cst_119 = arith.constant dense<0.000000e+00> : vector<64x60xf32>
    %105 = tpu.matmul %102, %104, %cst_119 {dimension_numbers = #tpu.dot_dimension_numbers<[1], [0], [0], [1], [0, 0, 1, 1], [], []>} : vector<64x60xf32>, vector<60x60xf32>, vector<64x60xf32> -> vector<64x60xf32>
    %106 = arith.addf %100, %105 : vector<64x60xf32>
    %c2_120 = arith.constant 2 : index
    %c0_121 = arith.constant 0 : index
    %c0_122 = arith.constant 0 : index
    %107 = vector.load %arg18[%c2_120, %c0_121, %c0_122] : memref<12x12x60xf32, #tpu.memory_space<vmem>>, vector<8x8x60xf32>
    %108 = vector.shape_cast %107 : vector<8x8x60xf32> to vector<64x60xf32>
    %c3_123 = arith.constant 3 : index
    %c0_124 = arith.constant 0 : index
    %c0_125 = arith.constant 0 : index
    %109 = vector.load %arg6[%c3_123, %c0_124, %c0_125] : memref<9x60x60xf32, #tpu.memory_space<vmem>>, vector<1x60x60xf32>
    %110 = vector.shape_cast %109 : vector<1x60x60xf32> to vector<60x60xf32>
    %cst_126 = arith.constant dense<0.000000e+00> : vector<64x60xf32>
    %111 = tpu.matmul %108, %110, %cst_126 {dimension_numbers = #tpu.dot_dimension_numbers<[1], [0], [0], [1], [0, 0, 1, 1], [], []>} : vector<64x60xf32>, vector<60x60xf32>, vector<64x60xf32> -> vector<64x60xf32>
    %112 = arith.addf %106, %111 : vector<64x60xf32>
    %c2_127 = arith.constant 2 : index
    %c2_128 = arith.constant 2 : index
    %c0_129 = arith.constant 0 : index
    %113 = vector.load %arg18[%c2_127, %c2_128, %c0_129] : memref<12x12x60xf32, #tpu.memory_space<vmem>>, vector<8x8x60xf32>
    %114 = vector.shape_cast %113 : vector<8x8x60xf32> to vector<64x60xf32>
    %c4_130 = arith.constant 4 : index
    %c0_131 = arith.constant 0 : index
    %c0_132 = arith.constant 0 : index
    %115 = vector.load %arg6[%c4_130, %c0_131, %c0_132] : memref<9x60x60xf32, #tpu.memory_space<vmem>>, vector<1x60x60xf32>
    %116 = vector.shape_cast %115 : vector<1x60x60xf32> to vector<60x60xf32>
    %cst_133 = arith.constant dense<0.000000e+00> : vector<64x60xf32>
    %117 = tpu.matmul %114, %116, %cst_133 {dimension_numbers = #tpu.dot_dimension_numbers<[1], [0], [0], [1], [0, 0, 1, 1], [], []>} : vector<64x60xf32>, vector<60x60xf32>, vector<64x60xf32> -> vector<64x60xf32>
    %118 = arith.addf %112, %117 : vector<64x60xf32>
    %c2_134 = arith.constant 2 : index
    %c4_135 = arith.constant 4 : index
    %c0_136 = arith.constant 0 : index
    %119 = vector.load %arg18[%c2_134, %c4_135, %c0_136] : memref<12x12x60xf32, #tpu.memory_space<vmem>>, vector<8x8x60xf32>
    %120 = vector.shape_cast %119 : vector<8x8x60xf32> to vector<64x60xf32>
    %c5_137 = arith.constant 5 : index
    %c0_138 = arith.constant 0 : index
    %c0_139 = arith.constant 0 : index
    %121 = vector.load %arg6[%c5_137, %c0_138, %c0_139] : memref<9x60x60xf32, #tpu.memory_space<vmem>>, vector<1x60x60xf32>
    %122 = vector.shape_cast %121 : vector<1x60x60xf32> to vector<60x60xf32>
    %cst_140 = arith.constant dense<0.000000e+00> : vector<64x60xf32>
    %123 = tpu.matmul %120, %122, %cst_140 {dimension_numbers = #tpu.dot_dimension_numbers<[1], [0], [0], [1], [0, 0, 1, 1], [], []>} : vector<64x60xf32>, vector<60x60xf32>, vector<64x60xf32> -> vector<64x60xf32>
    %124 = arith.addf %118, %123 : vector<64x60xf32>
    %c4_141 = arith.constant 4 : index
    %c0_142 = arith.constant 0 : index
    %c0_143 = arith.constant 0 : index
    %125 = vector.load %arg18[%c4_141, %c0_142, %c0_143] : memref<12x12x60xf32, #tpu.memory_space<vmem>>, vector<8x8x60xf32>
    %126 = vector.shape_cast %125 : vector<8x8x60xf32> to vector<64x60xf32>
    %c6_144 = arith.constant 6 : index
    %c0_145 = arith.constant 0 : index
    %c0_146 = arith.constant 0 : index
    %127 = vector.load %arg6[%c6_144, %c0_145, %c0_146] : memref<9x60x60xf32, #tpu.memory_space<vmem>>, vector<1x60x60xf32>
    %128 = vector.shape_cast %127 : vector<1x60x60xf32> to vector<60x60xf32>
    %cst_147 = arith.constant dense<0.000000e+00> : vector<64x60xf32>
    %129 = tpu.matmul %126, %128, %cst_147 {dimension_numbers = #tpu.dot_dimension_numbers<[1], [0], [0], [1], [0, 0, 1, 1], [], []>} : vector<64x60xf32>, vector<60x60xf32>, vector<64x60xf32> -> vector<64x60xf32>
    %130 = arith.addf %124, %129 : vector<64x60xf32>
    %c4_148 = arith.constant 4 : index
    %c2_149 = arith.constant 2 : index
    %c0_150 = arith.constant 0 : index
    %131 = vector.load %arg18[%c4_148, %c2_149, %c0_150] : memref<12x12x60xf32, #tpu.memory_space<vmem>>, vector<8x8x60xf32>
    %132 = vector.shape_cast %131 : vector<8x8x60xf32> to vector<64x60xf32>
    %c7_151 = arith.constant 7 : index
    %c0_152 = arith.constant 0 : index
    %c0_153 = arith.constant 0 : index
    %133 = vector.load %arg6[%c7_151, %c0_152, %c0_153] : memref<9x60x60xf32, #tpu.memory_space<vmem>>, vector<1x60x60xf32>
    %134 = vector.shape_cast %133 : vector<1x60x60xf32> to vector<60x60xf32>
    %cst_154 = arith.constant dense<0.000000e+00> : vector<64x60xf32>
    %135 = tpu.matmul %132, %134, %cst_154 {dimension_numbers = #tpu.dot_dimension_numbers<[1], [0], [0], [1], [0, 0, 1, 1], [], []>} : vector<64x60xf32>, vector<60x60xf32>, vector<64x60xf32> -> vector<64x60xf32>
    %136 = arith.addf %130, %135 : vector<64x60xf32>
    %c4_155 = arith.constant 4 : index
    %c4_156 = arith.constant 4 : index
    %c0_157 = arith.constant 0 : index
    %137 = vector.load %arg18[%c4_155, %c4_156, %c0_157] : memref<12x12x60xf32, #tpu.memory_space<vmem>>, vector<8x8x60xf32>
    %138 = vector.shape_cast %137 : vector<8x8x60xf32> to vector<64x60xf32>
    %c8_158 = arith.constant 8 : index
    %c0_159 = arith.constant 0 : index
    %c0_160 = arith.constant 0 : index
    %139 = vector.load %arg6[%c8_158, %c0_159, %c0_160] : memref<9x60x60xf32, #tpu.memory_space<vmem>>, vector<1x60x60xf32>
    %140 = vector.shape_cast %139 : vector<1x60x60xf32> to vector<60x60xf32>
    %cst_161 = arith.constant dense<0.000000e+00> : vector<64x60xf32>
    %141 = tpu.matmul %138, %140, %cst_161 {dimension_numbers = #tpu.dot_dimension_numbers<[1], [0], [0], [1], [0, 0, 1, 1], [], []>} : vector<64x60xf32>, vector<60x60xf32>, vector<64x60xf32> -> vector<64x60xf32>
    %142 = arith.addf %136, %141 : vector<64x60xf32>
    %c0_162 = arith.constant 0 : index
    %c0_163 = arith.constant 0 : index
    %143 = vector.load %arg7[%c0_162, %c0_163] : memref<1x60xf32, #tpu.memory_space<vmem>>, vector<1x60xf32>
    %144 = vector.broadcast %143 : vector<1x60xf32> to vector<64x60xf32>
    %145 = arith.addf %142, %144 : vector<64x60xf32>
    %cst_164 = arith.constant 0.000000e+00 : f32
    %146 = vector.broadcast %cst_164 : f32 to vector<64x60xf32>
    %147 = arith.maximumf %145, %146 : vector<64x60xf32>
    %148 = vector.shape_cast %147 : vector<64x60xf32> to vector<8x8x60xf32>
    %cst_165 = arith.constant 0.000000e+00 : f32
    %149 = vector.broadcast %cst_165 : f32 to vector<2x12x60xf32>
    %c0_166 = arith.constant 0 : index
    %c0_167 = arith.constant 0 : index
    %c0_168 = arith.constant 0 : index
    %150 = vector.load %arg19[%c0_166, %c0_167, %c0_168] : memref<12x12x60xf32, #tpu.memory_space<vmem>>, vector<2x12x60xf32>
    tpu.vector_store %arg19[%c0_166, %c0_167, %c0_168], %149 {strides = array<i32>} : memref<12x12x60xf32, #tpu.memory_space<vmem>>, vector<2x12x60xf32>,
    %c10_169 = arith.constant 10 : index
    %c0_170 = arith.constant 0 : index
    %c0_171 = arith.constant 0 : index
    %151 = vector.load %arg19[%c10_169, %c0_170, %c0_171] : memref<12x12x60xf32, #tpu.memory_space<vmem>>, vector<2x12x60xf32>
    tpu.vector_store %arg19[%c10_169, %c0_170, %c0_171], %149 {strides = array<i32>} : memref<12x12x60xf32, #tpu.memory_space<vmem>>, vector<2x12x60xf32>,
    %cst_172 = arith.constant 0.000000e+00 : f32
    %152 = vector.broadcast %cst_172 : f32 to vector<8x2x60xf32>
    %c2_173 = arith.constant 2 : index
    %c0_174 = arith.constant 0 : index
    %c0_175 = arith.constant 0 : index
    %153 = vector.load %arg19[%c2_173, %c0_174, %c0_175] : memref<12x12x60xf32, #tpu.memory_space<vmem>>, vector<8x2x60xf32>
    tpu.vector_store %arg19[%c2_173, %c0_174, %c0_175], %152 {strides = array<i32>} : memref<12x12x60xf32, #tpu.memory_space<vmem>>, vector<8x2x60xf32>,
    %c2_176 = arith.constant 2 : index
    %c10_177 = arith.constant 10 : index
    %c0_178 = arith.constant 0 : index
    %154 = vector.load %arg19[%c2_176, %c10_177, %c0_178] : memref<12x12x60xf32, #tpu.memory_space<vmem>>, vector<8x2x60xf32>
    tpu.vector_store %arg19[%c2_176, %c10_177, %c0_178], %152 {strides = array<i32>} : memref<12x12x60xf32, #tpu.memory_space<vmem>>, vector<8x2x60xf32>,
    %c2_179 = arith.constant 2 : index
    %c2_180 = arith.constant 2 : index
    %c0_181 = arith.constant 0 : index
    %155 = vector.load %arg19[%c2_179, %c2_180, %c0_181] : memref<12x12x60xf32, #tpu.memory_space<vmem>>, vector<8x8x60xf32>
    tpu.vector_store %arg19[%c2_179, %c2_180, %c0_181], %148 {strides = array<i32>} : memref<12x12x60xf32, #tpu.memory_space<vmem>>, vector<8x8x60xf32>,
    %c0_182 = arith.constant 0 : index
    %c0_183 = arith.constant 0 : index
    %c0_184 = arith.constant 0 : index
    %156 = vector.load %arg19[%c0_182, %c0_183, %c0_184] : memref<12x12x60xf32, #tpu.memory_space<vmem>>, vector<8x8x60xf32>
    %157 = vector.shape_cast %156 : vector<8x8x60xf32> to vector<64x60xf32>
    %c0_185 = arith.constant 0 : index
    %c0_186 = arith.constant 0 : index
    %c0_187 = arith.constant 0 : index
    %158 = vector.load %arg8[%c0_185, %c0_186, %c0_187] : memref<9x60x40xf32, #tpu.memory_space<vmem>>, vector<1x60x40xf32>
    %159 = vector.shape_cast %158 : vector<1x60x40xf32> to vector<60x40xf32>
    %cst_188 = arith.constant dense<0.000000e+00> : vector<64x40xf32>
    %160 = tpu.matmul %157, %159, %cst_188 {dimension_numbers = #tpu.dot_dimension_numbers<[1], [0], [0], [1], [0, 0, 1, 1], [], []>} : vector<64x60xf32>, vector<60x40xf32>, vector<64x40xf32> -> vector<64x40xf32>
    %c0_189 = arith.constant 0 : index
    %c2_190 = arith.constant 2 : index
    %c0_191 = arith.constant 0 : index
    %161 = vector.load %arg19[%c0_189, %c2_190, %c0_191] : memref<12x12x60xf32, #tpu.memory_space<vmem>>, vector<8x8x60xf32>
    %162 = vector.shape_cast %161 : vector<8x8x60xf32> to vector<64x60xf32>
    %c1_192 = arith.constant 1 : index
    %c0_193 = arith.constant 0 : index
    %c0_194 = arith.constant 0 : index
    %163 = vector.load %arg8[%c1_192, %c0_193, %c0_194] : memref<9x60x40xf32, #tpu.memory_space<vmem>>, vector<1x60x40xf32>
    %164 = vector.shape_cast %163 : vector<1x60x40xf32> to vector<60x40xf32>
    %cst_195 = arith.constant dense<0.000000e+00> : vector<64x40xf32>
    %165 = tpu.matmul %162, %164, %cst_195 {dimension_numbers = #tpu.dot_dimension_numbers<[1], [0], [0], [1], [0, 0, 1, 1], [], []>} : vector<64x60xf32>, vector<60x40xf32>, vector<64x40xf32> -> vector<64x40xf32>
    %166 = arith.addf %160, %165 : vector<64x40xf32>
    %c0_196 = arith.constant 0 : index
    %c4_197 = arith.constant 4 : index
    %c0_198 = arith.constant 0 : index
    %167 = vector.load %arg19[%c0_196, %c4_197, %c0_198] : memref<12x12x60xf32, #tpu.memory_space<vmem>>, vector<8x8x60xf32>
    %168 = vector.shape_cast %167 : vector<8x8x60xf32> to vector<64x60xf32>
    %c2_199 = arith.constant 2 : index
    %c0_200 = arith.constant 0 : index
    %c0_201 = arith.constant 0 : index
    %169 = vector.load %arg8[%c2_199, %c0_200, %c0_201] : memref<9x60x40xf32, #tpu.memory_space<vmem>>, vector<1x60x40xf32>
    %170 = vector.shape_cast %169 : vector<1x60x40xf32> to vector<60x40xf32>
    %cst_202 = arith.constant dense<0.000000e+00> : vector<64x40xf32>
    %171 = tpu.matmul %168, %170, %cst_202 {dimension_numbers = #tpu.dot_dimension_numbers<[1], [0], [0], [1], [0, 0, 1, 1], [], []>} : vector<64x60xf32>, vector<60x40xf32>, vector<64x40xf32> -> vector<64x40xf32>
    %172 = arith.addf %166, %171 : vector<64x40xf32>
    %c2_203 = arith.constant 2 : index
    %c0_204 = arith.constant 0 : index
    %c0_205 = arith.constant 0 : index
    %173 = vector.load %arg19[%c2_203, %c0_204, %c0_205] : memref<12x12x60xf32, #tpu.memory_space<vmem>>, vector<8x8x60xf32>
    %174 = vector.shape_cast %173 : vector<8x8x60xf32> to vector<64x60xf32>
    %c3_206 = arith.constant 3 : index
    %c0_207 = arith.constant 0 : index
    %c0_208 = arith.constant 0 : index
    %175 = vector.load %arg8[%c3_206, %c0_207, %c0_208] : memref<9x60x40xf32, #tpu.memory_space<vmem>>, vector<1x60x40xf32>
    %176 = vector.shape_cast %175 : vector<1x60x40xf32> to vector<60x40xf32>
    %cst_209 = arith.constant dense<0.000000e+00> : vector<64x40xf32>
    %177 = tpu.matmul %174, %176, %cst_209 {dimension_numbers = #tpu.dot_dimension_numbers<[1], [0], [0], [1], [0, 0, 1, 1], [], []>} : vector<64x60xf32>, vector<60x40xf32>, vector<64x40xf32> -> vector<64x40xf32>
    %178 = arith.addf %172, %177 : vector<64x40xf32>
    %c2_210 = arith.constant 2 : index
    %c2_211 = arith.constant 2 : index
    %c0_212 = arith.constant 0 : index
    %179 = vector.load %arg19[%c2_210, %c2_211, %c0_212] : memref<12x12x60xf32, #tpu.memory_space<vmem>>, vector<8x8x60xf32>
    %180 = vector.shape_cast %179 : vector<8x8x60xf32> to vector<64x60xf32>
    %c4_213 = arith.constant 4 : index
    %c0_214 = arith.constant 0 : index
    %c0_215 = arith.constant 0 : index
    %181 = vector.load %arg8[%c4_213, %c0_214, %c0_215] : memref<9x60x40xf32, #tpu.memory_space<vmem>>, vector<1x60x40xf32>
    %182 = vector.shape_cast %181 : vector<1x60x40xf32> to vector<60x40xf32>
    %cst_216 = arith.constant dense<0.000000e+00> : vector<64x40xf32>
    %183 = tpu.matmul %180, %182, %cst_216 {dimension_numbers = #tpu.dot_dimension_numbers<[1], [0], [0], [1], [0, 0, 1, 1], [], []>} : vector<64x60xf32>, vector<60x40xf32>, vector<64x40xf32> -> vector<64x40xf32>
    %184 = arith.addf %178, %183 : vector<64x40xf32>
    %c2_217 = arith.constant 2 : index
    %c4_218 = arith.constant 4 : index
    %c0_219 = arith.constant 0 : index
    %185 = vector.load %arg19[%c2_217, %c4_218, %c0_219] : memref<12x12x60xf32, #tpu.memory_space<vmem>>, vector<8x8x60xf32>
    %186 = vector.shape_cast %185 : vector<8x8x60xf32> to vector<64x60xf32>
    %c5_220 = arith.constant 5 : index
    %c0_221 = arith.constant 0 : index
    %c0_222 = arith.constant 0 : index
    %187 = vector.load %arg8[%c5_220, %c0_221, %c0_222] : memref<9x60x40xf32, #tpu.memory_space<vmem>>, vector<1x60x40xf32>
    %188 = vector.shape_cast %187 : vector<1x60x40xf32> to vector<60x40xf32>
    %cst_223 = arith.constant dense<0.000000e+00> : vector<64x40xf32>
    %189 = tpu.matmul %186, %188, %cst_223 {dimension_numbers = #tpu.dot_dimension_numbers<[1], [0], [0], [1], [0, 0, 1, 1], [], []>} : vector<64x60xf32>, vector<60x40xf32>, vector<64x40xf32> -> vector<64x40xf32>
    %190 = arith.addf %184, %189 : vector<64x40xf32>
    %c4_224 = arith.constant 4 : index
    %c0_225 = arith.constant 0 : index
    %c0_226 = arith.constant 0 : index
    %191 = vector.load %arg19[%c4_224, %c0_225, %c0_226] : memref<12x12x60xf32, #tpu.memory_space<vmem>>, vector<8x8x60xf32>
    %192 = vector.shape_cast %191 : vector<8x8x60xf32> to vector<64x60xf32>
    %c6_227 = arith.constant 6 : index
    %c0_228 = arith.constant 0 : index
    %c0_229 = arith.constant 0 : index
    %193 = vector.load %arg8[%c6_227, %c0_228, %c0_229] : memref<9x60x40xf32, #tpu.memory_space<vmem>>, vector<1x60x40xf32>
    %194 = vector.shape_cast %193 : vector<1x60x40xf32> to vector<60x40xf32>
    %cst_230 = arith.constant dense<0.000000e+00> : vector<64x40xf32>
    %195 = tpu.matmul %192, %194, %cst_230 {dimension_numbers = #tpu.dot_dimension_numbers<[1], [0], [0], [1], [0, 0, 1, 1], [], []>} : vector<64x60xf32>, vector<60x40xf32>, vector<64x40xf32> -> vector<64x40xf32>
    %196 = arith.addf %190, %195 : vector<64x40xf32>
    %c4_231 = arith.constant 4 : index
    %c2_232 = arith.constant 2 : index
    %c0_233 = arith.constant 0 : index
    %197 = vector.load %arg19[%c4_231, %c2_232, %c0_233] : memref<12x12x60xf32, #tpu.memory_space<vmem>>, vector<8x8x60xf32>
    %198 = vector.shape_cast %197 : vector<8x8x60xf32> to vector<64x60xf32>
    %c7_234 = arith.constant 7 : index
    %c0_235 = arith.constant 0 : index
    %c0_236 = arith.constant 0 : index
    %199 = vector.load %arg8[%c7_234, %c0_235, %c0_236] : memref<9x60x40xf32, #tpu.memory_space<vmem>>, vector<1x60x40xf32>
    %200 = vector.shape_cast %199 : vector<1x60x40xf32> to vector<60x40xf32>
    %cst_237 = arith.constant dense<0.000000e+00> : vector<64x40xf32>
    %201 = tpu.matmul %198, %200, %cst_237 {dimension_numbers = #tpu.dot_dimension_numbers<[1], [0], [0], [1], [0, 0, 1, 1], [], []>} : vector<64x60xf32>, vector<60x40xf32>, vector<64x40xf32> -> vector<64x40xf32>
    %202 = arith.addf %196, %201 : vector<64x40xf32>
    %c4_238 = arith.constant 4 : index
    %c4_239 = arith.constant 4 : index
    %c0_240 = arith.constant 0 : index
    %203 = vector.load %arg19[%c4_238, %c4_239, %c0_240] : memref<12x12x60xf32, #tpu.memory_space<vmem>>, vector<8x8x60xf32>
    %204 = vector.shape_cast %203 : vector<8x8x60xf32> to vector<64x60xf32>
    %c8_241 = arith.constant 8 : index
    %c0_242 = arith.constant 0 : index
    %c0_243 = arith.constant 0 : index
    %205 = vector.load %arg8[%c8_241, %c0_242, %c0_243] : memref<9x60x40xf32, #tpu.memory_space<vmem>>, vector<1x60x40xf32>
    %206 = vector.shape_cast %205 : vector<1x60x40xf32> to vector<60x40xf32>
    %cst_244 = arith.constant dense<0.000000e+00> : vector<64x40xf32>
    %207 = tpu.matmul %204, %206, %cst_244 {dimension_numbers = #tpu.dot_dimension_numbers<[1], [0], [0], [1], [0, 0, 1, 1], [], []>} : vector<64x60xf32>, vector<60x40xf32>, vector<64x40xf32> -> vector<64x40xf32>
    %208 = arith.addf %202, %207 : vector<64x40xf32>
    %c0_245 = arith.constant 0 : index
    %c0_246 = arith.constant 0 : index
    %209 = vector.load %arg9[%c0_245, %c0_246] : memref<1x40xf32, #tpu.memory_space<vmem>>, vector<1x40xf32>
    %210 = vector.broadcast %209 : vector<1x40xf32> to vector<64x40xf32>
    %211 = arith.addf %208, %210 : vector<64x40xf32>
    %cst_247 = arith.constant 0.000000e+00 : f32
    %212 = vector.broadcast %cst_247 : f32 to vector<64x40xf32>
    %213 = arith.maximumf %211, %212 : vector<64x40xf32>
    %214 = vector.shape_cast %213 : vector<64x40xf32> to vector<4x2x8x40xf32>
    %215 = vector.extract_strided_slice %214 {offsets = [0, 0, 0, 0], sizes = [4, 1, 8, 40], strides = [1, 1, 1, 1]} : vector<4x2x8x40xf32> to vector<4x1x8x40xf32>
    %216 = vector.shape_cast %215 : vector<4x1x8x40xf32> to vector<4x8x40xf32>
    %217 = vector.extract_strided_slice %214 {offsets = [0, 1, 0, 0], sizes = [4, 1, 8, 40], strides = [1, 1, 1, 1]} : vector<4x2x8x40xf32> to vector<4x1x8x40xf32>
    %218 = vector.shape_cast %217 : vector<4x1x8x40xf32> to vector<4x8x40xf32>
    %219 = arith.maximumf %216, %218 : vector<4x8x40xf32>
    %220 = vector.shape_cast %219 : vector<4x8x40xf32> to vector<4x4x2x40xf32>
    %cst_248 = arith.constant dense<0xFF800000> : vector<4x4x40xf32>
    %221 = vector.multi_reduction <maximumf>, %220, %cst_248 [2] : vector<4x4x2x40xf32> to vector<4x4x40xf32>
    %cst_249 = arith.constant 0.000000e+00 : f32
    %222 = vector.broadcast %cst_249 : f32 to vector<2x8x40xf32>
    %c0_250 = arith.constant 0 : index
    %c0_251 = arith.constant 0 : index
    %c0_252 = arith.constant 0 : index
    %223 = vector.load %arg20[%c0_250, %c0_251, %c0_252] : memref<8x8x40xf32, #tpu.memory_space<vmem>>, vector<2x8x40xf32>
    tpu.vector_store %arg20[%c0_250, %c0_251, %c0_252], %222 {strides = array<i32>} : memref<8x8x40xf32, #tpu.memory_space<vmem>>, vector<2x8x40xf32>,
    %c6_253 = arith.constant 6 : index
    %c0_254 = arith.constant 0 : index
    %c0_255 = arith.constant 0 : index
    %224 = vector.load %arg20[%c6_253, %c0_254, %c0_255] : memref<8x8x40xf32, #tpu.memory_space<vmem>>, vector<2x8x40xf32>
    tpu.vector_store %arg20[%c6_253, %c0_254, %c0_255], %222 {strides = array<i32>} : memref<8x8x40xf32, #tpu.memory_space<vmem>>, vector<2x8x40xf32>,
    %cst_256 = arith.constant 0.000000e+00 : f32
    %225 = vector.broadcast %cst_256 : f32 to vector<4x2x40xf32>
    %c2_257 = arith.constant 2 : index
    %c0_258 = arith.constant 0 : index
    %c0_259 = arith.constant 0 : index
    %226 = vector.load %arg20[%c2_257, %c0_258, %c0_259] : memref<8x8x40xf32, #tpu.memory_space<vmem>>, vector<4x2x40xf32>
    tpu.vector_store %arg20[%c2_257, %c0_258, %c0_259], %225 {strides = array<i32>} : memref<8x8x40xf32, #tpu.memory_space<vmem>>, vector<4x2x40xf32>,
    %c2_260 = arith.constant 2 : index
    %c6_261 = arith.constant 6 : index
    %c0_262 = arith.constant 0 : index
    %227 = vector.load %arg20[%c2_260, %c6_261, %c0_262] : memref<8x8x40xf32, #tpu.memory_space<vmem>>, vector<4x2x40xf32>
    tpu.vector_store %arg20[%c2_260, %c6_261, %c0_262], %225 {strides = array<i32>} : memref<8x8x40xf32, #tpu.memory_space<vmem>>, vector<4x2x40xf32>,
    %c2_263 = arith.constant 2 : index
    %c2_264 = arith.constant 2 : index
    %c0_265 = arith.constant 0 : index
    %228 = vector.load %arg20[%c2_263, %c2_264, %c0_265] : memref<8x8x40xf32, #tpu.memory_space<vmem>>, vector<4x4x40xf32>
    tpu.vector_store %arg20[%c2_263, %c2_264, %c0_265], %221 {strides = array<i32>} : memref<8x8x40xf32, #tpu.memory_space<vmem>>, vector<4x4x40xf32>,
    %c0_266 = arith.constant 0 : index
    %c0_267 = arith.constant 0 : index
    %c0_268 = arith.constant 0 : index
    %229 = vector.load %arg20[%c0_266, %c0_267, %c0_268] : memref<8x8x40xf32, #tpu.memory_space<vmem>>, vector<4x4x40xf32>
    %230 = vector.shape_cast %229 : vector<4x4x40xf32> to vector<16x40xf32>
    %c0_269 = arith.constant 0 : index
    %c0_270 = arith.constant 0 : index
    %c0_271 = arith.constant 0 : index
    %231 = vector.load %arg10[%c0_269, %c0_270, %c0_271] : memref<9x40x20xf32, #tpu.memory_space<vmem>>, vector<1x40x20xf32>
    %232 = vector.shape_cast %231 : vector<1x40x20xf32> to vector<40x20xf32>
    %cst_272 = arith.constant dense<0.000000e+00> : vector<16x20xf32>
    %233 = tpu.matmul %230, %232, %cst_272 {dimension_numbers = #tpu.dot_dimension_numbers<[1], [0], [0], [1], [0, 0, 1, 1], [], []>} : vector<16x40xf32>, vector<40x20xf32>, vector<16x20xf32> -> vector<16x20xf32>
    %c0_273 = arith.constant 0 : index
    %c2_274 = arith.constant 2 : index
    %c0_275 = arith.constant 0 : index
    %234 = vector.load %arg20[%c0_273, %c2_274, %c0_275] : memref<8x8x40xf32, #tpu.memory_space<vmem>>, vector<4x4x40xf32>
    %235 = vector.shape_cast %234 : vector<4x4x40xf32> to vector<16x40xf32>
    %c1_276 = arith.constant 1 : index
    %c0_277 = arith.constant 0 : index
    %c0_278 = arith.constant 0 : index
    %236 = vector.load %arg10[%c1_276, %c0_277, %c0_278] : memref<9x40x20xf32, #tpu.memory_space<vmem>>, vector<1x40x20xf32>
    %237 = vector.shape_cast %236 : vector<1x40x20xf32> to vector<40x20xf32>
    %cst_279 = arith.constant dense<0.000000e+00> : vector<16x20xf32>
    %238 = tpu.matmul %235, %237, %cst_279 {dimension_numbers = #tpu.dot_dimension_numbers<[1], [0], [0], [1], [0, 0, 1, 1], [], []>} : vector<16x40xf32>, vector<40x20xf32>, vector<16x20xf32> -> vector<16x20xf32>
    %239 = arith.addf %233, %238 : vector<16x20xf32>
    %c0_280 = arith.constant 0 : index
    %c4_281 = arith.constant 4 : index
    %c0_282 = arith.constant 0 : index
    %240 = vector.load %arg20[%c0_280, %c4_281, %c0_282] : memref<8x8x40xf32, #tpu.memory_space<vmem>>, vector<4x4x40xf32>
    %241 = vector.shape_cast %240 : vector<4x4x40xf32> to vector<16x40xf32>
    %c2_283 = arith.constant 2 : index
    %c0_284 = arith.constant 0 : index
    %c0_285 = arith.constant 0 : index
    %242 = vector.load %arg10[%c2_283, %c0_284, %c0_285] : memref<9x40x20xf32, #tpu.memory_space<vmem>>, vector<1x40x20xf32>
    %243 = vector.shape_cast %242 : vector<1x40x20xf32> to vector<40x20xf32>
    %cst_286 = arith.constant dense<0.000000e+00> : vector<16x20xf32>
    %244 = tpu.matmul %241, %243, %cst_286 {dimension_numbers = #tpu.dot_dimension_numbers<[1], [0], [0], [1], [0, 0, 1, 1], [], []>} : vector<16x40xf32>, vector<40x20xf32>, vector<16x20xf32> -> vector<16x20xf32>
    %245 = arith.addf %239, %244 : vector<16x20xf32>
    %c2_287 = arith.constant 2 : index
    %c0_288 = arith.constant 0 : index
    %c0_289 = arith.constant 0 : index
    %246 = vector.load %arg20[%c2_287, %c0_288, %c0_289] : memref<8x8x40xf32, #tpu.memory_space<vmem>>, vector<4x4x40xf32>
    %247 = vector.shape_cast %246 : vector<4x4x40xf32> to vector<16x40xf32>
    %c3_290 = arith.constant 3 : index
    %c0_291 = arith.constant 0 : index
    %c0_292 = arith.constant 0 : index
    %248 = vector.load %arg10[%c3_290, %c0_291, %c0_292] : memref<9x40x20xf32, #tpu.memory_space<vmem>>, vector<1x40x20xf32>
    %249 = vector.shape_cast %248 : vector<1x40x20xf32> to vector<40x20xf32>
    %cst_293 = arith.constant dense<0.000000e+00> : vector<16x20xf32>
    %250 = tpu.matmul %247, %249, %cst_293 {dimension_numbers = #tpu.dot_dimension_numbers<[1], [0], [0], [1], [0, 0, 1, 1], [], []>} : vector<16x40xf32>, vector<40x20xf32>, vector<16x20xf32> -> vector<16x20xf32>
    %251 = arith.addf %245, %250 : vector<16x20xf32>
    %c2_294 = arith.constant 2 : index
    %c2_295 = arith.constant 2 : index
    %c0_296 = arith.constant 0 : index
    %252 = vector.load %arg20[%c2_294, %c2_295, %c0_296] : memref<8x8x40xf32, #tpu.memory_space<vmem>>, vector<4x4x40xf32>
    %253 = vector.shape_cast %252 : vector<4x4x40xf32> to vector<16x40xf32>
    %c4_297 = arith.constant 4 : index
    %c0_298 = arith.constant 0 : index
    %c0_299 = arith.constant 0 : index
    %254 = vector.load %arg10[%c4_297, %c0_298, %c0_299] : memref<9x40x20xf32, #tpu.memory_space<vmem>>, vector<1x40x20xf32>
    %255 = vector.shape_cast %254 : vector<1x40x20xf32> to vector<40x20xf32>
    %cst_300 = arith.constant dense<0.000000e+00> : vector<16x20xf32>
    %256 = tpu.matmul %253, %255, %cst_300 {dimension_numbers = #tpu.dot_dimension_numbers<[1], [0], [0], [1], [0, 0, 1, 1], [], []>} : vector<16x40xf32>, vector<40x20xf32>, vector<16x20xf32> -> vector<16x20xf32>
    %257 = arith.addf %251, %256 : vector<16x20xf32>
    %c2_301 = arith.constant 2 : index
    %c4_302 = arith.constant 4 : index
    %c0_303 = arith.constant 0 : index
    %258 = vector.load %arg20[%c2_301, %c4_302, %c0_303] : memref<8x8x40xf32, #tpu.memory_space<vmem>>, vector<4x4x40xf32>
    %259 = vector.shape_cast %258 : vector<4x4x40xf32> to vector<16x40xf32>
    %c5_304 = arith.constant 5 : index
    %c0_305 = arith.constant 0 : index
    %c0_306 = arith.constant 0 : index
    %260 = vector.load %arg10[%c5_304, %c0_305, %c0_306] : memref<9x40x20xf32, #tpu.memory_space<vmem>>, vector<1x40x20xf32>
    %261 = vector.shape_cast %260 : vector<1x40x20xf32> to vector<40x20xf32>
    %cst_307 = arith.constant dense<0.000000e+00> : vector<16x20xf32>
    %262 = tpu.matmul %259, %261, %cst_307 {dimension_numbers = #tpu.dot_dimension_numbers<[1], [0], [0], [1], [0, 0, 1, 1], [], []>} : vector<16x40xf32>, vector<40x20xf32>, vector<16x20xf32> -> vector<16x20xf32>
    %263 = arith.addf %257, %262 : vector<16x20xf32>
    %c4_308 = arith.constant 4 : index
    %c0_309 = arith.constant 0 : index
    %c0_310 = arith.constant 0 : index
    %264 = vector.load %arg20[%c4_308, %c0_309, %c0_310] : memref<8x8x40xf32, #tpu.memory_space<vmem>>, vector<4x4x40xf32>
    %265 = vector.shape_cast %264 : vector<4x4x40xf32> to vector<16x40xf32>
    %c6_311 = arith.constant 6 : index
    %c0_312 = arith.constant 0 : index
    %c0_313 = arith.constant 0 : index
    %266 = vector.load %arg10[%c6_311, %c0_312, %c0_313] : memref<9x40x20xf32, #tpu.memory_space<vmem>>, vector<1x40x20xf32>
    %267 = vector.shape_cast %266 : vector<1x40x20xf32> to vector<40x20xf32>
    %cst_314 = arith.constant dense<0.000000e+00> : vector<16x20xf32>
    %268 = tpu.matmul %265, %267, %cst_314 {dimension_numbers = #tpu.dot_dimension_numbers<[1], [0], [0], [1], [0, 0, 1, 1], [], []>} : vector<16x40xf32>, vector<40x20xf32>, vector<16x20xf32> -> vector<16x20xf32>
    %269 = arith.addf %263, %268 : vector<16x20xf32>
    %c4_315 = arith.constant 4 : index
    %c2_316 = arith.constant 2 : index
    %c0_317 = arith.constant 0 : index
    %270 = vector.load %arg20[%c4_315, %c2_316, %c0_317] : memref<8x8x40xf32, #tpu.memory_space<vmem>>, vector<4x4x40xf32>
    %271 = vector.shape_cast %270 : vector<4x4x40xf32> to vector<16x40xf32>
    %c7_318 = arith.constant 7 : index
    %c0_319 = arith.constant 0 : index
    %c0_320 = arith.constant 0 : index
    %272 = vector.load %arg10[%c7_318, %c0_319, %c0_320] : memref<9x40x20xf32, #tpu.memory_space<vmem>>, vector<1x40x20xf32>
    %273 = vector.shape_cast %272 : vector<1x40x20xf32> to vector<40x20xf32>
    %cst_321 = arith.constant dense<0.000000e+00> : vector<16x20xf32>
    %274 = tpu.matmul %271, %273, %cst_321 {dimension_numbers = #tpu.dot_dimension_numbers<[1], [0], [0], [1], [0, 0, 1, 1], [], []>} : vector<16x40xf32>, vector<40x20xf32>, vector<16x20xf32> -> vector<16x20xf32>
    %275 = arith.addf %269, %274 : vector<16x20xf32>
    %c4_322 = arith.constant 4 : index
    %c4_323 = arith.constant 4 : index
    %c0_324 = arith.constant 0 : index
    %276 = vector.load %arg20[%c4_322, %c4_323, %c0_324] : memref<8x8x40xf32, #tpu.memory_space<vmem>>, vector<4x4x40xf32>
    %277 = vector.shape_cast %276 : vector<4x4x40xf32> to vector<16x40xf32>
    %c8_325 = arith.constant 8 : index
    %c0_326 = arith.constant 0 : index
    %c0_327 = arith.constant 0 : index
    %278 = vector.load %arg10[%c8_325, %c0_326, %c0_327] : memref<9x40x20xf32, #tpu.memory_space<vmem>>, vector<1x40x20xf32>
    %279 = vector.shape_cast %278 : vector<1x40x20xf32> to vector<40x20xf32>
    %cst_328 = arith.constant dense<0.000000e+00> : vector<16x20xf32>
    %280 = tpu.matmul %277, %279, %cst_328 {dimension_numbers = #tpu.dot_dimension_numbers<[1], [0], [0], [1], [0, 0, 1, 1], [], []>} : vector<16x40xf32>, vector<40x20xf32>, vector<16x20xf32> -> vector<16x20xf32>
    %281 = arith.addf %275, %280 : vector<16x20xf32>
    %c0_329 = arith.constant 0 : index
    %c0_330 = arith.constant 0 : index
    %282 = vector.load %arg11[%c0_329, %c0_330] : memref<1x20xf32, #tpu.memory_space<vmem>>, vector<1x20xf32>
    %283 = vector.broadcast %282 : vector<1x20xf32> to vector<16x20xf32>
    %284 = arith.addf %281, %283 : vector<16x20xf32>
    %cst_331 = arith.constant 0.000000e+00 : f32
    %285 = vector.broadcast %cst_331 : f32 to vector<16x20xf32>
    %286 = arith.maximumf %284, %285 : vector<16x20xf32>
    %287 = vector.shape_cast %286 : vector<16x20xf32> to vector<2x2x4x20xf32>
    %288 = vector.extract_strided_slice %287 {offsets = [0, 0, 0, 0], sizes = [2, 1, 4, 20], strides = [1, 1, 1, 1]} : vector<2x2x4x20xf32> to vector<2x1x4x20xf32>
    %289 = vector.shape_cast %288 : vector<2x1x4x20xf32> to vector<2x4x20xf32>
    %290 = vector.extract_strided_slice %287 {offsets = [0, 1, 0, 0], sizes = [2, 1, 4, 20], strides = [1, 1, 1, 1]} : vector<2x2x4x20xf32> to vector<2x1x4x20xf32>
    %291 = vector.shape_cast %290 : vector<2x1x4x20xf32> to vector<2x4x20xf32>
    %292 = arith.maximumf %289, %291 : vector<2x4x20xf32>
    %293 = vector.shape_cast %292 : vector<2x4x20xf32> to vector<2x2x2x20xf32>
    %cst_332 = arith.constant dense<0xFF800000> : vector<2x2x20xf32>
    %294 = vector.multi_reduction <maximumf>, %293, %cst_332 [2] : vector<2x2x2x20xf32> to vector<2x2x20xf32>
    %cst_333 = arith.constant 0.000000e+00 : f32
    %295 = vector.broadcast %cst_333 : f32 to vector<2x6x20xf32>
    %c0_334 = arith.constant 0 : index
    %c0_335 = arith.constant 0 : index
    %c0_336 = arith.constant 0 : index
    %296 = vector.load %arg21[%c0_334, %c0_335, %c0_336] : memref<6x6x20xf32, #tpu.memory_space<vmem>>, vector<2x6x20xf32>
    tpu.vector_store %arg21[%c0_334, %c0_335, %c0_336], %295 {strides = array<i32>} : memref<6x6x20xf32, #tpu.memory_space<vmem>>, vector<2x6x20xf32>,
    %c4_337 = arith.constant 4 : index
    %c0_338 = arith.constant 0 : index
    %c0_339 = arith.constant 0 : index
    %297 = vector.load %arg21[%c4_337, %c0_338, %c0_339] : memref<6x6x20xf32, #tpu.memory_space<vmem>>, vector<2x6x20xf32>
    tpu.vector_store %arg21[%c4_337, %c0_338, %c0_339], %295 {strides = array<i32>} : memref<6x6x20xf32, #tpu.memory_space<vmem>>, vector<2x6x20xf32>,
    %cst_340 = arith.constant 0.000000e+00 : f32
    %298 = vector.broadcast %cst_340 : f32 to vector<2x2x20xf32>
    %c2_341 = arith.constant 2 : index
    %c0_342 = arith.constant 0 : index
    %c0_343 = arith.constant 0 : index
    %299 = vector.load %arg21[%c2_341, %c0_342, %c0_343] : memref<6x6x20xf32, #tpu.memory_space<vmem>>, vector<2x2x20xf32>
    tpu.vector_store %arg21[%c2_341, %c0_342, %c0_343], %298 {strides = array<i32>} : memref<6x6x20xf32, #tpu.memory_space<vmem>>, vector<2x2x20xf32>,
    %c2_344 = arith.constant 2 : index
    %c4_345 = arith.constant 4 : index
    %c0_346 = arith.constant 0 : index
    %300 = vector.load %arg21[%c2_344, %c4_345, %c0_346] : memref<6x6x20xf32, #tpu.memory_space<vmem>>, vector<2x2x20xf32>
    tpu.vector_store %arg21[%c2_344, %c4_345, %c0_346], %298 {strides = array<i32>} : memref<6x6x20xf32, #tpu.memory_space<vmem>>, vector<2x2x20xf32>,
    %c2_347 = arith.constant 2 : index
    %c2_348 = arith.constant 2 : index
    %c0_349 = arith.constant 0 : index
    %301 = vector.load %arg21[%c2_347, %c2_348, %c0_349] : memref<6x6x20xf32, #tpu.memory_space<vmem>>, vector<2x2x20xf32>
    tpu.vector_store %arg21[%c2_347, %c2_348, %c0_349], %294 {strides = array<i32>} : memref<6x6x20xf32, #tpu.memory_space<vmem>>, vector<2x2x20xf32>,
    %c0_350 = arith.constant 0 : index
    %c0_351 = arith.constant 0 : index
    %c0_352 = arith.constant 0 : index
    %302 = vector.load %arg21[%c0_350, %c0_351, %c0_352] : memref<6x6x20xf32, #tpu.memory_space<vmem>>, vector<2x2x20xf32>
    %303 = vector.shape_cast %302 : vector<2x2x20xf32> to vector<4x20xf32>
    %c0_353 = arith.constant 0 : index
    %c0_354 = arith.constant 0 : index
    %c0_355 = arith.constant 0 : index
    %304 = vector.load %arg12[%c0_353, %c0_354, %c0_355] : memref<9x20x10xf32, #tpu.memory_space<vmem>>, vector<1x20x10xf32>
    %305 = vector.shape_cast %304 : vector<1x20x10xf32> to vector<20x10xf32>
    %cst_356 = arith.constant dense<0.000000e+00> : vector<4x10xf32>
    %306 = tpu.matmul %303, %305, %cst_356 {dimension_numbers = #tpu.dot_dimension_numbers<[1], [0], [0], [1], [0, 0, 1, 1], [], []>} : vector<4x20xf32>, vector<20x10xf32>, vector<4x10xf32> -> vector<4x10xf32>
    %c0_357 = arith.constant 0 : index
    %c2_358 = arith.constant 2 : index
    %c0_359 = arith.constant 0 : index
    %307 = vector.load %arg21[%c0_357, %c2_358, %c0_359] : memref<6x6x20xf32, #tpu.memory_space<vmem>>, vector<2x2x20xf32>
    %308 = vector.shape_cast %307 : vector<2x2x20xf32> to vector<4x20xf32>
    %c1_360 = arith.constant 1 : index
    %c0_361 = arith.constant 0 : index
    %c0_362 = arith.constant 0 : index
    %309 = vector.load %arg12[%c1_360, %c0_361, %c0_362] : memref<9x20x10xf32, #tpu.memory_space<vmem>>, vector<1x20x10xf32>
    %310 = vector.shape_cast %309 : vector<1x20x10xf32> to vector<20x10xf32>
    %cst_363 = arith.constant dense<0.000000e+00> : vector<4x10xf32>
    %311 = tpu.matmul %308, %310, %cst_363 {dimension_numbers = #tpu.dot_dimension_numbers<[1], [0], [0], [1], [0, 0, 1, 1], [], []>} : vector<4x20xf32>, vector<20x10xf32>, vector<4x10xf32> -> vector<4x10xf32>
    %312 = arith.addf %306, %311 : vector<4x10xf32>
    %c0_364 = arith.constant 0 : index
    %c4_365 = arith.constant 4 : index
    %c0_366 = arith.constant 0 : index
    %313 = vector.load %arg21[%c0_364, %c4_365, %c0_366] : memref<6x6x20xf32, #tpu.memory_space<vmem>>, vector<2x2x20xf32>
    %314 = vector.shape_cast %313 : vector<2x2x20xf32> to vector<4x20xf32>
    %c2_367 = arith.constant 2 : index
    %c0_368 = arith.constant 0 : index
    %c0_369 = arith.constant 0 : index
    %315 = vector.load %arg12[%c2_367, %c0_368, %c0_369] : memref<9x20x10xf32, #tpu.memory_space<vmem>>, vector<1x20x10xf32>
    %316 = vector.shape_cast %315 : vector<1x20x10xf32> to vector<20x10xf32>
    %cst_370 = arith.constant dense<0.000000e+00> : vector<4x10xf32>
    %317 = tpu.matmul %314, %316, %cst_370 {dimension_numbers = #tpu.dot_dimension_numbers<[1], [0], [0], [1], [0, 0, 1, 1], [], []>} : vector<4x20xf32>, vector<20x10xf32>, vector<4x10xf32> -> vector<4x10xf32>
    %318 = arith.addf %312, %317 : vector<4x10xf32>
    %c2_371 = arith.constant 2 : index
    %c0_372 = arith.constant 0 : index
    %c0_373 = arith.constant 0 : index
    %319 = vector.load %arg21[%c2_371, %c0_372, %c0_373] : memref<6x6x20xf32, #tpu.memory_space<vmem>>, vector<2x2x20xf32>
    %320 = vector.shape_cast %319 : vector<2x2x20xf32> to vector<4x20xf32>
    %c3_374 = arith.constant 3 : index
    %c0_375 = arith.constant 0 : index
    %c0_376 = arith.constant 0 : index
    %321 = vector.load %arg12[%c3_374, %c0_375, %c0_376] : memref<9x20x10xf32, #tpu.memory_space<vmem>>, vector<1x20x10xf32>
    %322 = vector.shape_cast %321 : vector<1x20x10xf32> to vector<20x10xf32>
    %cst_377 = arith.constant dense<0.000000e+00> : vector<4x10xf32>
    %323 = tpu.matmul %320, %322, %cst_377 {dimension_numbers = #tpu.dot_dimension_numbers<[1], [0], [0], [1], [0, 0, 1, 1], [], []>} : vector<4x20xf32>, vector<20x10xf32>, vector<4x10xf32> -> vector<4x10xf32>
    %324 = arith.addf %318, %323 : vector<4x10xf32>
    %c2_378 = arith.constant 2 : index
    %c2_379 = arith.constant 2 : index
    %c0_380 = arith.constant 0 : index
    %325 = vector.load %arg21[%c2_378, %c2_379, %c0_380] : memref<6x6x20xf32, #tpu.memory_space<vmem>>, vector<2x2x20xf32>
    %326 = vector.shape_cast %325 : vector<2x2x20xf32> to vector<4x20xf32>
    %c4_381 = arith.constant 4 : index
    %c0_382 = arith.constant 0 : index
    %c0_383 = arith.constant 0 : index
    %327 = vector.load %arg12[%c4_381, %c0_382, %c0_383] : memref<9x20x10xf32, #tpu.memory_space<vmem>>, vector<1x20x10xf32>
    %328 = vector.shape_cast %327 : vector<1x20x10xf32> to vector<20x10xf32>
    %cst_384 = arith.constant dense<0.000000e+00> : vector<4x10xf32>
    %329 = tpu.matmul %326, %328, %cst_384 {dimension_numbers = #tpu.dot_dimension_numbers<[1], [0], [0], [1], [0, 0, 1, 1], [], []>} : vector<4x20xf32>, vector<20x10xf32>, vector<4x10xf32> -> vector<4x10xf32>
    %330 = arith.addf %324, %329 : vector<4x10xf32>
    %c2_385 = arith.constant 2 : index
    %c4_386 = arith.constant 4 : index
    %c0_387 = arith.constant 0 : index
    %331 = vector.load %arg21[%c2_385, %c4_386, %c0_387] : memref<6x6x20xf32, #tpu.memory_space<vmem>>, vector<2x2x20xf32>
    %332 = vector.shape_cast %331 : vector<2x2x20xf32> to vector<4x20xf32>
    %c5_388 = arith.constant 5 : index
    %c0_389 = arith.constant 0 : index
    %c0_390 = arith.constant 0 : index
    %333 = vector.load %arg12[%c5_388, %c0_389, %c0_390] : memref<9x20x10xf32, #tpu.memory_space<vmem>>, vector<1x20x10xf32>
    %334 = vector.shape_cast %333 : vector<1x20x10xf32> to vector<20x10xf32>
    %cst_391 = arith.constant dense<0.000000e+00> : vector<4x10xf32>
    %335 = tpu.matmul %332, %334, %cst_391 {dimension_numbers = #tpu.dot_dimension_numbers<[1], [0], [0], [1], [0, 0, 1, 1], [], []>} : vector<4x20xf32>, vector<20x10xf32>, vector<4x10xf32> -> vector<4x10xf32>
    %336 = arith.addf %330, %335 : vector<4x10xf32>
    %c4_392 = arith.constant 4 : index
    %c0_393 = arith.constant 0 : index
    %c0_394 = arith.constant 0 : index
    %337 = vector.load %arg21[%c4_392, %c0_393, %c0_394] : memref<6x6x20xf32, #tpu.memory_space<vmem>>, vector<2x2x20xf32>
    %338 = vector.shape_cast %337 : vector<2x2x20xf32> to vector<4x20xf32>
    %c6_395 = arith.constant 6 : index
    %c0_396 = arith.constant 0 : index
    %c0_397 = arith.constant 0 : index
    %339 = vector.load %arg12[%c6_395, %c0_396, %c0_397] : memref<9x20x10xf32, #tpu.memory_space<vmem>>, vector<1x20x10xf32>
    %340 = vector.shape_cast %339 : vector<1x20x10xf32> to vector<20x10xf32>
    %cst_398 = arith.constant dense<0.000000e+00> : vector<4x10xf32>
    %341 = tpu.matmul %338, %340, %cst_398 {dimension_numbers = #tpu.dot_dimension_numbers<[1], [0], [0], [1], [0, 0, 1, 1], [], []>} : vector<4x20xf32>, vector<20x10xf32>, vector<4x10xf32> -> vector<4x10xf32>
    %342 = arith.addf %336, %341 : vector<4x10xf32>
    %c4_399 = arith.constant 4 : index
    %c2_400 = arith.constant 2 : index
    %c0_401 = arith.constant 0 : index
    %343 = vector.load %arg21[%c4_399, %c2_400, %c0_401] : memref<6x6x20xf32, #tpu.memory_space<vmem>>, vector<2x2x20xf32>
    %344 = vector.shape_cast %343 : vector<2x2x20xf32> to vector<4x20xf32>
    %c7_402 = arith.constant 7 : index
    %c0_403 = arith.constant 0 : index
    %c0_404 = arith.constant 0 : index
    %345 = vector.load %arg12[%c7_402, %c0_403, %c0_404] : memref<9x20x10xf32, #tpu.memory_space<vmem>>, vector<1x20x10xf32>
    %346 = vector.shape_cast %345 : vector<1x20x10xf32> to vector<20x10xf32>
    %cst_405 = arith.constant dense<0.000000e+00> : vector<4x10xf32>
    %347 = tpu.matmul %344, %346, %cst_405 {dimension_numbers = #tpu.dot_dimension_numbers<[1], [0], [0], [1], [0, 0, 1, 1], [], []>} : vector<4x20xf32>, vector<20x10xf32>, vector<4x10xf32> -> vector<4x10xf32>
    %348 = arith.addf %342, %347 : vector<4x10xf32>
    %c4_406 = arith.constant 4 : index
    %c4_407 = arith.constant 4 : index
    %c0_408 = arith.constant 0 : index
    %349 = vector.load %arg21[%c4_406, %c4_407, %c0_408] : memref<6x6x20xf32, #tpu.memory_space<vmem>>, vector<2x2x20xf32>
    %350 = vector.shape_cast %349 : vector<2x2x20xf32> to vector<4x20xf32>
    %c8_409 = arith.constant 8 : index
    %c0_410 = arith.constant 0 : index
    %c0_411 = arith.constant 0 : index
    %351 = vector.load %arg12[%c8_409, %c0_410, %c0_411] : memref<9x20x10xf32, #tpu.memory_space<vmem>>, vector<1x20x10xf32>
    %352 = vector.shape_cast %351 : vector<1x20x10xf32> to vector<20x10xf32>
    %cst_412 = arith.constant dense<0.000000e+00> : vector<4x10xf32>
    %353 = tpu.matmul %350, %352, %cst_412 {dimension_numbers = #tpu.dot_dimension_numbers<[1], [0], [0], [1], [0, 0, 1, 1], [], []>} : vector<4x20xf32>, vector<20x10xf32>, vector<4x10xf32> -> vector<4x10xf32>
    %354 = arith.addf %348, %353 : vector<4x10xf32>
    %c0_413 = arith.constant 0 : index
    %c0_414 = arith.constant 0 : index
    %355 = vector.load %arg13[%c0_413, %c0_414] : memref<1x10xf32, #tpu.memory_space<vmem>>, vector<1x10xf32>
    %356 = vector.broadcast %355 : vector<1x10xf32> to vector<4x10xf32>
    %357 = arith.addf %354, %356 : vector<4x10xf32>
    %cst_415 = arith.constant 0.000000e+00 : f32
    %358 = vector.broadcast %cst_415 : f32 to vector<4x10xf32>
    %359 = arith.maximumf %357, %358 : vector<4x10xf32>
    %c0_416 = arith.constant 0 : index
    %c0_417 = arith.constant 0 : index
    %360 = vector.load %arg14[%c0_416, %c0_417] : memref<1x10xf32, #tpu.memory_space<vmem>>, vector<1x10xf32>
    %361 = vector.broadcast %360 : vector<1x10xf32> to vector<4x10xf32>
    %362 = arith.mulf %359, %361 : vector<4x10xf32>
    %cst_418 = arith.constant dense<0.000000e+00> : vector<4xf32>
    %363 = vector.multi_reduction <add>, %362, %cst_418 [1] : vector<4x10xf32> to vector<4xf32>
    %364 = vector.shape_cast %363 : vector<4xf32> to vector<4x1xf32>
    %c0_419 = arith.constant 0 : index
    %c0_420 = arith.constant 0 : index
    %365 = vector.load %arg15[%c0_419, %c0_420] : memref<1x1xf32, #tpu.memory_space<vmem>>, vector<1x1xf32>
    %366 = vector.broadcast %365 : vector<1x1xf32> to vector<4x1xf32>
    %367 = arith.addf %364, %366 : vector<4x1xf32>
    %368 = vector.shape_cast %367 : vector<4x1xf32> to vector<1x2x2x1xf32>
    %c0_421 = arith.constant 0 : index
    %c0_422 = arith.constant 0 : index
    %c0_423 = arith.constant 0 : index
    %c0_424 = arith.constant 0 : index
    %369 = vector.load %arg16[%c0_421, %c0_422, %c0_423, %c0_424] : memref<1x2x2x1xf32, #tpu.memory_space<vmem>>, vector<1x2x2x1xf32>
    tpu.vector_store %arg16[%c0_421, %c0_422, %c0_423, %c0_424], %368 {strides = array<i32>} : memref<1x2x2x1xf32, #tpu.memory_space<vmem>>, vector<1x2x2x1xf32>,
    return
  }
  func.func @transform_0(%arg0: i32) -> (i32, i32, i32) {
    %c0_i32 = arith.constant 0 : i32
    %c0_i32_0 = arith.constant 0 : i32
    %c0_i32_1 = arith.constant 0 : i32
    return %arg0, %c0_i32, %c0_i32_0 : i32, i32, i32
  }
  func.func @transform_1(%arg0: i32) -> (i32, i32) {
    %c0_i32 = arith.constant 0 : i32
    %c0_i32_0 = arith.constant 0 : i32
    %c0_i32_1 = arith.constant 0 : i32
    return %c0_i32, %c0_i32_0 : i32, i32
  }
  func.func @transform_2(%arg0: i32) -> (i32, i32) {
    %c0_i32 = arith.constant 0 : i32
    %c0_i32_0 = arith.constant 0 : i32
    %c0_i32_1 = arith.constant 0 : i32
    return %c0_i32, %c0_i32_0 : i32, i32
  }
  func.func @transform_3(%arg0: i32) -> (i32, i32, i32) {
    %c0_i32 = arith.constant 0 : i32
    %c0_i32_0 = arith.constant 0 : i32
    %c0_i32_1 = arith.constant 0 : i32
    %c0_i32_2 = arith.constant 0 : i32
    return %c0_i32, %c0_i32_0, %c0_i32_1 : i32, i32, i32
  }
  func.func @transform_4(%arg0: i32) -> (i32, i32) {
    %c0_i32 = arith.constant 0 : i32
    %c0_i32_0 = arith.constant 0 : i32
    %c0_i32_1 = arith.constant 0 : i32
    return %c0_i32, %c0_i32_0 : i32, i32
  }
  func.func @transform_5(%arg0: i32) -> (i32, i32, i32) {
    %c0_i32 = arith.constant 0 : i32
    %c0_i32_0 = arith.constant 0 : i32
    %c0_i32_1 = arith.constant 0 : i32
    %c0_i32_2 = arith.constant 0 : i32
    return %c0_i32, %c0_i32_0, %c0_i32_1 : i32, i32, i32
  }
  func.func @transform_6(%arg0: i32) -> (i32, i32) {
    %c0_i32 = arith.constant 0 : i32
    %c0_i32_0 = arith.constant 0 : i32
    %c0_i32_1 = arith.constant 0 : i32
    return %c0_i32, %c0_i32_0 : i32, i32
  }
  func.func @transform_7(%arg0: i32) -> (i32, i32, i32) {
    %c0_i32 = arith.constant 0 : i32
    %c0_i32_0 = arith.constant 0 : i32
    %c0_i32_1 = arith.constant 0 : i32
    %c0_i32_2 = arith.constant 0 : i32
    return %c0_i32, %c0_i32_0, %c0_i32_1 : i32, i32, i32
  }
  func.func @transform_8(%arg0: i32) -> (i32, i32) {
    %c0_i32 = arith.constant 0 : i32
    %c0_i32_0 = arith.constant 0 : i32
    %c0_i32_1 = arith.constant 0 : i32
    return %c0_i32, %c0_i32_0 : i32, i32
  }
  func.func @transform_9(%arg0: i32) -> (i32, i32, i32) {
    %c0_i32 = arith.constant 0 : i32
    %c0_i32_0 = arith.constant 0 : i32
    %c0_i32_1 = arith.constant 0 : i32
    %c0_i32_2 = arith.constant 0 : i32
    return %c0_i32, %c0_i32_0, %c0_i32_1 : i32, i32, i32
  }
  func.func @transform_10(%arg0: i32) -> (i32, i32) {
    %c0_i32 = arith.constant 0 : i32
    %c0_i32_0 = arith.constant 0 : i32
    %c0_i32_1 = arith.constant 0 : i32
    return %c0_i32, %c0_i32_0 : i32, i32
  }
  func.func @transform_11(%arg0: i32) -> (i32, i32, i32) {
    %c0_i32 = arith.constant 0 : i32
    %c0_i32_0 = arith.constant 0 : i32
    %c0_i32_1 = arith.constant 0 : i32
    %c0_i32_2 = arith.constant 0 : i32
    return %c0_i32, %c0_i32_0, %c0_i32_1 : i32, i32, i32
  }
  func.func @transform_12(%arg0: i32) -> (i32, i32) {
    %c0_i32 = arith.constant 0 : i32
    %c0_i32_0 = arith.constant 0 : i32
    %c0_i32_1 = arith.constant 0 : i32
    return %c0_i32, %c0_i32_0 : i32, i32
  }
  func.func @transform_13(%arg0: i32) -> (i32, i32) {
    %c0_i32 = arith.constant 0 : i32
    %c0_i32_0 = arith.constant 0 : i32
    %c0_i32_1 = arith.constant 0 : i32
    return %c0_i32, %c0_i32_0 : i32, i32
  }
  func.func @transform_14(%arg0: i32) -> (i32, i32) {
    %c0_i32 = arith.constant 0 : i32
    %c0_i32_0 = arith.constant 0 : i32
    %c0_i32_1 = arith.constant 0 : i32
    return %c0_i32, %c0_i32_0 : i32, i32
  }
  func.func @transform_15(%arg0: i32) -> (i32, i32, i32, i32) {
    %c0_i32 = arith.constant 0 : i32
    %c0_i32_0 = arith.constant 0 : i32
    %c0_i32_1 = arith.constant 0 : i32
    %c0_i32_2 = arith.constant 0 : i32
    return %arg0, %c0_i32, %c0_i32_0, %c0_i32_1 : i32, i32, i32, i32
  }
}

</mosaic_0001>

<llo_original>
// kernel: big_tail7_forward.1
$region0: #{big_tail7_forward.1}
  #allocation0 [shape = 'u32[]', space=smem, size = 0x4, offset = 0x4, fixed_abs, tag = 'smem constant byte address 0x4 - core index']
  #allocation1 [shape = 'u32[144,128]{1,0:T(1,128)}', space=vmem, size = 0x12000, scoped, tag = 'internal scratch']
  #allocation2 [shape = 'f32[12,12,40]{2,1,0:T(8,128)}', space=vmem, size = 0x18000, scoped, tag = 'scratch operand']
  #allocation3 [shape = 'f32[12,12,60]{2,1,0:T(8,128)}', space=vmem, size = 0x18000, scoped, tag = 'scratch operand']
  #allocation4 [shape = 'f32[12,12,60]{2,1,0:T(8,128)}', space=vmem, size = 0x18000, scoped, tag = 'scratch operand']
  #allocation5 [shape = 'f32[8,8,40]{2,1,0:T(8,128)}', space=vmem, size = 0x8000, scoped, tag = 'scratch operand']
  #allocation6 [shape = 'f32[6,6,20]{2,1,0:T(8,128)}', space=vmem, size = 0x6000, scoped, tag = 'scratch operand']
  #allocation7 [shape = 'f32[1,1]{1,0:T(1,128)S(1)}', space=vmem, size = 0x200, scoped, tag = 'scoped memory for big_tail7_forward.1']
  %s0 = inlined_call_operand.vmem [shape: f32[2,256,256], index: 0, kind: input, shape index: {}]
  %s1 = inlined_call_operand.vmem [shape: f32[256,40], index: 1, kind: input, shape index: {}]
  %s2 = inlined_call_operand.vmem [shape: f32[1,40], index: 2, kind: input, shape index: {}]
  %s3 = inlined_call_operand.vmem [shape: f32[9,40,60], index: 3, kind: input, shape index: {}]
  %s4 = inlined_call_operand.vmem [shape: f32[1,60], index: 4, kind: input, shape index: {}]
  %s5 = inlined_call_operand.vmem [shape: f32[9,60,60], index: 5, kind: input, shape index: {}]
  %s6 = inlined_call_operand.vmem [shape: f32[1,60], index: 6, kind: input, shape index: {}]
  %s7 = inlined_call_operand.vmem [shape: f32[9,60,40], index: 7, kind: input, shape index: {}]
  %s8 = inlined_call_operand.vmem [shape: f32[1,40], index: 8, kind: input, shape index: {}]
  %s9 = inlined_call_operand.vmem [shape: f32[9,40,20], index: 9, kind: input, shape index: {}]
  %s10 = inlined_call_operand.vmem [shape: f32[1,20], index: 10, kind: input, shape index: {}]
  %s11 = inlined_call_operand.vmem [shape: f32[9,20,10], index: 11, kind: input, shape index: {}]
  %s12 = inlined_call_operand.vmem [shape: f32[1,10], index: 12, kind: input, shape index: {}]
  %s13 = inlined_call_operand.vmem [shape: f32[1,10], index: 13, kind: input, shape index: {}]
  %s14 = inlined_call_operand.<no memory space> [shape: f32[1,1], index: 14, kind: input, shape index: {}]
  %s15 = inlined_call_operand.vmem [shape: f32[2,2,2,1], index: 15, kind: output, shape index: {}]
  %s16 = sld [smem:[#allocation0]]
  $region93: #{big_tail7_forward.1} parent=0
    _
  %s18 = ssub.s32 1, %s16
  %s19 = scalar_select 0, %s18, %s16
  %v20 = vstv %s14
  %21 = vst [vmem:[#allocation7] sm:$0x1] %v20
  loop: start=0, step=1, limit=4
  $region2: #{big_tail7_forward.1} parent=0 // loop_pre_header
    _
  $region3: #{big_tail7_forward.1} parent=0 // loop_header
    %s23 = sphi 0, %s27
    %p24 = scmp.ge.s32.totalorder %s23, 4
    %s33 = sphi 0, %s35
    %s36 = sphi 0, %s33
    %s37 = sphi 0, %s36
    %s53 = sphi 0, %s37
    %s57 = sphi 0, %s57
    %s59 = sphi 0, %s57
    %s60 = sphi 0, %s59
    %s74 = sphi 0, %s60
    %s78 = sphi 0, %s78
    %s80 = sphi 0, %s78
    %s81 = sphi 0, %s80
    %s95 = sphi 0, %s81
    %s99 = sphi 0, %s99
    %s101 = sphi 0, %s99
    %s102 = sphi 0, %s101
    %s116 = sphi 0, %s102
    %s120 = sphi 0, %s120
    %s122 = sphi 0, %s120
    %s123 = sphi 0, %s122
    %s137 = sphi 0, %s123
    %s141 = sphi 0, %s141
    %s143 = sphi 0, %s141
    %s144 = sphi 0, %s143
    %s158 = sphi 0, %s144
    %s162 = sphi 0, %s162
    %s164 = sphi 0, %s162
    %s165 = sphi 0, %s164
    %s179 = sphi 0, %s165
    %s183 = sphi 0, %s183
    %s185 = sphi 0, %s183
    %s186 = sphi 0, %s185
    %s200 = sphi 0, %s186
    %s204 = sphi 0, %s204
    %s206 = sphi 0, %s204
    %s207 = sphi 0, %s206
    %s221 = sphi 0, %s207
    %s225 = sphi 0, %s225
    %s227 = sphi 0, %s225
    %s228 = sphi 0, %s227
    %s242 = sphi 0, %s228
    %s246 = sphi 0, %s246
    %s248 = sphi 0, %s246
    %s249 = sphi 0, %s248
    %s263 = sphi 0, %s249
    %s267 = sphi 0, %s267
    %s269 = sphi 0, %s267
    %s270 = sphi 0, %s269
    %s284 = sphi 0, %s270
    %s288 = sphi 0, %s288
    %s290 = sphi 0, %s288
    %s291 = sphi 0, %s290
    %s305 = sphi 0, %s291
    %s309 = sphi 0, %s309
    %s311 = sphi 0, %s309
    %s312 = sphi 0, %s311
    %s326 = sphi 0, %s312
    %s330 = sphi 0, %s330
    %s332 = sphi 0, %s330
    %s333 = sphi 0, %s332
    %s347 = sphi 0, %s333
    %s353 = sphi 0, %s355
    %s356 = sphi 0, %s353
    %s357 = sphi 0, %s356
    %s373 = sphi 0, %s357
  $region4: #{big_tail7_forward.1} parent=0 // loop_header_branch
    %26 = sbr.rel (%p24) target = $region8
  $region5: #{big_tail7_forward.1} parent=0 // loop_body
    %s28 = ssub.s32 %s23, 1
    %s29 = ssub.s32 %s23, 2
    %s30 = sadd.s32 %s23, 1
    %s31 = ssub.s32 %s23, %s30
    %p32 = scmp.eq.s32.totalorder %s31, 0
    %s34 = sadd.s32 %s33, 1
    %s35 = scalar_select %p32, %s33, %s34
    %p38 = pneg %p32
    %p39 = scmp.eq.s32.totalorder %s23, 1
    %p40 = por %p38, %p39
    %p41 = scmp.ne.s32.totalorder %s33, %s36
    %p42 = scmp.eq.s32.totalorder %s23, 0
    %p43 = por %p41, %p42
    %p44 = scmp.ne.s32.totalorder %s33, %s36
    %p45 = scmp.eq.s32.totalorder %s28, 1
    %p46 = por %p44, %p45
    %p47 = scmp.ne.s32.totalorder %s36, %s37
    %p48 = scmp.eq.s32.totalorder %s28, 0
    %p49 = por %p47, %p48
    %p50 = scmp.ne.s32.totalorder %s36, %s37
    %p51 = scmp.eq.s32.totalorder %s29, 1
    %p52 = por %p50, %p51
    %p54 = scmp.ne.s32.totalorder %s37, %s53
    %p55 = scmp.eq.s32.totalorder %s29, 0
    %p56 = por %p54, %p55
    %s58 = sadd.s32 %s57, 1
    %p61 = scmp.eq.s32.totalorder %s23, 1
    %p62 = scmp.ne.s32.totalorder %s57, %s59
    %p63 = scmp.eq.s32.totalorder %s23, 0
    %p64 = por %p62, %p63
    %p65 = scmp.ne.s32.totalorder %s57, %s59
    %p66 = scmp.eq.s32.totalorder %s28, 1
    %p67 = por %p65, %p66
    %p68 = scmp.ne.s32.totalorder %s59, %s60
    %p69 = scmp.eq.s32.totalorder %s28, 0
    %p70 = por %p68, %p69
    %p71 = scmp.ne.s32.totalorder %s59, %s60
    %p72 = scmp.eq.s32.totalorder %s29, 1
    %p73 = por %p71, %p72
    %p75 = scmp.ne.s32.totalorder %s60, %s74
    %p76 = scmp.eq.s32.totalorder %s29, 0
    %p77 = por %p75, %p76
    %s79 = sadd.s32 %s78, 1
    %p82 = scmp.eq.s32.totalorder %s23, 1
    %p83 = scmp.ne.s32.totalorder %s78, %s80
    %p84 = scmp.eq.s32.totalorder %s23, 0
    %p85 = por %p83, %p84
    %p86 = scmp.ne.s32.totalorder %s78, %s80
    %p87 = scmp.eq.s32.totalorder %s28, 1
    %p88 = por %p86, %p87
    %p89 = scmp.ne.s32.totalorder %s80, %s81
    %p90 = scmp.eq.s32.totalorder %s28, 0
    %p91 = por %p89, %p90
    %p92 = scmp.ne.s32.totalorder %s80, %s81
    %p93 = scmp.eq.s32.totalorder %s29, 1
    %p94 = por %p92, %p93
    %p96 = scmp.ne.s32.totalorder %s81, %s95
    %p97 = scmp.eq.s32.totalorder %s29, 0
    %p98 = por %p96, %p97
    %s100 = sadd.s32 %s99, 1
    %p103 = scmp.eq.s32.totalorder %s23, 1
    %p104 = scmp.ne.s32.totalorder %s99, %s101
    %p105 = scmp.eq.s32.totalorder %s23, 0
    %p106 = por %p104, %p105
    %p107 = scmp.ne.s32.totalorder %s99, %s101
    %p108 = scmp.eq.s32.totalorder %s28, 1
    %p109 = por %p107, %p108
    %p110 = scmp.ne.s32.totalorder %s101, %s102
    %p111 = scmp.eq.s32.totalorder %s28, 0
    %p112 = por %p110, %p111
    %p113 = scmp.ne.s32.totalorder %s101, %s102
    %p114 = scmp.eq.s32.totalorder %s29, 1
    %p115 = por %p113, %p114
    %p117 = scmp.ne.s32.totalorder %s102, %s116
    %p118 = scmp.eq.s32.totalorder %s29, 0
    %p119 = por %p117, %p118
    %s121 = sadd.s32 %s120, 1
    %p124 = scmp.eq.s32.totalorder %s23, 1
    %p125 = scmp.ne.s32.totalorder %s120, %s122
    %p126 = scmp.eq.s32.totalorder %s23, 0
    %p127 = por %p125, %p126
    %p128 = scmp.ne.s32.totalorder %s120, %s122
    %p129 = scmp.eq.s32.totalorder %s28, 1
    %p130 = por %p128, %p129
    %p131 = scmp.ne.s32.totalorder %s122, %s123
    %p132 = scmp.eq.s32.totalorder %s28, 0
    %p133 = por %p131, %p132
    %p134 = scmp.ne.s32.totalorder %s122, %s123
    %p135 = scmp.eq.s32.totalorder %s29, 1
    %p136 = por %p134, %p135
    %p138 = scmp.ne.s32.totalorder %s123, %s137
    %p139 = scmp.eq.s32.totalorder %s29, 0
    %p140 = por %p138, %p139
    %s142 = sadd.s32 %s141, 1
    %p145 = scmp.eq.s32.totalorder %s23, 1
    %p146 = scmp.ne.s32.totalorder %s141, %s143
    %p147 = scmp.eq.s32.totalorder %s23, 0
    %p148 = por %p146, %p147
    %p149 = scmp.ne.s32.totalorder %s141, %s143
    %p150 = scmp.eq.s32.totalorder %s28, 1
    %p151 = por %p149, %p150
    %p152 = scmp.ne.s32.totalorder %s143, %s144
    %p153 = scmp.eq.s32.totalorder %s28, 0
    %p154 = por %p152, %p153
    %p155 = scmp.ne.s32.totalorder %s143, %s144
    %p156 = scmp.eq.s32.totalorder %s29, 1
    %p157 = por %p155, %p156
    %p159 = scmp.ne.s32.totalorder %s144, %s158
    %p160 = scmp.eq.s32.totalorder %s29, 0
    %p161 = por %p159, %p160
    %s163 = sadd.s32 %s162, 1
    %p166 = scmp.eq.s32.totalorder %s23, 1
    %p167 = scmp.ne.s32.totalorder %s162, %s164
    %p168 = scmp.eq.s32.totalorder %s23, 0
    %p169 = por %p167, %p168
    %p170 = scmp.ne.s32.totalorder %s162, %s164
    %p171 = scmp.eq.s32.totalorder %s28, 1
    %p172 = por %p170, %p171
    %p173 = scmp.ne.s32.totalorder %s164, %s165
    %p174 = scmp.eq.s32.totalorder %s28, 0
    %p175 = por %p173, %p174
    %p176 = scmp.ne.s32.totalorder %s164, %s165
    %p177 = scmp.eq.s32.totalorder %s29, 1
    %p178 = por %p176, %p177
    %p180 = scmp.ne.s32.totalorder %s165, %s179
    %p181 = scmp.eq.s32.totalorder %s29, 0
    %p182 = por %p180, %p181
    %s184 = sadd.s32 %s183, 1
    %p187 = scmp.eq.s32.totalorder %s23, 1
    %p188 = scmp.ne.s32.totalorder %s183, %s185
    %p189 = scmp.eq.s32.totalorder %s23, 0
    %p190 = por %p188, %p189
    %p191 = scmp.ne.s32.totalorder %s183, %s185
    %p192 = scmp.eq.s32.totalorder %s28, 1
    %p193 = por %p191, %p192
    %p194 = scmp.ne.s32.totalorder %s185, %s186
    %p195 = scmp.eq.s32.totalorder %s28, 0
    %p196 = por %p194, %p195
    %p197 = scmp.ne.s32.totalorder %s185, %s186
    %p198 = scmp.eq.s32.totalorder %s29, 1
    %p199 = por %p197, %p198
    %p201 = scmp.ne.s32.totalorder %s186, %s200
    %p202 = scmp.eq.s32.totalorder %s29, 0
    %p203 = por %p201, %p202
    %s205 = sadd.s32 %s204, 1
    %p208 = scmp.eq.s32.totalorder %s23, 1
    %p209 = scmp.ne.s32.totalorder %s204, %s206
    %p210 = scmp.eq.s32.totalorder %s23, 0
    %p211 = por %p209, %p210
    %p212 = scmp.ne.s32.totalorder %s204, %s206
    %p213 = scmp.eq.s32.totalorder %s28, 1
    %p214 = por %p212, %p213
    %p215 = scmp.ne.s32.totalorder %s206, %s207
    %p216 = scmp.eq.s32.totalorder %s28, 0
    %p217 = por %p215, %p216
    %p218 = scmp.ne.s32.totalorder %s206, %s207
    %p219 = scmp.eq.s32.totalorder %s29, 1
    %p220 = por %p218, %p219
    %p222 = scmp.ne.s32.totalorder %s207, %s221
    %p223 = scmp.eq.s32.totalorder %s29, 0
    %p224 = por %p222, %p223
    %s226 = sadd.s32 %s225, 1
    %p229 = scmp.eq.s32.totalorder %s23, 1
    %p230 = scmp.ne.s32.totalorder %s225, %s227
    %p231 = scmp.eq.s32.totalorder %s23, 0
    %p232 = por %p230, %p231
    %p233 = scmp.ne.s32.totalorder %s225, %s227
    %p234 = scmp.eq.s32.totalorder %s28, 1
    %p235 = por %p233, %p234
    %p236 = scmp.ne.s32.totalorder %s227, %s228
    %p237 = scmp.eq.s32.totalorder %s28, 0
    %p238 = por %p236, %p237
    %p239 = scmp.ne.s32.totalorder %s227, %s228
    %p240 = scmp.eq.s32.totalorder %s29, 1
    %p241 = por %p239, %p240
    %p243 = scmp.ne.s32.totalorder %s228, %s242
    %p244 = scmp.eq.s32.totalorder %s29, 0
    %p245 = por %p243, %p244
    %s247 = sadd.s32 %s246, 1
    %p250 = scmp.eq.s32.totalorder %s23, 1
    %p251 = scmp.ne.s32.totalorder %s246, %s248
    %p252 = scmp.eq.s32.totalorder %s23, 0
    %p253 = por %p251, %p252
    %p254 = scmp.ne.s32.totalorder %s246, %s248
    %p255 = scmp.eq.s32.totalorder %s28, 1
    %p256 = por %p254, %p255
    %p257 = scmp.ne.s32.totalorder %s248, %s249
    %p258 = scmp.eq.s32.totalorder %s28, 0
    %p259 = por %p257, %p258
    %p260 = scmp.ne.s32.totalorder %s248, %s249
    %p261 = scmp.eq.s32.totalorder %s29, 1
    %p262 = por %p260, %p261
    %p264 = scmp.ne.s32.totalorder %s249, %s263
    %p265 = scmp.eq.s32.totalorder %s29, 0
    %p266 = por %p264, %p265
    %s268 = sadd.s32 %s267, 1
    %p271 = scmp.eq.s32.totalorder %s23, 1
    %p272 = scmp.ne.s32.totalorder %s267, %s269
    %p273 = scmp.eq.s32.totalorder %s23, 0
    %p274 = por %p272, %p273
    %p275 = scmp.ne.s32.totalorder %s267, %s269
    %p276 = scmp.eq.s32.totalorder %s28, 1
    %p277 = por %p275, %p276
    %p278 = scmp.ne.s32.totalorder %s269, %s270
    %p279 = scmp.eq.s32.totalorder %s28, 0
    %p280 = por %p278, %p279
    %p281 = scmp.ne.s32.totalorder %s269, %s270
    %p282 = scmp.eq.s32.totalorder %s29, 1
    %p283 = por %p281, %p282
    %p285 = scmp.ne.s32.totalorder %s270, %s284
    %p286 = scmp.eq.s32.totalorder %s29, 0
    %p287 = por %p285, %p286
    %s289 = sadd.s32 %s288, 1
    %p292 = scmp.eq.s32.totalorder %s23, 1
    %p293 = scmp.ne.s32.totalorder %s288, %s290
    %p294 = scmp.eq.s32.totalorder %s23, 0
    %p295 = por %p293, %p294
    %p296 = scmp.ne.s32.totalorder %s288, %s290
    %p297 = scmp.eq.s32.totalorder %s28, 1
    %p298 = por %p296, %p297
    %p299 = scmp.ne.s32.totalorder %s290, %s291
    %p300 = scmp.eq.s32.totalorder %s28, 0
    %p301 = por %p299, %p300
    %p302 = scmp.ne.s32.totalorder %s290, %s291
    %p303 = scmp.eq.s32.totalorder %s29, 1
    %p304 = por %p302, %p303
    %p306 = scmp.ne.s32.totalorder %s291, %s305
    %p307 = scmp.eq.s32.totalorder %s29, 0
    %p308 = por %p306, %p307
    %s310 = sadd.s32 %s309, 1
    %p313 = scmp.eq.s32.totalorder %s23, 1
    %p314 = scmp.ne.s32.totalorder %s309, %s311
    %p315 = scmp.eq.s32.totalorder %s23, 0
    %p316 = por %p314, %p315
    %p317 = scmp.ne.s32.totalorder %s309, %s311
    %p318 = scmp.eq.s32.totalorder %s28, 1
    %p319 = por %p317, %p318
    %p320 = scmp.ne.s32.totalorder %s311, %s312
    %p321 = scmp.eq.s32.totalorder %s28, 0
    %p322 = por %p320, %p321
    %p323 = scmp.ne.s32.totalorder %s311, %s312
    %p324 = scmp.eq.s32.totalorder %s29, 1
    %p325 = por %p323, %p324
    %p327 = scmp.ne.s32.totalorder %s312, %s326
    %p328 = scmp.eq.s32.totalorder %s29, 0
    %p329 = por %p327, %p328
    %s331 = sadd.s32 %s330, 1
    %p334 = scmp.eq.s32.totalorder %s23, 1
    %p335 = scmp.ne.s32.totalorder %s330, %s332
    %p336 = scmp.eq.s32.totalorder %s23, 0
    %p337 = por %p335, %p336
    %p338 = scmp.ne.s32.totalorder %s330, %s332
    %p339 = scmp.eq.s32.totalorder %s28, 1
    %p340 = por %p338, %p339
    %p341 = scmp.ne.s32.totalorder %s332, %s333
    %p342 = scmp.eq.s32.totalorder %s28, 0
    %p343 = por %p341, %p342
    %p344 = scmp.ne.s32.totalorder %s332, %s333
    %p345 = scmp.eq.s32.totalorder %s29, 1
    %p346 = por %p344, %p345
    %p348 = scmp.ne.s32.totalorder %s333, %s347
    %p349 = scmp.eq.s32.totalorder %s29, 0
    %p350 = por %p348, %p349
    %s351 = ssub.s32 %s23, %s30
    %p352 = scmp.eq.s32.totalorder %s351, 0
    %s354 = sadd.s32 %s353, 1
    %s355 = scalar_select %p352, %s353, %s354
    %p358 = pneg %p352
    %p359 = scmp.eq.s32.totalorder %s23, 1
    %p360 = por %p358, %p359
    %p361 = scmp.ne.s32.totalorder %s353, %s356
    %p362 = scmp.eq.s32.totalorder %s23, 0
    %p363 = por %p361, %p362
    %p364 = scmp.ne.s32.totalorder %s353, %s356
    %p365 = scmp.eq.s32.totalorder %s28, 1
    %p366 = por %p364, %p365
    %p367 = scmp.ne.s32.totalorder %s356, %s357
    %p368 = scmp.eq.s32.totalorder %s28, 0
    %p369 = por %p367, %p368
    %p370 = scmp.ne.s32.totalorder %s356, %s357
    %p371 = scmp.eq.s32.totalorder %s29, 1
    %p372 = por %p370, %p371
    %p374 = scmp.ne.s32.totalorder %s357, %s373
    %p375 = scmp.eq.s32.totalorder %s29, 0
    %p376 = por %p374, %p375
    %p377 = scmp.le.s32.totalorder 1, %s23
    %p378 = scmp.lt.s32.totalorder %s23, 3
    %p379 = pnand %p377, %p378
    %p380 = pneg %p379
    // Predicated region
    $region9: #{big_tail7_forward.1} parent=5 // pred_check
      _
    $region10: #{big_tail7_forward.1} parent=5 // pred_check_branch
      %382 = sbr.rel (%p379) target = $region12
    $region11: #{big_tail7_forward.1} parent=5 // pred_region
      %s383 = ssub.s32 %s23, 1
      // Predicated region
      $region13: #{big_tail7_forward.1} parent=11 // pred_check
        %p384 = pneg %p70
      $region14: #{big_tail7_forward.1} parent=11 // pred_check_branch
        %386 = sbr.rel (%p384) target = $region16
      $region15: #{big_tail7_forward.1} parent=11 // pred_region
        _
      $region16: #{big_tail7_forward.1} parent=11 // pred_fallthru
        _
      // Predicated region
      $region17: #{big_tail7_forward.1} parent=11 // pred_check
        %p387 = pneg %p91
      $region18: #{big_tail7_forward.1} parent=11 // pred_check_branch
        %389 = sbr.rel (%p387) target = $region20
      $region19: #{big_tail7_forward.1} parent=11 // pred_region
        _
      $region20: #{big_tail7_forward.1} parent=11 // pred_fallthru
        _
      // Predicated region
      $region21: #{big_tail7_forward.1} parent=11 // pred_check
        %p390 = pneg %p112
      $region22: #{big_tail7_forward.1} parent=11 // pred_check_branch
        %392 = sbr.rel (%p390) target = $region24
      $region23: #{big_tail7_forward.1} parent=11 // pred_region
        _
      $region24: #{big_tail7_forward.1} parent=11 // pred_fallthru
        _
      // Predicated region
      $region25: #{big_tail7_forward.1} parent=11 // pred_check
        %p393 = pneg %p133
      $region26: #{big_tail7_forward.1} parent=11 // pred_check_branch
        %395 = sbr.rel (%p393) target = $region28
      $region27: #{big_tail7_forward.1} parent=11 // pred_region
        _
      $region28: #{big_tail7_forward.1} parent=11 // pred_fallthru
        _
      // Predicated region
      $region29: #{big_tail7_forward.1} parent=11 // pred_check
        %p396 = pneg %p154
      $region30: #{big_tail7_forward.1} parent=11 // pred_check_branch
        %398 = sbr.rel (%p396) target = $region32
      $region31: #{big_tail7_forward.1} parent=11 // pred_region
        _
      $region32: #{big_tail7_forward.1} parent=11 // pred_fallthru
        _
      // Predicated region
      $region33: #{big_tail7_forward.1} parent=11 // pred_check
        %p399 = pneg %p175
      $region34: #{big_tail7_forward.1} parent=11 // pred_check_branch
        %401 = sbr.rel (%p399) target = $region36
      $region35: #{big_tail7_forward.1} parent=11 // pred_region
        _
      $region36: #{big_tail7_forward.1} parent=11 // pred_fallthru
        _
      // Predicated region
      $region37: #{big_tail7_forward.1} parent=11 // pred_check
        %p402 = pneg %p196
      $region38: #{big_tail7_forward.1} parent=11 // pred_check_branch
        %404 = sbr.rel (%p402) target = $region40
      $region39: #{big_tail7_forward.1} parent=11 // pred_region
        _
      $region40: #{big_tail7_forward.1} parent=11 // pred_fallthru
        _
      // Predicated region
      $region41: #{big_tail7_forward.1} parent=11 // pred_check
        %p405 = pneg %p217
      $region42: #{big_tail7_forward.1} parent=11 // pred_check_branch
        %407 = sbr.rel (%p405) target = $region44
      $region43: #{big_tail7_forward.1} parent=11 // pred_region
        _
      $region44: #{big_tail7_forward.1} parent=11 // pred_fallthru
        _
      // Predicated region
      $region45: #{big_tail7_forward.1} parent=11 // pred_check
        %p408 = pneg %p238
      $region46: #{big_tail7_forward.1} parent=11 // pred_check_branch
        %410 = sbr.rel (%p408) target = $region48
      $region47: #{big_tail7_forward.1} parent=11 // pred_region
        _
      $region48: #{big_tail7_forward.1} parent=11 // pred_fallthru
        _
      // Predicated region
      $region49: #{big_tail7_forward.1} parent=11 // pred_check
        %p411 = pneg %p259
      $region50: #{big_tail7_forward.1} parent=11 // pred_check_branch
        %413 = sbr.rel (%p411) target = $region52
      $region51: #{big_tail7_forward.1} parent=11 // pred_region
        _
      $region52: #{big_tail7_forward.1} parent=11 // pred_fallthru
        _
      // Predicated region
      $region53: #{big_tail7_forward.1} parent=11 // pred_check
        %p414 = pneg %p280
      $region54: #{big_tail7_forward.1} parent=11 // pred_check_branch
        %416 = sbr.rel (%p414) target = $region56
      $region55: #{big_tail7_forward.1} parent=11 // pred_region
        _
      $region56: #{big_tail7_forward.1} parent=11 // pred_fallthru
        _
      // Predicated region
      $region57: #{big_tail7_forward.1} parent=11 // pred_check
        %p417 = pneg %p301
      $region58: #{big_tail7_forward.1} parent=11 // pred_check_branch
        %419 = sbr.rel (%p417) target = $region60
      $region59: #{big_tail7_forward.1} parent=11 // pred_region
        _
      $region60: #{big_tail7_forward.1} parent=11 // pred_fallthru
        _
      // Predicated region
      $region61: #{big_tail7_forward.1} parent=11 // pred_check
        %p420 = pneg %p322
      $region62: #{big_tail7_forward.1} parent=11 // pred_check_branch
        %422 = sbr.rel (%p420) target = $region64
      $region63: #{big_tail7_forward.1} parent=11 // pred_region
        _
      $region64: #{big_tail7_forward.1} parent=11 // pred_fallthru
        _
      // Predicated region
      $region65: #{big_tail7_forward.1} parent=11 // pred_check
        %p423 = pneg %p343
      $region66: #{big_tail7_forward.1} parent=11 // pred_check_branch
        %425 = sbr.rel (%p423) target = $region68
      $region67: #{big_tail7_forward.1} parent=11 // pred_region
        _
      $region68: #{big_tail7_forward.1} parent=11 // pred_fallthru
        _
    $region12: #{big_tail7_forward.1} parent=5 // pred_fallthru
      _
    %p426 = scmp.lt.s32.totalorder %s23, 2
    // Predicated region
    $region69: #{big_tail7_forward.1} parent=5 // pred_check
      %p427 = pneg %p426
    $region70: #{big_tail7_forward.1} parent=5 // pred_check_branch
      %429 = sbr.rel (%p427) target = $region72
    $region71: #{big_tail7_forward.1} parent=5 // pred_region
      // Predicated region
      $region73: #{big_tail7_forward.1} parent=71 // pred_check
        %p430 = pneg %p43
      $region74: #{big_tail7_forward.1} parent=71 // pred_check_branch
        %432 = sbr.rel (%p430) target = $region76
      $region75: #{big_tail7_forward.1} parent=71 // pred_region
        %p433 = scmp.lt.s32.totalorder %s23, 1
        %s434 = scalar_select %p433, %s23, 1
        %s435 = smul.addr %s434, 64
        %s436 = smul.addr %s435, 8
        %s437 = scalar_lea.vmem %s0, %s436
      $region76: #{big_tail7_forward.1} parent=71 // pred_fallthru
        _
    $region72: #{big_tail7_forward.1} parent=5 // pred_fallthru
      _
    %p438 = scmp.le.s32.totalorder 1, %s23
    %p439 = scmp.lt.s32.totalorder %s23, 3
    %p440 = pnand %p438, %p439
    %p441 = pneg %p440
    // Predicated region
    $region77: #{big_tail7_forward.1} parent=5 // pred_check
      _
    $region78: #{big_tail7_forward.1} parent=5 // pred_check_branch
      %443 = sbr.rel (%p440) target = $region80
    $region79: #{big_tail7_forward.1} parent=5 // pred_region
      %s444 = ssub.s32 %s23, 1
      %p445 = scmp.lt.s32.totalorder %s28, 1
      %s446 = scalar_select %p445, %s28, 1
      %s447 = smul.addr %s446, 64
      %s448 = smul.addr %s447, 8
      %s449 = scalar_lea.vmem %s0, %s448
      %p450 = pneg %p49
      %p451 = pneg %p46
      %p452 = pneg %p70
      %p453 = pneg %p67
      %p454 = pneg %p91
      %p455 = pneg %p88
      %p456 = pneg %p112
      %p457 = pneg %p109
      %p458 = pneg %p133
      %p459 = pneg %p130
      %p460 = pneg %p154
      %p461 = pneg %p151
      %p462 = pneg %p175
      %p463 = pneg %p172
      %p464 = pneg %p196
      %p465 = pneg %p193
      %p466 = pneg %p217
      %p467 = pneg %p214
      %p468 = pneg %p238
      %p469 = pneg %p235
      %p470 = pneg %p259
      %p471 = pneg %p256
      %p472 = pneg %p280
      %p473 = pneg %p277
      %p474 = pneg %p301
      %p475 = pneg %p298
      %p476 = pneg %p322
      %p477 = pneg %p319
      %p478 = pneg %p343
      %p479 = pneg %p340
      %p480 = pneg %p369
      %p481 = pneg %p366
      %p482 = scmp.lt.s32.totalorder %s28, 1
      %s483 = scalar_select %p482, %s28, 1
      %s484 = smul.addr %s483, 2
      %s485 = smul.addr %s484, 2
      %s486 = scalar_lea.vmem %s15, %s485
      %p487 = scmp.lt.s32.totalorder %s28, 1
      %s488 = scalar_select %p487, %s28, 1
      %s489 = smul.addr %s488, 64
      %s490 = smul.addr %s489, 8
      %s491 = scalar_lea.vmem %s0, %s490
      %p492 = scmp.lt.s32.totalorder %s28, 1
      %s493 = scalar_select %p492, %s28, 1
      %s494 = smul.addr %s493, 2
      %s495 = smul.addr %s494, 2
      %s496 = scalar_lea.vmem %s15, %s495
      %v497 = vld [vmem:[%s491] sm:$0xff]
      %v498 = vld [vmem:[%s491 + $0x8] sm:$0xff]
      %v499 = vld [vmem:[%s491 + $0x10] sm:$0xff]
      %v500 = vld [vmem:[%s491 + $0x18] sm:$0xff]
      %v501 = vld [vmem:[%s491 + $0x20] sm:$0xff]
      %v502 = vld [vmem:[%s491 + $0x28] sm:$0xff]
      %v503 = vld [vmem:[%s491 + $0x30] sm:$0xff]
      %v504 = vld [vmem:[%s491 + $0x38] sm:$0xff]
      %v505 = vld [vmem:[%s491 + $0x40] sm:$0xff]
      %v506 = vld [vmem:[%s491 + $0x48] sm:$0xff]
      %v507 = vld [vmem:[%s491 + $0x50] sm:$0xff]
      %v508 = vld [vmem:[%s491 + $0x58] sm:$0xff]
      %v509 = vld [vmem:[%s491 + $0x60] sm:$0xff]
      %v510 = vld [vmem:[%s491 + $0x68] sm:$0xff]
      %v511 = vld [vmem:[%s491 + $0x70] sm:$0xff]
      %v512 = vld [vmem:[%s491 + $0x78] sm:$0xff]
      %v513 = vld [vmem:[%s491 + $0x80] sm:$0xff]
      %v514 = vld [vmem:[%s491 + $0x88] sm:$0xff]
      %v515 = vld [vmem:[%s491 + $0x90] sm:$0xff]
      %v516 = vld [vmem:[%s491 + $0x98] sm:$0xff]
      %v517 = vld [vmem:[%s491 + $0xa0] sm:$0xff]
      %v518 = vld [vmem:[%s491 + $0xa8] sm:$0xff]
      %v519 = vld [vmem:[%s491 + $0xb0] sm:$0xff]
      %v520 = vld [vmem:[%s491 + $0xb8] sm:$0xff]
      %v521 = vld [vmem:[%s491 + $0xc0] sm:$0xff]
      %v522 = vld [vmem:[%s491 + $0xc8] sm:$0xff]
      %v523 = vld [vmem:[%s491 + $0xd0] sm:$0xff]
      %v524 = vld [vmem:[%s491 + $0xd8] sm:$0xff]
      %v525 = vld [vmem:[%s491 + $0xe0] sm:$0xff]
      %v526 = vld [vmem:[%s491 + $0xe8] sm:$0xff]
      %v527 = vld [vmem:[%s491 + $0xf0] sm:$0xff]
      %v528 = vld [vmem:[%s491 + $0xf8] sm:$0xff]
      %v529 = vld [vmem:[%s491 + $0x100] sm:$0xff]
      %v530 = vld [vmem:[%s491 + $0x108] sm:$0xff]
      %v531 = vld [vmem:[%s491 + $0x110] sm:$0xff]
      %v532 = vld [vmem:[%s491 + $0x118] sm:$0xff]
      %v533 = vld [vmem:[%s491 + $0x120] sm:$0xff]
      %v534 = vld [vmem:[%s491 + $0x128] sm:$0xff]
      %v535 = vld [vmem:[%s491 + $0x130] sm:$0xff]
      %v536 = vld [vmem:[%s491 + $0x138] sm:$0xff]
      %v537 = vld [vmem:[%s491 + $0x140] sm:$0xff]
      %v538 = vld [vmem:[%s491 + $0x148] sm:$0xff]
      %v539 = vld [vmem:[%s491 + $0x150] sm:$0xff]
      %v540 = vld [vmem:[%s491 + $0x158] sm:$0xff]
      %v541 = vld [vmem:[%s491 + $0x160] sm:$0xff]
      %v542 = vld [vmem:[%s491 + $0x168] sm:$0xff]
      %v543 = vld [vmem:[%s491 + $0x170] sm:$0xff]
      %v544 = vld [vmem:[%s491 + $0x178] sm:$0xff]
      %v545 = vld [vmem:[%s491 + $0x180] sm:$0xff]
      %v546 = vld [vmem:[%s491 + $0x188] sm:$0xff]
      %v547 = vld [vmem:[%s491 + $0x190] sm:$0xff]
      %v548 = vld [vmem:[%s491 + $0x198] sm:$0xff]
      %v549 = vld [vmem:[%s491 + $0x1a0] sm:$0xff]
      %v550 = vld [vmem:[%s491 + $0x1a8] sm:$0xff]
      %v551 = vld [vmem:[%s491 + $0x1b0] sm:$0xff]
      %v552 = vld [vmem:[%s491 + $0x1b8] sm:$0xff]
      %v553 = vld [vmem:[%s491 + $0x1c0] sm:$0xff]
      %v554 = vld [vmem:[%s491 + $0x1c8] sm:$0xff]
      %v555 = vld [vmem:[%s491 + $0x1d0] sm:$0xff]
      %v556 = vld [vmem:[%s491 + $0x1d8] sm:$0xff]
      %v557 = vld [vmem:[%s491 + $0x1e0] sm:$0xff]
      %v558 = vld [vmem:[%s491 + $0x1e8] sm:$0xff]
      %v559 = vld [vmem:[%s491 + $0x1f0] sm:$0xff]
      %v560 = vld [vmem:[%s491 + $0x1f8] sm:$0xff]
      %v561 = vld [vmem:[%s1] sm:$0xff]
      %v562 = vld [vmem:[%s1 + $0x8] sm:$0xff]
      %v563 = vld [vmem:[%s1 + $0x10] sm:$0xff]
      %v564 = vld [vmem:[%s1 + $0x18] sm:$0xff]
      %v565 = vld [vmem:[%s1 + $0x20] sm:$0xff]
      %v566 = vld [vmem:[%s1 + $0x28] sm:$0xff]
      %v567 = vld [vmem:[%s1 + $0x30] sm:$0xff]
      %v568 = vld [vmem:[%s1 + $0x38] sm:$0xff]
      %v569 = vld [vmem:[%s1 + $0x40] sm:$0xff]
      %v570 = vld [vmem:[%s1 + $0x48] sm:$0xff]
      %v571 = vld [vmem:[%s1 + $0x50] sm:$0xff]
      %v572 = vld [vmem:[%s1 + $0x58] sm:$0xff]
      %v573 = vld [vmem:[%s1 + $0x60] sm:$0xff]
      %v574 = vld [vmem:[%s1 + $0x68] sm:$0xff]
      %v575 = vld [vmem:[%s1 + $0x70] sm:$0xff]
      %v576 = vld [vmem:[%s1 + $0x78] sm:$0xff]
      %v577 = vld [vmem:[%s1 + $0x80] sm:$0xff]
      %v578 = vld [vmem:[%s1 + $0x88] sm:$0xff]
      %v579 = vld [vmem:[%s1 + $0x90] sm:$0xff]
      %v580 = vld [vmem:[%s1 + $0x98] sm:$0xff]
      %v581 = vld [vmem:[%s1 + $0xa0] sm:$0xff]
      %v582 = vld [vmem:[%s1 + $0xa8] sm:$0xff]
      %v583 = vld [vmem:[%s1 + $0xb0] sm:$0xff]
      %v584 = vld [vmem:[%s1 + $0xb8] sm:$0xff]
      %v585 = vld [vmem:[%s1 + $0xc0] sm:$0xff]
      %v586 = vld [vmem:[%s1 + $0xc8] sm:$0xff]
      %v587 = vld [vmem:[%s1 + $0xd0] sm:$0xff]
      %v588 = vld [vmem:[%s1 + $0xd8] sm:$0xff]
      %v589 = vld [vmem:[%s1 + $0xe0] sm:$0xff]
      %v590 = vld [vmem:[%s1 + $0xe8] sm:$0xff]
      %v591 = vld [vmem:[%s1 + $0xf0] sm:$0xff]
      %v592 = vld [vmem:[%s1 + $0xf8] sm:$0xff]
      %v593 = vld [vmem:[%s2] sm:$0x1]
      %v595 = vlaneseq
      %v596 = vshrl.u32 %v595, 7
      %v597 = vsub.s32 0, %v596
      %v598 = vrot.slane %v593, %v597
      %600 = vmatprep.subr.mxu0 0.0
      %601 = vmatpush1.msra.mxu0 %v576
      %602 = vmatprep.subr.mxu0 0.0
      %603 = vmatpush1.msra.mxu0 %v575
      %604 = vmatprep.subr.mxu0 0.0
      %605 = vmatpush1.msra.mxu0 %v574
      %606 = vmatprep.subr.mxu0 0.0
      %607 = vmatpush1.msra.mxu0 %v573
      %608 = vmatprep.subr.mxu0 0.0
      %609 = vmatpush1.msra.mxu0 %v572
      %610 = vmatprep.subr.mxu0 0.0
      %611 = vmatpush1.msra.mxu0 %v571
      %612 = vmatprep.subr.mxu0 0.0
      %613 = vmatpush1.msra.mxu0 %v570
      %614 = vmatprep.subr.mxu0 0.0
      %615 = vmatpush1.msra.mxu0 %v569
      %616 = vmatprep.subr.mxu0 0.0
      %617 = vmatpush1.msra.mxu0 %v568
      %618 = vmatprep.subr.mxu0 0.0
      %619 = vmatpush1.msra.mxu0 %v567
      %620 = vmatprep.subr.mxu0 0.0
      %621 = vmatpush1.msra.mxu0 %v566
      %622 = vmatprep.subr.mxu0 0.0
      %623 = vmatpush1.msra.mxu0 %v565
      %624 = vmatprep.subr.mxu0 0.0
      %625 = vmatpush1.msra.mxu0 %v564
      %626 = vmatprep.subr.mxu0 0.0
      %627 = vmatpush1.msra.mxu0 %v563
      %628 = vmatprep.subr.mxu0 0.0
      %629 = vmatpush1.msra.mxu0 %v562
      %630 = vmatprep.subr.mxu0 0.0
      %631 = vmatpush1.msra.mxu0 %v561
      %632 = vmatprep.subr.mxu0 0.0
      %633 = vmatpush2.msra.mxu0 %v592
      %634 = vmatprep.subr.mxu0 0.0
      %635 = vmatpush2.msra.mxu0 %v591
      %636 = vmatprep.subr.mxu0 0.0
      %637 = vmatpush2.msra.mxu0 %v590
      %638 = vmatprep.subr.mxu0 0.0
      %639 = vmatpush2.msra.mxu0 %v589
      %640 = vmatprep.subr.mxu0 0.0
      %641 = vmatpush2.msra.mxu0 %v588
      %642 = vmatprep.subr.mxu0 0.0
      %643 = vmatpush2.msra.mxu0 %v587
      %644 = vmatprep.subr.mxu0 0.0
      %645 = vmatpush2.msra.mxu0 %v586
      %646 = vmatprep.subr.mxu0 0.0
      %647 = vmatpush2.msra.mxu0 %v585
      %648 = vmatprep.subr.mxu0 0.0
      %649 = vmatpush2.msra.mxu0 %v584
      %650 = vmatprep.subr.mxu0 0.0
      %651 = vmatpush2.msra.mxu0 %v583
      %652 = vmatprep.subr.mxu0 0.0
      %653 = vmatpush2.msra.mxu0 %v582
      %654 = vmatprep.subr.mxu0 0.0
      %655 = vmatpush2.msra.mxu0 %v581
      %656 = vmatprep.subr.mxu0 0.0
      %657 = vmatpush2.msra.mxu0 %v580
      %658 = vmatprep.subr.mxu0 0.0
      %659 = vmatpush2.msra.mxu0 %v579
      %660 = vmatprep.subr.mxu0 0.0
      %661 = vmatpush2.msra.mxu0 %v578
      %662 = vmatprep.subr.mxu0 0.0
      %663 = vmatpush2.msra.mxu0 %v577
      %664 = vmatprep.mubr.f32.mxu0 %v498
      %665 = vmatmul.mubr.f32.gmra.mxu0 %v497
      %v666 = vpop.f32.mrf.mxu0
      %v667 = vadd.f32 %v598, %v666
      %v668 = vpop.f32.mrf.mxu0
      %669 = vmatprep.mubr.f32.mxu0 %v500
      %670 = vmatmul.mubr.f32.gmra.mxu0 %v499
      %v671 = vpop.f32.mrf.mxu0
      %v672 = vadd.f32 %v598, %v671
      %v673 = vpop.f32.mrf.mxu0
      %674 = vmatprep.mubr.f32.mxu0 %v502
      %675 = vmatmul.mubr.f32.gmra.mxu0 %v501
      %v676 = vpop.f32.mrf.mxu0
      %v677 = vadd.f32 %v598, %v676
      %v678 = vpop.f32.mrf.mxu0
      %679 = vmatprep.mubr.f32.mxu0 %v504
      %680 = vmatmul.mubr.f32.gmra.mxu0 %v503
      %v681 = vpop.f32.mrf.mxu0
      %v682 = vadd.f32 %v598, %v681
      %v683 = vpop.f32.mrf.mxu0
      %684 = vmatprep.mubr.f32.mxu0 %v506
      %685 = vmatmul.mubr.f32.gmra.mxu0 %v505
      %v686 = vpop.f32.mrf.mxu0
      %v687 = vadd.f32 %v598, %v686
      %v688 = vpop.f32.mrf.mxu0
      %689 = vmatprep.mubr.f32.mxu0 %v508
      %690 = vmatmul.mubr.f32.gmra.mxu0 %v507
      %v691 = vpop.f32.mrf.mxu0
      %v692 = vadd.f32 %v598, %v691
      %v693 = vpop.f32.mrf.mxu0
      %694 = vmatprep.mubr.f32.mxu0 %v510
      %695 = vmatmul.mubr.f32.gmra.mxu0 %v509
      %v696 = vpop.f32.mrf.mxu0
      %v697 = vadd.f32 %v598, %v696
      %v698 = vpop.f32.mrf.mxu0
      %699 = vmatprep.mubr.f32.mxu0 %v512
      %700 = vmatmul.mubr.f32.gmra.mxu0 %v511
      %v701 = vpop.f32.mrf.mxu0
      %v702 = vadd.f32 %v598, %v701
      %v703 = vpop.f32.mrf.mxu0
      %704 = vmatprep.mubr.f32.mxu0 %v514
      %705 = vmatmul.mubr.f32.gmra.mxu0 %v513
      %v706 = vpop.f32.mrf.mxu0
      %v707 = vadd.f32 %v598, %v706
      %v708 = vpop.f32.mrf.mxu0
      %709 = vmatprep.mubr.f32.mxu0 %v516
      %710 = vmatmul.mubr.f32.gmra.mxu0 %v515
      %v711 = vpop.f32.mrf.mxu0
      %v712 = vadd.f32 %v598, %v711
      %v713 = vpop.f32.mrf.mxu0
      %714 = vmatprep.mubr.f32.mxu0 %v518
      %715 = vmatmul.mubr.f32.gmra.mxu0 %v517
      %v716 = vpop.f32.mrf.mxu0
      %v717 = vadd.f32 %v598, %v716
      %v718 = vpop.f32.mrf.mxu0
      %719 = vmatprep.mubr.f32.mxu0 %v520
      %720 = vmatmul.mubr.f32.gmra.mxu0 %v519
      %v721 = vpop.f32.mrf.mxu0
      %v722 = vadd.f32 %v598, %v721
      %v723 = vpop.f32.mrf.mxu0
      %724 = vmatprep.mubr.f32.mxu0 %v522
      %725 = vmatmul.mubr.f32.gmra.mxu0 %v521
      %v726 = vpop.f32.mrf.mxu0
      %v727 = vadd.f32 %v598, %v726
      %v728 = vpop.f32.mrf.mxu0
      %729 = vmatprep.mubr.f32.mxu0 %v524
      %730 = vmatmul.mubr.f32.gmra.mxu0 %v523
      %v731 = vpop.f32.mrf.mxu0
      %v732 = vadd.f32 %v598, %v731
      %v733 = vpop.f32.mrf.mxu0
      %734 = vmatprep.mubr.f32.mxu0 %v526
      %735 = vmatmul.mubr.f32.gmra.mxu0 %v525
      %v736 = vpop.f32.mrf.mxu0
      %v737 = vadd.f32 %v598, %v736
      %v738 = vpop.f32.mrf.mxu0
      %739 = vmatprep.mubr.f32.mxu0 %v528
      %740 = vmatmul.mubr.f32.gmra.mxu0 %v527
      %v741 = vpop.f32.mrf.mxu0
      %v742 = vadd.f32 %v598, %v741
      %v743 = vpop.f32.mrf.mxu0
      %744 = vmatprep.mubr.f32.mxu0 %v530
      %745 = vmatmul.mubr.f32.gmra.mxu0 %v529
      %v746 = vpop.f32.mrf.mxu0
      %v747 = vadd.f32 %v598, %v746
      %v748 = vpop.f32.mrf.mxu0
      %749 = vmatprep.mubr.f32.mxu0 %v532
      %750 = vmatmul.mubr.f32.gmra.mxu0 %v531
      %v751 = vpop.f32.mrf.mxu0
      %v752 = vadd.f32 %v598, %v751
      %v753 = vpop.f32.mrf.mxu0
      %754 = vmatprep.mubr.f32.mxu0 %v534
      %755 = vmatmul.mubr.f32.gmra.mxu0 %v533
      %v756 = vpop.f32.mrf.mxu0
      %v757 = vadd.f32 %v598, %v756
      %v758 = vpop.f32.mrf.mxu0
      %759 = vmatprep.mubr.f32.mxu0 %v536
      %760 = vmatmul.mubr.f32.gmra.mxu0 %v535
      %v761 = vpop.f32.mrf.mxu0
      %v762 = vadd.f32 %v598, %v761
      %v763 = vpop.f32.mrf.mxu0
      %764 = vmatprep.mubr.f32.mxu0 %v538
      %765 = vmatmul.mubr.f32.gmra.mxu0 %v537
      %v766 = vpop.f32.mrf.mxu0
      %v767 = vadd.f32 %v598, %v766
      %v768 = vpop.f32.mrf.mxu0
      %769 = vmatprep.mubr.f32.mxu0 %v540
      %770 = vmatmul.mubr.f32.gmra.mxu0 %v539
      %v771 = vpop.f32.mrf.mxu0
      %v772 = vadd.f32 %v598, %v771
      %v773 = vpop.f32.mrf.mxu0
      %774 = vmatprep.mubr.f32.mxu0 %v542
      %775 = vmatmul.mubr.f32.gmra.mxu0 %v541
      %v776 = vpop.f32.mrf.mxu0
      %v777 = vadd.f32 %v598, %v776
      %v778 = vpop.f32.mrf.mxu0
      %779 = vmatprep.mubr.f32.mxu0 %v544
      %780 = vmatmul.mubr.f32.gmra.mxu0 %v543
      %v781 = vpop.f32.mrf.mxu0
      %v782 = vadd.f32 %v598, %v781
      %v783 = vpop.f32.mrf.mxu0
      %784 = vmatprep.mubr.f32.mxu0 %v546
      %785 = vmatmul.mubr.f32.gmra.mxu0 %v545
      %v786 = vpop.f32.mrf.mxu0
      %v787 = vadd.f32 %v598, %v786
      %v788 = vpop.f32.mrf.mxu0
      %789 = vmatprep.mubr.f32.mxu0 %v548
      %790 = vmatmul.mubr.f32.gmra.mxu0 %v547
      %v791 = vpop.f32.mrf.mxu0
      %v792 = vadd.f32 %v598, %v791
      %v793 = vpop.f32.mrf.mxu0
      %794 = vmatprep.mubr.f32.mxu0 %v550
      %795 = vmatmul.mubr.f32.gmra.mxu0 %v549
      %v796 = vpop.f32.mrf.mxu0
      %v797 = vadd.f32 %v598, %v796
      %v798 = vpop.f32.mrf.mxu0
      %799 = vmatprep.mubr.f32.mxu0 %v552
      %800 = vmatmul.mubr.f32.gmra.mxu0 %v551
      %v801 = vpop.f32.mrf.mxu0
      %v802 = vadd.f32 %v598, %v801
      %v803 = vpop.f32.mrf.mxu0
      %804 = vmatprep.mubr.f32.mxu0 %v554
      %805 = vmatmul.mubr.f32.gmra.mxu0 %v553
      %v806 = vpop.f32.mrf.mxu0
      %v807 = vadd.f32 %v598, %v806
      %v808 = vpop.f32.mrf.mxu0
      %809 = vmatprep.mubr.f32.mxu0 %v556
      %810 = vmatmul.mubr.f32.gmra.mxu0 %v555
      %v811 = vpop.f32.mrf.mxu0
      %v812 = vadd.f32 %v598, %v811
      %v813 = vpop.f32.mrf.mxu0
      %814 = vmatprep.mubr.f32.mxu0 %v558
      %815 = vmatmul.mubr.f32.gmra.mxu0 %v557
      %v816 = vpop.f32.mrf.mxu0
      %v817 = vadd.f32 %v598, %v816
      %v818 = vpop.f32.mrf.mxu0
      %819 = vmatprep.mubr.f32.mxu0 %v560
      %820 = vmatmul.mubr.f32.gmra.mxu0 %v559
      %v821 = vpop.f32.mrf.mxu0
      %v822 = vadd.f32 %v598, %v821
      %v823 = vpop.f32.mrf.mxu0
      %824 = vdwg.mxu0
      %v825 = vmax.f32 %v667, 0.0
      %v826 = vmax.f32 %v672, 0.0
      %v827 = vmax.f32 %v677, 0.0
      %v828 = vmax.f32 %v682, 0.0
      %v829 = vmax.f32 %v687, 0.0
      %v830 = vmax.f32 %v692, 0.0
      %v831 = vmax.f32 %v697, 0.0
      %v832 = vmax.f32 %v702, 0.0
      %v833 = vmax.f32 %v707, 0.0
      %v834 = vmax.f32 %v712, 0.0
      %v835 = vmax.f32 %v717, 0.0
      %v836 = vmax.f32 %v722, 0.0
      %v837 = vmax.f32 %v727, 0.0
      %v838 = vmax.f32 %v732, 0.0
      %v839 = vmax.f32 %v737, 0.0
      %v840 = vmax.f32 %v742, 0.0
      %v841 = vmax.f32 %v747, 0.0
      %v842 = vmax.f32 %v752, 0.0
      %v843 = vmax.f32 %v757, 0.0
      %v844 = vmax.f32 %v762, 0.0
      %v845 = vmax.f32 %v767, 0.0
      %v846 = vmax.f32 %v772, 0.0
      %v847 = vmax.f32 %v777, 0.0
      %v848 = vmax.f32 %v782, 0.0
      %v849 = vmax.f32 %v787, 0.0
      %v850 = vmax.f32 %v792, 0.0
      %v851 = vmax.f32 %v797, 0.0
      %v852 = vmax.f32 %v802, 0.0
      %v853 = vmax.f32 %v807, 0.0
      %v854 = vmax.f32 %v812, 0.0
      %v855 = vmax.f32 %v817, 0.0
      %v856 = vmax.f32 %v822, 0.0
      %v857 = vmax.f32 %v825, %v827
      %v858 = vmax.f32 %v826, %v828
      %v859 = vmax.f32 %v829, %v831
      %v860 = vmax.f32 %v830, %v832
      %v861 = vmax.f32 %v833, %v835
      %v862 = vmax.f32 %v834, %v836
      %v863 = vmax.f32 %v837, %v839
      %v864 = vmax.f32 %v838, %v840
      %v865 = vmax.f32 %v841, %v843
      %v866 = vmax.f32 %v842, %v844
      %v867 = vmax.f32 %v845, %v847
      %v868 = vmax.f32 %v846, %v848
      %v869 = vmax.f32 %v849, %v851
      %v870 = vmax.f32 %v850, %v852
      %v871 = vmax.f32 %v853, %v855
      %v872 = vmax.f32 %v854, %v856
      %v889 = vcombine.high %v857, %v857
      %v891 = vunpack.c.l.s4 1983009808
      %v892 = vunpack.c.0.s8 %v891
      %v893 = vlaneseq
      %v894 = vshrl.u32 %v893, 7
      %v895 = vsub.s32 %v892, %v894
      %v896 = vrot.slane %v857, %v895
      %v898 = vunpack.c.l.s4 1983009808
      %v899 = vunpack.c.0.s8 %v898
      %v900 = vlaneseq
      %v901 = vshrl.u32 %v900, 7
      %v902 = vsub.s32 %v899, %v901
      %v903 = vrot.slane %v889, %v902
      %v904 = vcombine.high %v896, %v896
      %v905 = vcombine.high %v903, %v903
      %v906 = vcombine.high %v858, %v858
      %v908 = vunpack.c.l.s4 1983009808
      %v909 = vunpack.c.0.s8 %v908
      %v910 = vlaneseq
      %v911 = vshrl.u32 %v910, 7
      %v912 = vsub.s32 %v909, %v911
      %v913 = vrot.slane %v858, %v912
      %v915 = vunpack.c.l.s4 1983009808
      %v916 = vunpack.c.0.s8 %v915
      %v917 = vlaneseq
      %v918 = vshrl.u32 %v917, 7
      %v919 = vsub.s32 %v916, %v918
      %v920 = vrot.slane %v906, %v919
      %v921 = vcombine.high %v913, %v913
      %v922 = vcombine.high %v920, %v920
      %v923 = vcombine.high %v859, %v859
      %v925 = vunpack.c.l.s4 1983009808
      %v926 = vunpack.c.0.s8 %v925
      %v927 = vlaneseq
      %v928 = vshrl.u32 %v927, 7
      %v929 = vsub.s32 %v926, %v928
      %v930 = vrot.slane %v859, %v929
      %v932 = vunpack.c.l.s4 1983009808
      %v933 = vunpack.c.0.s8 %v932
      %v934 = vlaneseq
      %v935 = vshrl.u32 %v934, 7
      %v936 = vsub.s32 %v933, %v935
      %v937 = vrot.slane %v923, %v936
      %v938 = vcombine.high %v930, %v930
      %v939 = vcombine.high %v937, %v937
      %v940 = vcombine.high %v860, %v860
      %v942 = vunpack.c.l.s4 1983009808
      %v943 = vunpack.c.0.s8 %v942
      %v944 = vlaneseq
      %v945 = vshrl.u32 %v944, 7
      %v946 = vsub.s32 %v943, %v945
      %v947 = vrot.slane %v860, %v946
      %v949 = vunpack.c.l.s4 1983009808
      %v950 = vunpack.c.0.s8 %v949
      %v951 = vlaneseq
      %v952 = vshrl.u32 %v951, 7
      %v953 = vsub.s32 %v950, %v952
      %v954 = vrot.slane %v940, %v953
      %v955 = vcombine.high %v947, %v947
      %v956 = vcombine.high %v954, %v954
      %v957 = vcombine.high %v861, %v861
      %v959 = vunpack.c.l.s4 1983009808
      %v960 = vunpack.c.0.s8 %v959
      %v961 = vlaneseq
      %v962 = vshrl.u32 %v961, 7
      %v963 = vsub.s32 %v960, %v962
      %v964 = vrot.slane %v861, %v963
      %v966 = vunpack.c.l.s4 1983009808
      %v967 = vunpack.c.0.s8 %v966
      %v968 = vlaneseq
      %v969 = vshrl.u32 %v968, 7
      %v970 = vsub.s32 %v967, %v969
      %v971 = vrot.slane %v957, %v970
      %v972 = vcombine.high %v964, %v964
      %v973 = vcombine.high %v971, %v971
      %v974 = vcombine.high %v862, %v862
      %v976 = vunpack.c.l.s4 1983009808
      %v977 = vunpack.c.0.s8 %v976
      %v978 = vlaneseq
      %v979 = vshrl.u32 %v978, 7
      %v980 = vsub.s32 %v977, %v979
      %v981 = vrot.slane %v862, %v980
      %v983 = vunpack.c.l.s4 1983009808
      %v984 = vunpack.c.0.s8 %v983
      %v985 = vlaneseq
      %v986 = vshrl.u32 %v985, 7
      %v987 = vsub.s32 %v984, %v986
      %v988 = vrot.slane %v974, %v987
      %v989 = vcombine.high %v981, %v981
      %v990 = vcombine.high %v988, %v988
      %v991 = vcombine.high %v863, %v863
      %v993 = vunpack.c.l.s4 1983009808
      %v994 = vunpack.c.0.s8 %v993
      %v995 = vlaneseq
      %v996 = vshrl.u32 %v995, 7
      %v997 = vsub.s32 %v994, %v996
      %v998 = vrot.slane %v863, %v997
      %v1000 = vunpack.c.l.s4 1983009808
      %v1001 = vunpack.c.0.s8 %v1000
      %v1002 = vlaneseq
      %v1003 = vshrl.u32 %v1002, 7
      %v1004 = vsub.s32 %v1001, %v1003
      %v1005 = vrot.slane %v991, %v1004
      %v1006 = vcombine.high %v998, %v998
      %v1007 = vcombine.high %v1005, %v1005
      %v1008 = vcombine.high %v864, %v864
      %v1010 = vunpack.c.l.s4 1983009808
      %v1011 = vunpack.c.0.s8 %v1010
      %v1012 = vlaneseq
      %v1013 = vshrl.u32 %v1012, 7
      %v1014 = vsub.s32 %v1011, %v1013
      %v1015 = vrot.slane %v864, %v1014
      %v1017 = vunpack.c.l.s4 1983009808
      %v1018 = vunpack.c.0.s8 %v1017
      %v1019 = vlaneseq
      %v1020 = vshrl.u32 %v1019, 7
      %v1021 = vsub.s32 %v1018, %v1020
      %v1022 = vrot.slane %v1008, %v1021
      %v1023 = vcombine.high %v1015, %v1015
      %v1024 = vcombine.high %v1022, %v1022
      %v1025 = vcombine.high %v865, %v865
      %v1027 = vunpack.c.l.s4 1983009808
      %v1028 = vunpack.c.0.s8 %v1027
      %v1029 = vlaneseq
      %v1030 = vshrl.u32 %v1029, 7
      %v1031 = vsub.s32 %v1028, %v1030
      %v1032 = vrot.slane %v865, %v1031
      %v1034 = vunpack.c.l.s4 1983009808
      %v1035 = vunpack.c.0.s8 %v1034
      %v1036 = vlaneseq
      %v1037 = vshrl.u32 %v1036, 7
      %v1038 = vsub.s32 %v1035, %v1037
      %v1039 = vrot.slane %v1025, %v1038
      %v1040 = vcombine.high %v1032, %v1032
      %v1041 = vcombine.high %v1039, %v1039
      %v1042 = vcombine.high %v866, %v866
      %v1044 = vunpack.c.l.s4 1983009808
      %v1045 = vunpack.c.0.s8 %v1044
      %v1046 = vlaneseq
      %v1047 = vshrl.u32 %v1046, 7
      %v1048 = vsub.s32 %v1045, %v1047
      %v1049 = vrot.slane %v866, %v1048
      %v1051 = vunpack.c.l.s4 1983009808
      %v1052 = vunpack.c.0.s8 %v1051
      %v1053 = vlaneseq
      %v1054 = vshrl.u32 %v1053, 7
      %v1055 = vsub.s32 %v1052, %v1054
      %v1056 = vrot.slane %v1042, %v1055
      %v1057 = vcombine.high %v1049, %v1049
      %v1058 = vcombine.high %v1056, %v1056
      %v1059 = vcombine.high %v867, %v867
      %v1061 = vunpack.c.l.s4 1983009808
      %v1062 = vunpack.c.0.s8 %v1061
      %v1063 = vlaneseq
      %v1064 = vshrl.u32 %v1063, 7
      %v1065 = vsub.s32 %v1062, %v1064
      %v1066 = vrot.slane %v867, %v1065
      %v1068 = vunpack.c.l.s4 1983009808
      %v1069 = vunpack.c.0.s8 %v1068
      %v1070 = vlaneseq
      %v1071 = vshrl.u32 %v1070, 7
      %v1072 = vsub.s32 %v1069, %v1071
      %v1073 = vrot.slane %v1059, %v1072
      %v1074 = vcombine.high %v1066, %v1066
      %v1075 = vcombine.high %v1073, %v1073
      %v1076 = vcombine.high %v868, %v868
      %v1078 = vunpack.c.l.s4 1983009808
      %v1079 = vunpack.c.0.s8 %v1078
      %v1080 = vlaneseq
      %v1081 = vshrl.u32 %v1080, 7
      %v1082 = vsub.s32 %v1079, %v1081
      %v1083 = vrot.slane %v868, %v1082
      %v1085 = vunpack.c.l.s4 1983009808
      %v1086 = vunpack.c.0.s8 %v1085
      %v1087 = vlaneseq
      %v1088 = vshrl.u32 %v1087, 7
      %v1089 = vsub.s32 %v1086, %v1088
      %v1090 = vrot.slane %v1076, %v1089
      %v1091 = vcombine.high %v1083, %v1083
      %v1092 = vcombine.high %v1090, %v1090
      %v1093 = vcombine.high %v869, %v869
      %v1095 = vunpack.c.l.s4 1983009808
      %v1096 = vunpack.c.0.s8 %v1095
      %v1097 = vlaneseq
      %v1098 = vshrl.u32 %v1097, 7
      %v1099 = vsub.s32 %v1096, %v1098
      %v1100 = vrot.slane %v869, %v1099
      %v1102 = vunpack.c.l.s4 1983009808
      %v1103 = vunpack.c.0.s8 %v1102
      %v1104 = vlaneseq
      %v1105 = vshrl.u32 %v1104, 7
      %v1106 = vsub.s32 %v1103, %v1105
      %v1107 = vrot.slane %v1093, %v1106
      %v1108 = vcombine.high %v1100, %v1100
      %v1109 = vcombine.high %v1107, %v1107
      %v1110 = vcombine.high %v870, %v870
      %v1112 = vunpack.c.l.s4 1983009808
      %v1113 = vunpack.c.0.s8 %v1112
      %v1114 = vlaneseq
      %v1115 = vshrl.u32 %v1114, 7
      %v1116 = vsub.s32 %v1113, %v1115
      %v1117 = vrot.slane %v870, %v1116
      %v1119 = vunpack.c.l.s4 1983009808
      %v1120 = vunpack.c.0.s8 %v1119
      %v1121 = vlaneseq
      %v1122 = vshrl.u32 %v1121, 7
      %v1123 = vsub.s32 %v1120, %v1122
      %v1124 = vrot.slane %v1110, %v1123
      %v1125 = vcombine.high %v1117, %v1117
      %v1126 = vcombine.high %v1124, %v1124
      %v1127 = vcombine.high %v871, %v871
      %v1129 = vunpack.c.l.s4 1983009808
      %v1130 = vunpack.c.0.s8 %v1129
      %v1131 = vlaneseq
      %v1132 = vshrl.u32 %v1131, 7
      %v1133 = vsub.s32 %v1130, %v1132
      %v1134 = vrot.slane %v871, %v1133
      %v1136 = vunpack.c.l.s4 1983009808
      %v1137 = vunpack.c.0.s8 %v1136
      %v1138 = vlaneseq
      %v1139 = vshrl.u32 %v1138, 7
      %v1140 = vsub.s32 %v1137, %v1139
      %v1141 = vrot.slane %v1127, %v1140
      %v1142 = vcombine.high %v1134, %v1134
      %v1143 = vcombine.high %v1141, %v1141
      %v1144 = vcombine.high %v872, %v872
      %v1146 = vunpack.c.l.s4 1983009808
      %v1147 = vunpack.c.0.s8 %v1146
      %v1148 = vlaneseq
      %v1149 = vshrl.u32 %v1148, 7
      %v1150 = vsub.s32 %v1147, %v1149
      %v1151 = vrot.slane %v872, %v1150
      %v1153 = vunpack.c.l.s4 1983009808
      %v1154 = vunpack.c.0.s8 %v1153
      %v1155 = vlaneseq
      %v1156 = vshrl.u32 %v1155, 7
      %v1157 = vsub.s32 %v1154, %v1156
      %v1158 = vrot.slane %v1144, %v1157
      %v1159 = vcombine.high %v1151, %v1151
      %v1160 = vcombine.high %v1158, %v1158
      %vm1225 = vcmask 320512
      %v1226 = vsel %vm1225, %v896, -inf
      %v1227 = vrot.slane %v1226, 4
      %v1228 = vmax.f32 %v1226, %v1227
      %v1229 = vrot.slane %v1228, 2
      %v1230 = vmax.f32 %v1228, %v1229
      %v1231 = vrot.slane %v1230, 1
      %v1232 = vmax.f32 %v1230, %v1231
      %v1233 = vsel %vm1225, %v904, -inf
      %v1234 = vrot.slane %v1233, 4
      %v1235 = vmax.f32 %v1233, %v1234
      %v1236 = vrot.slane %v1235, 2
      %v1237 = vmax.f32 %v1235, %v1236
      %v1238 = vrot.slane %v1237, 1
      %v1239 = vmax.f32 %v1237, %v1238
      %v1240 = vsel %vm1225, %v903, -inf
      %v1241 = vrot.slane %v1240, 4
      %v1242 = vmax.f32 %v1240, %v1241
      %v1243 = vrot.slane %v1242, 2
      %v1244 = vmax.f32 %v1242, %v1243
      %v1245 = vrot.slane %v1244, 1
      %v1246 = vmax.f32 %v1244, %v1245
      %v1247 = vsel %vm1225, %v905, -inf
      %v1248 = vrot.slane %v1247, 4
      %v1249 = vmax.f32 %v1247, %v1248
      %v1250 = vrot.slane %v1249, 2
      %v1251 = vmax.f32 %v1249, %v1250
      %v1252 = vrot.slane %v1251, 1
      %v1253 = vmax.f32 %v1251, %v1252
      %v1254 = vsel %vm1225, %v913, -inf
      %v1255 = vrot.slane %v1254, 4
      %v1256 = vmax.f32 %v1254, %v1255
      %v1257 = vrot.slane %v1256, 2
      %v1258 = vmax.f32 %v1256, %v1257
      %v1259 = vrot.slane %v1258, 1
      %v1260 = vmax.f32 %v1258, %v1259
      %v1261 = vsel %vm1225, %v921, -inf
      %v1262 = vrot.slane %v1261, 4
      %v1263 = vmax.f32 %v1261, %v1262
      %v1264 = vrot.slane %v1263, 2
      %v1265 = vmax.f32 %v1263, %v1264
      %v1266 = vrot.slane %v1265, 1
      %v1267 = vmax.f32 %v1265, %v1266
      %v1268 = vsel %vm1225, %v920, -inf
      %v1269 = vrot.slane %v1268, 4
      %v1270 = vmax.f32 %v1268, %v1269
      %v1271 = vrot.slane %v1270, 2
      %v1272 = vmax.f32 %v1270, %v1271
      %v1273 = vrot.slane %v1272, 1
      %v1274 = vmax.f32 %v1272, %v1273
      %v1275 = vsel %vm1225, %v922, -inf
      %v1276 = vrot.slane %v1275, 4
      %v1277 = vmax.f32 %v1275, %v1276
      %v1278 = vrot.slane %v1277, 2
      %v1279 = vmax.f32 %v1277, %v1278
      %v1280 = vrot.slane %v1279, 1
      %v1281 = vmax.f32 %v1279, %v1280
      %v1282 = vsel %vm1225, %v930, -inf
      %v1283 = vrot.slane %v1282, 4
      %v1284 = vmax.f32 %v1282, %v1283
      %v1285 = vrot.slane %v1284, 2
      %v1286 = vmax.f32 %v1284, %v1285
      %v1287 = vrot.slane %v1286, 1
      %v1288 = vmax.f32 %v1286, %v1287
      %v1289 = vsel %vm1225, %v938, -inf
      %v1290 = vrot.slane %v1289, 4
      %v1291 = vmax.f32 %v1289, %v1290
      %v1292 = vrot.slane %v1291, 2
      %v1293 = vmax.f32 %v1291, %v1292
      %v1294 = vrot.slane %v1293, 1
      %v1295 = vmax.f32 %v1293, %v1294
      %v1296 = vsel %vm1225, %v937, -inf
      %v1297 = vrot.slane %v1296, 4
      %v1298 = vmax.f32 %v1296, %v1297
      %v1299 = vrot.slane %v1298, 2
      %v1300 = vmax.f32 %v1298, %v1299
      %v1301 = vrot.slane %v1300, 1
      %v1302 = vmax.f32 %v1300, %v1301
      %v1303 = vsel %vm1225, %v939, -inf
      %v1304 = vrot.slane %v1303, 4
      %v1305 = vmax.f32 %v1303, %v1304
      %v1306 = vrot.slane %v1305, 2
      %v1307 = vmax.f32 %v1305, %v1306
      %v1308 = vrot.slane %v1307, 1
      %v1309 = vmax.f32 %v1307, %v1308
      %v1310 = vsel %vm1225, %v947, -inf
      %v1311 = vrot.slane %v1310, 4
      %v1312 = vmax.f32 %v1310, %v1311
      %v1313 = vrot.slane %v1312, 2
      %v1314 = vmax.f32 %v1312, %v1313
      %v1315 = vrot.slane %v1314, 1
      %v1316 = vmax.f32 %v1314, %v1315
      %v1317 = vsel %vm1225, %v955, -inf
      %v1318 = vrot.slane %v1317, 4
      %v1319 = vmax.f32 %v1317, %v1318
      %v1320 = vrot.slane %v1319, 2
      %v1321 = vmax.f32 %v1319, %v1320
      %v1322 = vrot.slane %v1321, 1
      %v1323 = vmax.f32 %v1321, %v1322
      %v1324 = vsel %vm1225, %v954, -inf
      %v1325 = vrot.slane %v1324, 4
      %v1326 = vmax.f32 %v1324, %v1325
      %v1327 = vrot.slane %v1326, 2
      %v1328 = vmax.f32 %v1326, %v1327
      %v1329 = vrot.slane %v1328, 1
      %v1330 = vmax.f32 %v1328, %v1329
      %v1331 = vsel %vm1225, %v956, -inf
      %v1332 = vrot.slane %v1331, 4
      %v1333 = vmax.f32 %v1331, %v1332
      %v1334 = vrot.slane %v1333, 2
      %v1335 = vmax.f32 %v1333, %v1334
      %v1336 = vrot.slane %v1335, 1
      %v1337 = vmax.f32 %v1335, %v1336
      %v1338 = vsel %vm1225, %v964, -inf
      %v1339 = vrot.slane %v1338, 4
      %v1340 = vmax.f32 %v1338, %v1339
      %v1341 = vrot.slane %v1340, 2
      %v1342 = vmax.f32 %v1340, %v1341
      %v1343 = vrot.slane %v1342, 1
      %v1344 = vmax.f32 %v1342, %v1343
      %v1345 = vsel %vm1225, %v972, -inf
      %v1346 = vrot.slane %v1345, 4
      %v1347 = vmax.f32 %v1345, %v1346
      %v1348 = vrot.slane %v1347, 2
      %v1349 = vmax.f32 %v1347, %v1348
      %v1350 = vrot.slane %v1349, 1
      %v1351 = vmax.f32 %v1349, %v1350
      %v1352 = vsel %vm1225, %v971, -inf
      %v1353 = vrot.slane %v1352, 4
      %v1354 = vmax.f32 %v1352, %v1353
      %v1355 = vrot.slane %v1354, 2
      %v1356 = vmax.f32 %v1354, %v1355
      %v1357 = vrot.slane %v1356, 1
      %v1358 = vmax.f32 %v1356, %v1357
      %v1359 = vsel %vm1225, %v973, -inf
      %v1360 = vrot.slane %v1359, 4
      %v1361 = vmax.f32 %v1359, %v1360
      %v1362 = vrot.slane %v1361, 2
      %v1363 = vmax.f32 %v1361, %v1362
      %v1364 = vrot.slane %v1363, 1
      %v1365 = vmax.f32 %v1363, %v1364
      %v1366 = vsel %vm1225, %v981, -inf
      %v1367 = vrot.slane %v1366, 4
      %v1368 = vmax.f32 %v1366, %v1367
      %v1369 = vrot.slane %v1368, 2
      %v1370 = vmax.f32 %v1368, %v1369
      %v1371 = vrot.slane %v1370, 1
      %v1372 = vmax.f32 %v1370, %v1371
      %v1373 = vsel %vm1225, %v989, -inf
      %v1374 = vrot.slane %v1373, 4
      %v1375 = vmax.f32 %v1373, %v1374
      %v1376 = vrot.slane %v1375, 2
      %v1377 = vmax.f32 %v1375, %v1376
      %v1378 = vrot.slane %v1377, 1
      %v1379 = vmax.f32 %v1377, %v1378
      %v1380 = vsel %vm1225, %v988, -inf
      %v1381 = vrot.slane %v1380, 4
      %v1382 = vmax.f32 %v1380, %v1381
      %v1383 = vrot.slane %v1382, 2
      %v1384 = vmax.f32 %v1382, %v1383
      %v1385 = vrot.slane %v1384, 1
      %v1386 = vmax.f32 %v1384, %v1385
      %v1387 = vsel %vm1225, %v990, -inf
      %v1388 = vrot.slane %v1387, 4
      %v1389 = vmax.f32 %v1387, %v1388
      %v1390 = vrot.slane %v1389, 2
      %v1391 = vmax.f32 %v1389, %v1390
      %v1392 = vrot.slane %v1391, 1
      %v1393 = vmax.f32 %v1391, %v1392
      %v1394 = vsel %vm1225, %v998, -inf
      %v1395 = vrot.slane %v1394, 4
      %v1396 = vmax.f32 %v1394, %v1395
      %v1397 = vrot.slane %v1396, 2
      %v1398 = vmax.f32 %v1396, %v1397
      %v1399 = vrot.slane %v1398, 1
      %v1400 = vmax.f32 %v1398, %v1399
      %v1401 = vsel %vm1225, %v1006, -inf
      %v1402 = vrot.slane %v1401, 4
      %v1403 = vmax.f32 %v1401, %v1402
      %v1404 = vrot.slane %v1403, 2
      %v1405 = vmax.f32 %v1403, %v1404
      %v1406 = vrot.slane %v1405, 1
      %v1407 = vmax.f32 %v1405, %v1406
      %v1408 = vsel %vm1225, %v1005, -inf
      %v1409 = vrot.slane %v1408, 4
      %v1410 = vmax.f32 %v1408, %v1409
      %v1411 = vrot.slane %v1410, 2
      %v1412 = vmax.f32 %v1410, %v1411
      %v1413 = vrot.slane %v1412, 1
      %v1414 = vmax.f32 %v1412, %v1413
      %v1415 = vsel %vm1225, %v1007, -inf
      %v1416 = vrot.slane %v1415, 4
      %v1417 = vmax.f32 %v1415, %v1416
      %v1418 = vrot.slane %v1417, 2
      %v1419 = vmax.f32 %v1417, %v1418
      %v1420 = vrot.slane %v1419, 1
      %v1421 = vmax.f32 %v1419, %v1420
      %v1422 = vsel %vm1225, %v1015, -inf
      %v1423 = vrot.slane %v1422, 4
      %v1424 = vmax.f32 %v1422, %v1423
      %v1425 = vrot.slane %v1424, 2
      %v1426 = vmax.f32 %v1424, %v1425
      %v1427 = vrot.slane %v1426, 1
      %v1428 = vmax.f32 %v1426, %v1427
      %v1429 = vsel %vm1225, %v1023, -inf
      %v1430 = vrot.slane %v1429, 4
      %v1431 = vmax.f32 %v1429, %v1430
      %v1432 = vrot.slane %v1431, 2
      %v1433 = vmax.f32 %v1431, %v1432
      %v1434 = vrot.slane %v1433, 1
      %v1435 = vmax.f32 %v1433, %v1434
      %v1436 = vsel %vm1225, %v1022, -inf
      %v1437 = vrot.slane %v1436, 4
      %v1438 = vmax.f32 %v1436, %v1437
      %v1439 = vrot.slane %v1438, 2
      %v1440 = vmax.f32 %v1438, %v1439
      %v1441 = vrot.slane %v1440, 1
      %v1442 = vmax.f32 %v1440, %v1441
      %v1443 = vsel %vm1225, %v1024, -inf
      %v1444 = vrot.slane %v1443, 4
      %v1445 = vmax.f32 %v1443, %v1444
      %v1446 = vrot.slane %v1445, 2
      %v1447 = vmax.f32 %v1445, %v1446
      %v1448 = vrot.slane %v1447, 1
      %v1449 = vmax.f32 %v1447, %v1448
      %v1450 = vsel %vm1225, %v1032, -inf
      %v1451 = vrot.slane %v1450, 4
      %v1452 = vmax.f32 %v1450, %v1451
      %v1453 = vrot.slane %v1452, 2
      %v1454 = vmax.f32 %v1452, %v1453
      %v1455 = vrot.slane %v1454, 1
      %v1456 = vmax.f32 %v1454, %v1455
      %v1457 = vsel %vm1225, %v1040, -inf
      %v1458 = vrot.slane %v1457, 4
      %v1459 = vmax.f32 %v1457, %v1458
      %v1460 = vrot.slane %v1459, 2
      %v1461 = vmax.f32 %v1459, %v1460
      %v1462 = vrot.slane %v1461, 1
      %v1463 = vmax.f32 %v1461, %v1462
      %v1464 = vsel %vm1225, %v1039, -inf
      %v1465 = vrot.slane %v1464, 4
      %v1466 = vmax.f32 %v1464, %v1465
      %v1467 = vrot.slane %v1466, 2
      %v1468 = vmax.f32 %v1466, %v1467
      %v1469 = vrot.slane %v1468, 1
      %v1470 = vmax.f32 %v1468, %v1469
      %v1471 = vsel %vm1225, %v1041, -inf
      %v1472 = vrot.slane %v1471, 4
      %v1473 = vmax.f32 %v1471, %v1472
      %v1474 = vrot.slane %v1473, 2
      %v1475 = vmax.f32 %v1473, %v1474
      %v1476 = vrot.slane %v1475, 1
      %v1477 = vmax.f32 %v1475, %v1476
      %v1478 = vsel %vm1225, %v1049, -inf
      %v1479 = vrot.slane %v1478, 4
      %v1480 = vmax.f32 %v1478, %v1479
      %v1481 = vrot.slane %v1480, 2
      %v1482 = vmax.f32 %v1480, %v1481
      %v1483 = vrot.slane %v1482, 1
      %v1484 = vmax.f32 %v1482, %v1483
      %v1485 = vsel %vm1225, %v1057, -inf
      %v1486 = vrot.slane %v1485, 4
      %v1487 = vmax.f32 %v1485, %v1486
      %v1488 = vrot.slane %v1487, 2
      %v1489 = vmax.f32 %v1487, %v1488
      %v1490 = vrot.slane %v1489, 1
      %v1491 = vmax.f32 %v1489, %v1490
      %v1492 = vsel %vm1225, %v1056, -inf
      %v1493 = vrot.slane %v1492, 4
      %v1494 = vmax.f32 %v1492, %v1493
      %v1495 = vrot.slane %v1494, 2
      %v1496 = vmax.f32 %v1494, %v1495
      %v1497 = vrot.slane %v1496, 1
      %v1498 = vmax.f32 %v1496, %v1497
      %v1499 = vsel %vm1225, %v1058, -inf
      %v1500 = vrot.slane %v1499, 4
      %v1501 = vmax.f32 %v1499, %v1500
      %v1502 = vrot.slane %v1501, 2
      %v1503 = vmax.f32 %v1501, %v1502
      %v1504 = vrot.slane %v1503, 1
      %v1505 = vmax.f32 %v1503, %v1504
      %v1506 = vsel %vm1225, %v1066, -inf
      %v1507 = vrot.slane %v1506, 4
      %v1508 = vmax.f32 %v1506, %v1507
      %v1509 = vrot.slane %v1508, 2
      %v1510 = vmax.f32 %v1508, %v1509
      %v1511 = vrot.slane %v1510, 1
      %v1512 = vmax.f32 %v1510, %v1511
      %v1513 = vsel %vm1225, %v1074, -inf
      %v1514 = vrot.slane %v1513, 4
      %v1515 = vmax.f32 %v1513, %v1514
      %v1516 = vrot.slane %v1515, 2
      %v1517 = vmax.f32 %v1515, %v1516
      %v1518 = vrot.slane %v1517, 1
      %v1519 = vmax.f32 %v1517, %v1518
      %v1520 = vsel %vm1225, %v1073, -inf
      %v1521 = vrot.slane %v1520, 4
      %v1522 = vmax.f32 %v1520, %v1521
      %v1523 = vrot.slane %v1522, 2
      %v1524 = vmax.f32 %v1522, %v1523
      %v1525 = vrot.slane %v1524, 1
      %v1526 = vmax.f32 %v1524, %v1525
      %v1527 = vsel %vm1225, %v1075, -inf
      %v1528 = vrot.slane %v1527, 4
      %v1529 = vmax.f32 %v1527, %v1528
      %v1530 = vrot.slane %v1529, 2
      %v1531 = vmax.f32 %v1529, %v1530
      %v1532 = vrot.slane %v1531, 1
      %v1533 = vmax.f32 %v1531, %v1532
      %v1534 = vsel %vm1225, %v1083, -inf
      %v1535 = vrot.slane %v1534, 4
      %v1536 = vmax.f32 %v1534, %v1535
      %v1537 = vrot.slane %v1536, 2
      %v1538 = vmax.f32 %v1536, %v1537
      %v1539 = vrot.slane %v1538, 1
      %v1540 = vmax.f32 %v1538, %v1539
      %v1541 = vsel %vm1225, %v1091, -inf
      %v1542 = vrot.slane %v1541, 4
      %v1543 = vmax.f32 %v1541, %v1542
      %v1544 = vrot.slane %v1543, 2
      %v1545 = vmax.f32 %v1543, %v1544
      %v1546 = vrot.slane %v1545, 1
      %v1547 = vmax.f32 %v1545, %v1546
      %v1548 = vsel %vm1225, %v1090, -inf
      %v1549 = vrot.slane %v1548, 4
      %v1550 = vmax.f32 %v1548, %v1549
      %v1551 = vrot.slane %v1550, 2
      %v1552 = vmax.f32 %v1550, %v1551
      %v1553 = vrot.slane %v1552, 1
      %v1554 = vmax.f32 %v1552, %v1553
      %v1555 = vsel %vm1225, %v1092, -inf
      %v1556 = vrot.slane %v1555, 4
      %v1557 = vmax.f32 %v1555, %v1556
      %v1558 = vrot.slane %v1557, 2
      %v1559 = vmax.f32 %v1557, %v1558
      %v1560 = vrot.slane %v1559, 1
      %v1561 = vmax.f32 %v1559, %v1560
      %v1562 = vsel %vm1225, %v1100, -inf
      %v1563 = vrot.slane %v1562, 4
      %v1564 = vmax.f32 %v1562, %v1563
      %v1565 = vrot.slane %v1564, 2
      %v1566 = vmax.f32 %v1564, %v1565
      %v1567 = vrot.slane %v1566, 1
      %v1568 = vmax.f32 %v1566, %v1567
      %v1569 = vsel %vm1225, %v1108, -inf
      %v1570 = vrot.slane %v1569, 4
      %v1571 = vmax.f32 %v1569, %v1570
      %v1572 = vrot.slane %v1571, 2
      %v1573 = vmax.f32 %v1571, %v1572
      %v1574 = vrot.slane %v1573, 1
      %v1575 = vmax.f32 %v1573, %v1574
      %v1576 = vsel %vm1225, %v1107, -inf
      %v1577 = vrot.slane %v1576, 4
      %v1578 = vmax.f32 %v1576, %v1577
      %v1579 = vrot.slane %v1578, 2
      %v1580 = vmax.f32 %v1578, %v1579
      %v1581 = vrot.slane %v1580, 1
      %v1582 = vmax.f32 %v1580, %v1581
      %v1583 = vsel %vm1225, %v1109, -inf
      %v1584 = vrot.slane %v1583, 4
      %v1585 = vmax.f32 %v1583, %v1584
      %v1586 = vrot.slane %v1585, 2
      %v1587 = vmax.f32 %v1585, %v1586
      %v1588 = vrot.slane %v1587, 1
      %v1589 = vmax.f32 %v1587, %v1588
      %v1590 = vsel %vm1225, %v1117, -inf
      %v1591 = vrot.slane %v1590, 4
      %v1592 = vmax.f32 %v1590, %v1591
      %v1593 = vrot.slane %v1592, 2
      %v1594 = vmax.f32 %v1592, %v1593
      %v1595 = vrot.slane %v1594, 1
      %v1596 = vmax.f32 %v1594, %v1595
      %v1597 = vsel %vm1225, %v1125, -inf
      %v1598 = vrot.slane %v1597, 4
      %v1599 = vmax.f32 %v1597, %v1598
      %v1600 = vrot.slane %v1599, 2
      %v1601 = vmax.f32 %v1599, %v1600
      %v1602 = vrot.slane %v1601, 1
      %v1603 = vmax.f32 %v1601, %v1602
      %v1604 = vsel %vm1225, %v1124, -inf
      %v1605 = vrot.slane %v1604, 4
      %v1606 = vmax.f32 %v1604, %v1605
      %v1607 = vrot.slane %v1606, 2
      %v1608 = vmax.f32 %v1606, %v1607
      %v1609 = vrot.slane %v1608, 1
      %v1610 = vmax.f32 %v1608, %v1609
      %v1611 = vsel %vm1225, %v1126, -inf
      %v1612 = vrot.slane %v1611, 4
      %v1613 = vmax.f32 %v1611, %v1612
      %v1614 = vrot.slane %v1613, 2
      %v1615 = vmax.f32 %v1613, %v1614
      %v1616 = vrot.slane %v1615, 1
      %v1617 = vmax.f32 %v1615, %v1616
      %v1618 = vsel %vm1225, %v1134, -inf
      %v1619 = vrot.slane %v1618, 4
      %v1620 = vmax.f32 %v1618, %v1619
      %v1621 = vrot.slane %v1620, 2
      %v1622 = vmax.f32 %v1620, %v1621
      %v1623 = vrot.slane %v1622, 1
      %v1624 = vmax.f32 %v1622, %v1623
      %v1625 = vsel %vm1225, %v1142, -inf
      %v1626 = vrot.slane %v1625, 4
      %v1627 = vmax.f32 %v1625, %v1626
      %v1628 = vrot.slane %v1627, 2
      %v1629 = vmax.f32 %v1627, %v1628
      %v1630 = vrot.slane %v1629, 1
      %v1631 = vmax.f32 %v1629, %v1630
      %v1632 = vsel %vm1225, %v1141, -inf
      %v1633 = vrot.slane %v1632, 4
      %v1634 = vmax.f32 %v1632, %v1633
      %v1635 = vrot.slane %v1634, 2
      %v1636 = vmax.f32 %v1634, %v1635
      %v1637 = vrot.slane %v1636, 1
      %v1638 = vmax.f32 %v1636, %v1637
      %v1639 = vsel %vm1225, %v1143, -inf
      %v1640 = vrot.slane %v1639, 4
      %v1641 = vmax.f32 %v1639, %v1640
      %v1642 = vrot.slane %v1641, 2
      %v1643 = vmax.f32 %v1641, %v1642
      %v1644 = vrot.slane %v1643, 1
      %v1645 = vmax.f32 %v1643, %v1644
      %v1646 = vsel %vm1225, %v1151, -inf
      %v1647 = vrot.slane %v1646, 4
      %v1648 = vmax.f32 %v1646, %v1647
      %v1649 = vrot.slane %v1648, 2
      %v1650 = vmax.f32 %v1648, %v1649
      %v1651 = vrot.slane %v1650, 1
      %v1652 = vmax.f32 %v1650, %v1651
      %v1653 = vsel %vm1225, %v1159, -inf
      %v1654 = vrot.slane %v1653, 4
      %v1655 = vmax.f32 %v1653, %v1654
      %v1656 = vrot.slane %v1655, 2
      %v1657 = vmax.f32 %v1655, %v1656
      %v1658 = vrot.slane %v1657, 1
      %v1659 = vmax.f32 %v1657, %v1658
      %v1660 = vsel %vm1225, %v1158, -inf
      %v1661 = vrot.slane %v1660, 4
      %v1662 = vmax.f32 %v1660, %v1661
      %v1663 = vrot.slane %v1662, 2
      %v1664 = vmax.f32 %v1662, %v1663
      %v1665 = vrot.slane %v1664, 1
      %v1666 = vmax.f32 %v1664, %v1665
      %v1667 = vsel %vm1225, %v1160, -inf
      %v1668 = vrot.slane %v1667, 4
      %v1669 = vmax.f32 %v1667, %v1668
      %v1670 = vrot.slane %v1669, 2
      %v1671 = vmax.f32 %v1669, %v1670
      %v1672 = vrot.slane %v1671, 1
      %v1673 = vmax.f32 %v1671, %v1672
      %vm1674 = vcmask 326656
      %1675 = vst.msk [vmem:[#allocation2] sm:$0xff] %vm1674, 0.0
      %vm1676 = vcmask 322560
      %1677 = vst.msk [vmem:[#allocation2 + $0x8] sm:$0xf] %vm1676, 0.0
      %1678 = vst.msk [vmem:[#allocation2 + $0x10] sm:$0xff] %vm1674, 0.0
      %1679 = vst.msk [vmem:[#allocation2 + $0x18] sm:$0xf] %vm1676, 0.0
      %s1680 = scalar_lea.vmem [#allocation2], 160
      %1681 = vst.msk [vmem:[%s1680] sm:$0xff] %vm1674, 0.0
      %1682 = vst.msk [vmem:[%s1680 + $0x8] sm:$0xf] %vm1676, 0.0
      %1683 = vst.msk [vmem:[%s1680 + $0x10] sm:$0xff] %vm1674, 0.0
      %1684 = vst.msk [vmem:[%s1680 + $0x18] sm:$0xf] %vm1676, 0.0
      %s1685 = scalar_lea.vmem [#allocation2], 32
      %1686 = vst.msk [vmem:[%s1685] sm:$0x3] %vm1225, 0.0
      %1687 = vst.msk [vmem:[%s1685 + $0x10] sm:$0x3] %vm1225, 0.0
      %1688 = vst.msk [vmem:[%s1685 + $0x20] sm:$0x3] %vm1225, 0.0
      %1689 = vst.msk [vmem:[%s1685 + $0x30] sm:$0x3] %vm1225, 0.0
      %1690 = vst.msk [vmem:[%s1685 + $0x40] sm:$0x3] %vm1225, 0.0
      %1691 = vst.msk [vmem:[%s1685 + $0x50] sm:$0x3] %vm1225, 0.0
      %1692 = vst.msk [vmem:[%s1685 + $0x60] sm:$0x3] %vm1225, 0.0
      %1693 = vst.msk [vmem:[%s1685 + $0x70] sm:$0x3] %vm1225, 0.0
      %1694 = vst.msk [vmem:[%s1685 + $0xa] sm:$0x3] %vm1225, 0.0
      %1695 = vst.msk [vmem:[%s1685 + $0x1a] sm:$0x3] %vm1225, 0.0
      %1696 = vst.msk [vmem:[%s1685 + $0x2a] sm:$0x3] %vm1225, 0.0
      %1697 = vst.msk [vmem:[%s1685 + $0x3a] sm:$0x3] %vm1225, 0.0
      %1698 = vst.msk [vmem:[%s1685 + $0x4a] sm:$0x3] %vm1225, 0.0
      %1699 = vst.msk [vmem:[%s1685 + $0x5a] sm:$0x3] %vm1225, 0.0
      %1700 = vst.msk [vmem:[%s1685 + $0x6a] sm:$0x3] %vm1225, 0.0
      %1701 = vst.msk [vmem:[%s1685 + $0x7a] sm:$0x3] %vm1225, 0.0
      %vm1766 = vcmask 1041409
      %v1767 = vsel %vm1766, %v1239, %v1232
      %vm1768 = vcmask 1042434
      %v1769 = vsel %vm1768, %v1246, %v1767
      %vm1770 = vcmask 1043459
      %v1771 = vsel %vm1770, %v1253, %v1769
      %vm1772 = vcmask 1044484
      %v1773 = vsel %vm1772, %v1260, %v1771
      %vm1774 = vcmask 1045509
      %v1775 = vsel %vm1774, %v1267, %v1773
      %vm1776 = vcmask 1046534
      %v1777 = vsel %vm1776, %v1274, %v1775
      %vm1778 = vcmask 1047559
      %v1779 = vsel %vm1778, %v1281, %v1777
      %v1780 = vsel %vm1766, %v1295, %v1288
      %v1781 = vsel %vm1768, %v1302, %v1780
      %v1782 = vsel %vm1770, %v1309, %v1781
      %v1783 = vsel %vm1772, %v1316, %v1782
      %v1784 = vsel %vm1774, %v1323, %v1783
      %v1785 = vsel %vm1776, %v1330, %v1784
      %v1786 = vsel %vm1778, %v1337, %v1785
      %v1787 = vsel %vm1766, %v1351, %v1344
      %v1788 = vsel %vm1768, %v1358, %v1787
      %v1789 = vsel %vm1770, %v1365, %v1788
      %v1790 = vsel %vm1772, %v1372, %v1789
      %v1791 = vsel %vm1774, %v1379, %v1790
      %v1792 = vsel %vm1776, %v1386, %v1791
      %v1793 = vsel %vm1778, %v1393, %v1792
      %v1794 = vsel %vm1766, %v1407, %v1400
      %v1795 = vsel %vm1768, %v1414, %v1794
      %v1796 = vsel %vm1770, %v1421, %v1795
      %v1797 = vsel %vm1772, %v1428, %v1796
      %v1798 = vsel %vm1774, %v1435, %v1797
      %v1799 = vsel %vm1776, %v1442, %v1798
      %v1800 = vsel %vm1778, %v1449, %v1799
      %v1801 = vsel %vm1766, %v1463, %v1456
      %v1802 = vsel %vm1768, %v1470, %v1801
      %v1803 = vsel %vm1770, %v1477, %v1802
      %v1804 = vsel %vm1772, %v1484, %v1803
      %v1805 = vsel %vm1774, %v1491, %v1804
      %v1806 = vsel %vm1776, %v1498, %v1805
      %v1807 = vsel %vm1778, %v1505, %v1806
      %v1808 = vsel %vm1766, %v1519, %v1512
      %v1809 = vsel %vm1768, %v1526, %v1808
      %v1810 = vsel %vm1770, %v1533, %v1809
      %v1811 = vsel %vm1772, %v1540, %v1810
      %v1812 = vsel %vm1774, %v1547, %v1811
      %v1813 = vsel %vm1776, %v1554, %v1812
      %v1814 = vsel %vm1778, %v1561, %v1813
      %v1815 = vsel %vm1766, %v1575, %v1568
      %v1816 = vsel %vm1768, %v1582, %v1815
      %v1817 = vsel %vm1770, %v1589, %v1816
      %v1818 = vsel %vm1772, %v1596, %v1817
      %v1819 = vsel %vm1774, %v1603, %v1818
      %v1820 = vsel %vm1776, %v1610, %v1819
      %v1821 = vsel %vm1778, %v1617, %v1820
      %v1822 = vsel %vm1766, %v1631, %v1624
      %v1823 = vsel %vm1768, %v1638, %v1822
      %v1824 = vsel %vm1770, %v1645, %v1823
      %v1825 = vsel %vm1772, %v1652, %v1824
      %v1826 = vsel %vm1774, %v1659, %v1825
      %v1827 = vsel %vm1776, %v1666, %v1826
      %v1828 = vsel %vm1778, %v1673, %v1827
      %1837 = vst.msk [vmem:[%s1685 + $0x2] sm:$0xff] %vm1674, %v1779
      %1838 = vst.msk [vmem:[%s1685 + $0x12] sm:$0xff] %vm1674, %v1786
      %1839 = vst.msk [vmem:[%s1685 + $0x22] sm:$0xff] %vm1674, %v1793
      %1840 = vst.msk [vmem:[%s1685 + $0x32] sm:$0xff] %vm1674, %v1800
      %1841 = vst.msk [vmem:[%s1685 + $0x42] sm:$0xff] %vm1674, %v1807
      %1842 = vst.msk [vmem:[%s1685 + $0x52] sm:$0xff] %vm1674, %v1814
      %1843 = vst.msk [vmem:[%s1685 + $0x62] sm:$0xff] %vm1674, %v1821
      %1844 = vst.msk [vmem:[%s1685 + $0x72] sm:$0xff] %vm1674, %v1828
      %v1845 = vld [vmem:[#allocation2] sm:$0xff]
      %v1846 = vld [vmem:[#allocation2 + $0x10] sm:$0xff]
      %v1847 = vld [vmem:[#allocation2 + $0x20] sm:$0xff]
      %v1848 = vld [vmem:[#allocation2 + $0x30] sm:$0xff]
      %v1849 = vld [vmem:[#allocation2 + $0x40] sm:$0xff]
      %v1850 = vld [vmem:[#allocation2 + $0x50] sm:$0xff]
      %v1851 = vld [vmem:[#allocation2 + $0x60] sm:$0xff]
      %v1852 = vld [vmem:[#allocation2 + $0x70] sm:$0xff]
      %v1853 = vld [vmem:[%s3] sm:$0xff]
      %v1854 = vld [vmem:[%s3 + $0x8] sm:$0xff]
      %v1855 = vld [vmem:[%s3 + $0x10] sm:$0xff]
      %v1856 = vld [vmem:[%s3 + $0x18] sm:$0xff]
      %v1857 = vld [vmem:[%s3 + $0x20] sm:$0xff]
      %v1858 = vld [vmem:[#allocation2 + $0x2] sm:$0xff]
      %v1859 = vld [vmem:[#allocation2 + $0x12] sm:$0xff]
      %v1860 = vld [vmem:[#allocation2 + $0x22] sm:$0xff]
      %v1861 = vld [vmem:[#allocation2 + $0x32] sm:$0xff]
      %v1862 = vld [vmem:[#allocation2 + $0x42] sm:$0xff]
      %v1863 = vld [vmem:[#allocation2 + $0x52] sm:$0xff]
      %v1864 = vld [vmem:[#allocation2 + $0x62] sm:$0xff]
      %v1865 = vld [vmem:[#allocation2 + $0x72] sm:$0xff]
      %s1866 = scalar_lea.vmem %s3, 40
      %v1867 = vld [vmem:[%s1866] sm:$0xff]
      %v1868 = vld [vmem:[%s1866 + $0x8] sm:$0xff]
      %v1869 = vld [vmem:[%s1866 + $0x10] sm:$0xff]
      %v1870 = vld [vmem:[%s1866 + $0x18] sm:$0xff]
      %v1871 = vld [vmem:[%s1866 + $0x20] sm:$0xff]
      %v1873 = vsel %vm1674, %v1858, 0
      %v1876 = vsel %vm1674, %v1859, 0
      %v1879 = vsel %vm1674, %v1860, 0
      %v1882 = vsel %vm1674, %v1861, 0
      %v1885 = vsel %vm1674, %v1862, 0
      %v1888 = vsel %vm1674, %v1863, 0
      %v1891 = vsel %vm1674, %v1864, 0
      %v1894 = vsel %vm1674, %v1865, 0
      %1896 = vmatprep.subr.mxu0 0.0
      %1897 = vmatpush1.msra.mxu0 0.0
      %1898 = vmatprep.subr.mxu0 0.0
      %1899 = vmatpush1.msra.mxu0 0.0
      %1900 = vmatprep.subr.mxu0 0.0
      %1901 = vmatpush1.msra.mxu0 0.0
      %1902 = vmatprep.subr.mxu0 0.0
      %1903 = vmatpush1.msra.mxu0 0.0
      %1904 = vmatprep.subr.mxu0 0.0
      %1905 = vmatpush1.msra.mxu0 0.0
      %1906 = vmatprep.subr.mxu0 0.0
      %1907 = vmatpush1.msra.mxu0 0.0
      %1908 = vmatprep.subr.mxu0 0.0
      %1909 = vmatpush1.msra.mxu0 0.0
      %1910 = vmatprep.subr.mxu0 0.0
      %1911 = vmatpush1.msra.mxu0 0.0
      %1912 = vmatprep.subr.mxu0 0.0
      %1913 = vmatpush1.msra.mxu0 0.0
      %1914 = vmatprep.subr.mxu0 0.0
      %1915 = vmatpush1.msra.mxu0 0.0
      %1916 = vmatprep.subr.mxu0 0.0
      %1917 = vmatpush1.msra.mxu0 0.0
      %1918 = vmatprep.subr.mxu0 0.0
      %1919 = vmatpush1.msra.mxu0 %v1871
      %1920 = vmatprep.subr.mxu0 0.0
      %1921 = vmatpush1.msra.mxu0 %v1870
      %1922 = vmatprep.subr.mxu0 0.0
      %1923 = vmatpush1.msra.mxu0 %v1869
      %1924 = vmatprep.subr.mxu0 0.0
      %1925 = vmatpush1.msra.mxu0 %v1868
      %1926 = vmatprep.subr.mxu0 0.0
      %1927 = vmatpush1.msra.mxu0 %v1867
      %1928 = vmatprep.subr.mxu0 0.0
      %1929 = vmatpush2.msra.mxu0 0.0
      %1930 = vmatprep.subr.mxu0 0.0
      %1931 = vmatpush2.msra.mxu0 0.0
      %1932 = vmatprep.subr.mxu0 0.0
      %1933 = vmatpush2.msra.mxu0 0.0
      %1934 = vmatprep.subr.mxu0 0.0
      %1935 = vmatpush2.msra.mxu0 0.0
      %1936 = vmatprep.subr.mxu0 0.0
      %1937 = vmatpush2.msra.mxu0 0.0
      %1938 = vmatprep.subr.mxu0 0.0
      %1939 = vmatpush2.msra.mxu0 0.0
      %1940 = vmatprep.subr.mxu0 0.0
      %1941 = vmatpush2.msra.mxu0 0.0
      %1942 = vmatprep.subr.mxu0 0.0
      %1943 = vmatpush2.msra.mxu0 0.0
      %1944 = vmatprep.subr.mxu0 0.0
      %1945 = vmatpush2.msra.mxu0 0.0
      %1946 = vmatprep.subr.mxu0 0.0
      %1947 = vmatpush2.msra.mxu0 0.0
      %1948 = vmatprep.subr.mxu0 0.0
      %1949 = vmatpush2.msra.mxu0 0.0
      %1950 = vmatprep.subr.mxu0 0.0
      %1951 = vmatpush2.msra.mxu0 0.0
      %1952 = vmatprep.subr.mxu0 0.0
      %1953 = vmatpush2.msra.mxu0 0.0
      %1954 = vmatprep.subr.mxu0 0.0
      %1955 = vmatpush2.msra.mxu0 0.0
      %1956 = vmatprep.subr.mxu0 0.0
      %1957 = vmatpush2.msra.mxu0 0.0
      %1958 = vmatprep.subr.mxu0 0.0
      %1959 = vmatpush2.msra.mxu0 0.0
      %1960 = vmatprep.mubr.f32.mxu0 0.0
      %1961 = vmatmul.mubr.f32.gmra.mxu0 %v1873
      %v1962 = vpop.f32.mrf.mxu0
      %v1963 = vadd.f32 0.0, %v1962
      %v1964 = vpop.f32.mrf.mxu0
      %1965 = vmatprep.mubr.f32.mxu0 0.0
      %1966 = vmatmul.mubr.f32.gmra.mxu0 %v1876
      %v1967 = vpop.f32.mrf.mxu0
      %v1968 = vadd.f32 0.0, %v1967
      %v1969 = vpop.f32.mrf.mxu0
      %1970 = vmatprep.mubr.f32.mxu0 0.0
      %1971 = vmatmul.mubr.f32.gmra.mxu0 %v1879
      %v1972 = vpop.f32.mrf.mxu0
      %v1973 = vadd.f32 0.0, %v1972
      %v1974 = vpop.f32.mrf.mxu0
      %1975 = vmatprep.mubr.f32.mxu0 0.0
      %1976 = vmatmul.mubr.f32.gmra.mxu0 %v1882
      %v1977 = vpop.f32.mrf.mxu0
      %v1978 = vadd.f32 0.0, %v1977
      %v1979 = vpop.f32.mrf.mxu0
      %1980 = vmatprep.mubr.f32.mxu0 0.0
      %1981 = vmatmul.mubr.f32.gmra.mxu0 %v1885
      %v1982 = vpop.f32.mrf.mxu0
      %v1983 = vadd.f32 0.0, %v1982
      %v1984 = vpop.f32.mrf.mxu0
      %1985 = vmatprep.mubr.f32.mxu0 0.0
      %1986 = vmatmul.mubr.f32.gmra.mxu0 %v1888
      %v1987 = vpop.f32.mrf.mxu0
      %v1988 = vadd.f32 0.0, %v1987
      %v1989 = vpop.f32.mrf.mxu0
      %1990 = vmatprep.mubr.f32.mxu0 0.0
      %1991 = vmatmul.mubr.f32.gmra.mxu0 %v1891
      %v1992 = vpop.f32.mrf.mxu0
      %v1993 = vadd.f32 0.0, %v1992
      %v1994 = vpop.f32.mrf.mxu0
      %1995 = vmatprep.mubr.f32.mxu0 0.0
      %1996 = vmatmul.mubr.f32.gmra.mxu0 %v1894
      %v1997 = vpop.f32.mrf.mxu0
      %v1998 = vadd.f32 0.0, %v1997
      %v1999 = vpop.f32.mrf.mxu0
      %2000 = vdwg.mxu0
      %v2002 = vsel %vm1674, %v1845, 0
      %v2005 = vsel %vm1674, %v1846, 0
      %v2008 = vsel %vm1674, %v1847, 0
      %v2011 = vsel %vm1674, %v1848, 0
      %v2014 = vsel %vm1674, %v1849, 0
      %v2017 = vsel %vm1674, %v1850, 0
      %v2020 = vsel %vm1674, %v1851, 0
      %v2023 = vsel %vm1674, %v1852, 0
      %2025 = vmatprep.subr.mxu0 0.0
      %2026 = vmatpush1.msra.mxu0 0.0
      %2027 = vmatprep.subr.mxu0 0.0
      %2028 = vmatpush1.msra.mxu0 0.0
      %2029 = vmatprep.subr.mxu0 0.0
      %2030 = vmatpush1.msra.mxu0 0.0
      %2031 = vmatprep.subr.mxu0 0.0
      %2032 = vmatpush1.msra.mxu0 0.0
      %2033 = vmatprep.subr.mxu0 0.0
      %2034 = vmatpush1.msra.mxu0 0.0
      %2035 = vmatprep.subr.mxu0 0.0
      %2036 = vmatpush1.msra.mxu0 0.0
      %2037 = vmatprep.subr.mxu0 0.0
      %2038 = vmatpush1.msra.mxu0 0.0
      %2039 = vmatprep.subr.mxu0 0.0
      %2040 = vmatpush1.msra.mxu0 0.0
      %2041 = vmatprep.subr.mxu0 0.0
      %2042 = vmatpush1.msra.mxu0 0.0
      %2043 = vmatprep.subr.mxu0 0.0
      %2044 = vmatpush1.msra.mxu0 0.0
      %2045 = vmatprep.subr.mxu0 0.0
      %2046 = vmatpush1.msra.mxu0 0.0
      %2047 = vmatprep.subr.mxu0 0.0
      %2048 = vmatpush1.msra.mxu0 %v1857
      %2049 = vmatprep.subr.mxu0 0.0
      %2050 = vmatpush1.msra.mxu0 %v1856
      %2051 = vmatprep.subr.mxu0 0.0
      %2052 = vmatpush1.msra.mxu0 %v1855
      %2053 = vmatprep.subr.mxu0 0.0
      %2054 = vmatpush1.msra.mxu0 %v1854
      %2055 = vmatprep.subr.mxu0 0.0
      %2056 = vmatpush1.msra.mxu0 %v1853
      %2057 = vmatprep.subr.mxu0 0.0
      %2058 = vmatpush2.msra.mxu0 0.0
      %2059 = vmatprep.subr.mxu0 0.0
      %2060 = vmatpush2.msra.mxu0 0.0
      %2061 = vmatprep.subr.mxu0 0.0
      %2062 = vmatpush2.msra.mxu0 0.0
      %2063 = vmatprep.subr.mxu0 0.0
      %2064 = vmatpush2.msra.mxu0 0.0
      %2065 = vmatprep.subr.mxu0 0.0
      %2066 = vmatpush2.msra.mxu0 0.0
      %2067 = vmatprep.subr.mxu0 0.0
      %2068 = vmatpush2.msra.mxu0 0.0
      %2069 = vmatprep.subr.mxu0 0.0
      %2070 = vmatpush2.msra.mxu0 0.0
      %2071 = vmatprep.subr.mxu0 0.0
      %2072 = vmatpush2.msra.mxu0 0.0
      %2073 = vmatprep.subr.mxu0 0.0
      %2074 = vmatpush2.msra.mxu0 0.0
      %2075 = vmatprep.subr.mxu0 0.0
      %2076 = vmatpush2.msra.mxu0 0.0
      %2077 = vmatprep.subr.mxu0 0.0
      %2078 = vmatpush2.msra.mxu0 0.0
      %2079 = vmatprep.subr.mxu0 0.0
      %2080 = vmatpush2.msra.mxu0 0.0
      %2081 = vmatprep.subr.mxu0 0.0
      %2082 = vmatpush2.msra.mxu0 0.0
      %2083 = vmatprep.subr.mxu0 0.0
      %2084 = vmatpush2.msra.mxu0 0.0
      %2085 = vmatprep.subr.mxu0 0.0
      %2086 = vmatpush2.msra.mxu0 0.0
      %2087 = vmatprep.subr.mxu0 0.0
      %2088 = vmatpush2.msra.mxu0 0.0
      %2089 = vmatprep.mubr.f32.mxu0 0.0
      %2090 = vmatmul.mubr.f32.gmra.mxu0 %v2002
      %v2091 = vpop.f32.mrf.mxu0
      %v2092 = vadd.f32 %v1963, %v2091
      %v2093 = vpop.f32.mrf.mxu0
      %2094 = vmatprep.mubr.f32.mxu0 0.0
      %2095 = vmatmul.mubr.f32.gmra.mxu0 %v2005
      %v2096 = vpop.f32.mrf.mxu0
      %v2097 = vadd.f32 %v1968, %v2096
      %v2098 = vpop.f32.mrf.mxu0
      %2099 = vmatprep.mubr.f32.mxu0 0.0
      %2100 = vmatmul.mubr.f32.gmra.mxu0 %v2008
      %v2101 = vpop.f32.mrf.mxu0
      %v2102 = vadd.f32 %v1973, %v2101
      %v2103 = vpop.f32.mrf.mxu0
      %2104 = vmatprep.mubr.f32.mxu0 0.0
      %2105 = vmatmul.mubr.f32.gmra.mxu0 %v2011
      %v2106 = vpop.f32.mrf.mxu0
      %v2107 = vadd.f32 %v1978, %v2106
      %v2108 = vpop.f32.mrf.mxu0
      %2109 = vmatprep.mubr.f32.mxu0 0.0
      %2110 = vmatmul.mubr.f32.gmra.mxu0 %v2014
      %v2111 = vpop.f32.mrf.mxu0
      %v2112 = vadd.f32 %v1983, %v2111
      %v2113 = vpop.f32.mrf.mxu0
      %2114 = vmatprep.mubr.f32.mxu0 0.0
      %2115 = vmatmul.mubr.f32.gmra.mxu0 %v2017
      %v2116 = vpop.f32.mrf.mxu0
      %v2117 = vadd.f32 %v1988, %v2116
      %v2118 = vpop.f32.mrf.mxu0
      %2119 = vmatprep.mubr.f32.mxu0 0.0
      %2120 = vmatmul.mubr.f32.gmra.mxu0 %v2020
      %v2121 = vpop.f32.mrf.mxu0
      %v2122 = vadd.f32 %v1993, %v2121
      %v2123 = vpop.f32.mrf.mxu0
      %2124 = vmatprep.mubr.f32.mxu0 0.0
      %2125 = vmatmul.mubr.f32.gmra.mxu0 %v2023
      %v2126 = vpop.f32.mrf.mxu0
      %v2127 = vadd.f32 %v1998, %v2126
      %v2128 = vpop.f32.mrf.mxu0
      %2129 = vdwg.mxu0
      %v2130 = vld [vmem:[#allocation2 + $0x4] sm:$0xff]
      %v2131 = vld [vmem:[#allocation2 + $0x14] sm:$0xff]
      %v2132 = vld [vmem:[#allocation2 + $0x24] sm:$0xff]
      %v2133 = vld [vmem:[#allocation2 + $0x34] sm:$0xff]
      %v2134 = vld [vmem:[#allocation2 + $0x44] sm:$0xff]
      %v2135 = vld [vmem:[#allocation2 + $0x54] sm:$0xff]
      %v2136 = vld [vmem:[#allocation2 + $0x64] sm:$0xff]
      %v2137 = vld [vmem:[#allocation2 + $0x74] sm:$0xff]
      %s2138 = scalar_lea.vmem %s3, 80
      %v2139 = vld [vmem:[%s2138] sm:$0xff]
      %v2140 = vld [vmem:[%s2138 + $0x8] sm:$0xff]
      %v2141 = vld [vmem:[%s2138 + $0x10] sm:$0xff]
      %v2142 = vld [vmem:[%s2138 + $0x18] sm:$0xff]
      %v2143 = vld [vmem:[%s2138 + $0x20] sm:$0xff]
      %v2145 = vsel %vm1674, %v2130, 0
      %v2148 = vsel %vm1674, %v2131, 0
      %v2151 = vsel %vm1674, %v2132, 0
      %v2154 = vsel %vm1674, %v2133, 0
      %v2157 = vsel %vm1674, %v2134, 0
      %v2160 = vsel %vm1674, %v2135, 0
      %v2163 = vsel %vm1674, %v2136, 0
      %v2166 = vsel %vm1674, %v2137, 0
      %2168 = vmatprep.subr.mxu0 0.0
      %2169 = vmatpush1.msra.mxu0 0.0
      %2170 = vmatprep.subr.mxu0 0.0
      %2171 = vmatpush1.msra.mxu0 0.0
      %2172 = vmatprep.subr.mxu0 0.0
      %2173 = vmatpush1.msra.mxu0 0.0
      %2174 = vmatprep.subr.mxu0 0.0
      %2175 = vmatpush1.msra.mxu0 0.0
      %2176 = vmatprep.subr.mxu0 0.0
      %2177 = vmatpush1.msra.mxu0 0.0
      %2178 = vmatprep.subr.mxu0 0.0
      %2179 = vmatpush1.msra.mxu0 0.0
      %2180 = vmatprep.subr.mxu0 0.0
      %2181 = vmatpush1.msra.mxu0 0.0
      %2182 = vmatprep.subr.mxu0 0.0
      %2183 = vmatpush1.msra.mxu0 0.0
      %2184 = vmatprep.subr.mxu0 0.0
      %2185 = vmatpush1.msra.mxu0 0.0
      %2186 = vmatprep.subr.mxu0 0.0
      %2187 = vmatpush1.msra.mxu0 0.0
      %2188 = vmatprep.subr.mxu0 0.0
      %2189 = vmatpush1.msra.mxu0 0.0
      %2190 = vmatprep.subr.mxu0 0.0
      %2191 = vmatpush1.msra.mxu0 %v2143
      %2192 = vmatprep.subr.mxu0 0.0
      %2193 = vmatpush1.msra.mxu0 %v2142
      %2194 = vmatprep.subr.mxu0 0.0
      %2195 = vmatpush1.msra.mxu0 %v2141
      %2196 = vmatprep.subr.mxu0 0.0
      %2197 = vmatpush1.msra.mxu0 %v2140
      %2198 = vmatprep.subr.mxu0 0.0
      %2199 = vmatpush1.msra.mxu0 %v2139
      %2200 = vmatprep.subr.mxu0 0.0
      %2201 = vmatpush2.msra.mxu0 0.0
      %2202 = vmatprep.subr.mxu0 0.0
      %2203 = vmatpush2.msra.mxu0 0.0
      %2204 = vmatprep.subr.mxu0 0.0
      %2205 = vmatpush2.msra.mxu0 0.0
      %2206 = vmatprep.subr.mxu0 0.0
      %2207 = vmatpush2.msra.mxu0 0.0
      %2208 = vmatprep.subr.mxu0 0.0
      %2209 = vmatpush2.msra.mxu0 0.0
      %2210 = vmatprep.subr.mxu0 0.0
      %2211 = vmatpush2.msra.mxu0 0.0
      %2212 = vmatprep.subr.mxu0 0.0
      %2213 = vmatpush2.msra.mxu0 0.0
      %2214 = vmatprep.subr.mxu0 0.0
      %2215 = vmatpush2.msra.mxu0 0.0
      %2216 = vmatprep.subr.mxu0 0.0
      %2217 = vmatpush2.msra.mxu0 0.0
      %2218 = vmatprep.subr.mxu0 0.0
      %2219 = vmatpush2.msra.mxu0 0.0
      %2220 = vmatprep.subr.mxu0 0.0
      %2221 = vmatpush2.msra.mxu0 0.0
      %2222 = vmatprep.subr.mxu0 0.0
      %2223 = vmatpush2.msra.mxu0 0.0
      %2224 = vmatprep.subr.mxu0 0.0
      %2225 = vmatpush2.msra.mxu0 0.0
      %2226 = vmatprep.subr.mxu0 0.0
      %2227 = vmatpush2.msra.mxu0 0.0
      %2228 = vmatprep.subr.mxu0 0.0
      %2229 = vmatpush2.msra.mxu0 0.0
      %2230 = vmatprep.subr.mxu0 0.0
      %2231 = vmatpush2.msra.mxu0 0.0
      %2232 = vmatprep.mubr.f32.mxu0 0.0
      %2233 = vmatmul.mubr.f32.gmra.mxu0 %v2145
      %v2234 = vpop.f32.mrf.mxu0
      %v2235 = vadd.f32 0.0, %v2234
      %v2236 = vpop.f32.mrf.mxu0
      %2237 = vmatprep.mubr.f32.mxu0 0.0
      %2238 = vmatmul.mubr.f32.gmra.mxu0 %v2148
      %v2239 = vpop.f32.mrf.mxu0
      %v2240 = vadd.f32 0.0, %v2239
      %v2241 = vpop.f32.mrf.mxu0
      %2242 = vmatprep.mubr.f32.mxu0 0.0
      %2243 = vmatmul.mubr.f32.gmra.mxu0 %v2151
      %v2244 = vpop.f32.mrf.mxu0
      %v2245 = vadd.f32 0.0, %v2244
      %v2246 = vpop.f32.mrf.mxu0
      %2247 = vmatprep.mubr.f32.mxu0 0.0
      %2248 = vmatmul.mubr.f32.gmra.mxu0 %v2154
      %v2249 = vpop.f32.mrf.mxu0
      %v2250 = vadd.f32 0.0, %v2249
      %v2251 = vpop.f32.mrf.mxu0
      %2252 = vmatprep.mubr.f32.mxu0 0.0
      %2253 = vmatmul.mubr.f32.gmra.mxu0 %v2157
      %v2254 = vpop.f32.mrf.mxu0
      %v2255 = vadd.f32 0.0, %v2254
      %v2256 = vpop.f32.mrf.mxu0
      %2257 = vmatprep.mubr.f32.mxu0 0.0
      %2258 = vmatmul.mubr.f32.gmra.mxu0 %v2160
      %v2259 = vpop.f32.mrf.mxu0
      %v2260 = vadd.f32 0.0, %v2259
      %v2261 = vpop.f32.mrf.mxu0
      %2262 = vmatprep.mubr.f32.mxu0 0.0
      %2263 = vmatmul.mubr.f32.gmra.mxu0 %v2163
      %v2264 = vpop.f32.mrf.mxu0
      %v2265 = vadd.f32 0.0, %v2264
      %v2266 = vpop.f32.mrf.mxu0
      %2267 = vmatprep.mubr.f32.mxu0 0.0
      %2268 = vmatmul.mubr.f32.gmra.mxu0 %v2166
      %v2269 = vpop.f32.mrf.mxu0
      %v2270 = vadd.f32 0.0, %v2269
      %v2271 = vpop.f32.mrf.mxu0
      %2272 = vdwg.mxu0
      %v2273 = vadd.f32 %v2092, %v2235
      %v2274 = vadd.f32 %v2097, %v2240
      %v2275 = vadd.f32 %v2102, %v2245
      %v2276 = vadd.f32 %v2107, %v2250
      %v2277 = vadd.f32 %v2112, %v2255
      %v2278 = vadd.f32 %v2117, %v2260
      %v2279 = vadd.f32 %v2122, %v2265
      %v2280 = vadd.f32 %v2127, %v2270
      %v2281 = vld [vmem:[%s1685] sm:$0xff]
      %v2282 = vld [vmem:[%s1685 + $0x10] sm:$0xff]
      %v2283 = vld [vmem:[%s1685 + $0x20] sm:$0xff]
      %v2284 = vld [vmem:[%s1685 + $0x30] sm:$0xff]
      %v2285 = vld [vmem:[%s1685 + $0x40] sm:$0xff]
      %v2286 = vld [vmem:[%s1685 + $0x50] sm:$0xff]
      %v2287 = vld [vmem:[%s1685 + $0x60] sm:$0xff]
      %v2288 = vld [vmem:[%s1685 + $0x70] sm:$0xff]
      %s2289 = scalar_lea.vmem %s3, 120
      %v2290 = vld [vmem:[%s2289] sm:$0xff]
      %v2291 = vld [vmem:[%s2289 + $0x8] sm:$0xff]
      %v2292 = vld [vmem:[%s2289 + $0x10] sm:$0xff]
      %v2293 = vld [vmem:[%s2289 + $0x18] sm:$0xff]
      %v2294 = vld [vmem:[%s2289 + $0x20] sm:$0xff]
      %v2296 = vsel %vm1674, %v2281, 0
      %v2299 = vsel %vm1674, %v2282, 0
      %v2302 = vsel %vm1674, %v2283, 0
      %v2305 = vsel %vm1674, %v2284, 0
      %v2308 = vsel %vm1674, %v2285, 0
      %v2311 = vsel %vm1674, %v2286, 0
      %v2314 = vsel %vm1674, %v2287, 0
      %v2317 = vsel %vm1674, %v2288, 0
      %2319 = vmatprep.subr.mxu0 0.0
      %2320 = vmatpush1.msra.mxu0 0.0
      %2321 = vmatprep.subr.mxu0 0.0
      %2322 = vmatpush1.msra.mxu0 0.0
      %2323 = vmatprep.subr.mxu0 0.0
      %2324 = vmatpush1.msra.mxu0 0.0
      %2325 = vmatprep.subr.mxu0 0.0
      %2326 = vmatpush1.msra.mxu0 0.0
      %2327 = vmatprep.subr.mxu0 0.0
      %2328 = vmatpush1.msra.mxu0 0.0
      %2329 = vmatprep.subr.mxu0 0.0
      %2330 = vmatpush1.msra.mxu0 0.0
      %2331 = vmatprep.subr.mxu0 0.0
      %2332 = vmatpush1.msra.mxu0 0.0
      %2333 = vmatprep.subr.mxu0 0.0
      %2334 = vmatpush1.msra.mxu0 0.0
      %2335 = vmatprep.subr.mxu0 0.0
      %2336 = vmatpush1.msra.mxu0 0.0
      %2337 = vmatprep.subr.mxu0 0.0
      %2338 = vmatpush1.msra.mxu0 0.0
      %2339 = vmatprep.subr.mxu0 0.0
      %2340 = vmatpush1.msra.mxu0 0.0
      %2341 = vmatprep.subr.mxu0 0.0
      %2342 = vmatpush1.msra.mxu0 %v2294
      %2343 = vmatprep.subr.mxu0 0.0
      %2344 = vmatpush1.msra.mxu0 %v2293
      %2345 = vmatprep.subr.mxu0 0.0
      %2346 = vmatpush1.msra.mxu0 %v2292
      %2347 = vmatprep.subr.mxu0 0.0
      %2348 = vmatpush1.msra.mxu0 %v2291
      %2349 = vmatprep.subr.mxu0 0.0
      %2350 = vmatpush1.msra.mxu0 %v2290
      %2351 = vmatprep.subr.mxu0 0.0
      %2352 = vmatpush2.msra.mxu0 0.0
      %2353 = vmatprep.subr.mxu0 0.0
      %2354 = vmatpush2.msra.mxu0 0.0
      %2355 = vmatprep.subr.mxu0 0.0
      %2356 = vmatpush2.msra.mxu0 0.0
      %2357 = vmatprep.subr.mxu0 0.0
      %2358 = vmatpush2.msra.mxu0 0.0
      %2359 = vmatprep.subr.mxu0 0.0
      %2360 = vmatpush2.msra.mxu0 0.0
      %2361 = vmatprep.subr.mxu0 0.0
      %2362 = vmatpush2.msra.mxu0 0.0
      %2363 = vmatprep.subr.mxu0 0.0
      %2364 = vmatpush2.msra.mxu0 0.0
      %2365 = vmatprep.subr.mxu0 0.0
      %2366 = vmatpush2.msra.mxu0 0.0
      %2367 = vmatprep.subr.mxu0 0.0
      %2368 = vmatpush2.msra.mxu0 0.0
      %2369 = vmatprep.subr.mxu0 0.0
      %2370 = vmatpush2.msra.mxu0 0.0
      %2371 = vmatprep.subr.mxu0 0.0
      %2372 = vmatpush2.msra.mxu0 0.0
      %2373 = vmatprep.subr.mxu0 0.0
      %2374 = vmatpush2.msra.mxu0 0.0
      %2375 = vmatprep.subr.mxu0 0.0
      %2376 = vmatpush2.msra.mxu0 0.0
      %2377 = vmatprep.subr.mxu0 0.0
      %2378 = vmatpush2.msra.mxu0 0.0
      %2379 = vmatprep.subr.mxu0 0.0
      %2380 = vmatpush2.msra.mxu0 0.0
      %2381 = vmatprep.subr.mxu0 0.0
      %2382 = vmatpush2.msra.mxu0 0.0
      %2383 = vmatprep.mubr.f32.mxu0 0.0
      %2384 = vmatmul.mubr.f32.gmra.mxu0 %v2296
      %v2385 = vpop.f32.mrf.mxu0
      %v2386 = vadd.f32 0.0, %v2385
      %v2387 = vpop.f32.mrf.mxu0
      %2388 = vmatprep.mubr.f32.mxu0 0.0
      %2389 = vmatmul.mubr.f32.gmra.mxu0 %v2299
      %v2390 = vpop.f32.mrf.mxu0
      %v2391 = vadd.f32 0.0, %v2390
      %v2392 = vpop.f32.mrf.mxu0
      %2393 = vmatprep.mubr.f32.mxu0 0.0
      %2394 = vmatmul.mubr.f32.gmra.mxu0 %v2302
      %v2395 = vpop.f32.mrf.mxu0
      %v2396 = vadd.f32 0.0, %v2395
      %v2397 = vpop.f32.mrf.mxu0
      %2398 = vmatprep.mubr.f32.mxu0 0.0
      %2399 = vmatmul.mubr.f32.gmra.mxu0 %v2305
      %v2400 = vpop.f32.mrf.mxu0
      %v2401 = vadd.f32 0.0, %v2400
      %v2402 = vpop.f32.mrf.mxu0
      %2403 = vmatprep.mubr.f32.mxu0 0.0
      %2404 = vmatmul.mubr.f32.gmra.mxu0 %v2308
      %v2405 = vpop.f32.mrf.mxu0
      %v2406 = vadd.f32 0.0, %v2405
      %v2407 = vpop.f32.mrf.mxu0
      %2408 = vmatprep.mubr.f32.mxu0 0.0
      %2409 = vmatmul.mubr.f32.gmra.mxu0 %v2311
      %v2410 = vpop.f32.mrf.mxu0
      %v2411 = vadd.f32 0.0, %v2410
      %v2412 = vpop.f32.mrf.mxu0
      %2413 = vmatprep.mubr.f32.mxu0 0.0
      %2414 = vmatmul.mubr.f32.gmra.mxu0 %v2314
      %v2415 = vpop.f32.mrf.mxu0
      %v2416 = vadd.f32 0.0, %v2415
      %v2417 = vpop.f32.mrf.mxu0
      %2418 = vmatprep.mubr.f32.mxu0 0.0
      %2419 = vmatmul.mubr.f32.gmra.mxu0 %v2317
      %v2420 = vpop.f32.mrf.mxu0
      %v2421 = vadd.f32 0.0, %v2420
      %v2422 = vpop.f32.mrf.mxu0
      %2423 = vdwg.mxu0
      %v2424 = vadd.f32 %v2273, %v2386
      %v2425 = vadd.f32 %v2274, %v2391
      %v2426 = vadd.f32 %v2275, %v2396
      %v2427 = vadd.f32 %v2276, %v2401
      %v2428 = vadd.f32 %v2277, %v2406
      %v2429 = vadd.f32 %v2278, %v2411
      %v2430 = vadd.f32 %v2279, %v2416
      %v2431 = vadd.f32 %v2280, %v2421
      %v2432 = vld [vmem:[%s1685 + $0x2] sm:$0xff]
      %v2433 = vld [vmem:[%s1685 + $0x12] sm:$0xff]
      %v2434 = vld [vmem:[%s1685 + $0x22] sm:$0xff]
      %v2435 = vld [vmem:[%s1685 + $0x32] sm:$0xff]
      %v2436 = vld [vmem:[%s1685 + $0x42] sm:$0xff]
      %v2437 = vld [vmem:[%s1685 + $0x52] sm:$0xff]
      %v2438 = vld [vmem:[%s1685 + $0x62] sm:$0xff]
      %v2439 = vld [vmem:[%s1685 + $0x72] sm:$0xff]
      %s2440 = scalar_lea.vmem %s3, 160
      %v2441 = vld [vmem:[%s2440] sm:$0xff]
      %v2442 = vld [vmem:[%s2440 + $0x8] sm:$0xff]
      %v2443 = vld [vmem:[%s2440 + $0x10] sm:$0xff]
      %v2444 = vld [vmem:[%s2440 + $0x18] sm:$0xff]
      %v2445 = vld [vmem:[%s2440 + $0x20] sm:$0xff]
      %v2447 = vsel %vm1674, %v2432, 0
      %v2450 = vsel %vm1674, %v2433, 0
      %v2453 = vsel %vm1674, %v2434, 0
      %v2456 = vsel %vm1674, %v2435, 0
      %v2459 = vsel %vm1674, %v2436, 0
      %v2462 = vsel %vm1674, %v2437, 0
      %v2465 = vsel %vm1674, %v2438, 0
      %v2468 = vsel %vm1674, %v2439, 0
      %2470 = vmatprep.subr.mxu0 0.0
      %2471 = vmatpush1.msra.mxu0 0.0
      %2472 = vmatprep.subr.mxu0 0.0
      %2473 = vmatpush1.msra.mxu0 0.0
      %2474 = vmatprep.subr.mxu0 0.0
      %2475 = vmatpush1.msra.mxu0 0.0
      %2476 = vmatprep.subr.mxu0 0.0
      %2477 = vmatpush1.msra.mxu0 0.0
      %2478 = vmatprep.subr.mxu0 0.0
      %2479 = vmatpush1.msra.mxu0 0.0
      %2480 = vmatprep.subr.mxu0 0.0
      %2481 = vmatpush1.msra.mxu0 0.0
      %2482 = vmatprep.subr.mxu0 0.0
      %2483 = vmatpush1.msra.mxu0 0.0
      %2484 = vmatprep.subr.mxu0 0.0
      %2485 = vmatpush1.msra.mxu0 0.0
      %2486 = vmatprep.subr.mxu0 0.0
      %2487 = vmatpush1.msra.mxu0 0.0
      %2488 = vmatprep.subr.mxu0 0.0
      %2489 = vmatpush1.msra.mxu0 0.0
      %2490 = vmatprep.subr.mxu0 0.0
      %2491 = vmatpush1.msra.mxu0 0.0
      %2492 = vmatprep.subr.mxu0 0.0
      %2493 = vmatpush1.msra.mxu0 %v2445
      %2494 = vmatprep.subr.mxu0 0.0
      %2495 = vmatpush1.msra.mxu0 %v2444
      %2496 = vmatprep.subr.mxu0 0.0
      %2497 = vmatpush1.msra.mxu0 %v2443
      %2498 = vmatprep.subr.mxu0 0.0
      %2499 = vmatpush1.msra.mxu0 %v2442
      %2500 = vmatprep.subr.mxu0 0.0
      %2501 = vmatpush1.msra.mxu0 %v2441
      %2502 = vmatprep.subr.mxu0 0.0
      %2503 = vmatpush2.msra.mxu0 0.0
      %2504 = vmatprep.subr.mxu0 0.0
      %2505 = vmatpush2.msra.mxu0 0.0
      %2506 = vmatprep.subr.mxu0 0.0
      %2507 = vmatpush2.msra.mxu0 0.0
      %2508 = vmatprep.subr.mxu0 0.0
      %2509 = vmatpush2.msra.mxu0 0.0
      %2510 = vmatprep.subr.mxu0 0.0
      %2511 = vmatpush2.msra.mxu0 0.0
      %2512 = vmatprep.subr.mxu0 0.0
      %2513 = vmatpush2.msra.mxu0 0.0
      %2514 = vmatprep.subr.mxu0 0.0
      %2515 = vmatpush2.msra.mxu0 0.0
      %2516 = vmatprep.subr.mxu0 0.0
      %2517 = vmatpush2.msra.mxu0 0.0
      %2518 = vmatprep.subr.mxu0 0.0
      %2519 = vmatpush2.msra.mxu0 0.0
      %2520 = vmatprep.subr.mxu0 0.0
      %2521 = vmatpush2.msra.mxu0 0.0
      %2522 = vmatprep.subr.mxu0 0.0
      %2523 = vmatpush2.msra.mxu0 0.0
      %2524 = vmatprep.subr.mxu0 0.0
      %2525 = vmatpush2.msra.mxu0 0.0
      %2526 = vmatprep.subr.mxu0 0.0
      %2527 = vmatpush2.msra.mxu0 0.0
      %2528 = vmatprep.subr.mxu0 0.0
      %2529 = vmatpush2.msra.mxu0 0.0
      %2530 = vmatprep.subr.mxu0 0.0
      %2531 = vmatpush2.msra.mxu0 0.0
      %2532 = vmatprep.subr.mxu0 0.0
      %2533 = vmatpush2.msra.mxu0 0.0
      %2534 = vmatprep.mubr.f32.mxu0 0.0
      %2535 = vmatmul.mubr.f32.gmra.mxu0 %v2447
      %v2536 = vpop.f32.mrf.mxu0
      %v2537 = vadd.f32 0.0, %v2536
      %v2538 = vpop.f32.mrf.mxu0
      %2539 = vmatprep.mubr.f32.mxu0 0.0
      %2540 = vmatmul.mubr.f32.gmra.mxu0 %v2450
      %v2541 = vpop.f32.mrf.mxu0
      %v2542 = vadd.f32 0.0, %v2541
      %v2543 = vpop.f32.mrf.mxu0
      %2544 = vmatprep.mubr.f32.mxu0 0.0
      %2545 = vmatmul.mubr.f32.gmra.mxu0 %v2453
      %v2546 = vpop.f32.mrf.mxu0
      %v2547 = vadd.f32 0.0, %v2546
      %v2548 = vpop.f32.mrf.mxu0
      %2549 = vmatprep.mubr.f32.mxu0 0.0
      %2550 = vmatmul.mubr.f32.gmra.mxu0 %v2456
      %v2551 = vpop.f32.mrf.mxu0
      %v2552 = vadd.f32 0.0, %v2551
      %v2553 = vpop.f32.mrf.mxu0
      %2554 = vmatprep.mubr.f32.mxu0 0.0
      %2555 = vmatmul.mubr.f32.gmra.mxu0 %v2459
      %v2556 = vpop.f32.mrf.mxu0
      %v2557 = vadd.f32 0.0, %v2556
      %v2558 = vpop.f32.mrf.mxu0
      %2559 = vmatprep.mubr.f32.mxu0 0.0
      %2560 = vmatmul.mubr.f32.gmra.mxu0 %v2462
      %v2561 = vpop.f32.mrf.mxu0
      %v2562 = vadd.f32 0.0, %v2561
      %v2563 = vpop.f32.mrf.mxu0
      %2564 = vmatprep.mubr.f32.mxu0 0.0
      %2565 = vmatmul.mubr.f32.gmra.mxu0 %v2465
      %v2566 = vpop.f32.mrf.mxu0
      %v2567 = vadd.f32 0.0, %v2566
      %v2568 = vpop.f32.mrf.mxu0
      %2569 = vmatprep.mubr.f32.mxu0 0.0
      %2570 = vmatmul.mubr.f32.gmra.mxu0 %v2468
      %v2571 = vpop.f32.mrf.mxu0
      %v2572 = vadd.f32 0.0, %v2571
      %v2573 = vpop.f32.mrf.mxu0
      %2574 = vdwg.mxu0
      %v2575 = vadd.f32 %v2424, %v2537
      %v2576 = vadd.f32 %v2425, %v2542
      %v2577 = vadd.f32 %v2426, %v2547
      %v2578 = vadd.f32 %v2427, %v2552
      %v2579 = vadd.f32 %v2428, %v2557
      %v2580 = vadd.f32 %v2429, %v2562
      %v2581 = vadd.f32 %v2430, %v2567
      %v2582 = vadd.f32 %v2431, %v2572
      %v2583 = vld [vmem:[%s1685 + $0x4] sm:$0xff]
      %v2584 = vld [vmem:[%s1685 + $0x14] sm:$0xff]
      %v2585 = vld [vmem:[%s1685 + $0x24] sm:$0xff]
      %v2586 = vld [vmem:[%s1685 + $0x34] sm:$0xff]
      %v2587 = vld [vmem:[%s1685 + $0x44] sm:$0xff]
      %v2588 = vld [vmem:[%s1685 + $0x54] sm:$0xff]
      %v2589 = vld [vmem:[%s1685 + $0x64] sm:$0xff]
      %v2590 = vld [vmem:[%s1685 + $0x74] sm:$0xff]
      %s2591 = scalar_lea.vmem %s3, 200
      %v2592 = vld [vmem:[%s2591] sm:$0xff]
      %v2593 = vld [vmem:[%s2591 + $0x8] sm:$0xff]
      %v2594 = vld [vmem:[%s2591 + $0x10] sm:$0xff]
      %v2595 = vld [vmem:[%s2591 + $0x18] sm:$0xff]
      %v2596 = vld [vmem:[%s2591 + $0x20] sm:$0xff]
      %v2598 = vsel %vm1674, %v2583, 0
      %v2601 = vsel %vm1674, %v2584, 0
      %v2604 = vsel %vm1674, %v2585, 0
      %v2607 = vsel %vm1674, %v2586, 0
      %v2610 = vsel %vm1674, %v2587, 0
      %v2613 = vsel %vm1674, %v2588, 0
      %v2616 = vsel %vm1674, %v2589, 0
      %v2619 = vsel %vm1674, %v2590, 0
      %2621 = vmatprep.subr.mxu0 0.0
      %2622 = vmatpush1.msra.mxu0 0.0
      %2623 = vmatprep.subr.mxu0 0.0
      %2624 = vmatpush1.msra.mxu0 0.0
      %2625 = vmatprep.subr.mxu0 0.0
      %2626 = vmatpush1.msra.mxu0 0.0
      %2627 = vmatprep.subr.mxu0 0.0
      %2628 = vmatpush1.msra.mxu0 0.0
      %2629 = vmatprep.subr.mxu0 0.0
      %2630 = vmatpush1.msra.mxu0 0.0
      %2631 = vmatprep.subr.mxu0 0.0
      %2632 = vmatpush1.msra.mxu0 0.0
      %2633 = vmatprep.subr.mxu0 0.0
      %2634 = vmatpush1.msra.mxu0 0.0
      %2635 = vmatprep.subr.mxu0 0.0
      %2636 = vmatpush1.msra.mxu0 0.0
      %2637 = vmatprep.subr.mxu0 0.0
      %2638 = vmatpush1.msra.mxu0 0.0
      %2639 = vmatprep.subr.mxu0 0.0
      %2640 = vmatpush1.msra.mxu0 0.0
      %2641 = vmatprep.subr.mxu0 0.0
      %2642 = vmatpush1.msra.mxu0 0.0
      %2643 = vmatprep.subr.mxu0 0.0
      %2644 = vmatpush1.msra.mxu0 %v2596
      %2645 = vmatprep.subr.mxu0 0.0
      %2646 = vmatpush1.msra.mxu0 %v2595
      %2647 = vmatprep.subr.mxu0 0.0
      %2648 = vmatpush1.msra.mxu0 %v2594
      %2649 = vmatprep.subr.mxu0 0.0
      %2650 = vmatpush1.msra.mxu0 %v2593
      %2651 = vmatprep.subr.mxu0 0.0
      %2652 = vmatpush1.msra.mxu0 %v2592
      %2653 = vmatprep.subr.mxu0 0.0
      %2654 = vmatpush2.msra.mxu0 0.0
      %2655 = vmatprep.subr.mxu0 0.0
      %2656 = vmatpush2.msra.mxu0 0.0
      %2657 = vmatprep.subr.mxu0 0.0
      %2658 = vmatpush2.msra.mxu0 0.0
      %2659 = vmatprep.subr.mxu0 0.0
      %2660 = vmatpush2.msra.mxu0 0.0
      %2661 = vmatprep.subr.mxu0 0.0
      %2662 = vmatpush2.msra.mxu0 0.0
      %2663 = vmatprep.subr.mxu0 0.0
      %2664 = vmatpush2.msra.mxu0 0.0
      %2665 = vmatprep.subr.mxu0 0.0
      %2666 = vmatpush2.msra.mxu0 0.0
      %2667 = vmatprep.subr.mxu0 0.0
      %2668 = vmatpush2.msra.mxu0 0.0
      %2669 = vmatprep.subr.mxu0 0.0
      %2670 = vmatpush2.msra.mxu0 0.0
      %2671 = vmatprep.subr.mxu0 0.0
      %2672 = vmatpush2.msra.mxu0 0.0
      %2673 = vmatprep.subr.mxu0 0.0
      %2674 = vmatpush2.msra.mxu0 0.0
      %2675 = vmatprep.subr.mxu0 0.0
      %2676 = vmatpush2.msra.mxu0 0.0
      %2677 = vmatprep.subr.mxu0 0.0
      %2678 = vmatpush2.msra.mxu0 0.0
      %2679 = vmatprep.subr.mxu0 0.0
      %2680 = vmatpush2.msra.mxu0 0.0
      %2681 = vmatprep.subr.mxu0 0.0
      %2682 = vmatpush2.msra.mxu0 0.0
      %2683 = vmatprep.subr.mxu0 0.0
      %2684 = vmatpush2.msra.mxu0 0.0
      %2685 = vmatprep.mubr.f32.mxu0 0.0
      %2686 = vmatmul.mubr.f32.gmra.mxu0 %v2598
      %v2687 = vpop.f32.mrf.mxu0
      %v2688 = vadd.f32 0.0, %v2687
      %v2689 = vpop.f32.mrf.mxu0
      %2690 = vmatprep.mubr.f32.mxu0 0.0
      %2691 = vmatmul.mubr.f32.gmra.mxu0 %v2601
      %v2692 = vpop.f32.mrf.mxu0
      %v2693 = vadd.f32 0.0, %v2692
      %v2694 = vpop.f32.mrf.mxu0
      %2695 = vmatprep.mubr.f32.mxu0 0.0
      %2696 = vmatmul.mubr.f32.gmra.mxu0 %v2604
      %v2697 = vpop.f32.mrf.mxu0
      %v2698 = vadd.f32 0.0, %v2697
      %v2699 = vpop.f32.mrf.mxu0
      %2700 = vmatprep.mubr.f32.mxu0 0.0
      %2701 = vmatmul.mubr.f32.gmra.mxu0 %v2607
      %v2702 = vpop.f32.mrf.mxu0
      %v2703 = vadd.f32 0.0, %v2702
      %v2704 = vpop.f32.mrf.mxu0
      %2705 = vmatprep.mubr.f32.mxu0 0.0
      %2706 = vmatmul.mubr.f32.gmra.mxu0 %v2610
      %v2707 = vpop.f32.mrf.mxu0
      %v2708 = vadd.f32 0.0, %v2707
      %v2709 = vpop.f32.mrf.mxu0
      %2710 = vmatprep.mubr.f32.mxu0 0.0
      %2711 = vmatmul.mubr.f32.gmra.mxu0 %v2613
      %v2712 = vpop.f32.mrf.mxu0
      %v2713 = vadd.f32 0.0, %v2712
      %v2714 = vpop.f32.mrf.mxu0
      %2715 = vmatprep.mubr.f32.mxu0 0.0
      %2716 = vmatmul.mubr.f32.gmra.mxu0 %v2616
      %v2717 = vpop.f32.mrf.mxu0
      %v2718 = vadd.f32 0.0, %v2717
      %v2719 = vpop.f32.mrf.mxu0
      %2720 = vmatprep.mubr.f32.mxu0 0.0
      %2721 = vmatmul.mubr.f32.gmra.mxu0 %v2619
      %v2722 = vpop.f32.mrf.mxu0
      %v2723 = vadd.f32 0.0, %v2722
      %v2724 = vpop.f32.mrf.mxu0
      %2725 = vdwg.mxu0
      %v2726 = vadd.f32 %v2575, %v2688
      %v2727 = vadd.f32 %v2576, %v2693
      %v2728 = vadd.f32 %v2577, %v2698
      %v2729 = vadd.f32 %v2578, %v2703
      %v2730 = vadd.f32 %v2579, %v2708
      %v2731 = vadd.f32 %v2580, %v2713
      %v2732 = vadd.f32 %v2581, %v2718
      %v2733 = vadd.f32 %v2582, %v2723
      %s2734 = scalar_lea.vmem [#allocation2], 64
      %v2735 = vld [vmem:[%s2734] sm:$0xff]
      %v2736 = vld [vmem:[%s2734 + $0x10] sm:$0xff]
      %v2737 = vld [vmem:[%s2734 + $0x20] sm:$0xff]
      %v2738 = vld [vmem:[%s2734 + $0x30] sm:$0xff]
      %v2739 = vld [vmem:[%s2734 + $0x40] sm:$0xff]
      %v2740 = vld [vmem:[%s2734 + $0x50] sm:$0xff]
      %v2741 = vld [vmem:[%s2734 + $0x60] sm:$0xff]
      %v2742 = vld [vmem:[%s2734 + $0x70] sm:$0xff]
      %s2743 = scalar_lea.vmem %s3, 240
      %v2744 = vld [vmem:[%s2743] sm:$0xff]
      %v2745 = vld [vmem:[%s2743 + $0x8] sm:$0xff]
      %v2746 = vld [vmem:[%s2743 + $0x10] sm:$0xff]
      %v2747 = vld [vmem:[%s2743 + $0x18] sm:$0xff]
      %v2748 = vld [vmem:[%s2743 + $0x20] sm:$0xff]
      %v2750 = vsel %vm1674, %v2735, 0
      %v2753 = vsel %vm1674, %v2736, 0
      %v2756 = vsel %vm1674, %v2737, 0
      %v2759 = vsel %vm1674, %v2738, 0
      %v2762 = vsel %vm1674, %v2739, 0
      %v2765 = vsel %vm1674, %v2740, 0
      %v2768 = vsel %vm1674, %v2741, 0
      %v2771 = vsel %vm1674, %v2742, 0
      %2773 = vmatprep.subr.mxu0 0.0
      %2774 = vmatpush1.msra.mxu0 0.0
      %2775 = vmatprep.subr.mxu0 0.0
      %2776 = vmatpush1.msra.mxu0 0.0
      %2777 = vmatprep.subr.mxu0 0.0
      %2778 = vmatpush1.msra.mxu0 0.0
      %2779 = vmatprep.subr.mxu0 0.0
      %2780 = vmatpush1.msra.mxu0 0.0
      %2781 = vmatprep.subr.mxu0 0.0
      %2782 = vmatpush1.msra.mxu0 0.0
      %2783 = vmatprep.subr.mxu0 0.0
      %2784 = vmatpush1.msra.mxu0 0.0
      %2785 = vmatprep.subr.mxu0 0.0
      %2786 = vmatpush1.msra.mxu0 0.0
      %2787 = vmatprep.subr.mxu0 0.0
      %2788 = vmatpush1.msra.mxu0 0.0
      %2789 = vmatprep.subr.mxu0 0.0
      %2790 = vmatpush1.msra.mxu0 0.0
      %2791 = vmatprep.subr.mxu0 0.0
      %2792 = vmatpush1.msra.mxu0 0.0
      %2793 = vmatprep.subr.mxu0 0.0
      %2794 = vmatpush1.msra.mxu0 0.0
      %2795 = vmatprep.subr.mxu0 0.0
      %2796 = vmatpush1.msra.mxu0 %v2748
      %2797 = vmatprep.subr.mxu0 0.0
      %2798 = vmatpush1.msra.mxu0 %v2747
      %2799 = vmatprep.subr.mxu0 0.0
      %2800 = vmatpush1.msra.mxu0 %v2746
      %2801 = vmatprep.subr.mxu0 0.0
      %2802 = vmatpush1.msra.mxu0 %v2745
      %2803 = vmatprep.subr.mxu0 0.0
      %2804 = vmatpush1.msra.mxu0 %v2744
      %2805 = vmatprep.subr.mxu0 0.0
      %2806 = vmatpush2.msra.mxu0 0.0
      %2807 = vmatprep.subr.mxu0 0.0
      %2808 = vmatpush2.msra.mxu0 0.0
      %2809 = vmatprep.subr.mxu0 0.0
      %2810 = vmatpush2.msra.mxu0 0.0
      %2811 = vmatprep.subr.mxu0 0.0
      %2812 = vmatpush2.msra.mxu0 0.0
      %2813 = vmatprep.subr.mxu0 0.0
      %2814 = vmatpush2.msra.mxu0 0.0
      %2815 = vmatprep.subr.mxu0 0.0
      %2816 = vmatpush2.msra.mxu0 0.0
      %2817 = vmatprep.subr.mxu0 0.0
      %2818 = vmatpush2.msra.mxu0 0.0
      %2819 = vmatprep.subr.mxu0 0.0
      %2820 = vmatpush2.msra.mxu0 0.0
      %2821 = vmatprep.subr.mxu0 0.0
      %2822 = vmatpush2.msra.mxu0 0.0
      %2823 = vmatprep.subr.mxu0 0.0
      %2824 = vmatpush2.msra.mxu0 0.0
      %2825 = vmatprep.subr.mxu0 0.0
      %2826 = vmatpush2.msra.mxu0 0.0
      %2827 = vmatprep.subr.mxu0 0.0
      %2828 = vmatpush2.msra.mxu0 0.0
      %2829 = vmatprep.subr.mxu0 0.0
      %2830 = vmatpush2.msra.mxu0 0.0
      %2831 = vmatprep.subr.mxu0 0.0
      %2832 = vmatpush2.msra.mxu0 0.0
      %2833 = vmatprep.subr.mxu0 0.0
      %2834 = vmatpush2.msra.mxu0 0.0
      %2835 = vmatprep.subr.mxu0 0.0
      %2836 = vmatpush2.msra.mxu0 0.0
      %2837 = vmatprep.mubr.f32.mxu0 0.0
      %2838 = vmatmul.mubr.f32.gmra.mxu0 %v2750
      %v2839 = vpop.f32.mrf.mxu0
      %v2840 = vadd.f32 0.0, %v2839
      %v2841 = vpop.f32.mrf.mxu0
      %2842 = vmatprep.mubr.f32.mxu0 0.0
      %2843 = vmatmul.mubr.f32.gmra.mxu0 %v2753
      %v2844 = vpop.f32.mrf.mxu0
      %v2845 = vadd.f32 0.0, %v2844
      %v2846 = vpop.f32.mrf.mxu0
      %2847 = vmatprep.mubr.f32.mxu0 0.0
      %2848 = vmatmul.mubr.f32.gmra.mxu0 %v2756
      %v2849 = vpop.f32.mrf.mxu0
      %v2850 = vadd.f32 0.0, %v2849
      %v2851 = vpop.f32.mrf.mxu0
      %2852 = vmatprep.mubr.f32.mxu0 0.0
      %2853 = vmatmul.mubr.f32.gmra.mxu0 %v2759
      %v2854 = vpop.f32.mrf.mxu0
      %v2855 = vadd.f32 0.0, %v2854
      %v2856 = vpop.f32.mrf.mxu0
      %2857 = vmatprep.mubr.f32.mxu0 0.0
      %2858 = vmatmul.mubr.f32.gmra.mxu0 %v2762
      %v2859 = vpop.f32.mrf.mxu0
      %v2860 = vadd.f32 0.0, %v2859
      %v2861 = vpop.f32.mrf.mxu0
      %2862 = vmatprep.mubr.f32.mxu0 0.0
      %2863 = vmatmul.mubr.f32.gmra.mxu0 %v2765
      %v2864 = vpop.f32.mrf.mxu0
      %v2865 = vadd.f32 0.0, %v2864
      %v2866 = vpop.f32.mrf.mxu0
      %2867 = vmatprep.mubr.f32.mxu0 0.0
      %2868 = vmatmul.mubr.f32.gmra.mxu0 %v2768
      %v2869 = vpop.f32.mrf.mxu0
      %v2870 = vadd.f32 0.0, %v2869
      %v2871 = vpop.f32.mrf.mxu0
      %2872 = vmatprep.mubr.f32.mxu0 0.0
      %2873 = vmatmul.mubr.f32.gmra.mxu0 %v2771
      %v2874 = vpop.f32.mrf.mxu0
      %v2875 = vadd.f32 0.0, %v2874
      %v2876 = vpop.f32.mrf.mxu0
      %2877 = vdwg.mxu0
      %v2878 = vadd.f32 %v2726, %v2840
      %v2879 = vadd.f32 %v2727, %v2845
      %v2880 = vadd.f32 %v2728, %v2850
      %v2881 = vadd.f32 %v2729, %v2855
      %v2882 = vadd.f32 %v2730, %v2860
      %v2883 = vadd.f32 %v2731, %v2865
      %v2884 = vadd.f32 %v2732, %v2870
      %v2885 = vadd.f32 %v2733, %v2875
      %v2886 = vld [vmem:[%s2734 + $0x2] sm:$0xff]
      %v2887 = vld [vmem:[%s2734 + $0x12] sm:$0xff]
      %v2888 = vld [vmem:[%s2734 + $0x22] sm:$0xff]
      %v2889 = vld [vmem:[%s2734 + $0x32] sm:$0xff]
      %v2890 = vld [vmem:[%s2734 + $0x42] sm:$0xff]
      %v2891 = vld [vmem:[%s2734 + $0x52] sm:$0xff]
      %v2892 = vld [vmem:[%s2734 + $0x62] sm:$0xff]
      %v2893 = vld [vmem:[%s2734 + $0x72] sm:$0xff]
      %s2894 = scalar_lea.vmem %s3, 280
      %v2895 = vld [vmem:[%s2894] sm:$0xff]
      %v2896 = vld [vmem:[%s2894 + $0x8] sm:$0xff]
      %v2897 = vld [vmem:[%s2894 + $0x10] sm:$0xff]
      %v2898 = vld [vmem:[%s2894 + $0x18] sm:$0xff]
      %v2899 = vld [vmem:[%s2894 + $0x20] sm:$0xff]
      %v2901 = vsel %vm1674, %v2886, 0
      %v2904 = vsel %vm1674, %v2887, 0
      %v2907 = vsel %vm1674, %v2888, 0
      %v2910 = vsel %vm1674, %v2889, 0
      %v2913 = vsel %vm1674, %v2890, 0
      %v2916 = vsel %vm1674, %v2891, 0
      %v2919 = vsel %vm1674, %v2892, 0
      %v2922 = vsel %vm1674, %v2893, 0
      %2924 = vmatprep.subr.mxu0 0.0
      %2925 = vmatpush1.msra.mxu0 0.0
      %2926 = vmatprep.subr.mxu0 0.0
      %2927 = vmatpush1.msra.mxu0 0.0
      %2928 = vmatprep.subr.mxu0 0.0
      %2929 = vmatpush1.msra.mxu0 0.0
      %2930 = vmatprep.subr.mxu0 0.0
      %2931 = vmatpush1.msra.mxu0 0.0
      %2932 = vmatprep.subr.mxu0 0.0
      %2933 = vmatpush1.msra.mxu0 0.0
      %2934 = vmatprep.subr.mxu0 0.0
      %2935 = vmatpush1.msra.mxu0 0.0
      %2936 = vmatprep.subr.mxu0 0.0
      %2937 = vmatpush1.msra.mxu0 0.0
      %2938 = vmatprep.subr.mxu0 0.0
      %2939 = vmatpush1.msra.mxu0 0.0
      %2940 = vmatprep.subr.mxu0 0.0
      %2941 = vmatpush1.msra.mxu0 0.0
      %2942 = vmatprep.subr.mxu0 0.0
      %2943 = vmatpush1.msra.mxu0 0.0
      %2944 = vmatprep.subr.mxu0 0.0
      %2945 = vmatpush1.msra.mxu0 0.0
      %2946 = vmatprep.subr.mxu0 0.0
      %2947 = vmatpush1.msra.mxu0 %v2899
      %2948 = vmatprep.subr.mxu0 0.0
      %2949 = vmatpush1.msra.mxu0 %v2898
      %2950 = vmatprep.subr.mxu0 0.0
      %2951 = vmatpush1.msra.mxu0 %v2897
      %2952 = vmatprep.subr.mxu0 0.0
      %2953 = vmatpush1.msra.mxu0 %v2896
      %2954 = vmatprep.subr.mxu0 0.0
      %2955 = vmatpush1.msra.mxu0 %v2895
      %2956 = vmatprep.subr.mxu0 0.0
      %2957 = vmatpush2.msra.mxu0 0.0
      %2958 = vmatprep.subr.mxu0 0.0
      %2959 = vmatpush2.msra.mxu0 0.0
      %2960 = vmatprep.subr.mxu0 0.0
      %2961 = vmatpush2.msra.mxu0 0.0
      %2962 = vmatprep.subr.mxu0 0.0
      %2963 = vmatpush2.msra.mxu0 0.0
      %2964 = vmatprep.subr.mxu0 0.0
      %2965 = vmatpush2.msra.mxu0 0.0
      %2966 = vmatprep.subr.mxu0 0.0
      %2967 = vmatpush2.msra.mxu0 0.0
      %2968 = vmatprep.subr.mxu0 0.0
      %2969 = vmatpush2.msra.mxu0 0.0
      %2970 = vmatprep.subr.mxu0 0.0
      %2971 = vmatpush2.msra.mxu0 0.0
      %2972 = vmatprep.subr.mxu0 0.0
      %2973 = vmatpush2.msra.mxu0 0.0
      %2974 = vmatprep.subr.mxu0 0.0
      %2975 = vmatpush2.msra.mxu0 0.0
      %2976 = vmatprep.subr.mxu0 0.0
      %2977 = vmatpush2.msra.mxu0 0.0
      %2978 = vmatprep.subr.mxu0 0.0
      %2979 = vmatpush2.msra.mxu0 0.0
      %2980 = vmatprep.subr.mxu0 0.0
      %2981 = vmatpush2.msra.mxu0 0.0
      %2982 = vmatprep.subr.mxu0 0.0
      %2983 = vmatpush2.msra.mxu0 0.0
      %2984 = vmatprep.subr.mxu0 0.0
      %2985 = vmatpush2.msra.mxu0 0.0
      %2986 = vmatprep.subr.mxu0 0.0
      %2987 = vmatpush2.msra.mxu0 0.0
      %2988 = vmatprep.mubr.f32.mxu0 0.0
      %2989 = vmatmul.mubr.f32.gmra.mxu0 %v2901
      %v2990 = vpop.f32.mrf.mxu0
      %v2991 = vadd.f32 0.0, %v2990
      %v2992 = vpop.f32.mrf.mxu0
      %2993 = vmatprep.mubr.f32.mxu0 0.0
      %2994 = vmatmul.mubr.f32.gmra.mxu0 %v2904
      %v2995 = vpop.f32.mrf.mxu0
      %v2996 = vadd.f32 0.0, %v2995
      %v2997 = vpop.f32.mrf.mxu0
      %2998 = vmatprep.mubr.f32.mxu0 0.0
      %2999 = vmatmul.mubr.f32.gmra.mxu0 %v2907
      %v3000 = vpop.f32.mrf.mxu0
      %v3001 = vadd.f32 0.0, %v3000
      %v3002 = vpop.f32.mrf.mxu0
      %3003 = vmatprep.mubr.f32.mxu0 0.0
      %3004 = vmatmul.mubr.f32.gmra.mxu0 %v2910
      %v3005 = vpop.f32.mrf.mxu0
      %v3006 = vadd.f32 0.0, %v3005
      %v3007 = vpop.f32.mrf.mxu0
      %3008 = vmatprep.mubr.f32.mxu0 0.0
      %3009 = vmatmul.mubr.f32.gmra.mxu0 %v2913
      %v3010 = vpop.f32.mrf.mxu0
      %v3011 = vadd.f32 0.0, %v3010
      %v3012 = vpop.f32.mrf.mxu0
      %3013 = vmatprep.mubr.f32.mxu0 0.0
      %3014 = vmatmul.mubr.f32.gmra.mxu0 %v2916
      %v3015 = vpop.f32.mrf.mxu0
      %v3016 = vadd.f32 0.0, %v3015
      %v3017 = vpop.f32.mrf.mxu0
      %3018 = vmatprep.mubr.f32.mxu0 0.0
      %3019 = vmatmul.mubr.f32.gmra.mxu0 %v2919
      %v3020 = vpop.f32.mrf.mxu0
      %v3021 = vadd.f32 0.0, %v3020
      %v3022 = vpop.f32.mrf.mxu0
      %3023 = vmatprep.mubr.f32.mxu0 0.0
      %3024 = vmatmul.mubr.f32.gmra.mxu0 %v2922
      %v3025 = vpop.f32.mrf.mxu0
      %v3026 = vadd.f32 0.0, %v3025
      %v3027 = vpop.f32.mrf.mxu0
      %3028 = vdwg.mxu0
      %v3029 = vadd.f32 %v2878, %v2991
      %v3030 = vadd.f32 %v2879, %v2996
      %v3031 = vadd.f32 %v2880, %v3001
      %v3032 = vadd.f32 %v2881, %v3006
      %v3033 = vadd.f32 %v2882, %v3011
      %v3034 = vadd.f32 %v2883, %v3016
      %v3035 = vadd.f32 %v2884, %v3021
      %v3036 = vadd.f32 %v2885, %v3026
      %v3037 = vld [vmem:[%s2734 + $0x4] sm:$0xff]
      %v3038 = vld [vmem:[%s2734 + $0x14] sm:$0xff]
      %v3039 = vld [vmem:[%s2734 + $0x24] sm:$0xff]
      %v3040 = vld [vmem:[%s2734 + $0x34] sm:$0xff]
      %v3041 = vld [vmem:[%s2734 + $0x44] sm:$0xff]
      %v3042 = vld [vmem:[%s2734 + $0x54] sm:$0xff]
      %v3043 = vld [vmem:[%s2734 + $0x64] sm:$0xff]
      %v3044 = vld [vmem:[%s2734 + $0x74] sm:$0xff]
      %s3045 = scalar_lea.vmem %s3, 320
      %v3046 = vld [vmem:[%s3045] sm:$0xff]
      %v3047 = vld [vmem:[%s3045 + $0x8] sm:$0xff]
      %v3048 = vld [vmem:[%s3045 + $0x10] sm:$0xff]
      %v3049 = vld [vmem:[%s3045 + $0x18] sm:$0xff]
      %v3050 = vld [vmem:[%s3045 + $0x20] sm:$0xff]
      %v3052 = vsel %vm1674, %v3037, 0
      %v3055 = vsel %vm1674, %v3038, 0
      %v3058 = vsel %vm1674, %v3039, 0
      %v3061 = vsel %vm1674, %v3040, 0
      %v3064 = vsel %vm1674, %v3041, 0
      %v3067 = vsel %vm1674, %v3042, 0
      %v3070 = vsel %vm1674, %v3043, 0
      %v3073 = vsel %vm1674, %v3044, 0
      %3075 = vmatprep.subr.mxu0 0.0
      %3076 = vmatpush1.msra.mxu0 0.0
      %3077 = vmatprep.subr.mxu0 0.0
      %3078 = vmatpush1.msra.mxu0 0.0
      %3079 = vmatprep.subr.mxu0 0.0
      %3080 = vmatpush1.msra.mxu0 0.0
      %3081 = vmatprep.subr.mxu0 0.0
      %3082 = vmatpush1.msra.mxu0 0.0
      %3083 = vmatprep.subr.mxu0 0.0
      %3084 = vmatpush1.msra.mxu0 0.0
      %3085 = vmatprep.subr.mxu0 0.0
      %3086 = vmatpush1.msra.mxu0 0.0
      %3087 = vmatprep.subr.mxu0 0.0
      %3088 = vmatpush1.msra.mxu0 0.0
      %3089 = vmatprep.subr.mxu0 0.0
      %3090 = vmatpush1.msra.mxu0 0.0
      %3091 = vmatprep.subr.mxu0 0.0
      %3092 = vmatpush1.msra.mxu0 0.0
      %3093 = vmatprep.subr.mxu0 0.0
      %3094 = vmatpush1.msra.mxu0 0.0
      %3095 = vmatprep.subr.mxu0 0.0
      %3096 = vmatpush1.msra.mxu0 0.0
      %3097 = vmatprep.subr.mxu0 0.0
      %3098 = vmatpush1.msra.mxu0 %v3050
      %3099 = vmatprep.subr.mxu0 0.0
      %3100 = vmatpush1.msra.mxu0 %v3049
      %3101 = vmatprep.subr.mxu0 0.0
      %3102 = vmatpush1.msra.mxu0 %v3048
      %3103 = vmatprep.subr.mxu0 0.0
      %3104 = vmatpush1.msra.mxu0 %v3047
      %3105 = vmatprep.subr.mxu0 0.0
      %3106 = vmatpush1.msra.mxu0 %v3046
      %3107 = vmatprep.subr.mxu0 0.0
      %3108 = vmatpush2.msra.mxu0 0.0
      %3109 = vmatprep.subr.mxu0 0.0
      %3110 = vmatpush2.msra.mxu0 0.0
      %3111 = vmatprep.subr.mxu0 0.0
      %3112 = vmatpush2.msra.mxu0 0.0
      %3113 = vmatprep.subr.mxu0 0.0
      %3114 = vmatpush2.msra.mxu0 0.0
      %3115 = vmatprep.subr.mxu0 0.0
      %3116 = vmatpush2.msra.mxu0 0.0
      %3117 = vmatprep.subr.mxu0 0.0
      %3118 = vmatpush2.msra.mxu0 0.0
      %3119 = vmatprep.subr.mxu0 0.0
      %3120 = vmatpush2.msra.mxu0 0.0
      %3121 = vmatprep.subr.mxu0 0.0
      %3122 = vmatpush2.msra.mxu0 0.0
      %3123 = vmatprep.subr.mxu0 0.0
      %3124 = vmatpush2.msra.mxu0 0.0
      %3125 = vmatprep.subr.mxu0 0.0
      %3126 = vmatpush2.msra.mxu0 0.0
      %3127 = vmatprep.subr.mxu0 0.0
      %3128 = vmatpush2.msra.mxu0 0.0
      %3129 = vmatprep.subr.mxu0 0.0
      %3130 = vmatpush2.msra.mxu0 0.0
      %3131 = vmatprep.subr.mxu0 0.0
      %3132 = vmatpush2.msra.mxu0 0.0
      %3133 = vmatprep.subr.mxu0 0.0
      %3134 = vmatpush2.msra.mxu0 0.0
      %3135 = vmatprep.subr.mxu0 0.0
      %3136 = vmatpush2.msra.mxu0 0.0
      %3137 = vmatprep.subr.mxu0 0.0
      %3138 = vmatpush2.msra.mxu0 0.0
      %3139 = vmatprep.mubr.f32.mxu0 0.0
      %3140 = vmatmul.mubr.f32.gmra.mxu0 %v3052
      %v3141 = vpop.f32.mrf.mxu0
      %v3142 = vadd.f32 0.0, %v3141
      %v3143 = vpop.f32.mrf.mxu0
      %3144 = vmatprep.mubr.f32.mxu0 0.0
      %3145 = vmatmul.mubr.f32.gmra.mxu0 %v3055
      %v3146 = vpop.f32.mrf.mxu0
      %v3147 = vadd.f32 0.0, %v3146
      %v3148 = vpop.f32.mrf.mxu0
      %3149 = vmatprep.mubr.f32.mxu0 0.0
      %3150 = vmatmul.mubr.f32.gmra.mxu0 %v3058
      %v3151 = vpop.f32.mrf.mxu0
      %v3152 = vadd.f32 0.0, %v3151
      %v3153 = vpop.f32.mrf.mxu0
      %3154 = vmatprep.mubr.f32.mxu0 0.0
      %3155 = vmatmul.mubr.f32.gmra.mxu0 %v3061
      %v3156 = vpop.f32.mrf.mxu0
      %v3157 = vadd.f32 0.0, %v3156
      %v3158 = vpop.f32.mrf.mxu0
      %3159 = vmatprep.mubr.f32.mxu0 0.0
      %3160 = vmatmul.mubr.f32.gmra.mxu0 %v3064
      %v3161 = vpop.f32.mrf.mxu0
      %v3162 = vadd.f32 0.0, %v3161
      %v3163 = vpop.f32.mrf.mxu0
      %3164 = vmatprep.mubr.f32.mxu0 0.0
      %3165 = vmatmul.mubr.f32.gmra.mxu0 %v3067
      %v3166 = vpop.f32.mrf.mxu0
      %v3167 = vadd.f32 0.0, %v3166
      %v3168 = vpop.f32.mrf.mxu0
      %3169 = vmatprep.mubr.f32.mxu0 0.0
      %3170 = vmatmul.mubr.f32.gmra.mxu0 %v3070
      %v3171 = vpop.f32.mrf.mxu0
      %v3172 = vadd.f32 0.0, %v3171
      %v3173 = vpop.f32.mrf.mxu0
      %3174 = vmatprep.mubr.f32.mxu0 0.0
      %3175 = vmatmul.mubr.f32.gmra.mxu0 %v3073
      %v3176 = vpop.f32.mrf.mxu0
      %v3177 = vadd.f32 0.0, %v3176
      %v3178 = vpop.f32.mrf.mxu0
      %3179 = vdwg.mxu0
      %v3180 = vadd.f32 %v3029, %v3142
      %v3181 = vadd.f32 %v3030, %v3147
      %v3182 = vadd.f32 %v3031, %v3152
      %v3183 = vadd.f32 %v3032, %v3157
      %v3184 = vadd.f32 %v3033, %v3162
      %v3185 = vadd.f32 %v3034, %v3167
      %v3186 = vadd.f32 %v3035, %v3172
      %v3187 = vadd.f32 %v3036, %v3177
      %v3188 = vld [vmem:[%s4] sm:$0x1]
      %v3190 = vlaneseq
      %v3191 = vshrl.u32 %v3190, 7
      %v3192 = vsub.s32 0, %v3191
      %v3193 = vrot.slane %v3188, %v3192
      %v3195 = vadd.f32 %v3180, %v3193
      %v3196 = vadd.f32 %v3181, %v3193
      %v3197 = vadd.f32 %v3182, %v3193
      %v3198 = vadd.f32 %v3183, %v3193
      %v3199 = vadd.f32 %v3184, %v3193
      %v3200 = vadd.f32 %v3185, %v3193
      %v3201 = vadd.f32 %v3186, %v3193
      %v3202 = vadd.f32 %v3187, %v3193
      %v3203 = vmax.f32 %v3195, 0.0
      %v3204 = vmax.f32 %v3196, 0.0
      %v3205 = vmax.f32 %v3197, 0.0
      %v3206 = vmax.f32 %v3198, 0.0
      %v3207 = vmax.f32 %v3199, 0.0
      %v3208 = vmax.f32 %v3200, 0.0
      %v3209 = vmax.f32 %v3201, 0.0
      %v3210 = vmax.f32 %v3202, 0.0
      %vm3211 = vcmask 490496
      %3212 = vst.msk [vmem:[#allocation3] sm:$0xff] %vm3211, 0.0
      %vm3213 = vcmask 486400
      %3214 = vst.msk [vmem:[#allocation3 + $0x8] sm:$0xf] %vm3213, 0.0
      %3215 = vst.msk [vmem:[#allocation3 + $0x10] sm:$0xff] %vm3211, 0.0
      %3216 = vst.msk [vmem:[#allocation3 + $0x18] sm:$0xf] %vm3213, 0.0
      %s3217 = scalar_lea.vmem [#allocation3], 160
      %3218 = vst.msk [vmem:[%s3217] sm:$0xff] %vm3211, 0.0
      %3219 = vst.msk [vmem:[%s3217 + $0x8] sm:$0xf] %vm3213, 0.0
      %3220 = vst.msk [vmem:[%s3217 + $0x10] sm:$0xff] %vm3211, 0.0
      %3221 = vst.msk [vmem:[%s3217 + $0x18] sm:$0xf] %vm3213, 0.0
      %s3222 = scalar_lea.vmem [#allocation3], 32
      %vm3223 = vcmask 484352
      %3224 = vst.msk [vmem:[%s3222] sm:$0x3] %vm3223, 0.0
      %3225 = vst.msk [vmem:[%s3222 + $0x10] sm:$0x3] %vm3223, 0.0
      %3226 = vst.msk [vmem:[%s3222 + $0x20] sm:$0x3] %vm3223, 0.0
      %3227 = vst.msk [vmem:[%s3222 + $0x30] sm:$0x3] %vm3223, 0.0
      %3228 = vst.msk [vmem:[%s3222 + $0x40] sm:$0x3] %vm3223, 0.0
      %3229 = vst.msk [vmem:[%s3222 + $0x50] sm:$0x3] %vm3223, 0.0
      %3230 = vst.msk [vmem:[%s3222 + $0x60] sm:$0x3] %vm3223, 0.0
      %3231 = vst.msk [vmem:[%s3222 + $0x70] sm:$0x3] %vm3223, 0.0
      %3232 = vst.msk [vmem:[%s3222 + $0xa] sm:$0x3] %vm3223, 0.0
      %3233 = vst.msk [vmem:[%s3222 + $0x1a] sm:$0x3] %vm3223, 0.0
      %3234 = vst.msk [vmem:[%s3222 + $0x2a] sm:$0x3] %vm3223, 0.0
      %3235 = vst.msk [vmem:[%s3222 + $0x3a] sm:$0x3] %vm3223, 0.0
      %3236 = vst.msk [vmem:[%s3222 + $0x4a] sm:$0x3] %vm3223, 0.0
      %3237 = vst.msk [vmem:[%s3222 + $0x5a] sm:$0x3] %vm3223, 0.0
      %3238 = vst.msk [vmem:[%s3222 + $0x6a] sm:$0x3] %vm3223, 0.0
      %3239 = vst.msk [vmem:[%s3222 + $0x7a] sm:$0x3] %vm3223, 0.0
      %3240 = vst.msk [vmem:[%s3222 + $0x2] sm:$0xff] %vm3211, %v3203
      %3241 = vst.msk [vmem:[%s3222 + $0x12] sm:$0xff] %vm3211, %v3204
      %3242 = vst.msk [vmem:[%s3222 + $0x22] sm:$0xff] %vm3211, %v3205
      %3243 = vst.msk [vmem:[%s3222 + $0x32] sm:$0xff] %vm3211, %v3206
      %3244 = vst.msk [vmem:[%s3222 + $0x42] sm:$0xff] %vm3211, %v3207
      %3245 = vst.msk [vmem:[%s3222 + $0x52] sm:$0xff] %vm3211, %v3208
      %3246 = vst.msk [vmem:[%s3222 + $0x62] sm:$0xff] %vm3211, %v3209
      %3247 = vst.msk [vmem:[%s3222 + $0x72] sm:$0xff] %vm3211, %v3210
      %v3248 = vld [vmem:[#allocation3] sm:$0xff]
      %v3249 = vld [vmem:[#allocation3 + $0x10] sm:$0xff]
      %v3250 = vld [vmem:[#allocation3 + $0x20] sm:$0xff]
      %v3251 = vld [vmem:[#allocation3 + $0x30] sm:$0xff]
      %v3252 = vld [vmem:[#allocation3 + $0x40] sm:$0xff]
      %v3253 = vld [vmem:[#allocation3 + $0x50] sm:$0xff]
      %v3254 = vld [vmem:[#allocation3 + $0x60] sm:$0xff]
      %v3255 = vld [vmem:[#allocation3 + $0x70] sm:$0xff]
      %v3256 = vld [vmem:[%s5] sm:$0xff]
      %v3257 = vld [vmem:[%s5 + $0x8] sm:$0xff]
      %v3258 = vld [vmem:[%s5 + $0x10] sm:$0xff]
      %v3259 = vld [vmem:[%s5 + $0x18] sm:$0xff]
      %v3260 = vld [vmem:[%s5 + $0x20] sm:$0xff]
      %v3261 = vld [vmem:[%s5 + $0x28] sm:$0xff]
      %v3262 = vld [vmem:[%s5 + $0x30] sm:$0xff]
      %v3263 = vld [vmem:[%s5 + $0x38] sm:$0xf]
      %v3264 = vld [vmem:[#allocation3 + $0x2] sm:$0xff]
      %v3265 = vld [vmem:[#allocation3 + $0x12] sm:$0xff]
      %v3266 = vld [vmem:[#allocation3 + $0x22] sm:$0xff]
      %v3267 = vld [vmem:[#allocation3 + $0x32] sm:$0xff]
      %v3268 = vld [vmem:[#allocation3 + $0x42] sm:$0xff]
      %v3269 = vld [vmem:[#allocation3 + $0x52] sm:$0xff]
      %v3270 = vld [vmem:[#allocation3 + $0x62] sm:$0xff]
      %v3271 = vld [vmem:[#allocation3 + $0x72] sm:$0xff]
      %s3272 = scalar_lea.vmem %s5, 64
      %v3273 = vld [vmem:[%s3272] sm:$0xff]
      %v3274 = vld [vmem:[%s3272 + $0x8] sm:$0xff]
      %v3275 = vld [vmem:[%s3272 + $0x10] sm:$0xff]
      %v3276 = vld [vmem:[%s3272 + $0x18] sm:$0xff]
      %v3277 = vld [vmem:[%s3272 + $0x20] sm:$0xff]
      %v3278 = vld [vmem:[%s3272 + $0x28] sm:$0xff]
      %v3279 = vld [vmem:[%s3272 + $0x30] sm:$0xff]
      %v3280 = vld [vmem:[%s3272 + $0x38] sm:$0xf]
      %v3282 = vsel %vm3211, %v3264, 0
      %v3285 = vsel %vm3211, %v3265, 0
      %v3288 = vsel %vm3211, %v3266, 0
      %v3291 = vsel %vm3211, %v3267, 0
      %v3294 = vsel %vm3211, %v3268, 0
      %v3297 = vsel %vm3211, %v3269, 0
      %v3300 = vsel %vm3211, %v3270, 0
      %v3303 = vsel %vm3211, %v3271, 0
      %vm3305 = vcmask 1043456
      %v3307 = vsel %vm3305, %v3280, 0
      %3309 = vmatprep.subr.mxu0 0.0
      %3310 = vmatpush1.msra.mxu0 0.0
      %3311 = vmatprep.subr.mxu0 0.0
      %3312 = vmatpush1.msra.mxu0 0.0
      %3313 = vmatprep.subr.mxu0 0.0
      %3314 = vmatpush1.msra.mxu0 0.0
      %3315 = vmatprep.subr.mxu0 0.0
      %3316 = vmatpush1.msra.mxu0 0.0
      %3317 = vmatprep.subr.mxu0 0.0
      %3318 = vmatpush1.msra.mxu0 0.0
      %3319 = vmatprep.subr.mxu0 0.0
      %3320 = vmatpush1.msra.mxu0 0.0
      %3321 = vmatprep.subr.mxu0 0.0
      %3322 = vmatpush1.msra.mxu0 0.0
      %3323 = vmatprep.subr.mxu0 0.0
      %3324 = vmatpush1.msra.mxu0 0.0
      %3325 = vmatprep.subr.mxu0 0.0
      %3326 = vmatpush1.msra.mxu0 %v3307
      %3327 = vmatprep.subr.mxu0 0.0
      %3328 = vmatpush1.msra.mxu0 %v3279
      %3329 = vmatprep.subr.mxu0 0.0
      %3330 = vmatpush1.msra.mxu0 %v3278
      %3331 = vmatprep.subr.mxu0 0.0
      %3332 = vmatpush1.msra.mxu0 %v3277
      %3333 = vmatprep.subr.mxu0 0.0
      %3334 = vmatpush1.msra.mxu0 %v3276
      %3335 = vmatprep.subr.mxu0 0.0
      %3336 = vmatpush1.msra.mxu0 %v3275
      %3337 = vmatprep.subr.mxu0 0.0
      %3338 = vmatpush1.msra.mxu0 %v3274
      %3339 = vmatprep.subr.mxu0 0.0
      %3340 = vmatpush1.msra.mxu0 %v3273
      %3341 = vmatprep.subr.mxu0 0.0
      %3342 = vmatpush2.msra.mxu0 0.0
      %3343 = vmatprep.subr.mxu0 0.0
      %3344 = vmatpush2.msra.mxu0 0.0
      %3345 = vmatprep.subr.mxu0 0.0
      %3346 = vmatpush2.msra.mxu0 0.0
      %3347 = vmatprep.subr.mxu0 0.0
      %3348 = vmatpush2.msra.mxu0 0.0
      %3349 = vmatprep.subr.mxu0 0.0
      %3350 = vmatpush2.msra.mxu0 0.0
      %3351 = vmatprep.subr.mxu0 0.0
      %3352 = vmatpush2.msra.mxu0 0.0
      %3353 = vmatprep.subr.mxu0 0.0
      %3354 = vmatpush2.msra.mxu0 0.0
      %3355 = vmatprep.subr.mxu0 0.0
      %3356 = vmatpush2.msra.mxu0 0.0
      %3357 = vmatprep.subr.mxu0 0.0
      %3358 = vmatpush2.msra.mxu0 0.0
      %3359 = vmatprep.subr.mxu0 0.0
      %3360 = vmatpush2.msra.mxu0 0.0
      %3361 = vmatprep.subr.mxu0 0.0
      %3362 = vmatpush2.msra.mxu0 0.0
      %3363 = vmatprep.subr.mxu0 0.0
      %3364 = vmatpush2.msra.mxu0 0.0
      %3365 = vmatprep.subr.mxu0 0.0
      %3366 = vmatpush2.msra.mxu0 0.0
      %3367 = vmatprep.subr.mxu0 0.0
      %3368 = vmatpush2.msra.mxu0 0.0
      %3369 = vmatprep.subr.mxu0 0.0
      %3370 = vmatpush2.msra.mxu0 0.0
      %3371 = vmatprep.subr.mxu0 0.0
      %3372 = vmatpush2.msra.mxu0 0.0
      %3373 = vmatprep.mubr.f32.mxu0 0.0
      %3374 = vmatmul.mubr.f32.gmra.mxu0 %v3282
      %v3375 = vpop.f32.mrf.mxu0
      %v3376 = vadd.f32 0.0, %v3375
      %v3377 = vpop.f32.mrf.mxu0
      %3378 = vmatprep.mubr.f32.mxu0 0.0
      %3379 = vmatmul.mubr.f32.gmra.mxu0 %v3285
      %v3380 = vpop.f32.mrf.mxu0
      %v3381 = vadd.f32 0.0, %v3380
      %v3382 = vpop.f32.mrf.mxu0
      %3383 = vmatprep.mubr.f32.mxu0 0.0
      %3384 = vmatmul.mubr.f32.gmra.mxu0 %v3288
      %v3385 = vpop.f32.mrf.mxu0
      %v3386 = vadd.f32 0.0, %v3385
      %v3387 = vpop.f32.mrf.mxu0
      %3388 = vmatprep.mubr.f32.mxu0 0.0
      %3389 = vmatmul.mubr.f32.gmra.mxu0 %v3291
      %v3390 = vpop.f32.mrf.mxu0
      %v3391 = vadd.f32 0.0, %v3390
      %v3392 = vpop.f32.mrf.mxu0
      %3393 = vmatprep.mubr.f32.mxu0 0.0
      %3394 = vmatmul.mubr.f32.gmra.mxu0 %v3294
      %v3395 = vpop.f32.mrf.mxu0
      %v3396 = vadd.f32 0.0, %v3395
      %v3397 = vpop.f32.mrf.mxu0
      %3398 = vmatprep.mubr.f32.mxu0 0.0
      %3399 = vmatmul.mubr.f32.gmra.mxu0 %v3297
      %v3400 = vpop.f32.mrf.mxu0
      %v3401 = vadd.f32 0.0, %v3400
      %v3402 = vpop.f32.mrf.mxu0
      %3403 = vmatprep.mubr.f32.mxu0 0.0
      %3404 = vmatmul.mubr.f32.gmra.mxu0 %v3300
      %v3405 = vpop.f32.mrf.mxu0
      %v3406 = vadd.f32 0.0, %v3405
      %v3407 = vpop.f32.mrf.mxu0
      %3408 = vmatprep.mubr.f32.mxu0 0.0
      %3409 = vmatmul.mubr.f32.gmra.mxu0 %v3303
      %v3410 = vpop.f32.mrf.mxu0
      %v3411 = vadd.f32 0.0, %v3410
      %v3412 = vpop.f32.mrf.mxu0
      %3413 = vdwg.mxu0
      %v3415 = vsel %vm3211, %v3248, 0
      %v3418 = vsel %vm3211, %v3249, 0
      %v3421 = vsel %vm3211, %v3250, 0
      %v3424 = vsel %vm3211, %v3251, 0
      %v3427 = vsel %vm3211, %v3252, 0
      %v3430 = vsel %vm3211, %v3253, 0
      %v3433 = vsel %vm3211, %v3254, 0
      %v3436 = vsel %vm3211, %v3255, 0
      %v3439 = vsel %vm3305, %v3263, 0
      %3441 = vmatprep.subr.mxu0 0.0
      %3442 = vmatpush1.msra.mxu0 0.0
      %3443 = vmatprep.subr.mxu0 0.0
      %3444 = vmatpush1.msra.mxu0 0.0
      %3445 = vmatprep.subr.mxu0 0.0
      %3446 = vmatpush1.msra.mxu0 0.0
      %3447 = vmatprep.subr.mxu0 0.0
      %3448 = vmatpush1.msra.mxu0 0.0
      %3449 = vmatprep.subr.mxu0 0.0
      %3450 = vmatpush1.msra.mxu0 0.0
      %3451 = vmatprep.subr.mxu0 0.0
      %3452 = vmatpush1.msra.mxu0 0.0
      %3453 = vmatprep.subr.mxu0 0.0
      %3454 = vmatpush1.msra.mxu0 0.0
      %3455 = vmatprep.subr.mxu0 0.0
      %3456 = vmatpush1.msra.mxu0 0.0
      %3457 = vmatprep.subr.mxu0 0.0
      %3458 = vmatpush1.msra.mxu0 %v3439
      %3459 = vmatprep.subr.mxu0 0.0
      %3460 = vmatpush1.msra.mxu0 %v3262
      %3461 = vmatprep.subr.mxu0 0.0
      %3462 = vmatpush1.msra.mxu0 %v3261
      %3463 = vmatprep.subr.mxu0 0.0
      %3464 = vmatpush1.msra.mxu0 %v3260
      %3465 = vmatprep.subr.mxu0 0.0
      %3466 = vmatpush1.msra.mxu0 %v3259
      %3467 = vmatprep.subr.mxu0 0.0
      %3468 = vmatpush1.msra.mxu0 %v3258
      %3469 = vmatprep.subr.mxu0 0.0
      %3470 = vmatpush1.msra.mxu0 %v3257
      %3471 = vmatprep.subr.mxu0 0.0
      %3472 = vmatpush1.msra.mxu0 %v3256
      %3473 = vmatprep.subr.mxu0 0.0
      %3474 = vmatpush2.msra.mxu0 0.0
      %3475 = vmatprep.subr.mxu0 0.0
      %3476 = vmatpush2.msra.mxu0 0.0
      %3477 = vmatprep.subr.mxu0 0.0
      %3478 = vmatpush2.msra.mxu0 0.0
      %3479 = vmatprep.subr.mxu0 0.0
      %3480 = vmatpush2.msra.mxu0 0.0
      %3481 = vmatprep.subr.mxu0 0.0
      %3482 = vmatpush2.msra.mxu0 0.0
      %3483 = vmatprep.subr.mxu0 0.0
      %3484 = vmatpush2.msra.mxu0 0.0
      %3485 = vmatprep.subr.mxu0 0.0
      %3486 = vmatpush2.msra.mxu0 0.0
      %3487 = vmatprep.subr.mxu0 0.0
      %3488 = vmatpush2.msra.mxu0 0.0
      %3489 = vmatprep.subr.mxu0 0.0
      %3490 = vmatpush2.msra.mxu0 0.0
      %3491 = vmatprep.subr.mxu0 0.0
      %3492 = vmatpush2.msra.mxu0 0.0
      %3493 = vmatprep.subr.mxu0 0.0
      %3494 = vmatpush2.msra.mxu0 0.0
      %3495 = vmatprep.subr.mxu0 0.0
      %3496 = vmatpush2.msra.mxu0 0.0
      %3497 = vmatprep.subr.mxu0 0.0
      %3498 = vmatpush2.msra.mxu0 0.0
      %3499 = vmatprep.subr.mxu0 0.0
      %3500 = vmatpush2.msra.mxu0 0.0
      %3501 = vmatprep.subr.mxu0 0.0
      %3502 = vmatpush2.msra.mxu0 0.0
      %3503 = vmatprep.subr.mxu0 0.0
      %3504 = vmatpush2.msra.mxu0 0.0
      %3505 = vmatprep.mubr.f32.mxu0 0.0
      %3506 = vmatmul.mubr.f32.gmra.mxu0 %v3415
      %v3507 = vpop.f32.mrf.mxu0
      %v3508 = vadd.f32 %v3376, %v3507
      %v3509 = vpop.f32.mrf.mxu0
      %3510 = vmatprep.mubr.f32.mxu0 0.0
      %3511 = vmatmul.mubr.f32.gmra.mxu0 %v3418
      %v3512 = vpop.f32.mrf.mxu0
      %v3513 = vadd.f32 %v3381, %v3512
      %v3514 = vpop.f32.mrf.mxu0
      %3515 = vmatprep.mubr.f32.mxu0 0.0
      %3516 = vmatmul.mubr.f32.gmra.mxu0 %v3421
      %v3517 = vpop.f32.mrf.mxu0
      %v3518 = vadd.f32 %v3386, %v3517
      %v3519 = vpop.f32.mrf.mxu0
      %3520 = vmatprep.mubr.f32.mxu0 0.0
      %3521 = vmatmul.mubr.f32.gmra.mxu0 %v3424
      %v3522 = vpop.f32.mrf.mxu0
      %v3523 = vadd.f32 %v3391, %v3522
      %v3524 = vpop.f32.mrf.mxu0
      %3525 = vmatprep.mubr.f32.mxu0 0.0
      %3526 = vmatmul.mubr.f32.gmra.mxu0 %v3427
      %v3527 = vpop.f32.mrf.mxu0
      %v3528 = vadd.f32 %v3396, %v3527
      %v3529 = vpop.f32.mrf.mxu0
      %3530 = vmatprep.mubr.f32.mxu0 0.0
      %3531 = vmatmul.mubr.f32.gmra.mxu0 %v3430
      %v3532 = vpop.f32.mrf.mxu0
      %v3533 = vadd.f32 %v3401, %v3532
      %v3534 = vpop.f32.mrf.mxu0
      %3535 = vmatprep.mubr.f32.mxu0 0.0
      %3536 = vmatmul.mubr.f32.gmra.mxu0 %v3433
      %v3537 = vpop.f32.mrf.mxu0
      %v3538 = vadd.f32 %v3406, %v3537
      %v3539 = vpop.f32.mrf.mxu0
      %3540 = vmatprep.mubr.f32.mxu0 0.0
      %3541 = vmatmul.mubr.f32.gmra.mxu0 %v3436
      %v3542 = vpop.f32.mrf.mxu0
      %v3543 = vadd.f32 %v3411, %v3542
      %v3544 = vpop.f32.mrf.mxu0
      %3545 = vdwg.mxu0
      %v3546 = vld [vmem:[#allocation3 + $0x4] sm:$0xff]
      %v3547 = vld [vmem:[#allocation3 + $0x14] sm:$0xff]
      %v3548 = vld [vmem:[#allocation3 + $0x24] sm:$0xff]
      %v3549 = vld [vmem:[#allocation3 + $0x34] sm:$0xff]
      %v3550 = vld [vmem:[#allocation3 + $0x44] sm:$0xff]
      %v3551 = vld [vmem:[#allocation3 + $0x54] sm:$0xff]
      %v3552 = vld [vmem:[#allocation3 + $0x64] sm:$0xff]
      %v3553 = vld [vmem:[#allocation3 + $0x74] sm:$0xff]
      %s3554 = scalar_lea.vmem %s5, 128
      %v3555 = vld [vmem:[%s3554] sm:$0xff]
      %v3556 = vld [vmem:[%s3554 + $0x8] sm:$0xff]
      %v3557 = vld [vmem:[%s3554 + $0x10] sm:$0xff]
      %v3558 = vld [vmem:[%s3554 + $0x18] sm:$0xff]
      %v3559 = vld [vmem:[%s3554 + $0x20] sm:$0xff]
      %v3560 = vld [vmem:[%s3554 + $0x28] sm:$0xff]
      %v3561 = vld [vmem:[%s3554 + $0x30] sm:$0xff]
      %v3562 = vld [vmem:[%s3554 + $0x38] sm:$0xf]
      %v3564 = vsel %vm3211, %v3546, 0
      %v3567 = vsel %vm3211, %v3547, 0
      %v3570 = vsel %vm3211, %v3548, 0
      %v3573 = vsel %vm3211, %v3549, 0
      %v3576 = vsel %vm3211, %v3550, 0
      %v3579 = vsel %vm3211, %v3551, 0
      %v3582 = vsel %vm3211, %v3552, 0
      %v3585 = vsel %vm3211, %v3553, 0
      %v3588 = vsel %vm3305, %v3562, 0
      %3590 = vmatprep.subr.mxu0 0.0
      %3591 = vmatpush1.msra.mxu0 0.0
      %3592 = vmatprep.subr.mxu0 0.0
      %3593 = vmatpush1.msra.mxu0 0.0
      %3594 = vmatprep.subr.mxu0 0.0
      %3595 = vmatpush1.msra.mxu0 0.0
      %3596 = vmatprep.subr.mxu0 0.0
      %3597 = vmatpush1.msra.mxu0 0.0
      %3598 = vmatprep.subr.mxu0 0.0
      %3599 = vmatpush1.msra.mxu0 0.0
      %3600 = vmatprep.subr.mxu0 0.0
      %3601 = vmatpush1.msra.mxu0 0.0
      %3602 = vmatprep.subr.mxu0 0.0
      %3603 = vmatpush1.msra.mxu0 0.0
      %3604 = vmatprep.subr.mxu0 0.0
      %3605 = vmatpush1.msra.mxu0 0.0
      %3606 = vmatprep.subr.mxu0 0.0
      %3607 = vmatpush1.msra.mxu0 %v3588
      %3608 = vmatprep.subr.mxu0 0.0
      %3609 = vmatpush1.msra.mxu0 %v3561
      %3610 = vmatprep.subr.mxu0 0.0
      %3611 = vmatpush1.msra.mxu0 %v3560
      %3612 = vmatprep.subr.mxu0 0.0
      %3613 = vmatpush1.msra.mxu0 %v3559
      %3614 = vmatprep.subr.mxu0 0.0
      %3615 = vmatpush1.msra.mxu0 %v3558
      %3616 = vmatprep.subr.mxu0 0.0
      %3617 = vmatpush1.msra.mxu0 %v3557
      %3618 = vmatprep.subr.mxu0 0.0
      %3619 = vmatpush1.msra.mxu0 %v3556
      %3620 = vmatprep.subr.mxu0 0.0
      %3621 = vmatpush1.msra.mxu0 %v3555
      %3622 = vmatprep.subr.mxu0 0.0
      %3623 = vmatpush2.msra.mxu0 0.0
      %3624 = vmatprep.subr.mxu0 0.0
      %3625 = vmatpush2.msra.mxu0 0.0
      %3626 = vmatprep.subr.mxu0 0.0
      %3627 = vmatpush2.msra.mxu0 0.0
      %3628 = vmatprep.subr.mxu0 0.0
      %3629 = vmatpush2.msra.mxu0 0.0
      %3630 = vmatprep.subr.mxu0 0.0
      %3631 = vmatpush2.msra.mxu0 0.0
      %3632 = vmatprep.subr.mxu0 0.0
      %3633 = vmatpush2.msra.mxu0 0.0
      %3634 = vmatprep.subr.mxu0 0.0
      %3635 = vmatpush2.msra.mxu0 0.0
      %3636 = vmatprep.subr.mxu0 0.0
      %3637 = vmatpush2.msra.mxu0 0.0
      %3638 = vmatprep.subr.mxu0 0.0
      %3639 = vmatpush2.msra.mxu0 0.0
      %3640 = vmatprep.subr.mxu0 0.0
      %3641 = vmatpush2.msra.mxu0 0.0
      %3642 = vmatprep.subr.mxu0 0.0
      %3643 = vmatpush2.msra.mxu0 0.0
      %3644 = vmatprep.subr.mxu0 0.0
      %3645 = vmatpush2.msra.mxu0 0.0
      %3646 = vmatprep.subr.mxu0 0.0
      %3647 = vmatpush2.msra.mxu0 0.0
      %3648 = vmatprep.subr.mxu0 0.0
      %3649 = vmatpush2.msra.mxu0 0.0
      %3650 = vmatprep.subr.mxu0 0.0
      %3651 = vmatpush2.msra.mxu0 0.0
      %3652 = vmatprep.subr.mxu0 0.0
      %3653 = vmatpush2.msra.mxu0 0.0
      %3654 = vmatprep.mubr.f32.mxu0 0.0
      %3655 = vmatmul.mubr.f32.gmra.mxu0 %v3564
      %v3656 = vpop.f32.mrf.mxu0
      %v3657 = vadd.f32 0.0, %v3656
      %v3658 = vpop.f32.mrf.mxu0
      %3659 = vmatprep.mubr.f32.mxu0 0.0
      %3660 = vmatmul.mubr.f32.gmra.mxu0 %v3567
      %v3661 = vpop.f32.mrf.mxu0
      %v3662 = vadd.f32 0.0, %v3661
      %v3663 = vpop.f32.mrf.mxu0
      %3664 = vmatprep.mubr.f32.mxu0 0.0
      %3665 = vmatmul.mubr.f32.gmra.mxu0 %v3570
      %v3666 = vpop.f32.mrf.mxu0
      %v3667 = vadd.f32 0.0, %v3666
      %v3668 = vpop.f32.mrf.mxu0
      %3669 = vmatprep.mubr.f32.mxu0 0.0
      %3670 = vmatmul.mubr.f32.gmra.mxu0 %v3573
      %v3671 = vpop.f32.mrf.mxu0
      %v3672 = vadd.f32 0.0, %v3671
      %v3673 = vpop.f32.mrf.mxu0
      %3674 = vmatprep.mubr.f32.mxu0 0.0
      %3675 = vmatmul.mubr.f32.gmra.mxu0 %v3576
      %v3676 = vpop.f32.mrf.mxu0
      %v3677 = vadd.f32 0.0, %v3676
      %v3678 = vpop.f32.mrf.mxu0
      %3679 = vmatprep.mubr.f32.mxu0 0.0
      %3680 = vmatmul.mubr.f32.gmra.mxu0 %v3579
      %v3681 = vpop.f32.mrf.mxu0
      %v3682 = vadd.f32 0.0, %v3681
      %v3683 = vpop.f32.mrf.mxu0
      %3684 = vmatprep.mubr.f32.mxu0 0.0
      %3685 = vmatmul.mubr.f32.gmra.mxu0 %v3582
      %v3686 = vpop.f32.mrf.mxu0
      %v3687 = vadd.f32 0.0, %v3686
      %v3688 = vpop.f32.mrf.mxu0
      %3689 = vmatprep.mubr.f32.mxu0 0.0
      %3690 = vmatmul.mubr.f32.gmra.mxu0 %v3585
      %v3691 = vpop.f32.mrf.mxu0
      %v3692 = vadd.f32 0.0, %v3691
      %v3693 = vpop.f32.mrf.mxu0
      %3694 = vdwg.mxu0
      %v3695 = vadd.f32 %v3508, %v3657
      %v3696 = vadd.f32 %v3513, %v3662
      %v3697 = vadd.f32 %v3518, %v3667
      %v3698 = vadd.f32 %v3523, %v3672
      %v3699 = vadd.f32 %v3528, %v3677
      %v3700 = vadd.f32 %v3533, %v3682
      %v3701 = vadd.f32 %v3538, %v3687
      %v3702 = vadd.f32 %v3543, %v3692
      %v3703 = vld [vmem:[%s3222] sm:$0xff]
      %v3704 = vld [vmem:[%s3222 + $0x10] sm:$0xff]
      %v3705 = vld [vmem:[%s3222 + $0x20] sm:$0xff]
      %v3706 = vld [vmem:[%s3222 + $0x30] sm:$0xff]
      %v3707 = vld [vmem:[%s3222 + $0x40] sm:$0xff]
      %v3708 = vld [vmem:[%s3222 + $0x50] sm:$0xff]
      %v3709 = vld [vmem:[%s3222 + $0x60] sm:$0xff]
      %v3710 = vld [vmem:[%s3222 + $0x70] sm:$0xff]
      %s3711 = scalar_lea.vmem %s5, 192
      %v3712 = vld [vmem:[%s3711] sm:$0xff]
      %v3713 = vld [vmem:[%s3711 + $0x8] sm:$0xff]
      %v3714 = vld [vmem:[%s3711 + $0x10] sm:$0xff]
      %v3715 = vld [vmem:[%s3711 + $0x18] sm:$0xff]
      %v3716 = vld [vmem:[%s3711 + $0x20] sm:$0xff]
      %v3717 = vld [vmem:[%s3711 + $0x28] sm:$0xff]
      %v3718 = vld [vmem:[%s3711 + $0x30] sm:$0xff]
      %v3719 = vld [vmem:[%s3711 + $0x38] sm:$0xf]
      %v3721 = vsel %vm3211, %v3703, 0
      %v3724 = vsel %vm3211, %v3704, 0
      %v3727 = vsel %vm3211, %v3705, 0
      %v3730 = vsel %vm3211, %v3706, 0
      %v3733 = vsel %vm3211, %v3707, 0
      %v3736 = vsel %vm3211, %v3708, 0
      %v3739 = vsel %vm3211, %v3709, 0
      %v3742 = vsel %vm3211, %v3710, 0
      %v3745 = vsel %vm3305, %v3719, 0
      %3747 = vmatprep.subr.mxu0 0.0
      %3748 = vmatpush1.msra.mxu0 0.0
      %3749 = vmatprep.subr.mxu0 0.0
      %3750 = vmatpush1.msra.mxu0 0.0
      %3751 = vmatprep.subr.mxu0 0.0
      %3752 = vmatpush1.msra.mxu0 0.0
      %3753 = vmatprep.subr.mxu0 0.0
      %3754 = vmatpush1.msra.mxu0 0.0
      %3755 = vmatprep.subr.mxu0 0.0
      %3756 = vmatpush1.msra.mxu0 0.0
      %3757 = vmatprep.subr.mxu0 0.0
      %3758 = vmatpush1.msra.mxu0 0.0
      %3759 = vmatprep.subr.mxu0 0.0
      %3760 = vmatpush1.msra.mxu0 0.0
      %3761 = vmatprep.subr.mxu0 0.0
      %3762 = vmatpush1.msra.mxu0 0.0
      %3763 = vmatprep.subr.mxu0 0.0
      %3764 = vmatpush1.msra.mxu0 %v3745
      %3765 = vmatprep.subr.mxu0 0.0
      %3766 = vmatpush1.msra.mxu0 %v3718
      %3767 = vmatprep.subr.mxu0 0.0
      %3768 = vmatpush1.msra.mxu0 %v3717
      %3769 = vmatprep.subr.mxu0 0.0
      %3770 = vmatpush1.msra.mxu0 %v3716
      %3771 = vmatprep.subr.mxu0 0.0
      %3772 = vmatpush1.msra.mxu0 %v3715
      %3773 = vmatprep.subr.mxu0 0.0
      %3774 = vmatpush1.msra.mxu0 %v3714
      %3775 = vmatprep.subr.mxu0 0.0
      %3776 = vmatpush1.msra.mxu0 %v3713
      %3777 = vmatprep.subr.mxu0 0.0
      %3778 = vmatpush1.msra.mxu0 %v3712
      %3779 = vmatprep.subr.mxu0 0.0
      %3780 = vmatpush2.msra.mxu0 0.0
      %3781 = vmatprep.subr.mxu0 0.0
      %3782 = vmatpush2.msra.mxu0 0.0
      %3783 = vmatprep.subr.mxu0 0.0
      %3784 = vmatpush2.msra.mxu0 0.0
      %3785 = vmatprep.subr.mxu0 0.0
      %3786 = vmatpush2.msra.mxu0 0.0
      %3787 = vmatprep.subr.mxu0 0.0
      %3788 = vmatpush2.msra.mxu0 0.0
      %3789 = vmatprep.subr.mxu0 0.0
      %3790 = vmatpush2.msra.mxu0 0.0
      %3791 = vmatprep.subr.mxu0 0.0
      %3792 = vmatpush2.msra.mxu0 0.0
      %3793 = vmatprep.subr.mxu0 0.0
      %3794 = vmatpush2.msra.mxu0 0.0
      %3795 = vmatprep.subr.mxu0 0.0
      %3796 = vmatpush2.msra.mxu0 0.0
      %3797 = vmatprep.subr.mxu0 0.0
      %3798 = vmatpush2.msra.mxu0 0.0
      %3799 = vmatprep.subr.mxu0 0.0
      %3800 = vmatpush2.msra.mxu0 0.0
      %3801 = vmatprep.subr.mxu0 0.0
      %3802 = vmatpush2.msra.mxu0 0.0
      %3803 = vmatprep.subr.mxu0 0.0
      %3804 = vmatpush2.msra.mxu0 0.0
      %3805 = vmatprep.subr.mxu0 0.0
      %3806 = vmatpush2.msra.mxu0 0.0
      %3807 = vmatprep.subr.mxu0 0.0
      %3808 = vmatpush2.msra.mxu0 0.0
      %3809 = vmatprep.subr.mxu0 0.0
      %3810 = vmatpush2.msra.mxu0 0.0
      %3811 = vmatprep.mubr.f32.mxu0 0.0
      %3812 = vmatmul.mubr.f32.gmra.mxu0 %v3721
      %v3813 = vpop.f32.mrf.mxu0
      %v3814 = vadd.f32 0.0, %v3813
      %v3815 = vpop.f32.mrf.mxu0
      %3816 = vmatprep.mubr.f32.mxu0 0.0
      %3817 = vmatmul.mubr.f32.gmra.mxu0 %v3724
      %v3818 = vpop.f32.mrf.mxu0
      %v3819 = vadd.f32 0.0, %v3818
      %v3820 = vpop.f32.mrf.mxu0
      %3821 = vmatprep.mubr.f32.mxu0 0.0
      %3822 = vmatmul.mubr.f32.gmra.mxu0 %v3727
      %v3823 = vpop.f32.mrf.mxu0
      %v3824 = vadd.f32 0.0, %v3823
      %v3825 = vpop.f32.mrf.mxu0
      %3826 = vmatprep.mubr.f32.mxu0 0.0
      %3827 = vmatmul.mubr.f32.gmra.mxu0 %v3730
      %v3828 = vpop.f32.mrf.mxu0
      %v3829 = vadd.f32 0.0, %v3828
      %v3830 = vpop.f32.mrf.mxu0
      %3831 = vmatprep.mubr.f32.mxu0 0.0
      %3832 = vmatmul.mubr.f32.gmra.mxu0 %v3733
      %v3833 = vpop.f32.mrf.mxu0
      %v3834 = vadd.f32 0.0, %v3833
      %v3835 = vpop.f32.mrf.mxu0
      %3836 = vmatprep.mubr.f32.mxu0 0.0
      %3837 = vmatmul.mubr.f32.gmra.mxu0 %v3736
      %v3838 = vpop.f32.mrf.mxu0
      %v3839 = vadd.f32 0.0, %v3838
      %v3840 = vpop.f32.mrf.mxu0
      %3841 = vmatprep.mubr.f32.mxu0 0.0
      %3842 = vmatmul.mubr.f32.gmra.mxu0 %v3739
      %v3843 = vpop.f32.mrf.mxu0
      %v3844 = vadd.f32 0.0, %v3843
      %v3845 = vpop.f32.mrf.mxu0
      %3846 = vmatprep.mubr.f32.mxu0 0.0
      %3847 = vmatmul.mubr.f32.gmra.mxu0 %v3742
      %v3848 = vpop.f32.mrf.mxu0
      %v3849 = vadd.f32 0.0, %v3848
      %v3850 = vpop.f32.mrf.mxu0
      %3851 = vdwg.mxu0
      %v3852 = vadd.f32 %v3695, %v3814
      %v3853 = vadd.f32 %v3696, %v3819
      %v3854 = vadd.f32 %v3697, %v3824
      %v3855 = vadd.f32 %v3698, %v3829
      %v3856 = vadd.f32 %v3699, %v3834
      %v3857 = vadd.f32 %v3700, %v3839
      %v3858 = vadd.f32 %v3701, %v3844
      %v3859 = vadd.f32 %v3702, %v3849
      %v3860 = vld [vmem:[%s3222 + $0x2] sm:$0xff]
      %v3861 = vld [vmem:[%s3222 + $0x12] sm:$0xff]
      %v3862 = vld [vmem:[%s3222 + $0x22] sm:$0xff]
      %v3863 = vld [vmem:[%s3222 + $0x32] sm:$0xff]
      %v3864 = vld [vmem:[%s3222 + $0x42] sm:$0xff]
      %v3865 = vld [vmem:[%s3222 + $0x52] sm:$0xff]
      %v3866 = vld [vmem:[%s3222 + $0x62] sm:$0xff]
      %v3867 = vld [vmem:[%s3222 + $0x72] sm:$0xff]
      %s3868 = scalar_lea.vmem %s5, 256
      %v3869 = vld [vmem:[%s3868] sm:$0xff]
      %v3870 = vld [vmem:[%s3868 + $0x8] sm:$0xff]
      %v3871 = vld [vmem:[%s3868 + $0x10] sm:$0xff]
      %v3872 = vld [vmem:[%s3868 + $0x18] sm:$0xff]
      %v3873 = vld [vmem:[%s3868 + $0x20] sm:$0xff]
      %v3874 = vld [vmem:[%s3868 + $0x28] sm:$0xff]
      %v3875 = vld [vmem:[%s3868 + $0x30] sm:$0xff]
      %v3876 = vld [vmem:[%s3868 + $0x38] sm:$0xf]
      %v3878 = vsel %vm3211, %v3860, 0
      %v3881 = vsel %vm3211, %v3861, 0
      %v3884 = vsel %vm3211, %v3862, 0
      %v3887 = vsel %vm3211, %v3863, 0
      %v3890 = vsel %vm3211, %v3864, 0
      %v3893 = vsel %vm3211, %v3865, 0
      %v3896 = vsel %vm3211, %v3866, 0
      %v3899 = vsel %vm3211, %v3867, 0
      %v3902 = vsel %vm3305, %v3876, 0
      %3904 = vmatprep.subr.mxu0 0.0
      %3905 = vmatpush1.msra.mxu0 0.0
      %3906 = vmatprep.subr.mxu0 0.0
      %3907 = vmatpush1.msra.mxu0 0.0
      %3908 = vmatprep.subr.mxu0 0.0
      %3909 = vmatpush1.msra.mxu0 0.0
      %3910 = vmatprep.subr.mxu0 0.0
      %3911 = vmatpush1.msra.mxu0 0.0
      %3912 = vmatprep.subr.mxu0 0.0
      %3913 = vmatpush1.msra.mxu0 0.0
      %3914 = vmatprep.subr.mxu0 0.0
      %3915 = vmatpush1.msra.mxu0 0.0
      %3916 = vmatprep.subr.mxu0 0.0
      %3917 = vmatpush1.msra.mxu0 0.0
      %3918 = vmatprep.subr.mxu0 0.0
      %3919 = vmatpush1.msra.mxu0 0.0
      %3920 = vmatprep.subr.mxu0 0.0
      %3921 = vmatpush1.msra.mxu0 %v3902
      %3922 = vmatprep.subr.mxu0 0.0
      %3923 = vmatpush1.msra.mxu0 %v3875
      %3924 = vmatprep.subr.mxu0 0.0
      %3925 = vmatpush1.msra.mxu0 %v3874
      %3926 = vmatprep.subr.mxu0 0.0
      %3927 = vmatpush1.msra.mxu0 %v3873
      %3928 = vmatprep.subr.mxu0 0.0
      %3929 = vmatpush1.msra.mxu0 %v3872
      %3930 = vmatprep.subr.mxu0 0.0
      %3931 = vmatpush1.msra.mxu0 %v3871
      %3932 = vmatprep.subr.mxu0 0.0
      %3933 = vmatpush1.msra.mxu0 %v3870
      %3934 = vmatprep.subr.mxu0 0.0
      %3935 = vmatpush1.msra.mxu0 %v3869
      %3936 = vmatprep.subr.mxu0 0.0
      %3937 = vmatpush2.msra.mxu0 0.0
      %3938 = vmatprep.subr.mxu0 0.0
      %3939 = vmatpush2.msra.mxu0 0.0
      %3940 = vmatprep.subr.mxu0 0.0
      %3941 = vmatpush2.msra.mxu0 0.0
      %3942 = vmatprep.subr.mxu0 0.0
      %3943 = vmatpush2.msra.mxu0 0.0
      %3944 = vmatprep.subr.mxu0 0.0
      %3945 = vmatpush2.msra.mxu0 0.0
      %3946 = vmatprep.subr.mxu0 0.0
      %3947 = vmatpush2.msra.mxu0 0.0
      %3948 = vmatprep.subr.mxu0 0.0
      %3949 = vmatpush2.msra.mxu0 0.0
      %3950 = vmatprep.subr.mxu0 0.0
      %3951 = vmatpush2.msra.mxu0 0.0
      %3952 = vmatprep.subr.mxu0 0.0
      %3953 = vmatpush2.msra.mxu0 0.0
      %3954 = vmatprep.subr.mxu0 0.0
      %3955 = vmatpush2.msra.mxu0 0.0
      %3956 = vmatprep.subr.mxu0 0.0
      %3957 = vmatpush2.msra.mxu0 0.0
      %3958 = vmatprep.subr.mxu0 0.0
      %3959 = vmatpush2.msra.mxu0 0.0
      %3960 = vmatprep.subr.mxu0 0.0
      %3961 = vmatpush2.msra.mxu0 0.0
      %3962 = vmatprep.subr.mxu0 0.0
      %3963 = vmatpush2.msra.mxu0 0.0
      %3964 = vmatprep.subr.mxu0 0.0
      %3965 = vmatpush2.msra.mxu0 0.0
      %3966 = vmatprep.subr.mxu0 0.0
      %3967 = vmatpush2.msra.mxu0 0.0
      %3968 = vmatprep.mubr.f32.mxu0 0.0
      %3969 = vmatmul.mubr.f32.gmra.mxu0 %v3878
      %v3970 = vpop.f32.mrf.mxu0
      %v3971 = vadd.f32 0.0, %v3970
      %v3972 = vpop.f32.mrf.mxu0
      %3973 = vmatprep.mubr.f32.mxu0 0.0
      %3974 = vmatmul.mubr.f32.gmra.mxu0 %v3881
      %v3975 = vpop.f32.mrf.mxu0
      %v3976 = vadd.f32 0.0, %v3975
      %v3977 = vpop.f32.mrf.mxu0
      %3978 = vmatprep.mubr.f32.mxu0 0.0
      %3979 = vmatmul.mubr.f32.gmra.mxu0 %v3884
      %v3980 = vpop.f32.mrf.mxu0
      %v3981 = vadd.f32 0.0, %v3980
      %v3982 = vpop.f32.mrf.mxu0
      %3983 = vmatprep.mubr.f32.mxu0 0.0
      %3984 = vmatmul.mubr.f32.gmra.mxu0 %v3887
      %v3985 = vpop.f32.mrf.mxu0
      %v3986 = vadd.f32 0.0, %v3985
      %v3987 = vpop.f32.mrf.mxu0
      %3988 = vmatprep.mubr.f32.mxu0 0.0
      %3989 = vmatmul.mubr.f32.gmra.mxu0 %v3890
      %v3990 = vpop.f32.mrf.mxu0
      %v3991 = vadd.f32 0.0, %v3990
      %v3992 = vpop.f32.mrf.mxu0
      %3993 = vmatprep.mubr.f32.mxu0 0.0
      %3994 = vmatmul.mubr.f32.gmra.mxu0 %v3893
      %v3995 = vpop.f32.mrf.mxu0
      %v3996 = vadd.f32 0.0, %v3995
      %v3997 = vpop.f32.mrf.mxu0
      %3998 = vmatprep.mubr.f32.mxu0 0.0
      %3999 = vmatmul.mubr.f32.gmra.mxu0 %v3896
      %v4000 = vpop.f32.mrf.mxu0
      %v4001 = vadd.f32 0.0, %v4000
      %v4002 = vpop.f32.mrf.mxu0
      %4003 = vmatprep.mubr.f32.mxu0 0.0
      %4004 = vmatmul.mubr.f32.gmra.mxu0 %v3899
      %v4005 = vpop.f32.mrf.mxu0
      %v4006 = vadd.f32 0.0, %v4005
      %v4007 = vpop.f32.mrf.mxu0
      %4008 = vdwg.mxu0
      %v4009 = vadd.f32 %v3852, %v3971
      %v4010 = vadd.f32 %v3853, %v3976
      %v4011 = vadd.f32 %v3854, %v3981
      %v4012 = vadd.f32 %v3855, %v3986
      %v4013 = vadd.f32 %v3856, %v3991
      %v4014 = vadd.f32 %v3857, %v3996
      %v4015 = vadd.f32 %v3858, %v4001
      %v4016 = vadd.f32 %v3859, %v4006
      %v4017 = vld [vmem:[%s3222 + $0x4] sm:$0xff]
      %v4018 = vld [vmem:[%s3222 + $0x14] sm:$0xff]
      %v4019 = vld [vmem:[%s3222 + $0x24] sm:$0xff]
      %v4020 = vld [vmem:[%s3222 + $0x34] sm:$0xff]
      %v4021 = vld [vmem:[%s3222 + $0x44] sm:$0xff]
      %v4022 = vld [vmem:[%s3222 + $0x54] sm:$0xff]
      %v4023 = vld [vmem:[%s3222 + $0x64] sm:$0xff]
      %v4024 = vld [vmem:[%s3222 + $0x74] sm:$0xff]
      %s4025 = scalar_lea.vmem %s5, 320
      %v4026 = vld [vmem:[%s4025] sm:$0xff]
      %v4027 = vld [vmem:[%s4025 + $0x8] sm:$0xff]
      %v4028 = vld [vmem:[%s4025 + $0x10] sm:$0xff]
      %v4029 = vld [vmem:[%s4025 + $0x18] sm:$0xff]
      %v4030 = vld [vmem:[%s4025 + $0x20] sm:$0xff]
      %v4031 = vld [vmem:[%s4025 + $0x28] sm:$0xff]
      %v4032 = vld [vmem:[%s4025 + $0x30] sm:$0xff]
      %v4033 = vld [vmem:[%s4025 + $0x38] sm:$0xf]
      %v4035 = vsel %vm3211, %v4017, 0
      %v4038 = vsel %vm3211, %v4018, 0
      %v4041 = vsel %vm3211, %v4019, 0
      %v4044 = vsel %vm3211, %v4020, 0
      %v4047 = vsel %vm3211, %v4021, 0
      %v4050 = vsel %vm3211, %v4022, 0
      %v4053 = vsel %vm3211, %v4023, 0
      %v4056 = vsel %vm3211, %v4024, 0
      %v4059 = vsel %vm3305, %v4033, 0
      %4061 = vmatprep.subr.mxu0 0.0
      %4062 = vmatpush1.msra.mxu0 0.0
      %4063 = vmatprep.subr.mxu0 0.0
      %4064 = vmatpush1.msra.mxu0 0.0
      %4065 = vmatprep.subr.mxu0 0.0
      %4066 = vmatpush1.msra.mxu0 0.0
      %4067 = vmatprep.subr.mxu0 0.0
      %4068 = vmatpush1.msra.mxu0 0.0
      %4069 = vmatprep.subr.mxu0 0.0
      %4070 = vmatpush1.msra.mxu0 0.0
      %4071 = vmatprep.subr.mxu0 0.0
      %4072 = vmatpush1.msra.mxu0 0.0
      %4073 = vmatprep.subr.mxu0 0.0
      %4074 = vmatpush1.msra.mxu0 0.0
      %4075 = vmatprep.subr.mxu0 0.0
      %4076 = vmatpush1.msra.mxu0 0.0
      %4077 = vmatprep.subr.mxu0 0.0
      %4078 = vmatpush1.msra.mxu0 %v4059
      %4079 = vmatprep.subr.mxu0 0.0
      %4080 = vmatpush1.msra.mxu0 %v4032
      %4081 = vmatprep.subr.mxu0 0.0
      %4082 = vmatpush1.msra.mxu0 %v4031
      %4083 = vmatprep.subr.mxu0 0.0
      %4084 = vmatpush1.msra.mxu0 %v4030
      %4085 = vmatprep.subr.mxu0 0.0
      %4086 = vmatpush1.msra.mxu0 %v4029
      %4087 = vmatprep.subr.mxu0 0.0
      %4088 = vmatpush1.msra.mxu0 %v4028
      %4089 = vmatprep.subr.mxu0 0.0
      %4090 = vmatpush1.msra.mxu0 %v4027
      %4091 = vmatprep.subr.mxu0 0.0
      %4092 = vmatpush1.msra.mxu0 %v4026
      %4093 = vmatprep.subr.mxu0 0.0
      %4094 = vmatpush2.msra.mxu0 0.0
      %4095 = vmatprep.subr.mxu0 0.0
      %4096 = vmatpush2.msra.mxu0 0.0
      %4097 = vmatprep.subr.mxu0 0.0
      %4098 = vmatpush2.msra.mxu0 0.0
      %4099 = vmatprep.subr.mxu0 0.0
      %4100 = vmatpush2.msra.mxu0 0.0
      %4101 = vmatprep.subr.mxu0 0.0
      %4102 = vmatpush2.msra.mxu0 0.0
      %4103 = vmatprep.subr.mxu0 0.0
      %4104 = vmatpush2.msra.mxu0 0.0
      %4105 = vmatprep.subr.mxu0 0.0
      %4106 = vmatpush2.msra.mxu0 0.0
      %4107 = vmatprep.subr.mxu0 0.0
      %4108 = vmatpush2.msra.mxu0 0.0
      %4109 = vmatprep.subr.mxu0 0.0
      %4110 = vmatpush2.msra.mxu0 0.0
      %4111 = vmatprep.subr.mxu0 0.0
      %4112 = vmatpush2.msra.mxu0 0.0
      %4113 = vmatprep.subr.mxu0 0.0
      %4114 = vmatpush2.msra.mxu0 0.0
      %4115 = vmatprep.subr.mxu0 0.0
      %4116 = vmatpush2.msra.mxu0 0.0
      %4117 = vmatprep.subr.mxu0 0.0
      %4118 = vmatpush2.msra.mxu0 0.0
      %4119 = vmatprep.subr.mxu0 0.0
      %4120 = vmatpush2.msra.mxu0 0.0
      %4121 = vmatprep.subr.mxu0 0.0
      %4122 = vmatpush2.msra.mxu0 0.0
      %4123 = vmatprep.subr.mxu0 0.0
      %4124 = vmatpush2.msra.mxu0 0.0
      %4125 = vmatprep.mubr.f32.mxu0 0.0
      %4126 = vmatmul.mubr.f32.gmra.mxu0 %v4035
      %v4127 = vpop.f32.mrf.mxu0
      %v4128 = vadd.f32 0.0, %v4127
      %v4129 = vpop.f32.mrf.mxu0
      %4130 = vmatprep.mubr.f32.mxu0 0.0
      %4131 = vmatmul.mubr.f32.gmra.mxu0 %v4038
      %v4132 = vpop.f32.mrf.mxu0
      %v4133 = vadd.f32 0.0, %v4132
      %v4134 = vpop.f32.mrf.mxu0
      %4135 = vmatprep.mubr.f32.mxu0 0.0
      %4136 = vmatmul.mubr.f32.gmra.mxu0 %v4041
      %v4137 = vpop.f32.mrf.mxu0
      %v4138 = vadd.f32 0.0, %v4137
      %v4139 = vpop.f32.mrf.mxu0
      %4140 = vmatprep.mubr.f32.mxu0 0.0
      %4141 = vmatmul.mubr.f32.gmra.mxu0 %v4044
      %v4142 = vpop.f32.mrf.mxu0
      %v4143 = vadd.f32 0.0, %v4142
      %v4144 = vpop.f32.mrf.mxu0
      %4145 = vmatprep.mubr.f32.mxu0 0.0
      %4146 = vmatmul.mubr.f32.gmra.mxu0 %v4047
      %v4147 = vpop.f32.mrf.mxu0
      %v4148 = vadd.f32 0.0, %v4147
      %v4149 = vpop.f32.mrf.mxu0
      %4150 = vmatprep.mubr.f32.mxu0 0.0
      %4151 = vmatmul.mubr.f32.gmra.mxu0 %v4050
      %v4152 = vpop.f32.mrf.mxu0
      %v4153 = vadd.f32 0.0, %v4152
      %v4154 = vpop.f32.mrf.mxu0
      %4155 = vmatprep.mubr.f32.mxu0 0.0
      %4156 = vmatmul.mubr.f32.gmra.mxu0 %v4053
      %v4157 = vpop.f32.mrf.mxu0
      %v4158 = vadd.f32 0.0, %v4157
      %v4159 = vpop.f32.mrf.mxu0
      %4160 = vmatprep.mubr.f32.mxu0 0.0
      %4161 = vmatmul.mubr.f32.gmra.mxu0 %v4056
      %v4162 = vpop.f32.mrf.mxu0
      %v4163 = vadd.f32 0.0, %v4162
      %v4164 = vpop.f32.mrf.mxu0
      %4165 = vdwg.mxu0
      %v4166 = vadd.f32 %v4009, %v4128
      %v4167 = vadd.f32 %v4010, %v4133
      %v4168 = vadd.f32 %v4011, %v4138
      %v4169 = vadd.f32 %v4012, %v4143
      %v4170 = vadd.f32 %v4013, %v4148
      %v4171 = vadd.f32 %v4014, %v4153
      %v4172 = vadd.f32 %v4015, %v4158
      %v4173 = vadd.f32 %v4016, %v4163
      %s4174 = scalar_lea.vmem [#allocation3], 64
      %v4175 = vld [vmem:[%s4174] sm:$0xff]
      %v4176 = vld [vmem:[%s4174 + $0x10] sm:$0xff]
      %v4177 = vld [vmem:[%s4174 + $0x20] sm:$0xff]
      %v4178 = vld [vmem:[%s4174 + $0x30] sm:$0xff]
      %v4179 = vld [vmem:[%s4174 + $0x40] sm:$0xff]
      %v4180 = vld [vmem:[%s4174 + $0x50] sm:$0xff]
      %v4181 = vld [vmem:[%s4174 + $0x60] sm:$0xff]
      %v4182 = vld [vmem:[%s4174 + $0x70] sm:$0xff]
      %s4183 = scalar_lea.vmem %s5, 384
      %v4184 = vld [vmem:[%s4183] sm:$0xff]
      %v4185 = vld [vmem:[%s4183 + $0x8] sm:$0xff]
      %v4186 = vld [vmem:[%s4183 + $0x10] sm:$0xff]
      %v4187 = vld [vmem:[%s4183 + $0x18] sm:$0xff]
      %v4188 = vld [vmem:[%s4183 + $0x20] sm:$0xff]
      %v4189 = vld [vmem:[%s4183 + $0x28] sm:$0xff]
      %v4190 = vld [vmem:[%s4183 + $0x30] sm:$0xff]
      %v4191 = vld [vmem:[%s4183 + $0x38] sm:$0xf]
      %v4193 = vsel %vm3211, %v4175, 0
      %v4196 = vsel %vm3211, %v4176, 0
      %v4199 = vsel %vm3211, %v4177, 0
      %v4202 = vsel %vm3211, %v4178, 0
      %v4205 = vsel %vm3211, %v4179, 0
      %v4208 = vsel %vm3211, %v4180, 0
      %v4211 = vsel %vm3211, %v4181, 0
      %v4214 = vsel %vm3211, %v4182, 0
      %v4217 = vsel %vm3305, %v4191, 0
      %4219 = vmatprep.subr.mxu0 0.0
      %4220 = vmatpush1.msra.mxu0 0.0
      %4221 = vmatprep.subr.mxu0 0.0
      %4222 = vmatpush1.msra.mxu0 0.0
      %4223 = vmatprep.subr.mxu0 0.0
      %4224 = vmatpush1.msra.mxu0 0.0
      %4225 = vmatprep.subr.mxu0 0.0
      %4226 = vmatpush1.msra.mxu0 0.0
      %4227 = vmatprep.subr.mxu0 0.0
      %4228 = vmatpush1.msra.mxu0 0.0
      %4229 = vmatprep.subr.mxu0 0.0
      %4230 = vmatpush1.msra.mxu0 0.0
      %4231 = vmatprep.subr.mxu0 0.0
      %4232 = vmatpush1.msra.mxu0 0.0
      %4233 = vmatprep.subr.mxu0 0.0
      %4234 = vmatpush1.msra.mxu0 0.0
      %4235 = vmatprep.subr.mxu0 0.0
      %4236 = vmatpush1.msra.mxu0 %v4217
      %4237 = vmatprep.subr.mxu0 0.0
      %4238 = vmatpush1.msra.mxu0 %v4190
      %4239 = vmatprep.subr.mxu0 0.0
      %4240 = vmatpush1.msra.mxu0 %v4189
      %4241 = vmatprep.subr.mxu0 0.0
      %4242 = vmatpush1.msra.mxu0 %v4188
      %4243 = vmatprep.subr.mxu0 0.0
      %4244 = vmatpush1.msra.mxu0 %v4187
      %4245 = vmatprep.subr.mxu0 0.0
      %4246 = vmatpush1.msra.mxu0 %v4186
      %4247 = vmatprep.subr.mxu0 0.0
      %4248 = vmatpush1.msra.mxu0 %v4185
      %4249 = vmatprep.subr.mxu0 0.0
      %4250 = vmatpush1.msra.mxu0 %v4184
      %4251 = vmatprep.subr.mxu0 0.0
      %4252 = vmatpush2.msra.mxu0 0.0
      %4253 = vmatprep.subr.mxu0 0.0
      %4254 = vmatpush2.msra.mxu0 0.0
      %4255 = vmatprep.subr.mxu0 0.0
      %4256 = vmatpush2.msra.mxu0 0.0
      %4257 = vmatprep.subr.mxu0 0.0
      %4258 = vmatpush2.msra.mxu0 0.0
      %4259 = vmatprep.subr.mxu0 0.0
      %4260 = vmatpush2.msra.mxu0 0.0
      %4261 = vmatprep.subr.mxu0 0.0
      %4262 = vmatpush2.msra.mxu0 0.0
      %4263 = vmatprep.subr.mxu0 0.0
      %4264 = vmatpush2.msra.mxu0 0.0
      %4265 = vmatprep.subr.mxu0 0.0
      %4266 = vmatpush2.msra.mxu0 0.0
      %4267 = vmatprep.subr.mxu0 0.0
      %4268 = vmatpush2.msra.mxu0 0.0
      %4269 = vmatprep.subr.mxu0 0.0
      %4270 = vmatpush2.msra.mxu0 0.0
      %4271 = vmatprep.subr.mxu0 0.0
      %4272 = vmatpush2.msra.mxu0 0.0
      %4273 = vmatprep.subr.mxu0 0.0
      %4274 = vmatpush2.msra.mxu0 0.0
      %4275 = vmatprep.subr.mxu0 0.0
      %4276 = vmatpush2.msra.mxu0 0.0
      %4277 = vmatprep.subr.mxu0 0.0
      %4278 = vmatpush2.msra.mxu0 0.0
      %4279 = vmatprep.subr.mxu0 0.0
      %4280 = vmatpush2.msra.mxu0 0.0
      %4281 = vmatprep.subr.mxu0 0.0
      %4282 = vmatpush2.msra.mxu0 0.0
      %4283 = vmatprep.mubr.f32.mxu0 0.0
      %4284 = vmatmul.mubr.f32.gmra.mxu0 %v4193
      %v4285 = vpop.f32.mrf.mxu0
      %v4286 = vadd.f32 0.0, %v4285
      %v4287 = vpop.f32.mrf.mxu0
      %4288 = vmatprep.mubr.f32.mxu0 0.0
      %4289 = vmatmul.mubr.f32.gmra.mxu0 %v4196
      %v4290 = vpop.f32.mrf.mxu0
      %v4291 = vadd.f32 0.0, %v4290
      %v4292 = vpop.f32.mrf.mxu0
      %4293 = vmatprep.mubr.f32.mxu0 0.0
      %4294 = vmatmul.mubr.f32.gmra.mxu0 %v4199
      %v4295 = vpop.f32.mrf.mxu0
      %v4296 = vadd.f32 0.0, %v4295
      %v4297 = vpop.f32.mrf.mxu0
      %4298 = vmatprep.mubr.f32.mxu0 0.0
      %4299 = vmatmul.mubr.f32.gmra.mxu0 %v4202
      %v4300 = vpop.f32.mrf.mxu0
      %v4301 = vadd.f32 0.0, %v4300
      %v4302 = vpop.f32.mrf.mxu0
      %4303 = vmatprep.mubr.f32.mxu0 0.0
      %4304 = vmatmul.mubr.f32.gmra.mxu0 %v4205
      %v4305 = vpop.f32.mrf.mxu0
      %v4306 = vadd.f32 0.0, %v4305
      %v4307 = vpop.f32.mrf.mxu0
      %4308 = vmatprep.mubr.f32.mxu0 0.0
      %4309 = vmatmul.mubr.f32.gmra.mxu0 %v4208
      %v4310 = vpop.f32.mrf.mxu0
      %v4311 = vadd.f32 0.0, %v4310
      %v4312 = vpop.f32.mrf.mxu0
      %4313 = vmatprep.mubr.f32.mxu0 0.0
      %4314 = vmatmul.mubr.f32.gmra.mxu0 %v4211
      %v4315 = vpop.f32.mrf.mxu0
      %v4316 = vadd.f32 0.0, %v4315
      %v4317 = vpop.f32.mrf.mxu0
      %4318 = vmatprep.mubr.f32.mxu0 0.0
      %4319 = vmatmul.mubr.f32.gmra.mxu0 %v4214
      %v4320 = vpop.f32.mrf.mxu0
      %v4321 = vadd.f32 0.0, %v4320
      %v4322 = vpop.f32.mrf.mxu0
      %4323 = vdwg.mxu0
      %v4324 = vadd.f32 %v4166, %v4286
      %v4325 = vadd.f32 %v4167, %v4291
      %v4326 = vadd.f32 %v4168, %v4296
      %v4327 = vadd.f32 %v4169, %v4301
      %v4328 = vadd.f32 %v4170, %v4306
      %v4329 = vadd.f32 %v4171, %v4311
      %v4330 = vadd.f32 %v4172, %v4316
      %v4331 = vadd.f32 %v4173, %v4321
      %v4332 = vld [vmem:[%s4174 + $0x2] sm:$0xff]
      %v4333 = vld [vmem:[%s4174 + $0x12] sm:$0xff]
      %v4334 = vld [vmem:[%s4174 + $0x22] sm:$0xff]
      %v4335 = vld [vmem:[%s4174 + $0x32] sm:$0xff]
      %v4336 = vld [vmem:[%s4174 + $0x42] sm:$0xff]
      %v4337 = vld [vmem:[%s4174 + $0x52] sm:$0xff]
      %v4338 = vld [vmem:[%s4174 + $0x62] sm:$0xff]
      %v4339 = vld [vmem:[%s4174 + $0x72] sm:$0xff]
      %s4340 = scalar_lea.vmem %s5, 448
      %v4341 = vld [vmem:[%s4340] sm:$0xff]
      %v4342 = vld [vmem:[%s4340 + $0x8] sm:$0xff]
      %v4343 = vld [vmem:[%s4340 + $0x10] sm:$0xff]
      %v4344 = vld [vmem:[%s4340 + $0x18] sm:$0xff]
      %v4345 = vld [vmem:[%s4340 + $0x20] sm:$0xff]
      %v4346 = vld [vmem:[%s4340 + $0x28] sm:$0xff]
      %v4347 = vld [vmem:[%s4340 + $0x30] sm:$0xff]
      %v4348 = vld [vmem:[%s4340 + $0x38] sm:$0xf]
      %v4350 = vsel %vm3211, %v4332, 0
      %v4353 = vsel %vm3211, %v4333, 0
      %v4356 = vsel %vm3211, %v4334, 0
      %v4359 = vsel %vm3211, %v4335, 0
      %v4362 = vsel %vm3211, %v4336, 0
      %v4365 = vsel %vm3211, %v4337, 0
      %v4368 = vsel %vm3211, %v4338, 0
      %v4371 = vsel %vm3211, %v4339, 0
      %v4374 = vsel %vm3305, %v4348, 0
      %4376 = vmatprep.subr.mxu0 0.0
      %4377 = vmatpush1.msra.mxu0 0.0
      %4378 = vmatprep.subr.mxu0 0.0
      %4379 = vmatpush1.msra.mxu0 0.0
      %4380 = vmatprep.subr.mxu0 0.0
      %4381 = vmatpush1.msra.mxu0 0.0
      %4382 = vmatprep.subr.mxu0 0.0
      %4383 = vmatpush1.msra.mxu0 0.0
      %4384 = vmatprep.subr.mxu0 0.0
      %4385 = vmatpush1.msra.mxu0 0.0
      %4386 = vmatprep.subr.mxu0 0.0
      %4387 = vmatpush1.msra.mxu0 0.0
      %4388 = vmatprep.subr.mxu0 0.0
      %4389 = vmatpush1.msra.mxu0 0.0
      %4390 = vmatprep.subr.mxu0 0.0
      %4391 = vmatpush1.msra.mxu0 0.0
      %4392 = vmatprep.subr.mxu0 0.0
      %4393 = vmatpush1.msra.mxu0 %v4374
      %4394 = vmatprep.subr.mxu0 0.0
      %4395 = vmatpush1.msra.mxu0 %v4347
      %4396 = vmatprep.subr.mxu0 0.0
      %4397 = vmatpush1.msra.mxu0 %v4346
      %4398 = vmatprep.subr.mxu0 0.0
      %4399 = vmatpush1.msra.mxu0 %v4345
      %4400 = vmatprep.subr.mxu0 0.0
      %4401 = vmatpush1.msra.mxu0 %v4344
      %4402 = vmatprep.subr.mxu0 0.0
      %4403 = vmatpush1.msra.mxu0 %v4343
      %4404 = vmatprep.subr.mxu0 0.0
      %4405 = vmatpush1.msra.mxu0 %v4342
      %4406 = vmatprep.subr.mxu0 0.0
      %4407 = vmatpush1.msra.mxu0 %v4341
      %4408 = vmatprep.subr.mxu0 0.0
      %4409 = vmatpush2.msra.mxu0 0.0
      %4410 = vmatprep.subr.mxu0 0.0
      %4411 = vmatpush2.msra.mxu0 0.0
      %4412 = vmatprep.subr.mxu0 0.0
      %4413 = vmatpush2.msra.mxu0 0.0
      %4414 = vmatprep.subr.mxu0 0.0
      %4415 = vmatpush2.msra.mxu0 0.0
      %4416 = vmatprep.subr.mxu0 0.0
      %4417 = vmatpush2.msra.mxu0 0.0
      %4418 = vmatprep.subr.mxu0 0.0
      %4419 = vmatpush2.msra.mxu0 0.0
      %4420 = vmatprep.subr.mxu0 0.0
      %4421 = vmatpush2.msra.mxu0 0.0
      %4422 = vmatprep.subr.mxu0 0.0
      %4423 = vmatpush2.msra.mxu0 0.0
      %4424 = vmatprep.subr.mxu0 0.0
      %4425 = vmatpush2.msra.mxu0 0.0
      %4426 = vmatprep.subr.mxu0 0.0
      %4427 = vmatpush2.msra.mxu0 0.0
      %4428 = vmatprep.subr.mxu0 0.0
      %4429 = vmatpush2.msra.mxu0 0.0
      %4430 = vmatprep.subr.mxu0 0.0
      %4431 = vmatpush2.msra.mxu0 0.0
      %4432 = vmatprep.subr.mxu0 0.0
      %4433 = vmatpush2.msra.mxu0 0.0
      %4434 = vmatprep.subr.mxu0 0.0
      %4435 = vmatpush2.msra.mxu0 0.0
      %4436 = vmatprep.subr.mxu0 0.0
      %4437 = vmatpush2.msra.mxu0 0.0
      %4438 = vmatprep.subr.mxu0 0.0
      %4439 = vmatpush2.msra.mxu0 0.0
      %4440 = vmatprep.mubr.f32.mxu0 0.0
      %4441 = vmatmul.mubr.f32.gmra.mxu0 %v4350
      %v4442 = vpop.f32.mrf.mxu0
      %v4443 = vadd.f32 0.0, %v4442
      %v4444 = vpop.f32.mrf.mxu0
      %4445 = vmatprep.mubr.f32.mxu0 0.0
      %4446 = vmatmul.mubr.f32.gmra.mxu0 %v4353
      %v4447 = vpop.f32.mrf.mxu0
      %v4448 = vadd.f32 0.0, %v4447
      %v4449 = vpop.f32.mrf.mxu0
      %4450 = vmatprep.mubr.f32.mxu0 0.0
      %4451 = vmatmul.mubr.f32.gmra.mxu0 %v4356
      %v4452 = vpop.f32.mrf.mxu0
      %v4453 = vadd.f32 0.0, %v4452
      %v4454 = vpop.f32.mrf.mxu0
      %4455 = vmatprep.mubr.f32.mxu0 0.0
      %4456 = vmatmul.mubr.f32.gmra.mxu0 %v4359
      %v4457 = vpop.f32.mrf.mxu0
      %v4458 = vadd.f32 0.0, %v4457
      %v4459 = vpop.f32.mrf.mxu0
      %4460 = vmatprep.mubr.f32.mxu0 0.0
      %4461 = vmatmul.mubr.f32.gmra.mxu0 %v4362
      %v4462 = vpop.f32.mrf.mxu0
      %v4463 = vadd.f32 0.0, %v4462
      %v4464 = vpop.f32.mrf.mxu0
      %4465 = vmatprep.mubr.f32.mxu0 0.0
      %4466 = vmatmul.mubr.f32.gmra.mxu0 %v4365
      %v4467 = vpop.f32.mrf.mxu0
      %v4468 = vadd.f32 0.0, %v4467
      %v4469 = vpop.f32.mrf.mxu0
      %4470 = vmatprep.mubr.f32.mxu0 0.0
      %4471 = vmatmul.mubr.f32.gmra.mxu0 %v4368
      %v4472 = vpop.f32.mrf.mxu0
      %v4473 = vadd.f32 0.0, %v4472
      %v4474 = vpop.f32.mrf.mxu0
      %4475 = vmatprep.mubr.f32.mxu0 0.0
      %4476 = vmatmul.mubr.f32.gmra.mxu0 %v4371
      %v4477 = vpop.f32.mrf.mxu0
      %v4478 = vadd.f32 0.0, %v4477
      %v4479 = vpop.f32.mrf.mxu0
      %4480 = vdwg.mxu0
      %v4481 = vadd.f32 %v4324, %v4443
      %v4482 = vadd.f32 %v4325, %v4448
      %v4483 = vadd.f32 %v4326, %v4453
      %v4484 = vadd.f32 %v4327, %v4458
      %v4485 = vadd.f32 %v4328, %v4463
      %v4486 = vadd.f32 %v4329, %v4468
      %v4487 = vadd.f32 %v4330, %v4473
      %v4488 = vadd.f32 %v4331, %v4478
      %v4489 = vld [vmem:[%s4174 + $0x4] sm:$0xff]
      %v4490 = vld [vmem:[%s4174 + $0x14] sm:$0xff]
      %v4491 = vld [vmem:[%s4174 + $0x24] sm:$0xff]
      %v4492 = vld [vmem:[%s4174 + $0x34] sm:$0xff]
      %v4493 = vld [vmem:[%s4174 + $0x44] sm:$0xff]
      %v4494 = vld [vmem:[%s4174 + $0x54] sm:$0xff]
      %v4495 = vld [vmem:[%s4174 + $0x64] sm:$0xff]
      %v4496 = vld [vmem:[%s4174 + $0x74] sm:$0xff]
      %s4497 = scalar_lea.vmem %s5, 512
      %v4498 = vld [vmem:[%s4497] sm:$0xff]
      %v4499 = vld [vmem:[%s4497 + $0x8] sm:$0xff]
      %v4500 = vld [vmem:[%s4497 + $0x10] sm:$0xff]
      %v4501 = vld [vmem:[%s4497 + $0x18] sm:$0xff]
      %v4502 = vld [vmem:[%s4497 + $0x20] sm:$0xff]
      %v4503 = vld [vmem:[%s4497 + $0x28] sm:$0xff]
      %v4504 = vld [vmem:[%s4497 + $0x30] sm:$0xff]
      %v4505 = vld [vmem:[%s4497 + $0x38] sm:$0xf]
      %v4507 = vsel %vm3211, %v4489, 0
      %v4510 = vsel %vm3211, %v4490, 0
      %v4513 = vsel %vm3211, %v4491, 0
      %v4516 = vsel %vm3211, %v4492, 0
      %v4519 = vsel %vm3211, %v4493, 0
      %v4522 = vsel %vm3211, %v4494, 0
      %v4525 = vsel %vm3211, %v4495, 0
      %v4528 = vsel %vm3211, %v4496, 0
      %v4531 = vsel %vm3305, %v4505, 0
      %4533 = vmatprep.subr.mxu0 0.0
      %4534 = vmatpush1.msra.mxu0 0.0
      %4535 = vmatprep.subr.mxu0 0.0
      %4536 = vmatpush1.msra.mxu0 0.0
      %4537 = vmatprep.subr.mxu0 0.0
      %4538 = vmatpush1.msra.mxu0 0.0
      %4539 = vmatprep.subr.mxu0 0.0
      %4540 = vmatpush1.msra.mxu0 0.0
      %4541 = vmatprep.subr.mxu0 0.0
      %4542 = vmatpush1.msra.mxu0 0.0
      %4543 = vmatprep.subr.mxu0 0.0
      %4544 = vmatpush1.msra.mxu0 0.0
      %4545 = vmatprep.subr.mxu0 0.0
      %4546 = vmatpush1.msra.mxu0 0.0
      %4547 = vmatprep.subr.mxu0 0.0
      %4548 = vmatpush1.msra.mxu0 0.0
      %4549 = vmatprep.subr.mxu0 0.0
      %4550 = vmatpush1.msra.mxu0 %v4531
      %4551 = vmatprep.subr.mxu0 0.0
      %4552 = vmatpush1.msra.mxu0 %v4504
      %4553 = vmatprep.subr.mxu0 0.0
      %4554 = vmatpush1.msra.mxu0 %v4503
      %4555 = vmatprep.subr.mxu0 0.0
      %4556 = vmatpush1.msra.mxu0 %v4502
      %4557 = vmatprep.subr.mxu0 0.0
      %4558 = vmatpush1.msra.mxu0 %v4501
      %4559 = vmatprep.subr.mxu0 0.0
      %4560 = vmatpush1.msra.mxu0 %v4500
      %4561 = vmatprep.subr.mxu0 0.0
      %4562 = vmatpush1.msra.mxu0 %v4499
      %4563 = vmatprep.subr.mxu0 0.0
      %4564 = vmatpush1.msra.mxu0 %v4498
      %4565 = vmatprep.subr.mxu0 0.0
      %4566 = vmatpush2.msra.mxu0 0.0
      %4567 = vmatprep.subr.mxu0 0.0
      %4568 = vmatpush2.msra.mxu0 0.0
      %4569 = vmatprep.subr.mxu0 0.0
      %4570 = vmatpush2.msra.mxu0 0.0
      %4571 = vmatprep.subr.mxu0 0.0
      %4572 = vmatpush2.msra.mxu0 0.0
      %4573 = vmatprep.subr.mxu0 0.0
      %4574 = vmatpush2.msra.mxu0 0.0
      %4575 = vmatprep.subr.mxu0 0.0
      %4576 = vmatpush2.msra.mxu0 0.0
      %4577 = vmatprep.subr.mxu0 0.0
      %4578 = vmatpush2.msra.mxu0 0.0
      %4579 = vmatprep.subr.mxu0 0.0
      %4580 = vmatpush2.msra.mxu0 0.0
      %4581 = vmatprep.subr.mxu0 0.0
      %4582 = vmatpush2.msra.mxu0 0.0
      %4583 = vmatprep.subr.mxu0 0.0
      %4584 = vmatpush2.msra.mxu0 0.0
      %4585 = vmatprep.subr.mxu0 0.0
      %4586 = vmatpush2.msra.mxu0 0.0
      %4587 = vmatprep.subr.mxu0 0.0
      %4588 = vmatpush2.msra.mxu0 0.0
      %4589 = vmatprep.subr.mxu0 0.0
      %4590 = vmatpush2.msra.mxu0 0.0
      %4591 = vmatprep.subr.mxu0 0.0
      %4592 = vmatpush2.msra.mxu0 0.0
      %4593 = vmatprep.subr.mxu0 0.0
      %4594 = vmatpush2.msra.mxu0 0.0
      %4595 = vmatprep.subr.mxu0 0.0
      %4596 = vmatpush2.msra.mxu0 0.0
      %4597 = vmatprep.mubr.f32.mxu0 0.0
      %4598 = vmatmul.mubr.f32.gmra.mxu0 %v4507
      %v4599 = vpop.f32.mrf.mxu0
      %v4600 = vadd.f32 0.0, %v4599
      %v4601 = vpop.f32.mrf.mxu0
      %4602 = vmatprep.mubr.f32.mxu0 0.0
      %4603 = vmatmul.mubr.f32.gmra.mxu0 %v4510
      %v4604 = vpop.f32.mrf.mxu0
      %v4605 = vadd.f32 0.0, %v4604
      %v4606 = vpop.f32.mrf.mxu0
      %4607 = vmatprep.mubr.f32.mxu0 0.0
      %4608 = vmatmul.mubr.f32.gmra.mxu0 %v4513
      %v4609 = vpop.f32.mrf.mxu0
      %v4610 = vadd.f32 0.0, %v4609
      %v4611 = vpop.f32.mrf.mxu0
      %4612 = vmatprep.mubr.f32.mxu0 0.0
      %4613 = vmatmul.mubr.f32.gmra.mxu0 %v4516
      %v4614 = vpop.f32.mrf.mxu0
      %v4615 = vadd.f32 0.0, %v4614
      %v4616 = vpop.f32.mrf.mxu0
      %4617 = vmatprep.mubr.f32.mxu0 0.0
      %4618 = vmatmul.mubr.f32.gmra.mxu0 %v4519
      %v4619 = vpop.f32.mrf.mxu0
      %v4620 = vadd.f32 0.0, %v4619
      %v4621 = vpop.f32.mrf.mxu0
      %4622 = vmatprep.mubr.f32.mxu0 0.0
      %4623 = vmatmul.mubr.f32.gmra.mxu0 %v4522
      %v4624 = vpop.f32.mrf.mxu0
      %v4625 = vadd.f32 0.0, %v4624
      %v4626 = vpop.f32.mrf.mxu0
      %4627 = vmatprep.mubr.f32.mxu0 0.0
      %4628 = vmatmul.mubr.f32.gmra.mxu0 %v4525
      %v4629 = vpop.f32.mrf.mxu0
      %v4630 = vadd.f32 0.0, %v4629
      %v4631 = vpop.f32.mrf.mxu0
      %4632 = vmatprep.mubr.f32.mxu0 0.0
      %4633 = vmatmul.mubr.f32.gmra.mxu0 %v4528
      %v4634 = vpop.f32.mrf.mxu0
      %v4635 = vadd.f32 0.0, %v4634
      %v4636 = vpop.f32.mrf.mxu0
      %4637 = vdwg.mxu0
      %v4638 = vadd.f32 %v4481, %v4600
      %v4639 = vadd.f32 %v4482, %v4605
      %v4640 = vadd.f32 %v4483, %v4610
      %v4641 = vadd.f32 %v4484, %v4615
      %v4642 = vadd.f32 %v4485, %v4620
      %v4643 = vadd.f32 %v4486, %v4625
      %v4644 = vadd.f32 %v4487, %v4630
      %v4645 = vadd.f32 %v4488, %v4635
      %v4646 = vld [vmem:[%s6] sm:$0x1]
      %v4648 = vlaneseq
      %v4649 = vshrl.u32 %v4648, 7
      %v4650 = vsub.s32 0, %v4649
      %v4651 = vrot.slane %v4646, %v4650
      %v4653 = vadd.f32 %v4638, %v4651
      %v4654 = vadd.f32 %v4639, %v4651
      %v4655 = vadd.f32 %v4640, %v4651
      %v4656 = vadd.f32 %v4641, %v4651
      %v4657 = vadd.f32 %v4642, %v4651
      %v4658 = vadd.f32 %v4643, %v4651
      %v4659 = vadd.f32 %v4644, %v4651
      %v4660 = vadd.f32 %v4645, %v4651
      %v4661 = vmax.f32 %v4653, 0.0
      %v4662 = vmax.f32 %v4654, 0.0
      %v4663 = vmax.f32 %v4655, 0.0
      %v4664 = vmax.f32 %v4656, 0.0
      %v4665 = vmax.f32 %v4657, 0.0
      %v4666 = vmax.f32 %v4658, 0.0
      %v4667 = vmax.f32 %v4659, 0.0
      %v4668 = vmax.f32 %v4660, 0.0
      %4669 = vst.msk [vmem:[#allocation4] sm:$0xff] %vm3211, 0.0
      %4670 = vst.msk [vmem:[#allocation4 + $0x8] sm:$0xf] %vm3213, 0.0
      %4671 = vst.msk [vmem:[#allocation4 + $0x10] sm:$0xff] %vm3211, 0.0
      %4672 = vst.msk [vmem:[#allocation4 + $0x18] sm:$0xf] %vm3213, 0.0
      %s4673 = scalar_lea.vmem [#allocation4], 160
      %4674 = vst.msk [vmem:[%s4673] sm:$0xff] %vm3211, 0.0
      %4675 = vst.msk [vmem:[%s4673 + $0x8] sm:$0xf] %vm3213, 0.0
      %4676 = vst.msk [vmem:[%s4673 + $0x10] sm:$0xff] %vm3211, 0.0
      %4677 = vst.msk [vmem:[%s4673 + $0x18] sm:$0xf] %vm3213, 0.0
      %s4678 = scalar_lea.vmem [#allocation4], 32
      %4679 = vst.msk [vmem:[%s4678] sm:$0x3] %vm3223, 0.0
      %4680 = vst.msk [vmem:[%s4678 + $0x10] sm:$0x3] %vm3223, 0.0
      %4681 = vst.msk [vmem:[%s4678 + $0x20] sm:$0x3] %vm3223, 0.0
      %4682 = vst.msk [vmem:[%s4678 + $0x30] sm:$0x3] %vm3223, 0.0
      %4683 = vst.msk [vmem:[%s4678 + $0x40] sm:$0x3] %vm3223, 0.0
      %4684 = vst.msk [vmem:[%s4678 + $0x50] sm:$0x3] %vm3223, 0.0
      %4685 = vst.msk [vmem:[%s4678 + $0x60] sm:$0x3] %vm3223, 0.0
      %4686 = vst.msk [vmem:[%s4678 + $0x70] sm:$0x3] %vm3223, 0.0
      %4687 = vst.msk [vmem:[%s4678 + $0xa] sm:$0x3] %vm3223, 0.0
      %4688 = vst.msk [vmem:[%s4678 + $0x1a] sm:$0x3] %vm3223, 0.0
      %4689 = vst.msk [vmem:[%s4678 + $0x2a] sm:$0x3] %vm3223, 0.0
      %4690 = vst.msk [vmem:[%s4678 + $0x3a] sm:$0x3] %vm3223, 0.0
      %4691 = vst.msk [vmem:[%s4678 + $0x4a] sm:$0x3] %vm3223, 0.0
      %4692 = vst.msk [vmem:[%s4678 + $0x5a] sm:$0x3] %vm3223, 0.0
      %4693 = vst.msk [vmem:[%s4678 + $0x6a] sm:$0x3] %vm3223, 0.0
      %4694 = vst.msk [vmem:[%s4678 + $0x7a] sm:$0x3] %vm3223, 0.0
      %4695 = vst.msk [vmem:[%s4678 + $0x2] sm:$0xff] %vm3211, %v4661
      %4696 = vst.msk [vmem:[%s4678 + $0x12] sm:$0xff] %vm3211, %v4662
      %4697 = vst.msk [vmem:[%s4678 + $0x22] sm:$0xff] %vm3211, %v4663
      %4698 = vst.msk [vmem:[%s4678 + $0x32] sm:$0xff] %vm3211, %v4664
      %4699 = vst.msk [vmem:[%s4678 + $0x42] sm:$0xff] %vm3211, %v4665
      %4700 = vst.msk [vmem:[%s4678 + $0x52] sm:$0xff] %vm3211, %v4666
      %4701 = vst.msk [vmem:[%s4678 + $0x62] sm:$0xff] %vm3211, %v4667
      %4702 = vst.msk [vmem:[%s4678 + $0x72] sm:$0xff] %vm3211, %v4668
      %v4703 = vld [vmem:[#allocation4] sm:$0xff]
      %v4704 = vld [vmem:[#allocation4 + $0x10] sm:$0xff]
      %v4705 = vld [vmem:[#allocation4 + $0x20] sm:$0xff]
      %v4706 = vld [vmem:[#allocation4 + $0x30] sm:$0xff]
      %v4707 = vld [vmem:[#allocation4 + $0x40] sm:$0xff]
      %v4708 = vld [vmem:[#allocation4 + $0x50] sm:$0xff]
      %v4709 = vld [vmem:[#allocation4 + $0x60] sm:$0xff]
      %v4710 = vld [vmem:[#allocation4 + $0x70] sm:$0xff]
      %v4711 = vld [vmem:[%s7] sm:$0xff]
      %v4712 = vld [vmem:[%s7 + $0x8] sm:$0xff]
      %v4713 = vld [vmem:[%s7 + $0x10] sm:$0xff]
      %v4714 = vld [vmem:[%s7 + $0x18] sm:$0xff]
      %v4715 = vld [vmem:[%s7 + $0x20] sm:$0xff]
      %v4716 = vld [vmem:[%s7 + $0x28] sm:$0xff]
      %v4717 = vld [vmem:[%s7 + $0x30] sm:$0xff]
      %v4718 = vld [vmem:[%s7 + $0x38] sm:$0xf]
      %v4719 = vld [vmem:[#allocation4 + $0x2] sm:$0xff]
      %v4720 = vld [vmem:[#allocation4 + $0x12] sm:$0xff]
      %v4721 = vld [vmem:[#allocation4 + $0x22] sm:$0xff]
      %v4722 = vld [vmem:[#allocation4 + $0x32] sm:$0xff]
      %v4723 = vld [vmem:[#allocation4 + $0x42] sm:$0xff]
      %v4724 = vld [vmem:[#allocation4 + $0x52] sm:$0xff]
      %v4725 = vld [vmem:[#allocation4 + $0x62] sm:$0xff]
      %v4726 = vld [vmem:[#allocation4 + $0x72] sm:$0xff]
      %s4727 = scalar_lea.vmem %s7, 64
      %v4728 = vld [vmem:[%s4727] sm:$0xff]
      %v4729 = vld [vmem:[%s4727 + $0x8] sm:$0xff]
      %v4730 = vld [vmem:[%s4727 + $0x10] sm:$0xff]
      %v4731 = vld [vmem:[%s4727 + $0x18] sm:$0xff]
      %v4732 = vld [vmem:[%s4727 + $0x20] sm:$0xff]
      %v4733 = vld [vmem:[%s4727 + $0x28] sm:$0xff]
      %v4734 = vld [vmem:[%s4727 + $0x30] sm:$0xff]
      %v4735 = vld [vmem:[%s4727 + $0x38] sm:$0xf]
      %v4737 = vsel %vm3211, %v4719, 0
      %v4740 = vsel %vm3211, %v4720, 0
      %v4743 = vsel %vm3211, %v4721, 0
      %v4746 = vsel %vm3211, %v4722, 0
      %v4749 = vsel %vm3211, %v4723, 0
      %v4752 = vsel %vm3211, %v4724, 0
      %v4755 = vsel %vm3211, %v4725, 0
      %v4758 = vsel %vm3211, %v4726, 0
      %v4761 = vsel %vm3305, %v4735, 0
      %4763 = vmatprep.subr.mxu0 0.0
      %4764 = vmatpush1.msra.mxu0 0.0
      %4765 = vmatprep.subr.mxu0 0.0
      %4766 = vmatpush1.msra.mxu0 0.0
      %4767 = vmatprep.subr.mxu0 0.0
      %4768 = vmatpush1.msra.mxu0 0.0
      %4769 = vmatprep.subr.mxu0 0.0
      %4770 = vmatpush1.msra.mxu0 0.0
      %4771 = vmatprep.subr.mxu0 0.0
      %4772 = vmatpush1.msra.mxu0 0.0
      %4773 = vmatprep.subr.mxu0 0.0
      %4774 = vmatpush1.msra.mxu0 0.0
      %4775 = vmatprep.subr.mxu0 0.0
      %4776 = vmatpush1.msra.mxu0 0.0
      %4777 = vmatprep.subr.mxu0 0.0
      %4778 = vmatpush1.msra.mxu0 0.0
      %4779 = vmatprep.subr.mxu0 0.0
      %4780 = vmatpush1.msra.mxu0 %v4761
      %4781 = vmatprep.subr.mxu0 0.0
      %4782 = vmatpush1.msra.mxu0 %v4734
      %4783 = vmatprep.subr.mxu0 0.0
      %4784 = vmatpush1.msra.mxu0 %v4733
      %4785 = vmatprep.subr.mxu0 0.0
      %4786 = vmatpush1.msra.mxu0 %v4732
      %4787 = vmatprep.subr.mxu0 0.0
      %4788 = vmatpush1.msra.mxu0 %v4731
      %4789 = vmatprep.subr.mxu0 0.0
      %4790 = vmatpush1.msra.mxu0 %v4730
      %4791 = vmatprep.subr.mxu0 0.0
      %4792 = vmatpush1.msra.mxu0 %v4729
      %4793 = vmatprep.subr.mxu0 0.0
      %4794 = vmatpush1.msra.mxu0 %v4728
      %4795 = vmatprep.subr.mxu0 0.0
      %4796 = vmatpush2.msra.mxu0 0.0
      %4797 = vmatprep.subr.mxu0 0.0
      %4798 = vmatpush2.msra.mxu0 0.0
      %4799 = vmatprep.subr.mxu0 0.0
      %4800 = vmatpush2.msra.mxu0 0.0
      %4801 = vmatprep.subr.mxu0 0.0
      %4802 = vmatpush2.msra.mxu0 0.0
      %4803 = vmatprep.subr.mxu0 0.0
      %4804 = vmatpush2.msra.mxu0 0.0
      %4805 = vmatprep.subr.mxu0 0.0
      %4806 = vmatpush2.msra.mxu0 0.0
      %4807 = vmatprep.subr.mxu0 0.0
      %4808 = vmatpush2.msra.mxu0 0.0
      %4809 = vmatprep.subr.mxu0 0.0
      %4810 = vmatpush2.msra.mxu0 0.0
      %4811 = vmatprep.subr.mxu0 0.0
      %4812 = vmatpush2.msra.mxu0 0.0
      %4813 = vmatprep.subr.mxu0 0.0
      %4814 = vmatpush2.msra.mxu0 0.0
      %4815 = vmatprep.subr.mxu0 0.0
      %4816 = vmatpush2.msra.mxu0 0.0
      %4817 = vmatprep.subr.mxu0 0.0
      %4818 = vmatpush2.msra.mxu0 0.0
      %4819 = vmatprep.subr.mxu0 0.0
      %4820 = vmatpush2.msra.mxu0 0.0
      %4821 = vmatprep.subr.mxu0 0.0
      %4822 = vmatpush2.msra.mxu0 0.0
      %4823 = vmatprep.subr.mxu0 0.0
      %4824 = vmatpush2.msra.mxu0 0.0
      %4825 = vmatprep.subr.mxu0 0.0
      %4826 = vmatpush2.msra.mxu0 0.0
      %4827 = vmatprep.mubr.f32.mxu0 0.0
      %4828 = vmatmul.mubr.f32.gmra.mxu0 %v4737
      %v4829 = vpop.f32.mrf.mxu0
      %v4830 = vadd.f32 0.0, %v4829
      %v4831 = vpop.f32.mrf.mxu0
      %4832 = vmatprep.mubr.f32.mxu0 0.0
      %4833 = vmatmul.mubr.f32.gmra.mxu0 %v4740
      %v4834 = vpop.f32.mrf.mxu0
      %v4835 = vadd.f32 0.0, %v4834
      %v4836 = vpop.f32.mrf.mxu0
      %4837 = vmatprep.mubr.f32.mxu0 0.0
      %4838 = vmatmul.mubr.f32.gmra.mxu0 %v4743
      %v4839 = vpop.f32.mrf.mxu0
      %v4840 = vadd.f32 0.0, %v4839
      %v4841 = vpop.f32.mrf.mxu0
      %4842 = vmatprep.mubr.f32.mxu0 0.0
      %4843 = vmatmul.mubr.f32.gmra.mxu0 %v4746
      %v4844 = vpop.f32.mrf.mxu0
      %v4845 = vadd.f32 0.0, %v4844
      %v4846 = vpop.f32.mrf.mxu0
      %4847 = vmatprep.mubr.f32.mxu0 0.0
      %4848 = vmatmul.mubr.f32.gmra.mxu0 %v4749
      %v4849 = vpop.f32.mrf.mxu0
      %v4850 = vadd.f32 0.0, %v4849
      %v4851 = vpop.f32.mrf.mxu0
      %4852 = vmatprep.mubr.f32.mxu0 0.0
      %4853 = vmatmul.mubr.f32.gmra.mxu0 %v4752
      %v4854 = vpop.f32.mrf.mxu0
      %v4855 = vadd.f32 0.0, %v4854
      %v4856 = vpop.f32.mrf.mxu0
      %4857 = vmatprep.mubr.f32.mxu0 0.0
      %4858 = vmatmul.mubr.f32.gmra.mxu0 %v4755
      %v4859 = vpop.f32.mrf.mxu0
      %v4860 = vadd.f32 0.0, %v4859
      %v4861 = vpop.f32.mrf.mxu0
      %4862 = vmatprep.mubr.f32.mxu0 0.0
      %4863 = vmatmul.mubr.f32.gmra.mxu0 %v4758
      %v4864 = vpop.f32.mrf.mxu0
      %v4865 = vadd.f32 0.0, %v4864
      %v4866 = vpop.f32.mrf.mxu0
      %4867 = vdwg.mxu0
      %v4869 = vsel %vm3211, %v4703, 0
      %v4872 = vsel %vm3211, %v4704, 0
      %v4875 = vsel %vm3211, %v4705, 0
      %v4878 = vsel %vm3211, %v4706, 0
      %v4881 = vsel %vm3211, %v4707, 0
      %v4884 = vsel %vm3211, %v4708, 0
      %v4887 = vsel %vm3211, %v4709, 0
      %v4890 = vsel %vm3211, %v4710, 0
      %v4893 = vsel %vm3305, %v4718, 0
      %4895 = vmatprep.subr.mxu0 0.0
      %4896 = vmatpush1.msra.mxu0 0.0
      %4897 = vmatprep.subr.mxu0 0.0
      %4898 = vmatpush1.msra.mxu0 0.0
      %4899 = vmatprep.subr.mxu0 0.0
      %4900 = vmatpush1.msra.mxu0 0.0
      %4901 = vmatprep.subr.mxu0 0.0
      %4902 = vmatpush1.msra.mxu0 0.0
      %4903 = vmatprep.subr.mxu0 0.0
      %4904 = vmatpush1.msra.mxu0 0.0
      %4905 = vmatprep.subr.mxu0 0.0
      %4906 = vmatpush1.msra.mxu0 0.0
      %4907 = vmatprep.subr.mxu0 0.0
      %4908 = vmatpush1.msra.mxu0 0.0
      %4909 = vmatprep.subr.mxu0 0.0
      %4910 = vmatpush1.msra.mxu0 0.0
      %4911 = vmatprep.subr.mxu0 0.0
      %4912 = vmatpush1.msra.mxu0 %v4893
      %4913 = vmatprep.subr.mxu0 0.0
      %4914 = vmatpush1.msra.mxu0 %v4717
      %4915 = vmatprep.subr.mxu0 0.0
      %4916 = vmatpush1.msra.mxu0 %v4716
      %4917 = vmatprep.subr.mxu0 0.0
      %4918 = vmatpush1.msra.mxu0 %v4715
      %4919 = vmatprep.subr.mxu0 0.0
      %4920 = vmatpush1.msra.mxu0 %v4714
      %4921 = vmatprep.subr.mxu0 0.0
      %4922 = vmatpush1.msra.mxu0 %v4713
      %4923 = vmatprep.subr.mxu0 0.0
      %4924 = vmatpush1.msra.mxu0 %v4712
      %4925 = vmatprep.subr.mxu0 0.0
      %4926 = vmatpush1.msra.mxu0 %v4711
      %4927 = vmatprep.subr.mxu0 0.0
      %4928 = vmatpush2.msra.mxu0 0.0
      %4929 = vmatprep.subr.mxu0 0.0
      %4930 = vmatpush2.msra.mxu0 0.0
      %4931 = vmatprep.subr.mxu0 0.0
      %4932 = vmatpush2.msra.mxu0 0.0
      %4933 = vmatprep.subr.mxu0 0.0
      %4934 = vmatpush2.msra.mxu0 0.0
      %4935 = vmatprep.subr.mxu0 0.0
      %4936 = vmatpush2.msra.mxu0 0.0
      %4937 = vmatprep.subr.mxu0 0.0
      %4938 = vmatpush2.msra.mxu0 0.0
      %4939 = vmatprep.subr.mxu0 0.0
      %4940 = vmatpush2.msra.mxu0 0.0
      %4941 = vmatprep.subr.mxu0 0.0
      %4942 = vmatpush2.msra.mxu0 0.0
      %4943 = vmatprep.subr.mxu0 0.0
      %4944 = vmatpush2.msra.mxu0 0.0
      %4945 = vmatprep.subr.mxu0 0.0
      %4946 = vmatpush2.msra.mxu0 0.0
      %4947 = vmatprep.subr.mxu0 0.0
      %4948 = vmatpush2.msra.mxu0 0.0
      %4949 = vmatprep.subr.mxu0 0.0
      %4950 = vmatpush2.msra.mxu0 0.0
      %4951 = vmatprep.subr.mxu0 0.0
      %4952 = vmatpush2.msra.mxu0 0.0
      %4953 = vmatprep.subr.mxu0 0.0
      %4954 = vmatpush2.msra.mxu0 0.0
      %4955 = vmatprep.subr.mxu0 0.0
      %4956 = vmatpush2.msra.mxu0 0.0
      %4957 = vmatprep.subr.mxu0 0.0
      %4958 = vmatpush2.msra.mxu0 0.0
      %4959 = vmatprep.mubr.f32.mxu0 0.0
      %4960 = vmatmul.mubr.f32.gmra.mxu0 %v4869
      %v4961 = vpop.f32.mrf.mxu0
      %v4962 = vadd.f32 %v4830, %v4961
      %v4963 = vpop.f32.mrf.mxu0
      %4964 = vmatprep.mubr.f32.mxu0 0.0
      %4965 = vmatmul.mubr.f32.gmra.mxu0 %v4872
      %v4966 = vpop.f32.mrf.mxu0
      %v4967 = vadd.f32 %v4835, %v4966
      %v4968 = vpop.f32.mrf.mxu0
      %4969 = vmatprep.mubr.f32.mxu0 0.0
      %4970 = vmatmul.mubr.f32.gmra.mxu0 %v4875
      %v4971 = vpop.f32.mrf.mxu0
      %v4972 = vadd.f32 %v4840, %v4971
      %v4973 = vpop.f32.mrf.mxu0
      %4974 = vmatprep.mubr.f32.mxu0 0.0
      %4975 = vmatmul.mubr.f32.gmra.mxu0 %v4878
      %v4976 = vpop.f32.mrf.mxu0
      %v4977 = vadd.f32 %v4845, %v4976
      %v4978 = vpop.f32.mrf.mxu0
      %4979 = vmatprep.mubr.f32.mxu0 0.0
      %4980 = vmatmul.mubr.f32.gmra.mxu0 %v4881
      %v4981 = vpop.f32.mrf.mxu0
      %v4982 = vadd.f32 %v4850, %v4981
      %v4983 = vpop.f32.mrf.mxu0
      %4984 = vmatprep.mubr.f32.mxu0 0.0
      %4985 = vmatmul.mubr.f32.gmra.mxu0 %v4884
      %v4986 = vpop.f32.mrf.mxu0
      %v4987 = vadd.f32 %v4855, %v4986
      %v4988 = vpop.f32.mrf.mxu0
      %4989 = vmatprep.mubr.f32.mxu0 0.0
      %4990 = vmatmul.mubr.f32.gmra.mxu0 %v4887
      %v4991 = vpop.f32.mrf.mxu0
      %v4992 = vadd.f32 %v4860, %v4991
      %v4993 = vpop.f32.mrf.mxu0
      %4994 = vmatprep.mubr.f32.mxu0 0.0
      %4995 = vmatmul.mubr.f32.gmra.mxu0 %v4890
      %v4996 = vpop.f32.mrf.mxu0
      %v4997 = vadd.f32 %v4865, %v4996
      %v4998 = vpop.f32.mrf.mxu0
      %4999 = vdwg.mxu0
      %v5000 = vld [vmem:[#allocation4 + $0x4] sm:$0xff]
      %v5001 = vld [vmem:[#allocation4 + $0x14] sm:$0xff]
      %v5002 = vld [vmem:[#allocation4 + $0x24] sm:$0xff]
      %v5003 = vld [vmem:[#allocation4 + $0x34] sm:$0xff]
      %v5004 = vld [vmem:[#allocation4 + $0x44] sm:$0xff]
      %v5005 = vld [vmem:[#allocation4 + $0x54] sm:$0xff]
      %v5006 = vld [vmem:[#allocation4 + $0x64] sm:$0xff]
      %v5007 = vld [vmem:[#allocation4 + $0x74] sm:$0xff]
      %s5008 = scalar_lea.vmem %s7, 128
      %v5009 = vld [vmem:[%s5008] sm:$0xff]
      %v5010 = vld [vmem:[%s5008 + $0x8] sm:$0xff]
      %v5011 = vld [vmem:[%s5008 + $0x10] sm:$0xff]
      %v5012 = vld [vmem:[%s5008 + $0x18] sm:$0xff]
      %v5013 = vld [vmem:[%s5008 + $0x20] sm:$0xff]
      %v5014 = vld [vmem:[%s5008 + $0x28] sm:$0xff]
      %v5015 = vld [vmem:[%s5008 + $0x30] sm:$0xff]
      %v5016 = vld [vmem:[%s5008 + $0x38] sm:$0xf]
      %v5018 = vsel %vm3211, %v5000, 0
      %v5021 = vsel %vm3211, %v5001, 0
      %v5024 = vsel %vm3211, %v5002, 0
      %v5027 = vsel %vm3211, %v5003, 0
      %v5030 = vsel %vm3211, %v5004, 0
      %v5033 = vsel %vm3211, %v5005, 0
      %v5036 = vsel %vm3211, %v5006, 0
      %v5039 = vsel %vm3211, %v5007, 0
      %v5042 = vsel %vm3305, %v5016, 0
      %5044 = vmatprep.subr.mxu0 0.0
      %5045 = vmatpush1.msra.mxu0 0.0
      %5046 = vmatprep.subr.mxu0 0.0
      %5047 = vmatpush1.msra.mxu0 0.0
      %5048 = vmatprep.subr.mxu0 0.0
      %5049 = vmatpush1.msra.mxu0 0.0
      %5050 = vmatprep.subr.mxu0 0.0
      %5051 = vmatpush1.msra.mxu0 0.0
      %5052 = vmatprep.subr.mxu0 0.0
      %5053 = vmatpush1.msra.mxu0 0.0
      %5054 = vmatprep.subr.mxu0 0.0
      %5055 = vmatpush1.msra.mxu0 0.0
      %5056 = vmatprep.subr.mxu0 0.0
      %5057 = vmatpush1.msra.mxu0 0.0
      %5058 = vmatprep.subr.mxu0 0.0
      %5059 = vmatpush1.msra.mxu0 0.0
      %5060 = vmatprep.subr.mxu0 0.0
      %5061 = vmatpush1.msra.mxu0 %v5042
      %5062 = vmatprep.subr.mxu0 0.0
      %5063 = vmatpush1.msra.mxu0 %v5015
      %5064 = vmatprep.subr.mxu0 0.0
      %5065 = vmatpush1.msra.mxu0 %v5014
      %5066 = vmatprep.subr.mxu0 0.0
      %5067 = vmatpush1.msra.mxu0 %v5013
      %5068 = vmatprep.subr.mxu0 0.0
      %5069 = vmatpush1.msra.mxu0 %v5012
      %5070 = vmatprep.subr.mxu0 0.0
      %5071 = vmatpush1.msra.mxu0 %v5011
      %5072 = vmatprep.subr.mxu0 0.0
      %5073 = vmatpush1.msra.mxu0 %v5010
      %5074 = vmatprep.subr.mxu0 0.0
      %5075 = vmatpush1.msra.mxu0 %v5009
      %5076 = vmatprep.subr.mxu0 0.0
      %5077 = vmatpush2.msra.mxu0 0.0
      %5078 = vmatprep.subr.mxu0 0.0
      %5079 = vmatpush2.msra.mxu0 0.0
      %5080 = vmatprep.subr.mxu0 0.0
      %5081 = vmatpush2.msra.mxu0 0.0
      %5082 = vmatprep.subr.mxu0 0.0
      %5083 = vmatpush2.msra.mxu0 0.0
      %5084 = vmatprep.subr.mxu0 0.0
      %5085 = vmatpush2.msra.mxu0 0.0
      %5086 = vmatprep.subr.mxu0 0.0
      %5087 = vmatpush2.msra.mxu0 0.0
      %5088 = vmatprep.subr.mxu0 0.0
      %5089 = vmatpush2.msra.mxu0 0.0
      %5090 = vmatprep.subr.mxu0 0.0
      %5091 = vmatpush2.msra.mxu0 0.0
      %5092 = vmatprep.subr.mxu0 0.0
      %5093 = vmatpush2.msra.mxu0 0.0
      %5094 = vmatprep.subr.mxu0 0.0
      %5095 = vmatpush2.msra.mxu0 0.0
      %5096 = vmatprep.subr.mxu0 0.0
      %5097 = vmatpush2.msra.mxu0 0.0
      %5098 = vmatprep.subr.mxu0 0.0
      %5099 = vmatpush2.msra.mxu0 0.0
      %5100 = vmatprep.subr.mxu0 0.0
      %5101 = vmatpush2.msra.mxu0 0.0
      %5102 = vmatprep.subr.mxu0 0.0
      %5103 = vmatpush2.msra.mxu0 0.0
      %5104 = vmatprep.subr.mxu0 0.0
      %5105 = vmatpush2.msra.mxu0 0.0
      %5106 = vmatprep.subr.mxu0 0.0
      %5107 = vmatpush2.msra.mxu0 0.0
      %5108 = vmatprep.mubr.f32.mxu0 0.0
      %5109 = vmatmul.mubr.f32.gmra.mxu0 %v5018
      %v5110 = vpop.f32.mrf.mxu0
      %v5111 = vadd.f32 0.0, %v5110
      %v5112 = vpop.f32.mrf.mxu0
      %5113 = vmatprep.mubr.f32.mxu0 0.0
      %5114 = vmatmul.mubr.f32.gmra.mxu0 %v5021
      %v5115 = vpop.f32.mrf.mxu0
      %v5116 = vadd.f32 0.0, %v5115
      %v5117 = vpop.f32.mrf.mxu0
      %5118 = vmatprep.mubr.f32.mxu0 0.0
      %5119 = vmatmul.mubr.f32.gmra.mxu0 %v5024
      %v5120 = vpop.f32.mrf.mxu0
      %v5121 = vadd.f32 0.0, %v5120
      %v5122 = vpop.f32.mrf.mxu0
      %5123 = vmatprep.mubr.f32.mxu0 0.0
      %5124 = vmatmul.mubr.f32.gmra.mxu0 %v5027
      %v5125 = vpop.f32.mrf.mxu0
      %v5126 = vadd.f32 0.0, %v5125
      %v5127 = vpop.f32.mrf.mxu0
      %5128 = vmatprep.mubr.f32.mxu0 0.0
      %5129 = vmatmul.mubr.f32.gmra.mxu0 %v5030
      %v5130 = vpop.f32.mrf.mxu0
      %v5131 = vadd.f32 0.0, %v5130
      %v5132 = vpop.f32.mrf.mxu0
      %5133 = vmatprep.mubr.f32.mxu0 0.0
      %5134 = vmatmul.mubr.f32.gmra.mxu0 %v5033
      %v5135 = vpop.f32.mrf.mxu0
      %v5136 = vadd.f32 0.0, %v5135
      %v5137 = vpop.f32.mrf.mxu0
      %5138 = vmatprep.mubr.f32.mxu0 0.0
      %5139 = vmatmul.mubr.f32.gmra.mxu0 %v5036
      %v5140 = vpop.f32.mrf.mxu0
      %v5141 = vadd.f32 0.0, %v5140
      %v5142 = vpop.f32.mrf.mxu0
      %5143 = vmatprep.mubr.f32.mxu0 0.0
      %5144 = vmatmul.mubr.f32.gmra.mxu0 %v5039
      %v5145 = vpop.f32.mrf.mxu0
      %v5146 = vadd.f32 0.0, %v5145
      %v5147 = vpop.f32.mrf.mxu0
      %5148 = vdwg.mxu0
      %v5149 = vadd.f32 %v4962, %v5111
      %v5150 = vadd.f32 %v4967, %v5116
      %v5151 = vadd.f32 %v4972, %v5121
      %v5152 = vadd.f32 %v4977, %v5126
      %v5153 = vadd.f32 %v4982, %v5131
      %v5154 = vadd.f32 %v4987, %v5136
      %v5155 = vadd.f32 %v4992, %v5141
      %v5156 = vadd.f32 %v4997, %v5146
      %v5157 = vld [vmem:[%s4678] sm:$0xff]
      %v5158 = vld [vmem:[%s4678 + $0x10] sm:$0xff]
      %v5159 = vld [vmem:[%s4678 + $0x20] sm:$0xff]
      %v5160 = vld [vmem:[%s4678 + $0x30] sm:$0xff]
      %v5161 = vld [vmem:[%s4678 + $0x40] sm:$0xff]
      %v5162 = vld [vmem:[%s4678 + $0x50] sm:$0xff]
      %v5163 = vld [vmem:[%s4678 + $0x60] sm:$0xff]
      %v5164 = vld [vmem:[%s4678 + $0x70] sm:$0xff]
      %s5165 = scalar_lea.vmem %s7, 192
      %v5166 = vld [vmem:[%s5165] sm:$0xff]
      %v5167 = vld [vmem:[%s5165 + $0x8] sm:$0xff]
      %v5168 = vld [vmem:[%s5165 + $0x10] sm:$0xff]
      %v5169 = vld [vmem:[%s5165 + $0x18] sm:$0xff]
      %v5170 = vld [vmem:[%s5165 + $0x20] sm:$0xff]
      %v5171 = vld [vmem:[%s5165 + $0x28] sm:$0xff]
      %v5172 = vld [vmem:[%s5165 + $0x30] sm:$0xff]
      %v5173 = vld [vmem:[%s5165 + $0x38] sm:$0xf]
      %v5175 = vsel %vm3211, %v5157, 0
      %v5178 = vsel %vm3211, %v5158, 0
      %v5181 = vsel %vm3211, %v5159, 0
      %v5184 = vsel %vm3211, %v5160, 0
      %v5187 = vsel %vm3211, %v5161, 0
      %v5190 = vsel %vm3211, %v5162, 0
      %v5193 = vsel %vm3211, %v5163, 0
      %v5196 = vsel %vm3211, %v5164, 0
      %v5199 = vsel %vm3305, %v5173, 0
      %5201 = vmatprep.subr.mxu0 0.0
      %5202 = vmatpush1.msra.mxu0 0.0
      %5203 = vmatprep.subr.mxu0 0.0
      %5204 = vmatpush1.msra.mxu0 0.0
      %5205 = vmatprep.subr.mxu0 0.0
      %5206 = vmatpush1.msra.mxu0 0.0
      %5207 = vmatprep.subr.mxu0 0.0
      %5208 = vmatpush1.msra.mxu0 0.0
      %5209 = vmatprep.subr.mxu0 0.0
      %5210 = vmatpush1.msra.mxu0 0.0
      %5211 = vmatprep.subr.mxu0 0.0
      %5212 = vmatpush1.msra.mxu0 0.0
      %5213 = vmatprep.subr.mxu0 0.0
      %5214 = vmatpush1.msra.mxu0 0.0
      %5215 = vmatprep.subr.mxu0 0.0
      %5216 = vmatpush1.msra.mxu0 0.0
      %5217 = vmatprep.subr.mxu0 0.0
      %5218 = vmatpush1.msra.mxu0 %v5199
      %5219 = vmatprep.subr.mxu0 0.0
      %5220 = vmatpush1.msra.mxu0 %v5172
      %5221 = vmatprep.subr.mxu0 0.0
      %5222 = vmatpush1.msra.mxu0 %v5171
      %5223 = vmatprep.subr.mxu0 0.0
      %5224 = vmatpush1.msra.mxu0 %v5170
      %5225 = vmatprep.subr.mxu0 0.0
      %5226 = vmatpush1.msra.mxu0 %v5169
      %5227 = vmatprep.subr.mxu0 0.0
      %5228 = vmatpush1.msra.mxu0 %v5168
      %5229 = vmatprep.subr.mxu0 0.0
      %5230 = vmatpush1.msra.mxu0 %v5167
      %5231 = vmatprep.subr.mxu0 0.0
      %5232 = vmatpush1.msra.mxu0 %v5166
      %5233 = vmatprep.subr.mxu0 0.0
      %5234 = vmatpush2.msra.mxu0 0.0
      %5235 = vmatprep.subr.mxu0 0.0
      %5236 = vmatpush2.msra.mxu0 0.0
      %5237 = vmatprep.subr.mxu0 0.0
      %5238 = vmatpush2.msra.mxu0 0.0
      %5239 = vmatprep.subr.mxu0 0.0
      %5240 = vmatpush2.msra.mxu0 0.0
      %5241 = vmatprep.subr.mxu0 0.0
      %5242 = vmatpush2.msra.mxu0 0.0
      %5243 = vmatprep.subr.mxu0 0.0
      %5244 = vmatpush2.msra.mxu0 0.0
      %5245 = vmatprep.subr.mxu0 0.0
      %5246 = vmatpush2.msra.mxu0 0.0
      %5247 = vmatprep.subr.mxu0 0.0
      %5248 = vmatpush2.msra.mxu0 0.0
      %5249 = vmatprep.subr.mxu0 0.0
      %5250 = vmatpush2.msra.mxu0 0.0
      %5251 = vmatprep.subr.mxu0 0.0
      %5252 = vmatpush2.msra.mxu0 0.0
      %5253 = vmatprep.subr.mxu0 0.0
      %5254 = vmatpush2.msra.mxu0 0.0
      %5255 = vmatprep.subr.mxu0 0.0
      %5256 = vmatpush2.msra.mxu0 0.0
      %5257 = vmatprep.subr.mxu0 0.0
      %5258 = vmatpush2.msra.mxu0 0.0
      %5259 = vmatprep.subr.mxu0 0.0
      %5260 = vmatpush2.msra.mxu0 0.0
      %5261 = vmatprep.subr.mxu0 0.0
      %5262 = vmatpush2.msra.mxu0 0.0
      %5263 = vmatprep.subr.mxu0 0.0
      %5264 = vmatpush2.msra.mxu0 0.0
      %5265 = vmatprep.mubr.f32.mxu0 0.0
      %5266 = vmatmul.mubr.f32.gmra.mxu0 %v5175
      %v5267 = vpop.f32.mrf.mxu0
      %v5268 = vadd.f32 0.0, %v5267
      %v5269 = vpop.f32.mrf.mxu0
      %5270 = vmatprep.mubr.f32.mxu0 0.0
      %5271 = vmatmul.mubr.f32.gmra.mxu0 %v5178
      %v5272 = vpop.f32.mrf.mxu0
      %v5273 = vadd.f32 0.0, %v5272
      %v5274 = vpop.f32.mrf.mxu0
      %5275 = vmatprep.mubr.f32.mxu0 0.0
      %5276 = vmatmul.mubr.f32.gmra.mxu0 %v5181
      %v5277 = vpop.f32.mrf.mxu0
      %v5278 = vadd.f32 0.0, %v5277
      %v5279 = vpop.f32.mrf.mxu0
      %5280 = vmatprep.mubr.f32.mxu0 0.0
      %5281 = vmatmul.mubr.f32.gmra.mxu0 %v5184
      %v5282 = vpop.f32.mrf.mxu0
      %v5283 = vadd.f32 0.0, %v5282
      %v5284 = vpop.f32.mrf.mxu0
      %5285 = vmatprep.mubr.f32.mxu0 0.0
      %5286 = vmatmul.mubr.f32.gmra.mxu0 %v5187
      %v5287 = vpop.f32.mrf.mxu0
      %v5288 = vadd.f32 0.0, %v5287
      %v5289 = vpop.f32.mrf.mxu0
      %5290 = vmatprep.mubr.f32.mxu0 0.0
      %5291 = vmatmul.mubr.f32.gmra.mxu0 %v5190
      %v5292 = vpop.f32.mrf.mxu0
      %v5293 = vadd.f32 0.0, %v5292
      %v5294 = vpop.f32.mrf.mxu0
      %5295 = vmatprep.mubr.f32.mxu0 0.0
      %5296 = vmatmul.mubr.f32.gmra.mxu0 %v5193
      %v5297 = vpop.f32.mrf.mxu0
      %v5298 = vadd.f32 0.0, %v5297
      %v5299 = vpop.f32.mrf.mxu0
      %5300 = vmatprep.mubr.f32.mxu0 0.0
      %5301 = vmatmul.mubr.f32.gmra.mxu0 %v5196
      %v5302 = vpop.f32.mrf.mxu0
      %v5303 = vadd.f32 0.0, %v5302
      %v5304 = vpop.f32.mrf.mxu0
      %5305 = vdwg.mxu0
      %v5306 = vadd.f32 %v5149, %v5268
      %v5307 = vadd.f32 %v5150, %v5273
      %v5308 = vadd.f32 %v5151, %v5278
      %v5309 = vadd.f32 %v5152, %v5283
      %v5310 = vadd.f32 %v5153, %v5288
      %v5311 = vadd.f32 %v5154, %v5293
      %v5312 = vadd.f32 %v5155, %v5298
      %v5313 = vadd.f32 %v5156, %v5303
      %v5314 = vld [vmem:[%s4678 + $0x2] sm:$0xff]
      %v5315 = vld [vmem:[%s4678 + $0x12] sm:$0xff]
      %v5316 = vld [vmem:[%s4678 + $0x22] sm:$0xff]
      %v5317 = vld [vmem:[%s4678 + $0x32] sm:$0xff]
      %v5318 = vld [vmem:[%s4678 + $0x42] sm:$0xff]
      %v5319 = vld [vmem:[%s4678 + $0x52] sm:$0xff]
      %v5320 = vld [vmem:[%s4678 + $0x62] sm:$0xff]
      %v5321 = vld [vmem:[%s4678 + $0x72] sm:$0xff]
      %s5322 = scalar_lea.vmem %s7, 256
      %v5323 = vld [vmem:[%s5322] sm:$0xff]
      %v5324 = vld [vmem:[%s5322 + $0x8] sm:$0xff]
      %v5325 = vld [vmem:[%s5322 + $0x10] sm:$0xff]
      %v5326 = vld [vmem:[%s5322 + $0x18] sm:$0xff]
      %v5327 = vld [vmem:[%s5322 + $0x20] sm:$0xff]
      %v5328 = vld [vmem:[%s5322 + $0x28] sm:$0xff]
      %v5329 = vld [vmem:[%s5322 + $0x30] sm:$0xff]
      %v5330 = vld [vmem:[%s5322 + $0x38] sm:$0xf]
      %v5332 = vsel %vm3211, %v5314, 0
      %v5335 = vsel %vm3211, %v5315, 0
      %v5338 = vsel %vm3211, %v5316, 0
      %v5341 = vsel %vm3211, %v5317, 0
      %v5344 = vsel %vm3211, %v5318, 0
      %v5347 = vsel %vm3211, %v5319, 0
      %v5350 = vsel %vm3211, %v5320, 0
      %v5353 = vsel %vm3211, %v5321, 0
      %v5356 = vsel %vm3305, %v5330, 0
      %5358 = vmatprep.subr.mxu0 0.0
      %5359 = vmatpush1.msra.mxu0 0.0
      %5360 = vmatprep.subr.mxu0 0.0
      %5361 = vmatpush1.msra.mxu0 0.0
      %5362 = vmatprep.subr.mxu0 0.0
      %5363 = vmatpush1.msra.mxu0 0.0
      %5364 = vmatprep.subr.mxu0 0.0
      %5365 = vmatpush1.msra.mxu0 0.0
      %5366 = vmatprep.subr.mxu0 0.0
      %5367 = vmatpush1.msra.mxu0 0.0
      %5368 = vmatprep.subr.mxu0 0.0
      %5369 = vmatpush1.msra.mxu0 0.0
      %5370 = vmatprep.subr.mxu0 0.0
      %5371 = vmatpush1.msra.mxu0 0.0
      %5372 = vmatprep.subr.mxu0 0.0
      %5373 = vmatpush1.msra.mxu0 0.0
      %5374 = vmatprep.subr.mxu0 0.0
      %5375 = vmatpush1.msra.mxu0 %v5356
      %5376 = vmatprep.subr.mxu0 0.0
      %5377 = vmatpush1.msra.mxu0 %v5329
      %5378 = vmatprep.subr.mxu0 0.0
      %5379 = vmatpush1.msra.mxu0 %v5328
      %5380 = vmatprep.subr.mxu0 0.0
      %5381 = vmatpush1.msra.mxu0 %v5327
      %5382 = vmatprep.subr.mxu0 0.0
      %5383 = vmatpush1.msra.mxu0 %v5326
      %5384 = vmatprep.subr.mxu0 0.0
      %5385 = vmatpush1.msra.mxu0 %v5325
      %5386 = vmatprep.subr.mxu0 0.0
      %5387 = vmatpush1.msra.mxu0 %v5324
      %5388 = vmatprep.subr.mxu0 0.0
      %5389 = vmatpush1.msra.mxu0 %v5323
      %5390 = vmatprep.subr.mxu0 0.0
      %5391 = vmatpush2.msra.mxu0 0.0
      %5392 = vmatprep.subr.mxu0 0.0
      %5393 = vmatpush2.msra.mxu0 0.0
      %5394 = vmatprep.subr.mxu0 0.0
      %5395 = vmatpush2.msra.mxu0 0.0
      %5396 = vmatprep.subr.mxu0 0.0
      %5397 = vmatpush2.msra.mxu0 0.0
      %5398 = vmatprep.subr.mxu0 0.0
      %5399 = vmatpush2.msra.mxu0 0.0
      %5400 = vmatprep.subr.mxu0 0.0
      %5401 = vmatpush2.msra.mxu0 0.0
      %5402 = vmatprep.subr.mxu0 0.0
      %5403 = vmatpush2.msra.mxu0 0.0
      %5404 = vmatprep.subr.mxu0 0.0
      %5405 = vmatpush2.msra.mxu0 0.0
      %5406 = vmatprep.subr.mxu0 0.0
      %5407 = vmatpush2.msra.mxu0 0.0
      %5408 = vmatprep.subr.mxu0 0.0
      %5409 = vmatpush2.msra.mxu0 0.0
      %5410 = vmatprep.subr.mxu0 0.0
      %5411 = vmatpush2.msra.mxu0 0.0
      %5412 = vmatprep.subr.mxu0 0.0
      %5413 = vmatpush2.msra.mxu0 0.0
      %5414 = vmatprep.subr.mxu0 0.0
      %5415 = vmatpush2.msra.mxu0 0.0
      %5416 = vmatprep.subr.mxu0 0.0
      %5417 = vmatpush2.msra.mxu0 0.0
      %5418 = vmatprep.subr.mxu0 0.0
      %5419 = vmatpush2.msra.mxu0 0.0
      %5420 = vmatprep.subr.mxu0 0.0
      %5421 = vmatpush2.msra.mxu0 0.0
      %5422 = vmatprep.mubr.f32.mxu0 0.0
      %5423 = vmatmul.mubr.f32.gmra.mxu0 %v5332
      %v5424 = vpop.f32.mrf.mxu0
      %v5425 = vadd.f32 0.0, %v5424
      %v5426 = vpop.f32.mrf.mxu0
      %5427 = vmatprep.mubr.f32.mxu0 0.0
      %5428 = vmatmul.mubr.f32.gmra.mxu0 %v5335
      %v5429 = vpop.f32.mrf.mxu0
      %v5430 = vadd.f32 0.0, %v5429
      %v5431 = vpop.f32.mrf.mxu0
      %5432 = vmatprep.mubr.f32.mxu0 0.0
      %5433 = vmatmul.mubr.f32.gmra.mxu0 %v5338
      %v5434 = vpop.f32.mrf.mxu0
      %v5435 = vadd.f32 0.0, %v5434
      %v5436 = vpop.f32.mrf.mxu0
      %5437 = vmatprep.mubr.f32.mxu0 0.0
      %5438 = vmatmul.mubr.f32.gmra.mxu0 %v5341
      %v5439 = vpop.f32.mrf.mxu0
      %v5440 = vadd.f32 0.0, %v5439
      %v5441 = vpop.f32.mrf.mxu0
      %5442 = vmatprep.mubr.f32.mxu0 0.0
      %5443 = vmatmul.mubr.f32.gmra.mxu0 %v5344
      %v5444 = vpop.f32.mrf.mxu0
      %v5445 = vadd.f32 0.0, %v5444
      %v5446 = vpop.f32.mrf.mxu0
      %5447 = vmatprep.mubr.f32.mxu0 0.0
      %5448 = vmatmul.mubr.f32.gmra.mxu0 %v5347
      %v5449 = vpop.f32.mrf.mxu0
      %v5450 = vadd.f32 0.0, %v5449
      %v5451 = vpop.f32.mrf.mxu0
      %5452 = vmatprep.mubr.f32.mxu0 0.0
      %5453 = vmatmul.mubr.f32.gmra.mxu0 %v5350
      %v5454 = vpop.f32.mrf.mxu0
      %v5455 = vadd.f32 0.0, %v5454
      %v5456 = vpop.f32.mrf.mxu0
      %5457 = vmatprep.mubr.f32.mxu0 0.0
      %5458 = vmatmul.mubr.f32.gmra.mxu0 %v5353
      %v5459 = vpop.f32.mrf.mxu0
      %v5460 = vadd.f32 0.0, %v5459
      %v5461 = vpop.f32.mrf.mxu0
      %5462 = vdwg.mxu0
      %v5463 = vadd.f32 %v5306, %v5425
      %v5464 = vadd.f32 %v5307, %v5430
      %v5465 = vadd.f32 %v5308, %v5435
      %v5466 = vadd.f32 %v5309, %v5440
      %v5467 = vadd.f32 %v5310, %v5445
      %v5468 = vadd.f32 %v5311, %v5450
      %v5469 = vadd.f32 %v5312, %v5455
      %v5470 = vadd.f32 %v5313, %v5460
      %v5471 = vld [vmem:[%s4678 + $0x4] sm:$0xff]
      %v5472 = vld [vmem:[%s4678 + $0x14] sm:$0xff]
      %v5473 = vld [vmem:[%s4678 + $0x24] sm:$0xff]
      %v5474 = vld [vmem:[%s4678 + $0x34] sm:$0xff]
      %v5475 = vld [vmem:[%s4678 + $0x44] sm:$0xff]
      %v5476 = vld [vmem:[%s4678 + $0x54] sm:$0xff]
      %v5477 = vld [vmem:[%s4678 + $0x64] sm:$0xff]
      %v5478 = vld [vmem:[%s4678 + $0x74] sm:$0xff]
      %s5479 = scalar_lea.vmem %s7, 320
      %v5480 = vld [vmem:[%s5479] sm:$0xff]
      %v5481 = vld [vmem:[%s5479 + $0x8] sm:$0xff]
      %v5482 = vld [vmem:[%s5479 + $0x10] sm:$0xff]
      %v5483 = vld [vmem:[%s5479 + $0x18] sm:$0xff]
      %v5484 = vld [vmem:[%s5479 + $0x20] sm:$0xff]
      %v5485 = vld [vmem:[%s5479 + $0x28] sm:$0xff]
      %v5486 = vld [vmem:[%s5479 + $0x30] sm:$0xff]
      %v5487 = vld [vmem:[%s5479 + $0x38] sm:$0xf]
      %v5489 = vsel %vm3211, %v5471, 0
      %v5492 = vsel %vm3211, %v5472, 0
      %v5495 = vsel %vm3211, %v5473, 0
      %v5498 = vsel %vm3211, %v5474, 0
      %v5501 = vsel %vm3211, %v5475, 0
      %v5504 = vsel %vm3211, %v5476, 0
      %v5507 = vsel %vm3211, %v5477, 0
      %v5510 = vsel %vm3211, %v5478, 0
      %v5513 = vsel %vm3305, %v5487, 0
      %5515 = vmatprep.subr.mxu0 0.0
      %5516 = vmatpush1.msra.mxu0 0.0
      %5517 = vmatprep.subr.mxu0 0.0
      %5518 = vmatpush1.msra.mxu0 0.0
      %5519 = vmatprep.subr.mxu0 0.0
      %5520 = vmatpush1.msra.mxu0 0.0
      %5521 = vmatprep.subr.mxu0 0.0
      %5522 = vmatpush1.msra.mxu0 0.0
      %5523 = vmatprep.subr.mxu0 0.0
      %5524 = vmatpush1.msra.mxu0 0.0
      %5525 = vmatprep.subr.mxu0 0.0
      %5526 = vmatpush1.msra.mxu0 0.0
      %5527 = vmatprep.subr.mxu0 0.0
      %5528 = vmatpush1.msra.mxu0 0.0
      %5529 = vmatprep.subr.mxu0 0.0
      %5530 = vmatpush1.msra.mxu0 0.0
      %5531 = vmatprep.subr.mxu0 0.0
      %5532 = vmatpush1.msra.mxu0 %v5513
      %5533 = vmatprep.subr.mxu0 0.0
      %5534 = vmatpush1.msra.mxu0 %v5486
      %5535 = vmatprep.subr.mxu0 0.0
      %5536 = vmatpush1.msra.mxu0 %v5485
      %5537 = vmatprep.subr.mxu0 0.0
      %5538 = vmatpush1.msra.mxu0 %v5484
      %5539 = vmatprep.subr.mxu0 0.0
      %5540 = vmatpush1.msra.mxu0 %v5483
      %5541 = vmatprep.subr.mxu0 0.0
      %5542 = vmatpush1.msra.mxu0 %v5482
      %5543 = vmatprep.subr.mxu0 0.0
      %5544 = vmatpush1.msra.mxu0 %v5481
      %5545 = vmatprep.subr.mxu0 0.0
      %5546 = vmatpush1.msra.mxu0 %v5480
      %5547 = vmatprep.subr.mxu0 0.0
      %5548 = vmatpush2.msra.mxu0 0.0
      %5549 = vmatprep.subr.mxu0 0.0
      %5550 = vmatpush2.msra.mxu0 0.0
      %5551 = vmatprep.subr.mxu0 0.0
      %5552 = vmatpush2.msra.mxu0 0.0
      %5553 = vmatprep.subr.mxu0 0.0
      %5554 = vmatpush2.msra.mxu0 0.0
      %5555 = vmatprep.subr.mxu0 0.0
      %5556 = vmatpush2.msra.mxu0 0.0
      %5557 = vmatprep.subr.mxu0 0.0
      %5558 = vmatpush2.msra.mxu0 0.0
      %5559 = vmatprep.subr.mxu0 0.0
      %5560 = vmatpush2.msra.mxu0 0.0
      %5561 = vmatprep.subr.mxu0 0.0
      %5562 = vmatpush2.msra.mxu0 0.0
      %5563 = vmatprep.subr.mxu0 0.0
      %5564 = vmatpush2.msra.mxu0 0.0
      %5565 = vmatprep.subr.mxu0 0.0
      %5566 = vmatpush2.msra.mxu0 0.0
      %5567 = vmatprep.subr.mxu0 0.0
      %5568 = vmatpush2.msra.mxu0 0.0
      %5569 = vmatprep.subr.mxu0 0.0
      %5570 = vmatpush2.msra.mxu0 0.0
      %5571 = vmatprep.subr.mxu0 0.0
      %5572 = vmatpush2.msra.mxu0 0.0
      %5573 = vmatprep.subr.mxu0 0.0
      %5574 = vmatpush2.msra.mxu0 0.0
      %5575 = vmatprep.subr.mxu0 0.0
      %5576 = vmatpush2.msra.mxu0 0.0
      %5577 = vmatprep.subr.mxu0 0.0
      %5578 = vmatpush2.msra.mxu0 0.0
      %5579 = vmatprep.mubr.f32.mxu0 0.0
      %5580 = vmatmul.mubr.f32.gmra.mxu0 %v5489
      %v5581 = vpop.f32.mrf.mxu0
      %v5582 = vadd.f32 0.0, %v5581
      %v5583 = vpop.f32.mrf.mxu0
      %5584 = vmatprep.mubr.f32.mxu0 0.0
      %5585 = vmatmul.mubr.f32.gmra.mxu0 %v5492
      %v5586 = vpop.f32.mrf.mxu0
      %v5587 = vadd.f32 0.0, %v5586
      %v5588 = vpop.f32.mrf.mxu0
      %5589 = vmatprep.mubr.f32.mxu0 0.0
      %5590 = vmatmul.mubr.f32.gmra.mxu0 %v5495
      %v5591 = vpop.f32.mrf.mxu0
      %v5592 = vadd.f32 0.0, %v5591
      %v5593 = vpop.f32.mrf.mxu0
      %5594 = vmatprep.mubr.f32.mxu0 0.0
      %5595 = vmatmul.mubr.f32.gmra.mxu0 %v5498
      %v5596 = vpop.f32.mrf.mxu0
      %v5597 = vadd.f32 0.0, %v5596
      %v5598 = vpop.f32.mrf.mxu0
      %5599 = vmatprep.mubr.f32.mxu0 0.0
      %5600 = vmatmul.mubr.f32.gmra.mxu0 %v5501
      %v5601 = vpop.f32.mrf.mxu0
      %v5602 = vadd.f32 0.0, %v5601
      %v5603 = vpop.f32.mrf.mxu0
      %5604 = vmatprep.mubr.f32.mxu0 0.0
      %5605 = vmatmul.mubr.f32.gmra.mxu0 %v5504
      %v5606 = vpop.f32.mrf.mxu0
      %v5607 = vadd.f32 0.0, %v5606
      %v5608 = vpop.f32.mrf.mxu0
      %5609 = vmatprep.mubr.f32.mxu0 0.0
      %5610 = vmatmul.mubr.f32.gmra.mxu0 %v5507
      %v5611 = vpop.f32.mrf.mxu0
      %v5612 = vadd.f32 0.0, %v5611
      %v5613 = vpop.f32.mrf.mxu0
      %5614 = vmatprep.mubr.f32.mxu0 0.0
      %5615 = vmatmul.mubr.f32.gmra.mxu0 %v5510
      %v5616 = vpop.f32.mrf.mxu0
      %v5617 = vadd.f32 0.0, %v5616
      %v5618 = vpop.f32.mrf.mxu0
      %5619 = vdwg.mxu0
      %v5620 = vadd.f32 %v5463, %v5582
      %v5621 = vadd.f32 %v5464, %v5587
      %v5622 = vadd.f32 %v5465, %v5592
      %v5623 = vadd.f32 %v5466, %v5597
      %v5624 = vadd.f32 %v5467, %v5602
      %v5625 = vadd.f32 %v5468, %v5607
      %v5626 = vadd.f32 %v5469, %v5612
      %v5627 = vadd.f32 %v5470, %v5617
      %s5628 = scalar_lea.vmem [#allocation4], 64
      %v5629 = vld [vmem:[%s5628] sm:$0xff]
      %v5630 = vld [vmem:[%s5628 + $0x10] sm:$0xff]
      %v5631 = vld [vmem:[%s5628 + $0x20] sm:$0xff]
      %v5632 = vld [vmem:[%s5628 + $0x30] sm:$0xff]
      %v5633 = vld [vmem:[%s5628 + $0x40] sm:$0xff]
      %v5634 = vld [vmem:[%s5628 + $0x50] sm:$0xff]
      %v5635 = vld [vmem:[%s5628 + $0x60] sm:$0xff]
      %v5636 = vld [vmem:[%s5628 + $0x70] sm:$0xff]
      %s5637 = scalar_lea.vmem %s7, 384
      %v5638 = vld [vmem:[%s5637] sm:$0xff]
      %v5639 = vld [vmem:[%s5637 + $0x8] sm:$0xff]
      %v5640 = vld [vmem:[%s5637 + $0x10] sm:$0xff]
      %v5641 = vld [vmem:[%s5637 + $0x18] sm:$0xff]
      %v5642 = vld [vmem:[%s5637 + $0x20] sm:$0xff]
      %v5643 = vld [vmem:[%s5637 + $0x28] sm:$0xff]
      %v5644 = vld [vmem:[%s5637 + $0x30] sm:$0xff]
      %v5645 = vld [vmem:[%s5637 + $0x38] sm:$0xf]
      %v5647 = vsel %vm3211, %v5629, 0
      %v5650 = vsel %vm3211, %v5630, 0
      %v5653 = vsel %vm3211, %v5631, 0
      %v5656 = vsel %vm3211, %v5632, 0
      %v5659 = vsel %vm3211, %v5633, 0
      %v5662 = vsel %vm3211, %v5634, 0
      %v5665 = vsel %vm3211, %v5635, 0
      %v5668 = vsel %vm3211, %v5636, 0
      %v5671 = vsel %vm3305, %v5645, 0
      %5673 = vmatprep.subr.mxu0 0.0
      %5674 = vmatpush1.msra.mxu0 0.0
      %5675 = vmatprep.subr.mxu0 0.0
      %5676 = vmatpush1.msra.mxu0 0.0
      %5677 = vmatprep.subr.mxu0 0.0
      %5678 = vmatpush1.msra.mxu0 0.0
      %5679 = vmatprep.subr.mxu0 0.0
      %5680 = vmatpush1.msra.mxu0 0.0
      %5681 = vmatprep.subr.mxu0 0.0
      %5682 = vmatpush1.msra.mxu0 0.0
      %5683 = vmatprep.subr.mxu0 0.0
      %5684 = vmatpush1.msra.mxu0 0.0
      %5685 = vmatprep.subr.mxu0 0.0
      %5686 = vmatpush1.msra.mxu0 0.0
      %5687 = vmatprep.subr.mxu0 0.0
      %5688 = vmatpush1.msra.mxu0 0.0
      %5689 = vmatprep.subr.mxu0 0.0
      %5690 = vmatpush1.msra.mxu0 %v5671
      %5691 = vmatprep.subr.mxu0 0.0
      %5692 = vmatpush1.msra.mxu0 %v5644
      %5693 = vmatprep.subr.mxu0 0.0
      %5694 = vmatpush1.msra.mxu0 %v5643
      %5695 = vmatprep.subr.mxu0 0.0
      %5696 = vmatpush1.msra.mxu0 %v5642
      %5697 = vmatprep.subr.mxu0 0.0
      %5698 = vmatpush1.msra.mxu0 %v5641
      %5699 = vmatprep.subr.mxu0 0.0
      %5700 = vmatpush1.msra.mxu0 %v5640
      %5701 = vmatprep.subr.mxu0 0.0
      %5702 = vmatpush1.msra.mxu0 %v5639
      %5703 = vmatprep.subr.mxu0 0.0
      %5704 = vmatpush1.msra.mxu0 %v5638
      %5705 = vmatprep.subr.mxu0 0.0
      %5706 = vmatpush2.msra.mxu0 0.0
      %5707 = vmatprep.subr.mxu0 0.0
      %5708 = vmatpush2.msra.mxu0 0.0
      %5709 = vmatprep.subr.mxu0 0.0
      %5710 = vmatpush2.msra.mxu0 0.0
      %5711 = vmatprep.subr.mxu0 0.0
      %5712 = vmatpush2.msra.mxu0 0.0
      %5713 = vmatprep.subr.mxu0 0.0
      %5714 = vmatpush2.msra.mxu0 0.0
      %5715 = vmatprep.subr.mxu0 0.0
      %5716 = vmatpush2.msra.mxu0 0.0
      %5717 = vmatprep.subr.mxu0 0.0
      %5718 = vmatpush2.msra.mxu0 0.0
      %5719 = vmatprep.subr.mxu0 0.0
      %5720 = vmatpush2.msra.mxu0 0.0
      %5721 = vmatprep.subr.mxu0 0.0
      %5722 = vmatpush2.msra.mxu0 0.0
      %5723 = vmatprep.subr.mxu0 0.0
      %5724 = vmatpush2.msra.mxu0 0.0
      %5725 = vmatprep.subr.mxu0 0.0
      %5726 = vmatpush2.msra.mxu0 0.0
      %5727 = vmatprep.subr.mxu0 0.0
      %5728 = vmatpush2.msra.mxu0 0.0
      %5729 = vmatprep.subr.mxu0 0.0
      %5730 = vmatpush2.msra.mxu0 0.0
      %5731 = vmatprep.subr.mxu0 0.0
      %5732 = vmatpush2.msra.mxu0 0.0
      %5733 = vmatprep.subr.mxu0 0.0
      %5734 = vmatpush2.msra.mxu0 0.0
      %5735 = vmatprep.subr.mxu0 0.0
      %5736 = vmatpush2.msra.mxu0 0.0
      %5737 = vmatprep.mubr.f32.mxu0 0.0
      %5738 = vmatmul.mubr.f32.gmra.mxu0 %v5647
      %v5739 = vpop.f32.mrf.mxu0
      %v5740 = vadd.f32 0.0, %v5739
      %v5741 = vpop.f32.mrf.mxu0
      %5742 = vmatprep.mubr.f32.mxu0 0.0
      %5743 = vmatmul.mubr.f32.gmra.mxu0 %v5650
      %v5744 = vpop.f32.mrf.mxu0
      %v5745 = vadd.f32 0.0, %v5744
      %v5746 = vpop.f32.mrf.mxu0
      %5747 = vmatprep.mubr.f32.mxu0 0.0
      %5748 = vmatmul.mubr.f32.gmra.mxu0 %v5653
      %v5749 = vpop.f32.mrf.mxu0
      %v5750 = vadd.f32 0.0, %v5749
      %v5751 = vpop.f32.mrf.mxu0
      %5752 = vmatprep.mubr.f32.mxu0 0.0
      %5753 = vmatmul.mubr.f32.gmra.mxu0 %v5656
      %v5754 = vpop.f32.mrf.mxu0
      %v5755 = vadd.f32 0.0, %v5754
      %v5756 = vpop.f32.mrf.mxu0
      %5757 = vmatprep.mubr.f32.mxu0 0.0
      %5758 = vmatmul.mubr.f32.gmra.mxu0 %v5659
      %v5759 = vpop.f32.mrf.mxu0
      %v5760 = vadd.f32 0.0, %v5759
      %v5761 = vpop.f32.mrf.mxu0
      %5762 = vmatprep.mubr.f32.mxu0 0.0
      %5763 = vmatmul.mubr.f32.gmra.mxu0 %v5662
      %v5764 = vpop.f32.mrf.mxu0
      %v5765 = vadd.f32 0.0, %v5764
      %v5766 = vpop.f32.mrf.mxu0
      %5767 = vmatprep.mubr.f32.mxu0 0.0
      %5768 = vmatmul.mubr.f32.gmra.mxu0 %v5665
      %v5769 = vpop.f32.mrf.mxu0
      %v5770 = vadd.f32 0.0, %v5769
      %v5771 = vpop.f32.mrf.mxu0
      %5772 = vmatprep.mubr.f32.mxu0 0.0
      %5773 = vmatmul.mubr.f32.gmra.mxu0 %v5668
      %v5774 = vpop.f32.mrf.mxu0
      %v5775 = vadd.f32 0.0, %v5774
      %v5776 = vpop.f32.mrf.mxu0
      %5777 = vdwg.mxu0
      %v5778 = vadd.f32 %v5620, %v5740
      %v5779 = vadd.f32 %v5621, %v5745
      %v5780 = vadd.f32 %v5622, %v5750
      %v5781 = vadd.f32 %v5623, %v5755
      %v5782 = vadd.f32 %v5624, %v5760
      %v5783 = vadd.f32 %v5625, %v5765
      %v5784 = vadd.f32 %v5626, %v5770
      %v5785 = vadd.f32 %v5627, %v5775
      %v5786 = vld [vmem:[%s5628 + $0x2] sm:$0xff]
      %v5787 = vld [vmem:[%s5628 + $0x12] sm:$0xff]
      %v5788 = vld [vmem:[%s5628 + $0x22] sm:$0xff]
      %v5789 = vld [vmem:[%s5628 + $0x32] sm:$0xff]
      %v5790 = vld [vmem:[%s5628 + $0x42] sm:$0xff]
      %v5791 = vld [vmem:[%s5628 + $0x52] sm:$0xff]
      %v5792 = vld [vmem:[%s5628 + $0x62] sm:$0xff]
      %v5793 = vld [vmem:[%s5628 + $0x72] sm:$0xff]
      %s5794 = scalar_lea.vmem %s7, 448
      %v5795 = vld [vmem:[%s5794] sm:$0xff]
      %v5796 = vld [vmem:[%s5794 + $0x8] sm:$0xff]
      %v5797 = vld [vmem:[%s5794 + $0x10] sm:$0xff]
      %v5798 = vld [vmem:[%s5794 + $0x18] sm:$0xff]
      %v5799 = vld [vmem:[%s5794 + $0x20] sm:$0xff]
      %v5800 = vld [vmem:[%s5794 + $0x28] sm:$0xff]
      %v5801 = vld [vmem:[%s5794 + $0x30] sm:$0xff]
      %v5802 = vld [vmem:[%s5794 + $0x38] sm:$0xf]
      %v5804 = vsel %vm3211, %v5786, 0
      %v5807 = vsel %vm3211, %v5787, 0
      %v5810 = vsel %vm3211, %v5788, 0
      %v5813 = vsel %vm3211, %v5789, 0
      %v5816 = vsel %vm3211, %v5790, 0
      %v5819 = vsel %vm3211, %v5791, 0
      %v5822 = vsel %vm3211, %v5792, 0
      %v5825 = vsel %vm3211, %v5793, 0
      %v5828 = vsel %vm3305, %v5802, 0
      %5830 = vmatprep.subr.mxu0 0.0
      %5831 = vmatpush1.msra.mxu0 0.0
      %5832 = vmatprep.subr.mxu0 0.0
      %5833 = vmatpush1.msra.mxu0 0.0
      %5834 = vmatprep.subr.mxu0 0.0
      %5835 = vmatpush1.msra.mxu0 0.0
      %5836 = vmatprep.subr.mxu0 0.0
      %5837 = vmatpush1.msra.mxu0 0.0
      %5838 = vmatprep.subr.mxu0 0.0
      %5839 = vmatpush1.msra.mxu0 0.0
      %5840 = vmatprep.subr.mxu0 0.0
      %5841 = vmatpush1.msra.mxu0 0.0
      %5842 = vmatprep.subr.mxu0 0.0
      %5843 = vmatpush1.msra.mxu0 0.0
      %5844 = vmatprep.subr.mxu0 0.0
      %5845 = vmatpush1.msra.mxu0 0.0
      %5846 = vmatprep.subr.mxu0 0.0
      %5847 = vmatpush1.msra.mxu0 %v5828
      %5848 = vmatprep.subr.mxu0 0.0
      %5849 = vmatpush1.msra.mxu0 %v5801
      %5850 = vmatprep.subr.mxu0 0.0
      %5851 = vmatpush1.msra.mxu0 %v5800
      %5852 = vmatprep.subr.mxu0 0.0
      %5853 = vmatpush1.msra.mxu0 %v5799
      %5854 = vmatprep.subr.mxu0 0.0
      %5855 = vmatpush1.msra.mxu0 %v5798
      %5856 = vmatprep.subr.mxu0 0.0
      %5857 = vmatpush1.msra.mxu0 %v5797
      %5858 = vmatprep.subr.mxu0 0.0
      %5859 = vmatpush1.msra.mxu0 %v5796
      %5860 = vmatprep.subr.mxu0 0.0
      %5861 = vmatpush1.msra.mxu0 %v5795
      %5862 = vmatprep.subr.mxu0 0.0
      %5863 = vmatpush2.msra.mxu0 0.0
      %5864 = vmatprep.subr.mxu0 0.0
      %5865 = vmatpush2.msra.mxu0 0.0
      %5866 = vmatprep.subr.mxu0 0.0
      %5867 = vmatpush2.msra.mxu0 0.0
      %5868 = vmatprep.subr.mxu0 0.0
      %5869 = vmatpush2.msra.mxu0 0.0
      %5870 = vmatprep.subr.mxu0 0.0
      %5871 = vmatpush2.msra.mxu0 0.0
      %5872 = vmatprep.subr.mxu0 0.0
      %5873 = vmatpush2.msra.mxu0 0.0
      %5874 = vmatprep.subr.mxu0 0.0
      %5875 = vmatpush2.msra.mxu0 0.0
      %5876 = vmatprep.subr.mxu0 0.0
      %5877 = vmatpush2.msra.mxu0 0.0
      %5878 = vmatprep.subr.mxu0 0.0
      %5879 = vmatpush2.msra.mxu0 0.0
      %5880 = vmatprep.subr.mxu0 0.0
      %5881 = vmatpush2.msra.mxu0 0.0
      %5882 = vmatprep.subr.mxu0 0.0
      %5883 = vmatpush2.msra.mxu0 0.0
      %5884 = vmatprep.subr.mxu0 0.0
      %5885 = vmatpush2.msra.mxu0 0.0
      %5886 = vmatprep.subr.mxu0 0.0
      %5887 = vmatpush2.msra.mxu0 0.0
      %5888 = vmatprep.subr.mxu0 0.0
      %5889 = vmatpush2.msra.mxu0 0.0
      %5890 = vmatprep.subr.mxu0 0.0
      %5891 = vmatpush2.msra.mxu0 0.0
      %5892 = vmatprep.subr.mxu0 0.0
      %5893 = vmatpush2.msra.mxu0 0.0
      %5894 = vmatprep.mubr.f32.mxu0 0.0
      %5895 = vmatmul.mubr.f32.gmra.mxu0 %v5804
      %v5896 = vpop.f32.mrf.mxu0
      %v5897 = vadd.f32 0.0, %v5896
      %v5898 = vpop.f32.mrf.mxu0
      %5899 = vmatprep.mubr.f32.mxu0 0.0
      %5900 = vmatmul.mubr.f32.gmra.mxu0 %v5807
      %v5901 = vpop.f32.mrf.mxu0
      %v5902 = vadd.f32 0.0, %v5901
      %v5903 = vpop.f32.mrf.mxu0
      %5904 = vmatprep.mubr.f32.mxu0 0.0
      %5905 = vmatmul.mubr.f32.gmra.mxu0 %v5810
      %v5906 = vpop.f32.mrf.mxu0
      %v5907 = vadd.f32 0.0, %v5906
      %v5908 = vpop.f32.mrf.mxu0
      %5909 = vmatprep.mubr.f32.mxu0 0.0
      %5910 = vmatmul.mubr.f32.gmra.mxu0 %v5813
      %v5911 = vpop.f32.mrf.mxu0
      %v5912 = vadd.f32 0.0, %v5911
      %v5913 = vpop.f32.mrf.mxu0
      %5914 = vmatprep.mubr.f32.mxu0 0.0
      %5915 = vmatmul.mubr.f32.gmra.mxu0 %v5816
      %v5916 = vpop.f32.mrf.mxu0
      %v5917 = vadd.f32 0.0, %v5916
      %v5918 = vpop.f32.mrf.mxu0
      %5919 = vmatprep.mubr.f32.mxu0 0.0
      %5920 = vmatmul.mubr.f32.gmra.mxu0 %v5819
      %v5921 = vpop.f32.mrf.mxu0
      %v5922 = vadd.f32 0.0, %v5921
      %v5923 = vpop.f32.mrf.mxu0
      %5924 = vmatprep.mubr.f32.mxu0 0.0
      %5925 = vmatmul.mubr.f32.gmra.mxu0 %v5822
      %v5926 = vpop.f32.mrf.mxu0
      %v5927 = vadd.f32 0.0, %v5926
      %v5928 = vpop.f32.mrf.mxu0
      %5929 = vmatprep.mubr.f32.mxu0 0.0
      %5930 = vmatmul.mubr.f32.gmra.mxu0 %v5825
      %v5931 = vpop.f32.mrf.mxu0
      %v5932 = vadd.f32 0.0, %v5931
      %v5933 = vpop.f32.mrf.mxu0
      %5934 = vdwg.mxu0
      %v5935 = vadd.f32 %v5778, %v5897
      %v5936 = vadd.f32 %v5779, %v5902
      %v5937 = vadd.f32 %v5780, %v5907
      %v5938 = vadd.f32 %v5781, %v5912
      %v5939 = vadd.f32 %v5782, %v5917
      %v5940 = vadd.f32 %v5783, %v5922
      %v5941 = vadd.f32 %v5784, %v5927
      %v5942 = vadd.f32 %v5785, %v5932
      %v5943 = vld [vmem:[%s5628 + $0x4] sm:$0xff]
      %v5944 = vld [vmem:[%s5628 + $0x14] sm:$0xff]
      %v5945 = vld [vmem:[%s5628 + $0x24] sm:$0xff]
      %v5946 = vld [vmem:[%s5628 + $0x34] sm:$0xff]
      %v5947 = vld [vmem:[%s5628 + $0x44] sm:$0xff]
      %v5948 = vld [vmem:[%s5628 + $0x54] sm:$0xff]
      %v5949 = vld [vmem:[%s5628 + $0x64] sm:$0xff]
      %v5950 = vld [vmem:[%s5628 + $0x74] sm:$0xff]
      %s5951 = scalar_lea.vmem %s7, 512
      %v5952 = vld [vmem:[%s5951] sm:$0xff]
      %v5953 = vld [vmem:[%s5951 + $0x8] sm:$0xff]
      %v5954 = vld [vmem:[%s5951 + $0x10] sm:$0xff]
      %v5955 = vld [vmem:[%s5951 + $0x18] sm:$0xff]
      %v5956 = vld [vmem:[%s5951 + $0x20] sm:$0xff]
      %v5957 = vld [vmem:[%s5951 + $0x28] sm:$0xff]
      %v5958 = vld [vmem:[%s5951 + $0x30] sm:$0xff]
      %v5959 = vld [vmem:[%s5951 + $0x38] sm:$0xf]
      %v5961 = vsel %vm3211, %v5943, 0
      %v5964 = vsel %vm3211, %v5944, 0
      %v5967 = vsel %vm3211, %v5945, 0
      %v5970 = vsel %vm3211, %v5946, 0
      %v5973 = vsel %vm3211, %v5947, 0
      %v5976 = vsel %vm3211, %v5948, 0
      %v5979 = vsel %vm3211, %v5949, 0
      %v5982 = vsel %vm3211, %v5950, 0
      %v5985 = vsel %vm3305, %v5959, 0
      %5987 = vmatprep.subr.mxu0 0.0
      %5988 = vmatpush1.msra.mxu0 0.0
      %5989 = vmatprep.subr.mxu0 0.0
      %5990 = vmatpush1.msra.mxu0 0.0
      %5991 = vmatprep.subr.mxu0 0.0
      %5992 = vmatpush1.msra.mxu0 0.0
      %5993 = vmatprep.subr.mxu0 0.0
      %5994 = vmatpush1.msra.mxu0 0.0
      %5995 = vmatprep.subr.mxu0 0.0
      %5996 = vmatpush1.msra.mxu0 0.0
      %5997 = vmatprep.subr.mxu0 0.0
      %5998 = vmatpush1.msra.mxu0 0.0
      %5999 = vmatprep.subr.mxu0 0.0
      %6000 = vmatpush1.msra.mxu0 0.0
      %6001 = vmatprep.subr.mxu0 0.0
      %6002 = vmatpush1.msra.mxu0 0.0
      %6003 = vmatprep.subr.mxu0 0.0
      %6004 = vmatpush1.msra.mxu0 %v5985
      %6005 = vmatprep.subr.mxu0 0.0
      %6006 = vmatpush1.msra.mxu0 %v5958
      %6007 = vmatprep.subr.mxu0 0.0
      %6008 = vmatpush1.msra.mxu0 %v5957
      %6009 = vmatprep.subr.mxu0 0.0
      %6010 = vmatpush1.msra.mxu0 %v5956
      %6011 = vmatprep.subr.mxu0 0.0
      %6012 = vmatpush1.msra.mxu0 %v5955
      %6013 = vmatprep.subr.mxu0 0.0
      %6014 = vmatpush1.msra.mxu0 %v5954
      %6015 = vmatprep.subr.mxu0 0.0
      %6016 = vmatpush1.msra.mxu0 %v5953
      %6017 = vmatprep.subr.mxu0 0.0
      %6018 = vmatpush1.msra.mxu0 %v5952
      %6019 = vmatprep.subr.mxu0 0.0
      %6020 = vmatpush2.msra.mxu0 0.0
      %6021 = vmatprep.subr.mxu0 0.0
      %6022 = vmatpush2.msra.mxu0 0.0
      %6023 = vmatprep.subr.mxu0 0.0
      %6024 = vmatpush2.msra.mxu0 0.0
      %6025 = vmatprep.subr.mxu0 0.0
      %6026 = vmatpush2.msra.mxu0 0.0
      %6027 = vmatprep.subr.mxu0 0.0
      %6028 = vmatpush2.msra.mxu0 0.0
      %6029 = vmatprep.subr.mxu0 0.0
      %6030 = vmatpush2.msra.mxu0 0.0
      %6031 = vmatprep.subr.mxu0 0.0
      %6032 = vmatpush2.msra.mxu0 0.0
      %6033 = vmatprep.subr.mxu0 0.0
      %6034 = vmatpush2.msra.mxu0 0.0
      %6035 = vmatprep.subr.mxu0 0.0
      %6036 = vmatpush2.msra.mxu0 0.0
      %6037 = vmatprep.subr.mxu0 0.0
      %6038 = vmatpush2.msra.mxu0 0.0
      %6039 = vmatprep.subr.mxu0 0.0
      %6040 = vmatpush2.msra.mxu0 0.0
      %6041 = vmatprep.subr.mxu0 0.0
      %6042 = vmatpush2.msra.mxu0 0.0
      %6043 = vmatprep.subr.mxu0 0.0
      %6044 = vmatpush2.msra.mxu0 0.0
      %6045 = vmatprep.subr.mxu0 0.0
      %6046 = vmatpush2.msra.mxu0 0.0
      %6047 = vmatprep.subr.mxu0 0.0
      %6048 = vmatpush2.msra.mxu0 0.0
      %6049 = vmatprep.subr.mxu0 0.0
      %6050 = vmatpush2.msra.mxu0 0.0
      %6051 = vmatprep.mubr.f32.mxu0 0.0
      %6052 = vmatmul.mubr.f32.gmra.mxu0 %v5961
      %v6053 = vpop.f32.mrf.mxu0
      %v6054 = vadd.f32 0.0, %v6053
      %v6055 = vpop.f32.mrf.mxu0
      %6056 = vmatprep.mubr.f32.mxu0 0.0
      %6057 = vmatmul.mubr.f32.gmra.mxu0 %v5964
      %v6058 = vpop.f32.mrf.mxu0
      %v6059 = vadd.f32 0.0, %v6058
      %v6060 = vpop.f32.mrf.mxu0
      %6061 = vmatprep.mubr.f32.mxu0 0.0
      %6062 = vmatmul.mubr.f32.gmra.mxu0 %v5967
      %v6063 = vpop.f32.mrf.mxu0
      %v6064 = vadd.f32 0.0, %v6063
      %v6065 = vpop.f32.mrf.mxu0
      %6066 = vmatprep.mubr.f32.mxu0 0.0
      %6067 = vmatmul.mubr.f32.gmra.mxu0 %v5970
      %v6068 = vpop.f32.mrf.mxu0
      %v6069 = vadd.f32 0.0, %v6068
      %v6070 = vpop.f32.mrf.mxu0
      %6071 = vmatprep.mubr.f32.mxu0 0.0
      %6072 = vmatmul.mubr.f32.gmra.mxu0 %v5973
      %v6073 = vpop.f32.mrf.mxu0
      %v6074 = vadd.f32 0.0, %v6073
      %v6075 = vpop.f32.mrf.mxu0
      %6076 = vmatprep.mubr.f32.mxu0 0.0
      %6077 = vmatmul.mubr.f32.gmra.mxu0 %v5976
      %v6078 = vpop.f32.mrf.mxu0
      %v6079 = vadd.f32 0.0, %v6078
      %v6080 = vpop.f32.mrf.mxu0
      %6081 = vmatprep.mubr.f32.mxu0 0.0
      %6082 = vmatmul.mubr.f32.gmra.mxu0 %v5979
      %v6083 = vpop.f32.mrf.mxu0
      %v6084 = vadd.f32 0.0, %v6083
      %v6085 = vpop.f32.mrf.mxu0
      %6086 = vmatprep.mubr.f32.mxu0 0.0
      %6087 = vmatmul.mubr.f32.gmra.mxu0 %v5982
      %v6088 = vpop.f32.mrf.mxu0
      %v6089 = vadd.f32 0.0, %v6088
      %v6090 = vpop.f32.mrf.mxu0
      %6091 = vdwg.mxu0
      %v6092 = vadd.f32 %v5935, %v6054
      %v6093 = vadd.f32 %v5936, %v6059
      %v6094 = vadd.f32 %v5937, %v6064
      %v6095 = vadd.f32 %v5938, %v6069
      %v6096 = vadd.f32 %v5939, %v6074
      %v6097 = vadd.f32 %v5940, %v6079
      %v6098 = vadd.f32 %v5941, %v6084
      %v6099 = vadd.f32 %v5942, %v6089
      %v6100 = vld [vmem:[%s8] sm:$0x1]
      %v6102 = vlaneseq
      %v6103 = vshrl.u32 %v6102, 7
      %v6104 = vsub.s32 0, %v6103
      %v6105 = vrot.slane %v6100, %v6104
      %v6107 = vadd.f32 %v6092, %v6105
      %v6108 = vadd.f32 %v6093, %v6105
      %v6109 = vadd.f32 %v6094, %v6105
      %v6110 = vadd.f32 %v6095, %v6105
      %v6111 = vadd.f32 %v6096, %v6105
      %v6112 = vadd.f32 %v6097, %v6105
      %v6113 = vadd.f32 %v6098, %v6105
      %v6114 = vadd.f32 %v6099, %v6105
      %v6115 = vmax.f32 %v6107, 0.0
      %v6116 = vmax.f32 %v6108, 0.0
      %v6117 = vmax.f32 %v6109, 0.0
      %v6118 = vmax.f32 %v6110, 0.0
      %v6119 = vmax.f32 %v6111, 0.0
      %v6120 = vmax.f32 %v6112, 0.0
      %v6121 = vmax.f32 %v6113, 0.0
      %v6122 = vmax.f32 %v6114, 0.0
      %v6123 = vmax.f32 %v6115, %v6116
      %v6124 = vmax.f32 %v6117, %v6118
      %v6125 = vmax.f32 %v6119, %v6120
      %v6126 = vmax.f32 %v6121, %v6122
      %v6131 = vcombine.high %v6123, %v6123
      %v6133 = vunpack.c.l.s4 1983009808
      %v6134 = vunpack.c.0.s8 %v6133
      %v6135 = vlaneseq
      %v6136 = vshrl.u32 %v6135, 7
      %v6137 = vsub.s32 %v6134, %v6136
      %v6138 = vrot.slane %v6123, %v6137
      %v6140 = vunpack.c.l.s4 1983009808
      %v6141 = vunpack.c.0.s8 %v6140
      %v6142 = vlaneseq
      %v6143 = vshrl.u32 %v6142, 7
      %v6144 = vsub.s32 %v6141, %v6143
      %v6145 = vrot.slane %v6131, %v6144
      %v6146 = vcombine.high %v6138, %v6138
      %v6147 = vcombine.high %v6145, %v6145
      %v6148 = vcombine.high %v6124, %v6124
      %v6150 = vunpack.c.l.s4 1983009808
      %v6151 = vunpack.c.0.s8 %v6150
      %v6152 = vlaneseq
      %v6153 = vshrl.u32 %v6152, 7
      %v6154 = vsub.s32 %v6151, %v6153
      %v6155 = vrot.slane %v6124, %v6154
      %v6157 = vunpack.c.l.s4 1983009808
      %v6158 = vunpack.c.0.s8 %v6157
      %v6159 = vlaneseq
      %v6160 = vshrl.u32 %v6159, 7
      %v6161 = vsub.s32 %v6158, %v6160
      %v6162 = vrot.slane %v6148, %v6161
      %v6163 = vcombine.high %v6155, %v6155
      %v6164 = vcombine.high %v6162, %v6162
      %v6165 = vcombine.high %v6125, %v6125
      %v6167 = vunpack.c.l.s4 1983009808
      %v6168 = vunpack.c.0.s8 %v6167
      %v6169 = vlaneseq
      %v6170 = vshrl.u32 %v6169, 7
      %v6171 = vsub.s32 %v6168, %v6170
      %v6172 = vrot.slane %v6125, %v6171
      %v6174 = vunpack.c.l.s4 1983009808
      %v6175 = vunpack.c.0.s8 %v6174
      %v6176 = vlaneseq
      %v6177 = vshrl.u32 %v6176, 7
      %v6178 = vsub.s32 %v6175, %v6177
      %v6179 = vrot.slane %v6165, %v6178
      %v6180 = vcombine.high %v6172, %v6172
      %v6181 = vcombine.high %v6179, %v6179
      %v6182 = vcombine.high %v6126, %v6126
      %v6184 = vunpack.c.l.s4 1983009808
      %v6185 = vunpack.c.0.s8 %v6184
      %v6186 = vlaneseq
      %v6187 = vshrl.u32 %v6186, 7
      %v6188 = vsub.s32 %v6185, %v6187
      %v6189 = vrot.slane %v6126, %v6188
      %v6191 = vunpack.c.l.s4 1983009808
      %v6192 = vunpack.c.0.s8 %v6191
      %v6193 = vlaneseq
      %v6194 = vshrl.u32 %v6193, 7
      %v6195 = vsub.s32 %v6192, %v6194
      %v6196 = vrot.slane %v6182, %v6195
      %v6197 = vcombine.high %v6189, %v6189
      %v6198 = vcombine.high %v6196, %v6196
      %v6215 = vsel %vm1225, %v6138, -inf
      %v6216 = vrot.slane %v6215, 4
      %v6217 = vmax.f32 %v6215, %v6216
      %v6218 = vrot.slane %v6217, 2
      %v6219 = vmax.f32 %v6217, %v6218
      %v6220 = vrot.slane %v6219, 1
      %v6221 = vmax.f32 %v6219, %v6220
      %v6222 = vsel %vm1225, %v6146, -inf
      %v6223 = vrot.slane %v6222, 4
      %v6224 = vmax.f32 %v6222, %v6223
      %v6225 = vrot.slane %v6224, 2
      %v6226 = vmax.f32 %v6224, %v6225
      %v6227 = vrot.slane %v6226, 1
      %v6228 = vmax.f32 %v6226, %v6227
      %v6229 = vsel %vm1225, %v6145, -inf
      %v6230 = vrot.slane %v6229, 4
      %v6231 = vmax.f32 %v6229, %v6230
      %v6232 = vrot.slane %v6231, 2
      %v6233 = vmax.f32 %v6231, %v6232
      %v6234 = vrot.slane %v6233, 1
      %v6235 = vmax.f32 %v6233, %v6234
      %v6236 = vsel %vm1225, %v6147, -inf
      %v6237 = vrot.slane %v6236, 4
      %v6238 = vmax.f32 %v6236, %v6237
      %v6239 = vrot.slane %v6238, 2
      %v6240 = vmax.f32 %v6238, %v6239
      %v6241 = vrot.slane %v6240, 1
      %v6242 = vmax.f32 %v6240, %v6241
      %v6243 = vsel %vm1225, %v6155, -inf
      %v6244 = vrot.slane %v6243, 4
      %v6245 = vmax.f32 %v6243, %v6244
      %v6246 = vrot.slane %v6245, 2
      %v6247 = vmax.f32 %v6245, %v6246
      %v6248 = vrot.slane %v6247, 1
      %v6249 = vmax.f32 %v6247, %v6248
      %v6250 = vsel %vm1225, %v6163, -inf
      %v6251 = vrot.slane %v6250, 4
      %v6252 = vmax.f32 %v6250, %v6251
      %v6253 = vrot.slane %v6252, 2
      %v6254 = vmax.f32 %v6252, %v6253
      %v6255 = vrot.slane %v6254, 1
      %v6256 = vmax.f32 %v6254, %v6255
      %v6257 = vsel %vm1225, %v6162, -inf
      %v6258 = vrot.slane %v6257, 4
      %v6259 = vmax.f32 %v6257, %v6258
      %v6260 = vrot.slane %v6259, 2
      %v6261 = vmax.f32 %v6259, %v6260
      %v6262 = vrot.slane %v6261, 1
      %v6263 = vmax.f32 %v6261, %v6262
      %v6264 = vsel %vm1225, %v6164, -inf
      %v6265 = vrot.slane %v6264, 4
      %v6266 = vmax.f32 %v6264, %v6265
      %v6267 = vrot.slane %v6266, 2
      %v6268 = vmax.f32 %v6266, %v6267
      %v6269 = vrot.slane %v6268, 1
      %v6270 = vmax.f32 %v6268, %v6269
      %v6271 = vsel %vm1225, %v6172, -inf
      %v6272 = vrot.slane %v6271, 4
      %v6273 = vmax.f32 %v6271, %v6272
      %v6274 = vrot.slane %v6273, 2
      %v6275 = vmax.f32 %v6273, %v6274
      %v6276 = vrot.slane %v6275, 1
      %v6277 = vmax.f32 %v6275, %v6276
      %v6278 = vsel %vm1225, %v6180, -inf
      %v6279 = vrot.slane %v6278, 4
      %v6280 = vmax.f32 %v6278, %v6279
      %v6281 = vrot.slane %v6280, 2
      %v6282 = vmax.f32 %v6280, %v6281
      %v6283 = vrot.slane %v6282, 1
      %v6284 = vmax.f32 %v6282, %v6283
      %v6285 = vsel %vm1225, %v6179, -inf
      %v6286 = vrot.slane %v6285, 4
      %v6287 = vmax.f32 %v6285, %v6286
      %v6288 = vrot.slane %v6287, 2
      %v6289 = vmax.f32 %v6287, %v6288
      %v6290 = vrot.slane %v6289, 1
      %v6291 = vmax.f32 %v6289, %v6290
      %v6292 = vsel %vm1225, %v6181, -inf
      %v6293 = vrot.slane %v6292, 4
      %v6294 = vmax.f32 %v6292, %v6293
      %v6295 = vrot.slane %v6294, 2
      %v6296 = vmax.f32 %v6294, %v6295
      %v6297 = vrot.slane %v6296, 1
      %v6298 = vmax.f32 %v6296, %v6297
      %v6299 = vsel %vm1225, %v6189, -inf
      %v6300 = vrot.slane %v6299, 4
      %v6301 = vmax.f32 %v6299, %v6300
      %v6302 = vrot.slane %v6301, 2
      %v6303 = vmax.f32 %v6301, %v6302
      %v6304 = vrot.slane %v6303, 1
      %v6305 = vmax.f32 %v6303, %v6304
      %v6306 = vsel %vm1225, %v6197, -inf
      %v6307 = vrot.slane %v6306, 4
      %v6308 = vmax.f32 %v6306, %v6307
      %v6309 = vrot.slane %v6308, 2
      %v6310 = vmax.f32 %v6308, %v6309
      %v6311 = vrot.slane %v6310, 1
      %v6312 = vmax.f32 %v6310, %v6311
      %v6313 = vsel %vm1225, %v6196, -inf
      %v6314 = vrot.slane %v6313, 4
      %v6315 = vmax.f32 %v6313, %v6314
      %v6316 = vrot.slane %v6315, 2
      %v6317 = vmax.f32 %v6315, %v6316
      %v6318 = vrot.slane %v6317, 1
      %v6319 = vmax.f32 %v6317, %v6318
      %v6320 = vsel %vm1225, %v6198, -inf
      %v6321 = vrot.slane %v6320, 4
      %v6322 = vmax.f32 %v6320, %v6321
      %v6323 = vrot.slane %v6322, 2
      %v6324 = vmax.f32 %v6322, %v6323
      %v6325 = vrot.slane %v6324, 1
      %v6326 = vmax.f32 %v6324, %v6325
      %6327 = vst.msk [vmem:[#allocation5] sm:$0xff] %vm1674, 0.0
      %6328 = vst.msk [vmem:[#allocation5 + $0x8] sm:$0xff] %vm1674, 0.0
      %s6329 = scalar_lea.vmem [#allocation5], 48
      %6330 = vst.msk [vmem:[%s6329] sm:$0xff] %vm1674, 0.0
      %6331 = vst.msk [vmem:[%s6329 + $0x8] sm:$0xff] %vm1674, 0.0
      %s6332 = scalar_lea.vmem [#allocation5], 16
      %6333 = vst.msk [vmem:[%s6332] sm:$0x3] %vm1225, 0.0
      %6334 = vst.msk [vmem:[%s6332 + $0x8] sm:$0x3] %vm1225, 0.0
      %6335 = vst.msk [vmem:[%s6332 + $0x10] sm:$0x3] %vm1225, 0.0
      %6336 = vst.msk [vmem:[%s6332 + $0x18] sm:$0x3] %vm1225, 0.0
      %6337 = vst.msk [vmem:[%s6332 + $0x6] sm:$0x3] %vm1225, 0.0
      %6338 = vst.msk [vmem:[%s6332 + $0xe] sm:$0x3] %vm1225, 0.0
      %6339 = vst.msk [vmem:[%s6332 + $0x16] sm:$0x3] %vm1225, 0.0
      %6340 = vst.msk [vmem:[%s6332 + $0x1e] sm:$0x3] %vm1225, 0.0
      %v6357 = vsel %vm1766, %v6228, %v6221
      %v6358 = vsel %vm1768, %v6235, %v6357
      %v6359 = vsel %vm1770, %v6242, %v6358
      %v6360 = vsel %vm1766, %v6256, %v6249
      %v6361 = vsel %vm1768, %v6263, %v6360
      %v6362 = vsel %vm1770, %v6270, %v6361
      %v6363 = vsel %vm1766, %v6284, %v6277
      %v6364 = vsel %vm1768, %v6291, %v6363
      %v6365 = vsel %vm1770, %v6298, %v6364
      %v6366 = vsel %vm1766, %v6312, %v6305
      %v6367 = vsel %vm1768, %v6319, %v6366
      %v6368 = vsel %vm1770, %v6326, %v6367
      %6373 = vst.msk [vmem:[%s6332 + $0x2] sm:$0xf] %vm1676, %v6359
      %6374 = vst.msk [vmem:[%s6332 + $0xa] sm:$0xf] %vm1676, %v6362
      %6375 = vst.msk [vmem:[%s6332 + $0x12] sm:$0xf] %vm1676, %v6365
      %6376 = vst.msk [vmem:[%s6332 + $0x1a] sm:$0xf] %vm1676, %v6368
      %v6377 = vld [vmem:[#allocation5] sm:$0xf]
      %v6378 = vld [vmem:[#allocation5 + $0x8] sm:$0xf]
      %v6379 = vld [vmem:[#allocation5 + $0x10] sm:$0xf]
      %v6380 = vld [vmem:[#allocation5 + $0x18] sm:$0xf]
      %v6381 = vld [vmem:[%s9] sm:$0xff]
      %v6382 = vld [vmem:[%s9 + $0x8] sm:$0xff]
      %v6383 = vld [vmem:[%s9 + $0x10] sm:$0xff]
      %v6384 = vld [vmem:[%s9 + $0x18] sm:$0xff]
      %v6385 = vld [vmem:[%s9 + $0x20] sm:$0xff]
      %v6386 = vld [vmem:[#allocation5 + $0x2] sm:$0xf]
      %v6387 = vld [vmem:[#allocation5 + $0xa] sm:$0xf]
      %v6388 = vld [vmem:[#allocation5 + $0x12] sm:$0xf]
      %v6389 = vld [vmem:[#allocation5 + $0x1a] sm:$0xf]
      %s6390 = scalar_lea.vmem %s9, 40
      %v6391 = vld [vmem:[%s6390] sm:$0xff]
      %v6392 = vld [vmem:[%s6390 + $0x8] sm:$0xff]
      %v6393 = vld [vmem:[%s6390 + $0x10] sm:$0xff]
      %v6394 = vld [vmem:[%s6390 + $0x18] sm:$0xff]
      %v6395 = vld [vmem:[%s6390 + $0x20] sm:$0xff]
      %v6400 = vcombine.low %v6386, %v6387
      %v6401 = vcombine.low %v6388, %v6389
      %v6402 = vsel %vm1674, %v6400, 0
      %v6404 = vsel %vm1674, %v6401, 0
      %6406 = vmatprep.subr.mxu0 0.0
      %6407 = vmatpush1.msra.mxu0 0.0
      %6408 = vmatprep.subr.mxu0 0.0
      %6409 = vmatpush1.msra.mxu0 0.0
      %6410 = vmatprep.subr.mxu0 0.0
      %6411 = vmatpush1.msra.mxu0 0.0
      %6412 = vmatprep.subr.mxu0 0.0
      %6413 = vmatpush1.msra.mxu0 0.0
      %6414 = vmatprep.subr.mxu0 0.0
      %6415 = vmatpush1.msra.mxu0 0.0
      %6416 = vmatprep.subr.mxu0 0.0
      %6417 = vmatpush1.msra.mxu0 0.0
      %6418 = vmatprep.subr.mxu0 0.0
      %6419 = vmatpush1.msra.mxu0 0.0
      %6420 = vmatprep.subr.mxu0 0.0
      %6421 = vmatpush1.msra.mxu0 0.0
      %6422 = vmatprep.subr.mxu0 0.0
      %6423 = vmatpush1.msra.mxu0 0.0
      %6424 = vmatprep.subr.mxu0 0.0
      %6425 = vmatpush1.msra.mxu0 0.0
      %6426 = vmatprep.subr.mxu0 0.0
      %6427 = vmatpush1.msra.mxu0 0.0
      %6428 = vmatprep.subr.mxu0 0.0
      %6429 = vmatpush1.msra.mxu0 %v6395
      %6430 = vmatprep.subr.mxu0 0.0
      %6431 = vmatpush1.msra.mxu0 %v6394
      %6432 = vmatprep.subr.mxu0 0.0
      %6433 = vmatpush1.msra.mxu0 %v6393
      %6434 = vmatprep.subr.mxu0 0.0
      %6435 = vmatpush1.msra.mxu0 %v6392
      %6436 = vmatprep.subr.mxu0 0.0
      %6437 = vmatpush1.msra.mxu0 %v6391
      %6438 = vmatprep.subr.mxu0 0.0
      %6439 = vmatpush2.msra.mxu0 0.0
      %6440 = vmatprep.subr.mxu0 0.0
      %6441 = vmatpush2.msra.mxu0 0.0
      %6442 = vmatprep.subr.mxu0 0.0
      %6443 = vmatpush2.msra.mxu0 0.0
      %6444 = vmatprep.subr.mxu0 0.0
      %6445 = vmatpush2.msra.mxu0 0.0
      %6446 = vmatprep.subr.mxu0 0.0
      %6447 = vmatpush2.msra.mxu0 0.0
      %6448 = vmatprep.subr.mxu0 0.0
      %6449 = vmatpush2.msra.mxu0 0.0
      %6450 = vmatprep.subr.mxu0 0.0
      %6451 = vmatpush2.msra.mxu0 0.0
      %6452 = vmatprep.subr.mxu0 0.0
      %6453 = vmatpush2.msra.mxu0 0.0
      %6454 = vmatprep.subr.mxu0 0.0
      %6455 = vmatpush2.msra.mxu0 0.0
      %6456 = vmatprep.subr.mxu0 0.0
      %6457 = vmatpush2.msra.mxu0 0.0
      %6458 = vmatprep.subr.mxu0 0.0
      %6459 = vmatpush2.msra.mxu0 0.0
      %6460 = vmatprep.subr.mxu0 0.0
      %6461 = vmatpush2.msra.mxu0 0.0
      %6462 = vmatprep.subr.mxu0 0.0
      %6463 = vmatpush2.msra.mxu0 0.0
      %6464 = vmatprep.subr.mxu0 0.0
      %6465 = vmatpush2.msra.mxu0 0.0
      %6466 = vmatprep.subr.mxu0 0.0
      %6467 = vmatpush2.msra.mxu0 0.0
      %6468 = vmatprep.subr.mxu0 0.0
      %6469 = vmatpush2.msra.mxu0 0.0
      %6470 = vmatprep.mubr.f32.mxu0 0.0
      %6471 = vmatmul.mubr.f32.gmra.mxu0 %v6402
      %v6472 = vpop.f32.mrf.mxu0
      %v6473 = vadd.f32 0.0, %v6472
      %v6474 = vpop.f32.mrf.mxu0
      %6475 = vmatprep.mubr.f32.mxu0 0.0
      %6476 = vmatmul.mubr.f32.gmra.mxu0 %v6404
      %v6477 = vpop.f32.mrf.mxu0
      %v6478 = vadd.f32 0.0, %v6477
      %v6479 = vpop.f32.mrf.mxu0
      %6480 = vdwg.mxu0
      %v6485 = vcombine.low %v6377, %v6378
      %v6486 = vcombine.low %v6379, %v6380
      %v6487 = vsel %vm1674, %v6485, 0
      %v6489 = vsel %vm1674, %v6486, 0
      %6491 = vmatprep.subr.mxu0 0.0
      %6492 = vmatpush1.msra.mxu0 0.0
      %6493 = vmatprep.subr.mxu0 0.0
      %6494 = vmatpush1.msra.mxu0 0.0
      %6495 = vmatprep.subr.mxu0 0.0
      %6496 = vmatpush1.msra.mxu0 0.0
      %6497 = vmatprep.subr.mxu0 0.0
      %6498 = vmatpush1.msra.mxu0 0.0
      %6499 = vmatprep.subr.mxu0 0.0
      %6500 = vmatpush1.msra.mxu0 0.0
      %6501 = vmatprep.subr.mxu0 0.0
      %6502 = vmatpush1.msra.mxu0 0.0
      %6503 = vmatprep.subr.mxu0 0.0
      %6504 = vmatpush1.msra.mxu0 0.0
      %6505 = vmatprep.subr.mxu0 0.0
      %6506 = vmatpush1.msra.mxu0 0.0
      %6507 = vmatprep.subr.mxu0 0.0
      %6508 = vmatpush1.msra.mxu0 0.0
      %6509 = vmatprep.subr.mxu0 0.0
      %6510 = vmatpush1.msra.mxu0 0.0
      %6511 = vmatprep.subr.mxu0 0.0
      %6512 = vmatpush1.msra.mxu0 0.0
      %6513 = vmatprep.subr.mxu0 0.0
      %6514 = vmatpush1.msra.mxu0 %v6385
      %6515 = vmatprep.subr.mxu0 0.0
      %6516 = vmatpush1.msra.mxu0 %v6384
      %6517 = vmatprep.subr.mxu0 0.0
      %6518 = vmatpush1.msra.mxu0 %v6383
      %6519 = vmatprep.subr.mxu0 0.0
      %6520 = vmatpush1.msra.mxu0 %v6382
      %6521 = vmatprep.subr.mxu0 0.0
      %6522 = vmatpush1.msra.mxu0 %v6381
      %6523 = vmatprep.subr.mxu0 0.0
      %6524 = vmatpush2.msra.mxu0 0.0
      %6525 = vmatprep.subr.mxu0 0.0
      %6526 = vmatpush2.msra.mxu0 0.0
      %6527 = vmatprep.subr.mxu0 0.0
      %6528 = vmatpush2.msra.mxu0 0.0
      %6529 = vmatprep.subr.mxu0 0.0
      %6530 = vmatpush2.msra.mxu0 0.0
      %6531 = vmatprep.subr.mxu0 0.0
      %6532 = vmatpush2.msra.mxu0 0.0
      %6533 = vmatprep.subr.mxu0 0.0
      %6534 = vmatpush2.msra.mxu0 0.0
      %6535 = vmatprep.subr.mxu0 0.0
      %6536 = vmatpush2.msra.mxu0 0.0
      %6537 = vmatprep.subr.mxu0 0.0
      %6538 = vmatpush2.msra.mxu0 0.0
      %6539 = vmatprep.subr.mxu0 0.0
      %6540 = vmatpush2.msra.mxu0 0.0
      %6541 = vmatprep.subr.mxu0 0.0
      %6542 = vmatpush2.msra.mxu0 0.0
      %6543 = vmatprep.subr.mxu0 0.0
      %6544 = vmatpush2.msra.mxu0 0.0
      %6545 = vmatprep.subr.mxu0 0.0
      %6546 = vmatpush2.msra.mxu0 0.0
      %6547 = vmatprep.subr.mxu0 0.0
      %6548 = vmatpush2.msra.mxu0 0.0
      %6549 = vmatprep.subr.mxu0 0.0
      %6550 = vmatpush2.msra.mxu0 0.0
      %6551 = vmatprep.subr.mxu0 0.0
      %6552 = vmatpush2.msra.mxu0 0.0
      %6553 = vmatprep.subr.mxu0 0.0
      %6554 = vmatpush2.msra.mxu0 0.0
      %6555 = vmatprep.mubr.f32.mxu0 0.0
      %6556 = vmatmul.mubr.f32.gmra.mxu0 %v6487
      %v6557 = vpop.f32.mrf.mxu0
      %v6558 = vadd.f32 %v6473, %v6557
      %v6559 = vpop.f32.mrf.mxu0
      %6560 = vmatprep.mubr.f32.mxu0 0.0
      %6561 = vmatmul.mubr.f32.gmra.mxu0 %v6489
      %v6562 = vpop.f32.mrf.mxu0
      %v6563 = vadd.f32 %v6478, %v6562
      %v6564 = vpop.f32.mrf.mxu0
      %6565 = vdwg.mxu0
      %v6566 = vld [vmem:[#allocation5 + $0x4] sm:$0xf]
      %v6567 = vld [vmem:[#allocation5 + $0xc] sm:$0xf]
      %v6568 = vld [vmem:[#allocation5 + $0x14] sm:$0xf]
      %v6569 = vld [vmem:[#allocation5 + $0x1c] sm:$0xf]
      %s6570 = scalar_lea.vmem %s9, 80
      %v6571 = vld [vmem:[%s6570] sm:$0xff]
      %v6572 = vld [vmem:[%s6570 + $0x8] sm:$0xff]
      %v6573 = vld [vmem:[%s6570 + $0x10] sm:$0xff]
      %v6574 = vld [vmem:[%s6570 + $0x18] sm:$0xff]
      %v6575 = vld [vmem:[%s6570 + $0x20] sm:$0xff]
      %v6580 = vcombine.low %v6566, %v6567
      %v6581 = vcombine.low %v6568, %v6569
      %v6582 = vsel %vm1674, %v6580, 0
      %v6584 = vsel %vm1674, %v6581, 0
      %6586 = vmatprep.subr.mxu0 0.0
      %6587 = vmatpush1.msra.mxu0 0.0
      %6588 = vmatprep.subr.mxu0 0.0
      %6589 = vmatpush1.msra.mxu0 0.0
      %6590 = vmatprep.subr.mxu0 0.0
      %6591 = vmatpush1.msra.mxu0 0.0
      %6592 = vmatprep.subr.mxu0 0.0
      %6593 = vmatpush1.msra.mxu0 0.0
      %6594 = vmatprep.subr.mxu0 0.0
      %6595 = vmatpush1.msra.mxu0 0.0
      %6596 = vmatprep.subr.mxu0 0.0
      %6597 = vmatpush1.msra.mxu0 0.0
      %6598 = vmatprep.subr.mxu0 0.0
      %6599 = vmatpush1.msra.mxu0 0.0
      %6600 = vmatprep.subr.mxu0 0.0
      %6601 = vmatpush1.msra.mxu0 0.0
      %6602 = vmatprep.subr.mxu0 0.0
      %6603 = vmatpush1.msra.mxu0 0.0
      %6604 = vmatprep.subr.mxu0 0.0
      %6605 = vmatpush1.msra.mxu0 0.0
      %6606 = vmatprep.subr.mxu0 0.0
      %6607 = vmatpush1.msra.mxu0 0.0
      %6608 = vmatprep.subr.mxu0 0.0
      %6609 = vmatpush1.msra.mxu0 %v6575
      %6610 = vmatprep.subr.mxu0 0.0
      %6611 = vmatpush1.msra.mxu0 %v6574
      %6612 = vmatprep.subr.mxu0 0.0
      %6613 = vmatpush1.msra.mxu0 %v6573
      %6614 = vmatprep.subr.mxu0 0.0
      %6615 = vmatpush1.msra.mxu0 %v6572
      %6616 = vmatprep.subr.mxu0 0.0
      %6617 = vmatpush1.msra.mxu0 %v6571
      %6618 = vmatprep.subr.mxu0 0.0
      %6619 = vmatpush2.msra.mxu0 0.0
      %6620 = vmatprep.subr.mxu0 0.0
      %6621 = vmatpush2.msra.mxu0 0.0
      %6622 = vmatprep.subr.mxu0 0.0
      %6623 = vmatpush2.msra.mxu0 0.0
      %6624 = vmatprep.subr.mxu0 0.0
      %6625 = vmatpush2.msra.mxu0 0.0
      %6626 = vmatprep.subr.mxu0 0.0
      %6627 = vmatpush2.msra.mxu0 0.0
      %6628 = vmatprep.subr.mxu0 0.0
      %6629 = vmatpush2.msra.mxu0 0.0
      %6630 = vmatprep.subr.mxu0 0.0
      %6631 = vmatpush2.msra.mxu0 0.0
      %6632 = vmatprep.subr.mxu0 0.0
      %6633 = vmatpush2.msra.mxu0 0.0
      %6634 = vmatprep.subr.mxu0 0.0
      %6635 = vmatpush2.msra.mxu0 0.0
      %6636 = vmatprep.subr.mxu0 0.0
      %6637 = vmatpush2.msra.mxu0 0.0
      %6638 = vmatprep.subr.mxu0 0.0
      %6639 = vmatpush2.msra.mxu0 0.0
      %6640 = vmatprep.subr.mxu0 0.0
      %6641 = vmatpush2.msra.mxu0 0.0
      %6642 = vmatprep.subr.mxu0 0.0
      %6643 = vmatpush2.msra.mxu0 0.0
      %6644 = vmatprep.subr.mxu0 0.0
      %6645 = vmatpush2.msra.mxu0 0.0
      %6646 = vmatprep.subr.mxu0 0.0
      %6647 = vmatpush2.msra.mxu0 0.0
      %6648 = vmatprep.subr.mxu0 0.0
      %6649 = vmatpush2.msra.mxu0 0.0
      %6650 = vmatprep.mubr.f32.mxu0 0.0
      %6651 = vmatmul.mubr.f32.gmra.mxu0 %v6582
      %v6652 = vpop.f32.mrf.mxu0
      %v6653 = vadd.f32 0.0, %v6652
      %v6654 = vpop.f32.mrf.mxu0
      %6655 = vmatprep.mubr.f32.mxu0 0.0
      %6656 = vmatmul.mubr.f32.gmra.mxu0 %v6584
      %v6657 = vpop.f32.mrf.mxu0
      %v6658 = vadd.f32 0.0, %v6657
      %v6659 = vpop.f32.mrf.mxu0
      %6660 = vdwg.mxu0
      %v6661 = vadd.f32 %v6558, %v6653
      %v6662 = vadd.f32 %v6563, %v6658
      %v6663 = vld [vmem:[%s6332] sm:$0xf]
      %v6664 = vld [vmem:[%s6332 + $0x8] sm:$0xf]
      %v6665 = vld [vmem:[%s6332 + $0x10] sm:$0xf]
      %v6666 = vld [vmem:[%s6332 + $0x18] sm:$0xf]
      %s6667 = scalar_lea.vmem %s9, 120
      %v6668 = vld [vmem:[%s6667] sm:$0xff]
      %v6669 = vld [vmem:[%s6667 + $0x8] sm:$0xff]
      %v6670 = vld [vmem:[%s6667 + $0x10] sm:$0xff]
      %v6671 = vld [vmem:[%s6667 + $0x18] sm:$0xff]
      %v6672 = vld [vmem:[%s6667 + $0x20] sm:$0xff]
      %v6677 = vcombine.low %v6663, %v6664
      %v6678 = vcombine.low %v6665, %v6666
      %v6679 = vsel %vm1674, %v6677, 0
      %v6681 = vsel %vm1674, %v6678, 0
      %6683 = vmatprep.subr.mxu0 0.0
      %6684 = vmatpush1.msra.mxu0 0.0
      %6685 = vmatprep.subr.mxu0 0.0
      %6686 = vmatpush1.msra.mxu0 0.0
      %6687 = vmatprep.subr.mxu0 0.0
      %6688 = vmatpush1.msra.mxu0 0.0
      %6689 = vmatprep.subr.mxu0 0.0
      %6690 = vmatpush1.msra.mxu0 0.0
      %6691 = vmatprep.subr.mxu0 0.0
      %6692 = vmatpush1.msra.mxu0 0.0
      %6693 = vmatprep.subr.mxu0 0.0
      %6694 = vmatpush1.msra.mxu0 0.0
      %6695 = vmatprep.subr.mxu0 0.0
      %6696 = vmatpush1.msra.mxu0 0.0
      %6697 = vmatprep.subr.mxu0 0.0
      %6698 = vmatpush1.msra.mxu0 0.0
      %6699 = vmatprep.subr.mxu0 0.0
      %6700 = vmatpush1.msra.mxu0 0.0
      %6701 = vmatprep.subr.mxu0 0.0
      %6702 = vmatpush1.msra.mxu0 0.0
      %6703 = vmatprep.subr.mxu0 0.0
      %6704 = vmatpush1.msra.mxu0 0.0
      %6705 = vmatprep.subr.mxu0 0.0
      %6706 = vmatpush1.msra.mxu0 %v6672
      %6707 = vmatprep.subr.mxu0 0.0
      %6708 = vmatpush1.msra.mxu0 %v6671
      %6709 = vmatprep.subr.mxu0 0.0
      %6710 = vmatpush1.msra.mxu0 %v6670
      %6711 = vmatprep.subr.mxu0 0.0
      %6712 = vmatpush1.msra.mxu0 %v6669
      %6713 = vmatprep.subr.mxu0 0.0
      %6714 = vmatpush1.msra.mxu0 %v6668
      %6715 = vmatprep.subr.mxu0 0.0
      %6716 = vmatpush2.msra.mxu0 0.0
      %6717 = vmatprep.subr.mxu0 0.0
      %6718 = vmatpush2.msra.mxu0 0.0
      %6719 = vmatprep.subr.mxu0 0.0
      %6720 = vmatpush2.msra.mxu0 0.0
      %6721 = vmatprep.subr.mxu0 0.0
      %6722 = vmatpush2.msra.mxu0 0.0
      %6723 = vmatprep.subr.mxu0 0.0
      %6724 = vmatpush2.msra.mxu0 0.0
      %6725 = vmatprep.subr.mxu0 0.0
      %6726 = vmatpush2.msra.mxu0 0.0
      %6727 = vmatprep.subr.mxu0 0.0
      %6728 = vmatpush2.msra.mxu0 0.0
      %6729 = vmatprep.subr.mxu0 0.0
      %6730 = vmatpush2.msra.mxu0 0.0
      %6731 = vmatprep.subr.mxu0 0.0
      %6732 = vmatpush2.msra.mxu0 0.0
      %6733 = vmatprep.subr.mxu0 0.0
      %6734 = vmatpush2.msra.mxu0 0.0
      %6735 = vmatprep.subr.mxu0 0.0
      %6736 = vmatpush2.msra.mxu0 0.0
      %6737 = vmatprep.subr.mxu0 0.0
      %6738 = vmatpush2.msra.mxu0 0.0
      %6739 = vmatprep.subr.mxu0 0.0
      %6740 = vmatpush2.msra.mxu0 0.0
      %6741 = vmatprep.subr.mxu0 0.0
      %6742 = vmatpush2.msra.mxu0 0.0
      %6743 = vmatprep.subr.mxu0 0.0
      %6744 = vmatpush2.msra.mxu0 0.0
      %6745 = vmatprep.subr.mxu0 0.0
      %6746 = vmatpush2.msra.mxu0 0.0
      %6747 = vmatprep.mubr.f32.mxu0 0.0
      %6748 = vmatmul.mubr.f32.gmra.mxu0 %v6679
      %v6749 = vpop.f32.mrf.mxu0
      %v6750 = vadd.f32 0.0, %v6749
      %v6751 = vpop.f32.mrf.mxu0
      %6752 = vmatprep.mubr.f32.mxu0 0.0
      %6753 = vmatmul.mubr.f32.gmra.mxu0 %v6681
      %v6754 = vpop.f32.mrf.mxu0
      %v6755 = vadd.f32 0.0, %v6754
      %v6756 = vpop.f32.mrf.mxu0
      %6757 = vdwg.mxu0
      %v6758 = vadd.f32 %v6661, %v6750
      %v6759 = vadd.f32 %v6662, %v6755
      %v6760 = vld [vmem:[%s6332 + $0x2] sm:$0xf]
      %v6761 = vld [vmem:[%s6332 + $0xa] sm:$0xf]
      %v6762 = vld [vmem:[%s6332 + $0x12] sm:$0xf]
      %v6763 = vld [vmem:[%s6332 + $0x1a] sm:$0xf]
      %s6764 = scalar_lea.vmem %s9, 160
      %v6765 = vld [vmem:[%s6764] sm:$0xff]
      %v6766 = vld [vmem:[%s6764 + $0x8] sm:$0xff]
      %v6767 = vld [vmem:[%s6764 + $0x10] sm:$0xff]
      %v6768 = vld [vmem:[%s6764 + $0x18] sm:$0xff]
      %v6769 = vld [vmem:[%s6764 + $0x20] sm:$0xff]
      %v6774 = vcombine.low %v6760, %v6761
      %v6775 = vcombine.low %v6762, %v6763
      %v6776 = vsel %vm1674, %v6774, 0
      %v6778 = vsel %vm1674, %v6775, 0
      %6780 = vmatprep.subr.mxu0 0.0
      %6781 = vmatpush1.msra.mxu0 0.0
      %6782 = vmatprep.subr.mxu0 0.0
      %6783 = vmatpush1.msra.mxu0 0.0
      %6784 = vmatprep.subr.mxu0 0.0
      %6785 = vmatpush1.msra.mxu0 0.0
      %6786 = vmatprep.subr.mxu0 0.0
      %6787 = vmatpush1.msra.mxu0 0.0
      %6788 = vmatprep.subr.mxu0 0.0
      %6789 = vmatpush1.msra.mxu0 0.0
      %6790 = vmatprep.subr.mxu0 0.0
      %6791 = vmatpush1.msra.mxu0 0.0
      %6792 = vmatprep.subr.mxu0 0.0
      %6793 = vmatpush1.msra.mxu0 0.0
      %6794 = vmatprep.subr.mxu0 0.0
      %6795 = vmatpush1.msra.mxu0 0.0
      %6796 = vmatprep.subr.mxu0 0.0
      %6797 = vmatpush1.msra.mxu0 0.0
      %6798 = vmatprep.subr.mxu0 0.0
      %6799 = vmatpush1.msra.mxu0 0.0
      %6800 = vmatprep.subr.mxu0 0.0
      %6801 = vmatpush1.msra.mxu0 0.0
      %6802 = vmatprep.subr.mxu0 0.0
      %6803 = vmatpush1.msra.mxu0 %v6769
      %6804 = vmatprep.subr.mxu0 0.0
      %6805 = vmatpush1.msra.mxu0 %v6768
      %6806 = vmatprep.subr.mxu0 0.0
      %6807 = vmatpush1.msra.mxu0 %v6767
      %6808 = vmatprep.subr.mxu0 0.0
      %6809 = vmatpush1.msra.mxu0 %v6766
      %6810 = vmatprep.subr.mxu0 0.0
      %6811 = vmatpush1.msra.mxu0 %v6765
      %6812 = vmatprep.subr.mxu0 0.0
      %6813 = vmatpush2.msra.mxu0 0.0
      %6814 = vmatprep.subr.mxu0 0.0
      %6815 = vmatpush2.msra.mxu0 0.0
      %6816 = vmatprep.subr.mxu0 0.0
      %6817 = vmatpush2.msra.mxu0 0.0
      %6818 = vmatprep.subr.mxu0 0.0
      %6819 = vmatpush2.msra.mxu0 0.0
      %6820 = vmatprep.subr.mxu0 0.0
      %6821 = vmatpush2.msra.mxu0 0.0
      %6822 = vmatprep.subr.mxu0 0.0
      %6823 = vmatpush2.msra.mxu0 0.0
      %6824 = vmatprep.subr.mxu0 0.0
      %6825 = vmatpush2.msra.mxu0 0.0
      %6826 = vmatprep.subr.mxu0 0.0
      %6827 = vmatpush2.msra.mxu0 0.0
      %6828 = vmatprep.subr.mxu0 0.0
      %6829 = vmatpush2.msra.mxu0 0.0
      %6830 = vmatprep.subr.mxu0 0.0
      %6831 = vmatpush2.msra.mxu0 0.0
      %6832 = vmatprep.subr.mxu0 0.0
      %6833 = vmatpush2.msra.mxu0 0.0
      %6834 = vmatprep.subr.mxu0 0.0
      %6835 = vmatpush2.msra.mxu0 0.0
      %6836 = vmatprep.subr.mxu0 0.0
      %6837 = vmatpush2.msra.mxu0 0.0
      %6838 = vmatprep.subr.mxu0 0.0
      %6839 = vmatpush2.msra.mxu0 0.0
      %6840 = vmatprep.subr.mxu0 0.0
      %6841 = vmatpush2.msra.mxu0 0.0
      %6842 = vmatprep.subr.mxu0 0.0
      %6843 = vmatpush2.msra.mxu0 0.0
      %6844 = vmatprep.mubr.f32.mxu0 0.0
      %6845 = vmatmul.mubr.f32.gmra.mxu0 %v6776
      %v6846 = vpop.f32.mrf.mxu0
      %v6847 = vadd.f32 0.0, %v6846
      %v6848 = vpop.f32.mrf.mxu0
      %6849 = vmatprep.mubr.f32.mxu0 0.0
      %6850 = vmatmul.mubr.f32.gmra.mxu0 %v6778
      %v6851 = vpop.f32.mrf.mxu0
      %v6852 = vadd.f32 0.0, %v6851
      %v6853 = vpop.f32.mrf.mxu0
      %6854 = vdwg.mxu0
      %v6855 = vadd.f32 %v6758, %v6847
      %v6856 = vadd.f32 %v6759, %v6852
      %v6857 = vld [vmem:[%s6332 + $0x4] sm:$0xf]
      %v6858 = vld [vmem:[%s6332 + $0xc] sm:$0xf]
      %v6859 = vld [vmem:[%s6332 + $0x14] sm:$0xf]
      %v6860 = vld [vmem:[%s6332 + $0x1c] sm:$0xf]
      %s6861 = scalar_lea.vmem %s9, 200
      %v6862 = vld [vmem:[%s6861] sm:$0xff]
      %v6863 = vld [vmem:[%s6861 + $0x8] sm:$0xff]
      %v6864 = vld [vmem:[%s6861 + $0x10] sm:$0xff]
      %v6865 = vld [vmem:[%s6861 + $0x18] sm:$0xff]
      %v6866 = vld [vmem:[%s6861 + $0x20] sm:$0xff]
      %v6871 = vcombine.low %v6857, %v6858
      %v6872 = vcombine.low %v6859, %v6860
      %v6873 = vsel %vm1674, %v6871, 0
      %v6875 = vsel %vm1674, %v6872, 0
      %6877 = vmatprep.subr.mxu0 0.0
      %6878 = vmatpush1.msra.mxu0 0.0
      %6879 = vmatprep.subr.mxu0 0.0
      %6880 = vmatpush1.msra.mxu0 0.0
      %6881 = vmatprep.subr.mxu0 0.0
      %6882 = vmatpush1.msra.mxu0 0.0
      %6883 = vmatprep.subr.mxu0 0.0
      %6884 = vmatpush1.msra.mxu0 0.0
      %6885 = vmatprep.subr.mxu0 0.0
      %6886 = vmatpush1.msra.mxu0 0.0
      %6887 = vmatprep.subr.mxu0 0.0
      %6888 = vmatpush1.msra.mxu0 0.0
      %6889 = vmatprep.subr.mxu0 0.0
      %6890 = vmatpush1.msra.mxu0 0.0
      %6891 = vmatprep.subr.mxu0 0.0
      %6892 = vmatpush1.msra.mxu0 0.0
      %6893 = vmatprep.subr.mxu0 0.0
      %6894 = vmatpush1.msra.mxu0 0.0
      %6895 = vmatprep.subr.mxu0 0.0
      %6896 = vmatpush1.msra.mxu0 0.0
      %6897 = vmatprep.subr.mxu0 0.0
      %6898 = vmatpush1.msra.mxu0 0.0
      %6899 = vmatprep.subr.mxu0 0.0
      %6900 = vmatpush1.msra.mxu0 %v6866
      %6901 = vmatprep.subr.mxu0 0.0
      %6902 = vmatpush1.msra.mxu0 %v6865
      %6903 = vmatprep.subr.mxu0 0.0
      %6904 = vmatpush1.msra.mxu0 %v6864
      %6905 = vmatprep.subr.mxu0 0.0
      %6906 = vmatpush1.msra.mxu0 %v6863
      %6907 = vmatprep.subr.mxu0 0.0
      %6908 = vmatpush1.msra.mxu0 %v6862
      %6909 = vmatprep.subr.mxu0 0.0
      %6910 = vmatpush2.msra.mxu0 0.0
      %6911 = vmatprep.subr.mxu0 0.0
      %6912 = vmatpush2.msra.mxu0 0.0
      %6913 = vmatprep.subr.mxu0 0.0
      %6914 = vmatpush2.msra.mxu0 0.0
      %6915 = vmatprep.subr.mxu0 0.0
      %6916 = vmatpush2.msra.mxu0 0.0
      %6917 = vmatprep.subr.mxu0 0.0
      %6918 = vmatpush2.msra.mxu0 0.0
      %6919 = vmatprep.subr.mxu0 0.0
      %6920 = vmatpush2.msra.mxu0 0.0
      %6921 = vmatprep.subr.mxu0 0.0
      %6922 = vmatpush2.msra.mxu0 0.0
      %6923 = vmatprep.subr.mxu0 0.0
      %6924 = vmatpush2.msra.mxu0 0.0
      %6925 = vmatprep.subr.mxu0 0.0
      %6926 = vmatpush2.msra.mxu0 0.0
      %6927 = vmatprep.subr.mxu0 0.0
      %6928 = vmatpush2.msra.mxu0 0.0
      %6929 = vmatprep.subr.mxu0 0.0
      %6930 = vmatpush2.msra.mxu0 0.0
      %6931 = vmatprep.subr.mxu0 0.0
      %6932 = vmatpush2.msra.mxu0 0.0
      %6933 = vmatprep.subr.mxu0 0.0
      %6934 = vmatpush2.msra.mxu0 0.0
      %6935 = vmatprep.subr.mxu0 0.0
      %6936 = vmatpush2.msra.mxu0 0.0
      %6937 = vmatprep.subr.mxu0 0.0
      %6938 = vmatpush2.msra.mxu0 0.0
      %6939 = vmatprep.subr.mxu0 0.0
      %6940 = vmatpush2.msra.mxu0 0.0
      %6941 = vmatprep.mubr.f32.mxu0 0.0
      %6942 = vmatmul.mubr.f32.gmra.mxu0 %v6873
      %v6943 = vpop.f32.mrf.mxu0
      %v6944 = vadd.f32 0.0, %v6943
      %v6945 = vpop.f32.mrf.mxu0
      %6946 = vmatprep.mubr.f32.mxu0 0.0
      %6947 = vmatmul.mubr.f32.gmra.mxu0 %v6875
      %v6948 = vpop.f32.mrf.mxu0
      %v6949 = vadd.f32 0.0, %v6948
      %v6950 = vpop.f32.mrf.mxu0
      %6951 = vdwg.mxu0
      %v6952 = vadd.f32 %v6855, %v6944
      %v6953 = vadd.f32 %v6856, %v6949
      %s6954 = scalar_lea.vmem [#allocation5], 32
      %v6955 = vld [vmem:[%s6954] sm:$0xf]
      %v6956 = vld [vmem:[%s6954 + $0x8] sm:$0xf]
      %v6957 = vld [vmem:[%s6954 + $0x10] sm:$0xf]
      %v6958 = vld [vmem:[%s6954 + $0x18] sm:$0xf]
      %s6959 = scalar_lea.vmem %s9, 240
      %v6960 = vld [vmem:[%s6959] sm:$0xff]
      %v6961 = vld [vmem:[%s6959 + $0x8] sm:$0xff]
      %v6962 = vld [vmem:[%s6959 + $0x10] sm:$0xff]
      %v6963 = vld [vmem:[%s6959 + $0x18] sm:$0xff]
      %v6964 = vld [vmem:[%s6959 + $0x20] sm:$0xff]
      %v6969 = vcombine.low %v6955, %v6956
      %v6970 = vcombine.low %v6957, %v6958
      %v6971 = vsel %vm1674, %v6969, 0
      %v6973 = vsel %vm1674, %v6970, 0
      %6975 = vmatprep.subr.mxu0 0.0
      %6976 = vmatpush1.msra.mxu0 0.0
      %6977 = vmatprep.subr.mxu0 0.0
      %6978 = vmatpush1.msra.mxu0 0.0
      %6979 = vmatprep.subr.mxu0 0.0
      %6980 = vmatpush1.msra.mxu0 0.0
      %6981 = vmatprep.subr.mxu0 0.0
      %6982 = vmatpush1.msra.mxu0 0.0
      %6983 = vmatprep.subr.mxu0 0.0
      %6984 = vmatpush1.msra.mxu0 0.0
      %6985 = vmatprep.subr.mxu0 0.0
      %6986 = vmatpush1.msra.mxu0 0.0
      %6987 = vmatprep.subr.mxu0 0.0
      %6988 = vmatpush1.msra.mxu0 0.0
      %6989 = vmatprep.subr.mxu0 0.0
      %6990 = vmatpush1.msra.mxu0 0.0
      %6991 = vmatprep.subr.mxu0 0.0
      %6992 = vmatpush1.msra.mxu0 0.0
      %6993 = vmatprep.subr.mxu0 0.0
      %6994 = vmatpush1.msra.mxu0 0.0
      %6995 = vmatprep.subr.mxu0 0.0
      %6996 = vmatpush1.msra.mxu0 0.0
      %6997 = vmatprep.subr.mxu0 0.0
      %6998 = vmatpush1.msra.mxu0 %v6964
      %6999 = vmatprep.subr.mxu0 0.0
      %7000 = vmatpush1.msra.mxu0 %v6963
      %7001 = vmatprep.subr.mxu0 0.0
      %7002 = vmatpush1.msra.mxu0 %v6962
      %7003 = vmatprep.subr.mxu0 0.0
      %7004 = vmatpush1.msra.mxu0 %v6961
      %7005 = vmatprep.subr.mxu0 0.0
      %7006 = vmatpush1.msra.mxu0 %v6960
      %7007 = vmatprep.subr.mxu0 0.0
      %7008 = vmatpush2.msra.mxu0 0.0
      %7009 = vmatprep.subr.mxu0 0.0
      %7010 = vmatpush2.msra.mxu0 0.0
      %7011 = vmatprep.subr.mxu0 0.0
      %7012 = vmatpush2.msra.mxu0 0.0
      %7013 = vmatprep.subr.mxu0 0.0
      %7014 = vmatpush2.msra.mxu0 0.0
      %7015 = vmatprep.subr.mxu0 0.0
      %7016 = vmatpush2.msra.mxu0 0.0
      %7017 = vmatprep.subr.mxu0 0.0
      %7018 = vmatpush2.msra.mxu0 0.0
      %7019 = vmatprep.subr.mxu0 0.0
      %7020 = vmatpush2.msra.mxu0 0.0
      %7021 = vmatprep.subr.mxu0 0.0
      %7022 = vmatpush2.msra.mxu0 0.0
      %7023 = vmatprep.subr.mxu0 0.0
      %7024 = vmatpush2.msra.mxu0 0.0
      %7025 = vmatprep.subr.mxu0 0.0
      %7026 = vmatpush2.msra.mxu0 0.0
      %7027 = vmatprep.subr.mxu0 0.0
      %7028 = vmatpush2.msra.mxu0 0.0
      %7029 = vmatprep.subr.mxu0 0.0
      %7030 = vmatpush2.msra.mxu0 0.0
      %7031 = vmatprep.subr.mxu0 0.0
      %7032 = vmatpush2.msra.mxu0 0.0
      %7033 = vmatprep.subr.mxu0 0.0
      %7034 = vmatpush2.msra.mxu0 0.0
      %7035 = vmatprep.subr.mxu0 0.0
      %7036 = vmatpush2.msra.mxu0 0.0
      %7037 = vmatprep.subr.mxu0 0.0
      %7038 = vmatpush2.msra.mxu0 0.0
      %7039 = vmatprep.mubr.f32.mxu0 0.0
      %7040 = vmatmul.mubr.f32.gmra.mxu0 %v6971
      %v7041 = vpop.f32.mrf.mxu0
      %v7042 = vadd.f32 0.0, %v7041
      %v7043 = vpop.f32.mrf.mxu0
      %7044 = vmatprep.mubr.f32.mxu0 0.0
      %7045 = vmatmul.mubr.f32.gmra.mxu0 %v6973
      %v7046 = vpop.f32.mrf.mxu0
      %v7047 = vadd.f32 0.0, %v7046
      %v7048 = vpop.f32.mrf.mxu0
      %7049 = vdwg.mxu0
      %v7050 = vadd.f32 %v6952, %v7042
      %v7051 = vadd.f32 %v6953, %v7047
      %v7052 = vld [vmem:[%s6954 + $0x2] sm:$0xf]
      %v7053 = vld [vmem:[%s6954 + $0xa] sm:$0xf]
      %v7054 = vld [vmem:[%s6954 + $0x12] sm:$0xf]
      %v7055 = vld [vmem:[%s6954 + $0x1a] sm:$0xf]
      %s7056 = scalar_lea.vmem %s9, 280
      %v7057 = vld [vmem:[%s7056] sm:$0xff]
      %v7058 = vld [vmem:[%s7056 + $0x8] sm:$0xff]
      %v7059 = vld [vmem:[%s7056 + $0x10] sm:$0xff]
      %v7060 = vld [vmem:[%s7056 + $0x18] sm:$0xff]
      %v7061 = vld [vmem:[%s7056 + $0x20] sm:$0xff]
      %v7066 = vcombine.low %v7052, %v7053
      %v7067 = vcombine.low %v7054, %v7055
      %v7068 = vsel %vm1674, %v7066, 0
      %v7070 = vsel %vm1674, %v7067, 0
      %7072 = vmatprep.subr.mxu0 0.0
      %7073 = vmatpush1.msra.mxu0 0.0
      %7074 = vmatprep.subr.mxu0 0.0
      %7075 = vmatpush1.msra.mxu0 0.0
      %7076 = vmatprep.subr.mxu0 0.0
      %7077 = vmatpush1.msra.mxu0 0.0
      %7078 = vmatprep.subr.mxu0 0.0
      %7079 = vmatpush1.msra.mxu0 0.0
      %7080 = vmatprep.subr.mxu0 0.0
      %7081 = vmatpush1.msra.mxu0 0.0
      %7082 = vmatprep.subr.mxu0 0.0
      %7083 = vmatpush1.msra.mxu0 0.0
      %7084 = vmatprep.subr.mxu0 0.0
      %7085 = vmatpush1.msra.mxu0 0.0
      %7086 = vmatprep.subr.mxu0 0.0
      %7087 = vmatpush1.msra.mxu0 0.0
      %7088 = vmatprep.subr.mxu0 0.0
      %7089 = vmatpush1.msra.mxu0 0.0
      %7090 = vmatprep.subr.mxu0 0.0
      %7091 = vmatpush1.msra.mxu0 0.0
      %7092 = vmatprep.subr.mxu0 0.0
      %7093 = vmatpush1.msra.mxu0 0.0
      %7094 = vmatprep.subr.mxu0 0.0
      %7095 = vmatpush1.msra.mxu0 %v7061
      %7096 = vmatprep.subr.mxu0 0.0
      %7097 = vmatpush1.msra.mxu0 %v7060
      %7098 = vmatprep.subr.mxu0 0.0
      %7099 = vmatpush1.msra.mxu0 %v7059
      %7100 = vmatprep.subr.mxu0 0.0
      %7101 = vmatpush1.msra.mxu0 %v7058
      %7102 = vmatprep.subr.mxu0 0.0
      %7103 = vmatpush1.msra.mxu0 %v7057
      %7104 = vmatprep.subr.mxu0 0.0
      %7105 = vmatpush2.msra.mxu0 0.0
      %7106 = vmatprep.subr.mxu0 0.0
      %7107 = vmatpush2.msra.mxu0 0.0
      %7108 = vmatprep.subr.mxu0 0.0
      %7109 = vmatpush2.msra.mxu0 0.0
      %7110 = vmatprep.subr.mxu0 0.0
      %7111 = vmatpush2.msra.mxu0 0.0
      %7112 = vmatprep.subr.mxu0 0.0
      %7113 = vmatpush2.msra.mxu0 0.0
      %7114 = vmatprep.subr.mxu0 0.0
      %7115 = vmatpush2.msra.mxu0 0.0
      %7116 = vmatprep.subr.mxu0 0.0
      %7117 = vmatpush2.msra.mxu0 0.0
      %7118 = vmatprep.subr.mxu0 0.0
      %7119 = vmatpush2.msra.mxu0 0.0
      %7120 = vmatprep.subr.mxu0 0.0
      %7121 = vmatpush2.msra.mxu0 0.0
      %7122 = vmatprep.subr.mxu0 0.0
      %7123 = vmatpush2.msra.mxu0 0.0
      %7124 = vmatprep.subr.mxu0 0.0
      %7125 = vmatpush2.msra.mxu0 0.0
      %7126 = vmatprep.subr.mxu0 0.0
      %7127 = vmatpush2.msra.mxu0 0.0
      %7128 = vmatprep.subr.mxu0 0.0
      %7129 = vmatpush2.msra.mxu0 0.0
      %7130 = vmatprep.subr.mxu0 0.0
      %7131 = vmatpush2.msra.mxu0 0.0
      %7132 = vmatprep.subr.mxu0 0.0
      %7133 = vmatpush2.msra.mxu0 0.0
      %7134 = vmatprep.subr.mxu0 0.0
      %7135 = vmatpush2.msra.mxu0 0.0
      %7136 = vmatprep.mubr.f32.mxu0 0.0
      %7137 = vmatmul.mubr.f32.gmra.mxu0 %v7068
      %v7138 = vpop.f32.mrf.mxu0
      %v7139 = vadd.f32 0.0, %v7138
      %v7140 = vpop.f32.mrf.mxu0
      %7141 = vmatprep.mubr.f32.mxu0 0.0
      %7142 = vmatmul.mubr.f32.gmra.mxu0 %v7070
      %v7143 = vpop.f32.mrf.mxu0
      %v7144 = vadd.f32 0.0, %v7143
      %v7145 = vpop.f32.mrf.mxu0
      %7146 = vdwg.mxu0
      %v7147 = vadd.f32 %v7050, %v7139
      %v7148 = vadd.f32 %v7051, %v7144
      %v7149 = vld [vmem:[%s6954 + $0x4] sm:$0xf]
      %v7150 = vld [vmem:[%s6954 + $0xc] sm:$0xf]
      %v7151 = vld [vmem:[%s6954 + $0x14] sm:$0xf]
      %v7152 = vld [vmem:[%s6954 + $0x1c] sm:$0xf]
      %s7153 = scalar_lea.vmem %s9, 320
      %v7154 = vld [vmem:[%s7153] sm:$0xff]
      %v7155 = vld [vmem:[%s7153 + $0x8] sm:$0xff]
      %v7156 = vld [vmem:[%s7153 + $0x10] sm:$0xff]
      %v7157 = vld [vmem:[%s7153 + $0x18] sm:$0xff]
      %v7158 = vld [vmem:[%s7153 + $0x20] sm:$0xff]
      %v7163 = vcombine.low %v7149, %v7150
      %v7164 = vcombine.low %v7151, %v7152
      %v7165 = vsel %vm1674, %v7163, 0
      %v7167 = vsel %vm1674, %v7164, 0
      %7169 = vmatprep.subr.mxu0 0.0
      %7170 = vmatpush1.msra.mxu0 0.0
      %7171 = vmatprep.subr.mxu0 0.0
      %7172 = vmatpush1.msra.mxu0 0.0
      %7173 = vmatprep.subr.mxu0 0.0
      %7174 = vmatpush1.msra.mxu0 0.0
      %7175 = vmatprep.subr.mxu0 0.0
      %7176 = vmatpush1.msra.mxu0 0.0
      %7177 = vmatprep.subr.mxu0 0.0
      %7178 = vmatpush1.msra.mxu0 0.0
      %7179 = vmatprep.subr.mxu0 0.0
      %7180 = vmatpush1.msra.mxu0 0.0
      %7181 = vmatprep.subr.mxu0 0.0
      %7182 = vmatpush1.msra.mxu0 0.0
      %7183 = vmatprep.subr.mxu0 0.0
      %7184 = vmatpush1.msra.mxu0 0.0
      %7185 = vmatprep.subr.mxu0 0.0
      %7186 = vmatpush1.msra.mxu0 0.0
      %7187 = vmatprep.subr.mxu0 0.0
      %7188 = vmatpush1.msra.mxu0 0.0
      %7189 = vmatprep.subr.mxu0 0.0
      %7190 = vmatpush1.msra.mxu0 0.0
      %7191 = vmatprep.subr.mxu0 0.0
      %7192 = vmatpush1.msra.mxu0 %v7158
      %7193 = vmatprep.subr.mxu0 0.0
      %7194 = vmatpush1.msra.mxu0 %v7157
      %7195 = vmatprep.subr.mxu0 0.0
      %7196 = vmatpush1.msra.mxu0 %v7156
      %7197 = vmatprep.subr.mxu0 0.0
      %7198 = vmatpush1.msra.mxu0 %v7155
      %7199 = vmatprep.subr.mxu0 0.0
      %7200 = vmatpush1.msra.mxu0 %v7154
      %7201 = vmatprep.subr.mxu0 0.0
      %7202 = vmatpush2.msra.mxu0 0.0
      %7203 = vmatprep.subr.mxu0 0.0
      %7204 = vmatpush2.msra.mxu0 0.0
      %7205 = vmatprep.subr.mxu0 0.0
      %7206 = vmatpush2.msra.mxu0 0.0
      %7207 = vmatprep.subr.mxu0 0.0
      %7208 = vmatpush2.msra.mxu0 0.0
      %7209 = vmatprep.subr.mxu0 0.0
      %7210 = vmatpush2.msra.mxu0 0.0
      %7211 = vmatprep.subr.mxu0 0.0
      %7212 = vmatpush2.msra.mxu0 0.0
      %7213 = vmatprep.subr.mxu0 0.0
      %7214 = vmatpush2.msra.mxu0 0.0
      %7215 = vmatprep.subr.mxu0 0.0
      %7216 = vmatpush2.msra.mxu0 0.0
      %7217 = vmatprep.subr.mxu0 0.0
      %7218 = vmatpush2.msra.mxu0 0.0
      %7219 = vmatprep.subr.mxu0 0.0
      %7220 = vmatpush2.msra.mxu0 0.0
      %7221 = vmatprep.subr.mxu0 0.0
      %7222 = vmatpush2.msra.mxu0 0.0
      %7223 = vmatprep.subr.mxu0 0.0
      %7224 = vmatpush2.msra.mxu0 0.0
      %7225 = vmatprep.subr.mxu0 0.0
      %7226 = vmatpush2.msra.mxu0 0.0
      %7227 = vmatprep.subr.mxu0 0.0
      %7228 = vmatpush2.msra.mxu0 0.0
      %7229 = vmatprep.subr.mxu0 0.0
      %7230 = vmatpush2.msra.mxu0 0.0
      %7231 = vmatprep.subr.mxu0 0.0
      %7232 = vmatpush2.msra.mxu0 0.0
      %7233 = vmatprep.mubr.f32.mxu0 0.0
      %7234 = vmatmul.mubr.f32.gmra.mxu0 %v7165
      %v7235 = vpop.f32.mrf.mxu0
      %v7236 = vadd.f32 0.0, %v7235
      %v7237 = vpop.f32.mrf.mxu0
      %7238 = vmatprep.mubr.f32.mxu0 0.0
      %7239 = vmatmul.mubr.f32.gmra.mxu0 %v7167
      %v7240 = vpop.f32.mrf.mxu0
      %v7241 = vadd.f32 0.0, %v7240
      %v7242 = vpop.f32.mrf.mxu0
      %7243 = vdwg.mxu0
      %v7244 = vadd.f32 %v7147, %v7236
      %v7245 = vadd.f32 %v7148, %v7241
      %v7246 = vld [vmem:[%s10] sm:$0x1]
      %v7248 = vlaneseq
      %v7249 = vshrl.u32 %v7248, 7
      %v7250 = vsub.s32 0, %v7249
      %v7251 = vrot.slane %v7246, %v7250
      %v7253 = vadd.f32 %v7244, %v7251
      %v7254 = vadd.f32 %v7245, %v7251
      %v7255 = vmax.f32 %v7253, 0.0
      %v7256 = vmax.f32 %v7254, 0.0
      %v7259 = vcombine.high %v7255, %v7255
      %v7260 = vcombine.high %v7256, %v7256
      %v7263 = vmax.f32 %v7255, %v7259
      %v7264 = vmax.f32 %v7256, %v7260
      %v7268 = vunpack.c.l.s4 1983009808
      %v7269 = vunpack.c.0.s8 %v7268
      %v7270 = vlaneseq
      %v7271 = vshrl.u32 %v7270, 7
      %v7272 = vsub.s32 %v7269, %v7271
      %v7273 = vrot.slane %v7263, %v7272
      %v7274 = vcombine.high %v7273, %v7273
      %v7276 = vunpack.c.l.s4 1983009808
      %v7277 = vunpack.c.0.s8 %v7276
      %v7278 = vlaneseq
      %v7279 = vshrl.u32 %v7278, 7
      %v7280 = vsub.s32 %v7277, %v7279
      %v7281 = vrot.slane %v7264, %v7280
      %v7282 = vcombine.high %v7281, %v7281
      %vm7287 = vcmask 156672
      %v7288 = vsel %vm7287, %v7273, -inf
      %v7289 = vrot.slane %v7288, 4
      %v7290 = vmax.f32 %v7288, %v7289
      %v7291 = vrot.slane %v7290, 2
      %v7292 = vmax.f32 %v7290, %v7291
      %v7293 = vrot.slane %v7292, 1
      %v7294 = vmax.f32 %v7292, %v7293
      %v7295 = vsel %vm7287, %v7274, -inf
      %v7296 = vrot.slane %v7295, 4
      %v7297 = vmax.f32 %v7295, %v7296
      %v7298 = vrot.slane %v7297, 2
      %v7299 = vmax.f32 %v7297, %v7298
      %v7300 = vrot.slane %v7299, 1
      %v7301 = vmax.f32 %v7299, %v7300
      %v7302 = vsel %vm7287, %v7281, -inf
      %v7303 = vrot.slane %v7302, 4
      %v7304 = vmax.f32 %v7302, %v7303
      %v7305 = vrot.slane %v7304, 2
      %v7306 = vmax.f32 %v7304, %v7305
      %v7307 = vrot.slane %v7306, 1
      %v7308 = vmax.f32 %v7306, %v7307
      %v7309 = vsel %vm7287, %v7282, -inf
      %v7310 = vrot.slane %v7309, 4
      %v7311 = vmax.f32 %v7309, %v7310
      %v7312 = vrot.slane %v7311, 2
      %v7313 = vmax.f32 %v7311, %v7312
      %v7314 = vrot.slane %v7313, 1
      %v7315 = vmax.f32 %v7313, %v7314
      %vm7316 = vcmask 160768
      %7317 = vst.msk [vmem:[#allocation6] sm:$0x3f] %vm7316, 0.0
      %7318 = vst.msk [vmem:[#allocation6 + $0x8] sm:$0x3f] %vm7316, 0.0
      %s7319 = scalar_lea.vmem [#allocation6], 32
      %7320 = vst.msk [vmem:[%s7319] sm:$0x3f] %vm7316, 0.0
      %7321 = vst.msk [vmem:[%s7319 + $0x8] sm:$0x3f] %vm7316, 0.0
      %s7322 = scalar_lea.vmem [#allocation6], 16
      %7323 = vst.msk [vmem:[%s7322] sm:$0x3] %vm7287, 0.0
      %7324 = vst.msk [vmem:[%s7322 + $0x8] sm:$0x3] %vm7287, 0.0
      %7325 = vst.msk [vmem:[%s7322 + $0x4] sm:$0x3] %vm7287, 0.0
      %7326 = vst.msk [vmem:[%s7322 + $0xc] sm:$0x3] %vm7287, 0.0
      %v7331 = vsel %vm1766, %v7301, %v7294
      %v7332 = vsel %vm1766, %v7315, %v7308
      %7335 = vst.msk [vmem:[%s7322 + $0x2] sm:$0x3] %vm7287, %v7331
      %7336 = vst.msk [vmem:[%s7322 + $0xa] sm:$0x3] %vm7287, %v7332
      %v7337 = vld [vmem:[#allocation6] sm:$0x3]
      %v7338 = vld [vmem:[#allocation6 + $0x8] sm:$0x3]
      %v7339 = vld [vmem:[%s11] sm:$0xff]
      %v7340 = vld [vmem:[%s11 + $0x8] sm:$0xff]
      %v7341 = vld [vmem:[%s11 + $0x10] sm:$0xf]
      %v7342 = vld [vmem:[#allocation6 + $0x2] sm:$0x3]
      %v7343 = vld [vmem:[#allocation6 + $0xa] sm:$0x3]
      %s7344 = scalar_lea.vmem %s11, 24
      %v7345 = vld [vmem:[%s7344] sm:$0xff]
      %v7346 = vld [vmem:[%s7344 + $0x8] sm:$0xff]
      %v7347 = vld [vmem:[%s7344 + $0x10] sm:$0xf]
      %v7350 = vcombine.low %v7342, %v7343
      %v7352 = vunpack.c.l.s4 1983009808
      %v7353 = vunpack.c.0.s8 %v7352
      %v7354 = vlaneseq
      %v7355 = vshrl.u32 %v7354, 7
      %v7356 = vsub.s32 %v7353, %v7355
      %v7357 = vrot.slane %v7350, %v7356
      %vm7358 = vcmask 162816
      %v7359 = vsel %vm7358, %v7357, 0
      %v7362 = vsel %vm3305, %v7347, 0
      %7364 = vmatprep.subr.mxu0 0.0
      %7365 = vmatpush1.msra.mxu0 0.0
      %7366 = vmatprep.subr.mxu0 0.0
      %7367 = vmatpush1.msra.mxu0 0.0
      %7368 = vmatprep.subr.mxu0 0.0
      %7369 = vmatpush1.msra.mxu0 0.0
      %7370 = vmatprep.subr.mxu0 0.0
      %7371 = vmatpush1.msra.mxu0 0.0
      %7372 = vmatprep.subr.mxu0 0.0
      %7373 = vmatpush1.msra.mxu0 0.0
      %7374 = vmatprep.subr.mxu0 0.0
      %7375 = vmatpush1.msra.mxu0 0.0
      %7376 = vmatprep.subr.mxu0 0.0
      %7377 = vmatpush1.msra.mxu0 0.0
      %7378 = vmatprep.subr.mxu0 0.0
      %7379 = vmatpush1.msra.mxu0 0.0
      %7380 = vmatprep.subr.mxu0 0.0
      %7381 = vmatpush1.msra.mxu0 0.0
      %7382 = vmatprep.subr.mxu0 0.0
      %7383 = vmatpush1.msra.mxu0 0.0
      %7384 = vmatprep.subr.mxu0 0.0
      %7385 = vmatpush1.msra.mxu0 0.0
      %7386 = vmatprep.subr.mxu0 0.0
      %7387 = vmatpush1.msra.mxu0 0.0
      %7388 = vmatprep.subr.mxu0 0.0
      %7389 = vmatpush1.msra.mxu0 0.0
      %7390 = vmatprep.subr.mxu0 0.0
      %7391 = vmatpush1.msra.mxu0 %v7362
      %7392 = vmatprep.subr.mxu0 0.0
      %7393 = vmatpush1.msra.mxu0 %v7346
      %7394 = vmatprep.subr.mxu0 0.0
      %7395 = vmatpush1.msra.mxu0 %v7345
      %7396 = vmatprep.subr.mxu0 0.0
      %7397 = vmatpush2.msra.mxu0 0.0
      %7398 = vmatprep.subr.mxu0 0.0
      %7399 = vmatpush2.msra.mxu0 0.0
      %7400 = vmatprep.subr.mxu0 0.0
      %7401 = vmatpush2.msra.mxu0 0.0
      %7402 = vmatprep.subr.mxu0 0.0
      %7403 = vmatpush2.msra.mxu0 0.0
      %7404 = vmatprep.subr.mxu0 0.0
      %7405 = vmatpush2.msra.mxu0 0.0
      %7406 = vmatprep.subr.mxu0 0.0
      %7407 = vmatpush2.msra.mxu0 0.0
      %7408 = vmatprep.subr.mxu0 0.0
      %7409 = vmatpush2.msra.mxu0 0.0
      %7410 = vmatprep.subr.mxu0 0.0
      %7411 = vmatpush2.msra.mxu0 0.0
      %7412 = vmatprep.subr.mxu0 0.0
      %7413 = vmatpush2.msra.mxu0 0.0
      %7414 = vmatprep.subr.mxu0 0.0
      %7415 = vmatpush2.msra.mxu0 0.0
      %7416 = vmatprep.subr.mxu0 0.0
      %7417 = vmatpush2.msra.mxu0 0.0
      %7418 = vmatprep.subr.mxu0 0.0
      %7419 = vmatpush2.msra.mxu0 0.0
      %7420 = vmatprep.subr.mxu0 0.0
      %7421 = vmatpush2.msra.mxu0 0.0
      %7422 = vmatprep.subr.mxu0 0.0
      %7423 = vmatpush2.msra.mxu0 0.0
      %7424 = vmatprep.subr.mxu0 0.0
      %7425 = vmatpush2.msra.mxu0 0.0
      %7426 = vmatprep.subr.mxu0 0.0
      %7427 = vmatpush2.msra.mxu0 0.0
      %7428 = vmatprep.mubr.f32.mxu0 0.0
      %7429 = vmatmul.mubr.f32.gmra.mxu0 %v7359
      %v7430 = vpop.f32.mrf.mxu0
      %v7431 = vadd.f32 0.0, %v7430
      %v7432 = vpop.f32.mrf.mxu0
      %7433 = vdwg.mxu0
      %v7436 = vcombine.low %v7337, %v7338
      %v7438 = vunpack.c.l.s4 1983009808
      %v7439 = vunpack.c.0.s8 %v7438
      %v7440 = vlaneseq
      %v7441 = vshrl.u32 %v7440, 7
      %v7442 = vsub.s32 %v7439, %v7441
      %v7443 = vrot.slane %v7436, %v7442
      %v7444 = vsel %vm7358, %v7443, 0
      %v7447 = vsel %vm3305, %v7341, 0
      %7449 = vmatprep.subr.mxu0 0.0
      %7450 = vmatpush1.msra.mxu0 0.0
      %7451 = vmatprep.subr.mxu0 0.0
      %7452 = vmatpush1.msra.mxu0 0.0
      %7453 = vmatprep.subr.mxu0 0.0
      %7454 = vmatpush1.msra.mxu0 0.0
      %7455 = vmatprep.subr.mxu0 0.0
      %7456 = vmatpush1.msra.mxu0 0.0
      %7457 = vmatprep.subr.mxu0 0.0
      %7458 = vmatpush1.msra.mxu0 0.0
      %7459 = vmatprep.subr.mxu0 0.0
      %7460 = vmatpush1.msra.mxu0 0.0
      %7461 = vmatprep.subr.mxu0 0.0
      %7462 = vmatpush1.msra.mxu0 0.0
      %7463 = vmatprep.subr.mxu0 0.0
      %7464 = vmatpush1.msra.mxu0 0.0
      %7465 = vmatprep.subr.mxu0 0.0
      %7466 = vmatpush1.msra.mxu0 0.0
      %7467 = vmatprep.subr.mxu0 0.0
      %7468 = vmatpush1.msra.mxu0 0.0
      %7469 = vmatprep.subr.mxu0 0.0
      %7470 = vmatpush1.msra.mxu0 0.0
      %7471 = vmatprep.subr.mxu0 0.0
      %7472 = vmatpush1.msra.mxu0 0.0
      %7473 = vmatprep.subr.mxu0 0.0
      %7474 = vmatpush1.msra.mxu0 0.0
      %7475 = vmatprep.subr.mxu0 0.0
      %7476 = vmatpush1.msra.mxu0 %v7447
      %7477 = vmatprep.subr.mxu0 0.0
      %7478 = vmatpush1.msra.mxu0 %v7340
      %7479 = vmatprep.subr.mxu0 0.0
      %7480 = vmatpush1.msra.mxu0 %v7339
      %7481 = vmatprep.subr.mxu0 0.0
      %7482 = vmatpush2.msra.mxu0 0.0
      %7483 = vmatprep.subr.mxu0 0.0
      %7484 = vmatpush2.msra.mxu0 0.0
      %7485 = vmatprep.subr.mxu0 0.0
      %7486 = vmatpush2.msra.mxu0 0.0
      %7487 = vmatprep.subr.mxu0 0.0
      %7488 = vmatpush2.msra.mxu0 0.0
      %7489 = vmatprep.subr.mxu0 0.0
      %7490 = vmatpush2.msra.mxu0 0.0
      %7491 = vmatprep.subr.mxu0 0.0
      %7492 = vmatpush2.msra.mxu0 0.0
      %7493 = vmatprep.subr.mxu0 0.0
      %7494 = vmatpush2.msra.mxu0 0.0
      %7495 = vmatprep.subr.mxu0 0.0
      %7496 = vmatpush2.msra.mxu0 0.0
      %7497 = vmatprep.subr.mxu0 0.0
      %7498 = vmatpush2.msra.mxu0 0.0
      %7499 = vmatprep.subr.mxu0 0.0
      %7500 = vmatpush2.msra.mxu0 0.0
      %7501 = vmatprep.subr.mxu0 0.0
      %7502 = vmatpush2.msra.mxu0 0.0
      %7503 = vmatprep.subr.mxu0 0.0
      %7504 = vmatpush2.msra.mxu0 0.0
      %7505 = vmatprep.subr.mxu0 0.0
      %7506 = vmatpush2.msra.mxu0 0.0
      %7507 = vmatprep.subr.mxu0 0.0
      %7508 = vmatpush2.msra.mxu0 0.0
      %7509 = vmatprep.subr.mxu0 0.0
      %7510 = vmatpush2.msra.mxu0 0.0
      %7511 = vmatprep.subr.mxu0 0.0
      %7512 = vmatpush2.msra.mxu0 0.0
      %7513 = vmatprep.mubr.f32.mxu0 0.0
      %7514 = vmatmul.mubr.f32.gmra.mxu0 %v7444
      %v7515 = vpop.f32.mrf.mxu0
      %v7516 = vadd.f32 %v7431, %v7515
      %v7517 = vpop.f32.mrf.mxu0
      %7518 = vdwg.mxu0
      %v7519 = vld [vmem:[#allocation6 + $0x4] sm:$0x3]
      %v7520 = vld [vmem:[#allocation6 + $0xc] sm:$0x3]
      %s7521 = scalar_lea.vmem %s11, 48
      %v7522 = vld [vmem:[%s7521] sm:$0xff]
      %v7523 = vld [vmem:[%s7521 + $0x8] sm:$0xff]
      %v7524 = vld [vmem:[%s7521 + $0x10] sm:$0xf]
      %v7527 = vcombine.low %v7519, %v7520
      %v7529 = vunpack.c.l.s4 1983009808
      %v7530 = vunpack.c.0.s8 %v7529
      %v7531 = vlaneseq
      %v7532 = vshrl.u32 %v7531, 7
      %v7533 = vsub.s32 %v7530, %v7532
      %v7534 = vrot.slane %v7527, %v7533
      %v7535 = vsel %vm7358, %v7534, 0
      %v7538 = vsel %vm3305, %v7524, 0
      %7540 = vmatprep.subr.mxu0 0.0
      %7541 = vmatpush1.msra.mxu0 0.0
      %7542 = vmatprep.subr.mxu0 0.0
      %7543 = vmatpush1.msra.mxu0 0.0
      %7544 = vmatprep.subr.mxu0 0.0
      %7545 = vmatpush1.msra.mxu0 0.0
      %7546 = vmatprep.subr.mxu0 0.0
      %7547 = vmatpush1.msra.mxu0 0.0
      %7548 = vmatprep.subr.mxu0 0.0
      %7549 = vmatpush1.msra.mxu0 0.0
      %7550 = vmatprep.subr.mxu0 0.0
      %7551 = vmatpush1.msra.mxu0 0.0
      %7552 = vmatprep.subr.mxu0 0.0
      %7553 = vmatpush1.msra.mxu0 0.0
      %7554 = vmatprep.subr.mxu0 0.0
      %7555 = vmatpush1.msra.mxu0 0.0
      %7556 = vmatprep.subr.mxu0 0.0
      %7557 = vmatpush1.msra.mxu0 0.0
      %7558 = vmatprep.subr.mxu0 0.0
      %7559 = vmatpush1.msra.mxu0 0.0
      %7560 = vmatprep.subr.mxu0 0.0
      %7561 = vmatpush1.msra.mxu0 0.0
      %7562 = vmatprep.subr.mxu0 0.0
      %7563 = vmatpush1.msra.mxu0 0.0
      %7564 = vmatprep.subr.mxu0 0.0
      %7565 = vmatpush1.msra.mxu0 0.0
      %7566 = vmatprep.subr.mxu0 0.0
      %7567 = vmatpush1.msra.mxu0 %v7538
      %7568 = vmatprep.subr.mxu0 0.0
      %7569 = vmatpush1.msra.mxu0 %v7523
      %7570 = vmatprep.subr.mxu0 0.0
      %7571 = vmatpush1.msra.mxu0 %v7522
      %7572 = vmatprep.subr.mxu0 0.0
      %7573 = vmatpush2.msra.mxu0 0.0
      %7574 = vmatprep.subr.mxu0 0.0
      %7575 = vmatpush2.msra.mxu0 0.0
      %7576 = vmatprep.subr.mxu0 0.0
      %7577 = vmatpush2.msra.mxu0 0.0
      %7578 = vmatprep.subr.mxu0 0.0
      %7579 = vmatpush2.msra.mxu0 0.0
      %7580 = vmatprep.subr.mxu0 0.0
      %7581 = vmatpush2.msra.mxu0 0.0
      %7582 = vmatprep.subr.mxu0 0.0
      %7583 = vmatpush2.msra.mxu0 0.0
      %7584 = vmatprep.subr.mxu0 0.0
      %7585 = vmatpush2.msra.mxu0 0.0
      %7586 = vmatprep.subr.mxu0 0.0
      %7587 = vmatpush2.msra.mxu0 0.0
      %7588 = vmatprep.subr.mxu0 0.0
      %7589 = vmatpush2.msra.mxu0 0.0
      %7590 = vmatprep.subr.mxu0 0.0
      %7591 = vmatpush2.msra.mxu0 0.0
      %7592 = vmatprep.subr.mxu0 0.0
      %7593 = vmatpush2.msra.mxu0 0.0
      %7594 = vmatprep.subr.mxu0 0.0
      %7595 = vmatpush2.msra.mxu0 0.0
      %7596 = vmatprep.subr.mxu0 0.0
      %7597 = vmatpush2.msra.mxu0 0.0
      %7598 = vmatprep.subr.mxu0 0.0
      %7599 = vmatpush2.msra.mxu0 0.0
      %7600 = vmatprep.subr.mxu0 0.0
      %7601 = vmatpush2.msra.mxu0 0.0
      %7602 = vmatprep.subr.mxu0 0.0
      %7603 = vmatpush2.msra.mxu0 0.0
      %7604 = vmatprep.mubr.f32.mxu0 0.0
      %7605 = vmatmul.mubr.f32.gmra.mxu0 %v7535
      %v7606 = vpop.f32.mrf.mxu0
      %v7607 = vadd.f32 0.0, %v7606
      %v7608 = vpop.f32.mrf.mxu0
      %7609 = vdwg.mxu0
      %v7610 = vadd.f32 %v7516, %v7607
      %v7611 = vld [vmem:[%s7322] sm:$0x3]
      %v7612 = vld [vmem:[%s7322 + $0x8] sm:$0x3]
      %s7613 = scalar_lea.vmem %s11, 72
      %v7614 = vld [vmem:[%s7613] sm:$0xff]
      %v7615 = vld [vmem:[%s7613 + $0x8] sm:$0xff]
      %v7616 = vld [vmem:[%s7613 + $0x10] sm:$0xf]
      %v7619 = vcombine.low %v7611, %v7612
      %v7621 = vunpack.c.l.s4 1983009808
      %v7622 = vunpack.c.0.s8 %v7621
      %v7623 = vlaneseq
      %v7624 = vshrl.u32 %v7623, 7
      %v7625 = vsub.s32 %v7622, %v7624
      %v7626 = vrot.slane %v7619, %v7625
      %v7627 = vsel %vm7358, %v7626, 0
      %v7630 = vsel %vm3305, %v7616, 0
      %7632 = vmatprep.subr.mxu0 0.0
      %7633 = vmatpush1.msra.mxu0 0.0
      %7634 = vmatprep.subr.mxu0 0.0
      %7635 = vmatpush1.msra.mxu0 0.0
      %7636 = vmatprep.subr.mxu0 0.0
      %7637 = vmatpush1.msra.mxu0 0.0
      %7638 = vmatprep.subr.mxu0 0.0
      %7639 = vmatpush1.msra.mxu0 0.0
      %7640 = vmatprep.subr.mxu0 0.0
      %7641 = vmatpush1.msra.mxu0 0.0
      %7642 = vmatprep.subr.mxu0 0.0
      %7643 = vmatpush1.msra.mxu0 0.0
      %7644 = vmatprep.subr.mxu0 0.0
      %7645 = vmatpush1.msra.mxu0 0.0
      %7646 = vmatprep.subr.mxu0 0.0
      %7647 = vmatpush1.msra.mxu0 0.0
      %7648 = vmatprep.subr.mxu0 0.0
      %7649 = vmatpush1.msra.mxu0 0.0
      %7650 = vmatprep.subr.mxu0 0.0
      %7651 = vmatpush1.msra.mxu0 0.0
      %7652 = vmatprep.subr.mxu0 0.0
      %7653 = vmatpush1.msra.mxu0 0.0
      %7654 = vmatprep.subr.mxu0 0.0
      %7655 = vmatpush1.msra.mxu0 0.0
      %7656 = vmatprep.subr.mxu0 0.0
      %7657 = vmatpush1.msra.mxu0 0.0
      %7658 = vmatprep.subr.mxu0 0.0
      %7659 = vmatpush1.msra.mxu0 %v7630
      %7660 = vmatprep.subr.mxu0 0.0
      %7661 = vmatpush1.msra.mxu0 %v7615
      %7662 = vmatprep.subr.mxu0 0.0
      %7663 = vmatpush1.msra.mxu0 %v7614
      %7664 = vmatprep.subr.mxu0 0.0
      %7665 = vmatpush2.msra.mxu0 0.0
      %7666 = vmatprep.subr.mxu0 0.0
      %7667 = vmatpush2.msra.mxu0 0.0
      %7668 = vmatprep.subr.mxu0 0.0
      %7669 = vmatpush2.msra.mxu0 0.0
      %7670 = vmatprep.subr.mxu0 0.0
      %7671 = vmatpush2.msra.mxu0 0.0
      %7672 = vmatprep.subr.mxu0 0.0
      %7673 = vmatpush2.msra.mxu0 0.0
      %7674 = vmatprep.subr.mxu0 0.0
      %7675 = vmatpush2.msra.mxu0 0.0
      %7676 = vmatprep.subr.mxu0 0.0
      %7677 = vmatpush2.msra.mxu0 0.0
      %7678 = vmatprep.subr.mxu0 0.0
      %7679 = vmatpush2.msra.mxu0 0.0
      %7680 = vmatprep.subr.mxu0 0.0
      %7681 = vmatpush2.msra.mxu0 0.0
      %7682 = vmatprep.subr.mxu0 0.0
      %7683 = vmatpush2.msra.mxu0 0.0
      %7684 = vmatprep.subr.mxu0 0.0
      %7685 = vmatpush2.msra.mxu0 0.0
      %7686 = vmatprep.subr.mxu0 0.0
      %7687 = vmatpush2.msra.mxu0 0.0
      %7688 = vmatprep.subr.mxu0 0.0
      %7689 = vmatpush2.msra.mxu0 0.0
      %7690 = vmatprep.subr.mxu0 0.0
      %7691 = vmatpush2.msra.mxu0 0.0
      %7692 = vmatprep.subr.mxu0 0.0
      %7693 = vmatpush2.msra.mxu0 0.0
      %7694 = vmatprep.subr.mxu0 0.0
      %7695 = vmatpush2.msra.mxu0 0.0
      %7696 = vmatprep.mubr.f32.mxu0 0.0
      %7697 = vmatmul.mubr.f32.gmra.mxu0 %v7627
      %v7698 = vpop.f32.mrf.mxu0
      %v7699 = vadd.f32 0.0, %v7698
      %v7700 = vpop.f32.mrf.mxu0
      %7701 = vdwg.mxu0
      %v7702 = vadd.f32 %v7610, %v7699
      %v7703 = vld [vmem:[%s7322 + $0x2] sm:$0x3]
      %v7704 = vld [vmem:[%s7322 + $0xa] sm:$0x3]
      %s7705 = scalar_lea.vmem %s11, 96
      %v7706 = vld [vmem:[%s7705] sm:$0xff]
      %v7707 = vld [vmem:[%s7705 + $0x8] sm:$0xff]
      %v7708 = vld [vmem:[%s7705 + $0x10] sm:$0xf]
      %v7711 = vcombine.low %v7703, %v7704
      %v7713 = vunpack.c.l.s4 1983009808
      %v7714 = vunpack.c.0.s8 %v7713
      %v7715 = vlaneseq
      %v7716 = vshrl.u32 %v7715, 7
      %v7717 = vsub.s32 %v7714, %v7716
      %v7718 = vrot.slane %v7711, %v7717
      %v7719 = vsel %vm7358, %v7718, 0
      %v7722 = vsel %vm3305, %v7708, 0
      %7724 = vmatprep.subr.mxu0 0.0
      %7725 = vmatpush1.msra.mxu0 0.0
      %7726 = vmatprep.subr.mxu0 0.0
      %7727 = vmatpush1.msra.mxu0 0.0
      %7728 = vmatprep.subr.mxu0 0.0
      %7729 = vmatpush1.msra.mxu0 0.0
      %7730 = vmatprep.subr.mxu0 0.0
      %7731 = vmatpush1.msra.mxu0 0.0
      %7732 = vmatprep.subr.mxu0 0.0
      %7733 = vmatpush1.msra.mxu0 0.0
      %7734 = vmatprep.subr.mxu0 0.0
      %7735 = vmatpush1.msra.mxu0 0.0
      %7736 = vmatprep.subr.mxu0 0.0
      %7737 = vmatpush1.msra.mxu0 0.0
      %7738 = vmatprep.subr.mxu0 0.0
      %7739 = vmatpush1.msra.mxu0 0.0
      %7740 = vmatprep.subr.mxu0 0.0
      %7741 = vmatpush1.msra.mxu0 0.0
      %7742 = vmatprep.subr.mxu0 0.0
      %7743 = vmatpush1.msra.mxu0 0.0
      %7744 = vmatprep.subr.mxu0 0.0
      %7745 = vmatpush1.msra.mxu0 0.0
      %7746 = vmatprep.subr.mxu0 0.0
      %7747 = vmatpush1.msra.mxu0 0.0
      %7748 = vmatprep.subr.mxu0 0.0
      %7749 = vmatpush1.msra.mxu0 0.0
      %7750 = vmatprep.subr.mxu0 0.0
      %7751 = vmatpush1.msra.mxu0 %v7722
      %7752 = vmatprep.subr.mxu0 0.0
      %7753 = vmatpush1.msra.mxu0 %v7707
      %7754 = vmatprep.subr.mxu0 0.0
      %7755 = vmatpush1.msra.mxu0 %v7706
      %7756 = vmatprep.subr.mxu0 0.0
      %7757 = vmatpush2.msra.mxu0 0.0
      %7758 = vmatprep.subr.mxu0 0.0
      %7759 = vmatpush2.msra.mxu0 0.0
      %7760 = vmatprep.subr.mxu0 0.0
      %7761 = vmatpush2.msra.mxu0 0.0
      %7762 = vmatprep.subr.mxu0 0.0
      %7763 = vmatpush2.msra.mxu0 0.0
      %7764 = vmatprep.subr.mxu0 0.0
      %7765 = vmatpush2.msra.mxu0 0.0
      %7766 = vmatprep.subr.mxu0 0.0
      %7767 = vmatpush2.msra.mxu0 0.0
      %7768 = vmatprep.subr.mxu0 0.0
      %7769 = vmatpush2.msra.mxu0 0.0
      %7770 = vmatprep.subr.mxu0 0.0
      %7771 = vmatpush2.msra.mxu0 0.0
      %7772 = vmatprep.subr.mxu0 0.0
      %7773 = vmatpush2.msra.mxu0 0.0
      %7774 = vmatprep.subr.mxu0 0.0
      %7775 = vmatpush2.msra.mxu0 0.0
      %7776 = vmatprep.subr.mxu0 0.0
      %7777 = vmatpush2.msra.mxu0 0.0
      %7778 = vmatprep.subr.mxu0 0.0
      %7779 = vmatpush2.msra.mxu0 0.0
      %7780 = vmatprep.subr.mxu0 0.0
      %7781 = vmatpush2.msra.mxu0 0.0
      %7782 = vmatprep.subr.mxu0 0.0
      %7783 = vmatpush2.msra.mxu0 0.0
      %7784 = vmatprep.subr.mxu0 0.0
      %7785 = vmatpush2.msra.mxu0 0.0
      %7786 = vmatprep.subr.mxu0 0.0
      %7787 = vmatpush2.msra.mxu0 0.0
      %7788 = vmatprep.mubr.f32.mxu0 0.0
      %7789 = vmatmul.mubr.f32.gmra.mxu0 %v7719
      %v7790 = vpop.f32.mrf.mxu0
      %v7791 = vadd.f32 0.0, %v7790
      %v7792 = vpop.f32.mrf.mxu0
      %7793 = vdwg.mxu0
      %v7794 = vadd.f32 %v7702, %v7791
      %v7795 = vld [vmem:[%s7322 + $0x4] sm:$0x3]
      %v7796 = vld [vmem:[%s7322 + $0xc] sm:$0x3]
      %s7797 = scalar_lea.vmem %s11, 120
      %v7798 = vld [vmem:[%s7797] sm:$0xff]
      %v7799 = vld [vmem:[%s7797 + $0x8] sm:$0xff]
      %v7800 = vld [vmem:[%s7797 + $0x10] sm:$0xf]
      %v7803 = vcombine.low %v7795, %v7796
      %v7805 = vunpack.c.l.s4 1983009808
      %v7806 = vunpack.c.0.s8 %v7805
      %v7807 = vlaneseq
      %v7808 = vshrl.u32 %v7807, 7
      %v7809 = vsub.s32 %v7806, %v7808
      %v7810 = vrot.slane %v7803, %v7809
      %v7811 = vsel %vm7358, %v7810, 0
      %v7814 = vsel %vm3305, %v7800, 0
      %7816 = vmatprep.subr.mxu0 0.0
      %7817 = vmatpush1.msra.mxu0 0.0
      %7818 = vmatprep.subr.mxu0 0.0
      %7819 = vmatpush1.msra.mxu0 0.0
      %7820 = vmatprep.subr.mxu0 0.0
      %7821 = vmatpush1.msra.mxu0 0.0
      %7822 = vmatprep.subr.mxu0 0.0
      %7823 = vmatpush1.msra.mxu0 0.0
      %7824 = vmatprep.subr.mxu0 0.0
      %7825 = vmatpush1.msra.mxu0 0.0
      %7826 = vmatprep.subr.mxu0 0.0
      %7827 = vmatpush1.msra.mxu0 0.0
      %7828 = vmatprep.subr.mxu0 0.0
      %7829 = vmatpush1.msra.mxu0 0.0
      %7830 = vmatprep.subr.mxu0 0.0
      %7831 = vmatpush1.msra.mxu0 0.0
      %7832 = vmatprep.subr.mxu0 0.0
      %7833 = vmatpush1.msra.mxu0 0.0
      %7834 = vmatprep.subr.mxu0 0.0
      %7835 = vmatpush1.msra.mxu0 0.0
      %7836 = vmatprep.subr.mxu0 0.0
      %7837 = vmatpush1.msra.mxu0 0.0
      %7838 = vmatprep.subr.mxu0 0.0
      %7839 = vmatpush1.msra.mxu0 0.0
      %7840 = vmatprep.subr.mxu0 0.0
      %7841 = vmatpush1.msra.mxu0 0.0
      %7842 = vmatprep.subr.mxu0 0.0
      %7843 = vmatpush1.msra.mxu0 %v7814
      %7844 = vmatprep.subr.mxu0 0.0
      %7845 = vmatpush1.msra.mxu0 %v7799
      %7846 = vmatprep.subr.mxu0 0.0
      %7847 = vmatpush1.msra.mxu0 %v7798
      %7848 = vmatprep.subr.mxu0 0.0
      %7849 = vmatpush2.msra.mxu0 0.0
      %7850 = vmatprep.subr.mxu0 0.0
      %7851 = vmatpush2.msra.mxu0 0.0
      %7852 = vmatprep.subr.mxu0 0.0
      %7853 = vmatpush2.msra.mxu0 0.0
      %7854 = vmatprep.subr.mxu0 0.0
      %7855 = vmatpush2.msra.mxu0 0.0
      %7856 = vmatprep.subr.mxu0 0.0
      %7857 = vmatpush2.msra.mxu0 0.0
      %7858 = vmatprep.subr.mxu0 0.0
      %7859 = vmatpush2.msra.mxu0 0.0
      %7860 = vmatprep.subr.mxu0 0.0
      %7861 = vmatpush2.msra.mxu0 0.0
      %7862 = vmatprep.subr.mxu0 0.0
      %7863 = vmatpush2.msra.mxu0 0.0
      %7864 = vmatprep.subr.mxu0 0.0
      %7865 = vmatpush2.msra.mxu0 0.0
      %7866 = vmatprep.subr.mxu0 0.0
      %7867 = vmatpush2.msra.mxu0 0.0
      %7868 = vmatprep.subr.mxu0 0.0
      %7869 = vmatpush2.msra.mxu0 0.0
      %7870 = vmatprep.subr.mxu0 0.0
      %7871 = vmatpush2.msra.mxu0 0.0
      %7872 = vmatprep.subr.mxu0 0.0
      %7873 = vmatpush2.msra.mxu0 0.0
      %7874 = vmatprep.subr.mxu0 0.0
      %7875 = vmatpush2.msra.mxu0 0.0
      %7876 = vmatprep.subr.mxu0 0.0
      %7877 = vmatpush2.msra.mxu0 0.0
      %7878 = vmatprep.subr.mxu0 0.0
      %7879 = vmatpush2.msra.mxu0 0.0
      %7880 = vmatprep.mubr.f32.mxu0 0.0
      %7881 = vmatmul.mubr.f32.gmra.mxu0 %v7811
      %v7882 = vpop.f32.mrf.mxu0
      %v7883 = vadd.f32 0.0, %v7882
      %v7884 = vpop.f32.mrf.mxu0
      %7885 = vdwg.mxu0
      %v7886 = vadd.f32 %v7794, %v7883
      %v7887 = vld [vmem:[%s7319] sm:$0x3]
      %v7888 = vld [vmem:[%s7319 + $0x8] sm:$0x3]
      %s7889 = scalar_lea.vmem %s11, 144
      %v7890 = vld [vmem:[%s7889] sm:$0xff]
      %v7891 = vld [vmem:[%s7889 + $0x8] sm:$0xff]
      %v7892 = vld [vmem:[%s7889 + $0x10] sm:$0xf]
      %v7895 = vcombine.low %v7887, %v7888
      %v7897 = vunpack.c.l.s4 1983009808
      %v7898 = vunpack.c.0.s8 %v7897
      %v7899 = vlaneseq
      %v7900 = vshrl.u32 %v7899, 7
      %v7901 = vsub.s32 %v7898, %v7900
      %v7902 = vrot.slane %v7895, %v7901
      %v7903 = vsel %vm7358, %v7902, 0
      %v7906 = vsel %vm3305, %v7892, 0
      %7908 = vmatprep.subr.mxu0 0.0
      %7909 = vmatpush1.msra.mxu0 0.0
      %7910 = vmatprep.subr.mxu0 0.0
      %7911 = vmatpush1.msra.mxu0 0.0
      %7912 = vmatprep.subr.mxu0 0.0
      %7913 = vmatpush1.msra.mxu0 0.0
      %7914 = vmatprep.subr.mxu0 0.0
      %7915 = vmatpush1.msra.mxu0 0.0
      %7916 = vmatprep.subr.mxu0 0.0
      %7917 = vmatpush1.msra.mxu0 0.0
      %7918 = vmatprep.subr.mxu0 0.0
      %7919 = vmatpush1.msra.mxu0 0.0
      %7920 = vmatprep.subr.mxu0 0.0
      %7921 = vmatpush1.msra.mxu0 0.0
      %7922 = vmatprep.subr.mxu0 0.0
      %7923 = vmatpush1.msra.mxu0 0.0
      %7924 = vmatprep.subr.mxu0 0.0
      %7925 = vmatpush1.msra.mxu0 0.0
      %7926 = vmatprep.subr.mxu0 0.0
      %7927 = vmatpush1.msra.mxu0 0.0
      %7928 = vmatprep.subr.mxu0 0.0
      %7929 = vmatpush1.msra.mxu0 0.0
      %7930 = vmatprep.subr.mxu0 0.0
      %7931 = vmatpush1.msra.mxu0 0.0
      %7932 = vmatprep.subr.mxu0 0.0
      %7933 = vmatpush1.msra.mxu0 0.0
      %7934 = vmatprep.subr.mxu0 0.0
      %7935 = vmatpush1.msra.mxu0 %v7906
      %7936 = vmatprep.subr.mxu0 0.0
      %7937 = vmatpush1.msra.mxu0 %v7891
      %7938 = vmatprep.subr.mxu0 0.0
      %7939 = vmatpush1.msra.mxu0 %v7890
      %7940 = vmatprep.subr.mxu0 0.0
      %7941 = vmatpush2.msra.mxu0 0.0
      %7942 = vmatprep.subr.mxu0 0.0
      %7943 = vmatpush2.msra.mxu0 0.0
      %7944 = vmatprep.subr.mxu0 0.0
      %7945 = vmatpush2.msra.mxu0 0.0
      %7946 = vmatprep.subr.mxu0 0.0
      %7947 = vmatpush2.msra.mxu0 0.0
      %7948 = vmatprep.subr.mxu0 0.0
      %7949 = vmatpush2.msra.mxu0 0.0
      %7950 = vmatprep.subr.mxu0 0.0
      %7951 = vmatpush2.msra.mxu0 0.0
      %7952 = vmatprep.subr.mxu0 0.0
      %7953 = vmatpush2.msra.mxu0 0.0
      %7954 = vmatprep.subr.mxu0 0.0
      %7955 = vmatpush2.msra.mxu0 0.0
      %7956 = vmatprep.subr.mxu0 0.0
      %7957 = vmatpush2.msra.mxu0 0.0
      %7958 = vmatprep.subr.mxu0 0.0
      %7959 = vmatpush2.msra.mxu0 0.0
      %7960 = vmatprep.subr.mxu0 0.0
      %7961 = vmatpush2.msra.mxu0 0.0
      %7962 = vmatprep.subr.mxu0 0.0
      %7963 = vmatpush2.msra.mxu0 0.0
      %7964 = vmatprep.subr.mxu0 0.0
      %7965 = vmatpush2.msra.mxu0 0.0
      %7966 = vmatprep.subr.mxu0 0.0
      %7967 = vmatpush2.msra.mxu0 0.0
      %7968 = vmatprep.subr.mxu0 0.0
      %7969 = vmatpush2.msra.mxu0 0.0
      %7970 = vmatprep.subr.mxu0 0.0
      %7971 = vmatpush2.msra.mxu0 0.0
      %7972 = vmatprep.mubr.f32.mxu0 0.0
      %7973 = vmatmul.mubr.f32.gmra.mxu0 %v7903
      %v7974 = vpop.f32.mrf.mxu0
      %v7975 = vadd.f32 0.0, %v7974
      %v7976 = vpop.f32.mrf.mxu0
      %7977 = vdwg.mxu0
      %v7978 = vadd.f32 %v7886, %v7975
      %v7979 = vld [vmem:[%s7319 + $0x2] sm:$0x3]
      %v7980 = vld [vmem:[%s7319 + $0xa] sm:$0x3]
      %s7981 = scalar_lea.vmem %s11, 168
      %v7982 = vld [vmem:[%s7981] sm:$0xff]
      %v7983 = vld [vmem:[%s7981 + $0x8] sm:$0xff]
      %v7984 = vld [vmem:[%s7981 + $0x10] sm:$0xf]
      %v7987 = vcombine.low %v7979, %v7980
      %v7989 = vunpack.c.l.s4 1983009808
      %v7990 = vunpack.c.0.s8 %v7989
      %v7991 = vlaneseq
      %v7992 = vshrl.u32 %v7991, 7
      %v7993 = vsub.s32 %v7990, %v7992
      %v7994 = vrot.slane %v7987, %v7993
      %v7995 = vsel %vm7358, %v7994, 0
      %v7998 = vsel %vm3305, %v7984, 0
      %8000 = vmatprep.subr.mxu0 0.0
      %8001 = vmatpush1.msra.mxu0 0.0
      %8002 = vmatprep.subr.mxu0 0.0
      %8003 = vmatpush1.msra.mxu0 0.0
      %8004 = vmatprep.subr.mxu0 0.0
      %8005 = vmatpush1.msra.mxu0 0.0
      %8006 = vmatprep.subr.mxu0 0.0
      %8007 = vmatpush1.msra.mxu0 0.0
      %8008 = vmatprep.subr.mxu0 0.0
      %8009 = vmatpush1.msra.mxu0 0.0
      %8010 = vmatprep.subr.mxu0 0.0
      %8011 = vmatpush1.msra.mxu0 0.0
      %8012 = vmatprep.subr.mxu0 0.0
      %8013 = vmatpush1.msra.mxu0 0.0
      %8014 = vmatprep.subr.mxu0 0.0
      %8015 = vmatpush1.msra.mxu0 0.0
      %8016 = vmatprep.subr.mxu0 0.0
      %8017 = vmatpush1.msra.mxu0 0.0
      %8018 = vmatprep.subr.mxu0 0.0
      %8019 = vmatpush1.msra.mxu0 0.0
      %8020 = vmatprep.subr.mxu0 0.0
      %8021 = vmatpush1.msra.mxu0 0.0
      %8022 = vmatprep.subr.mxu0 0.0
      %8023 = vmatpush1.msra.mxu0 0.0
      %8024 = vmatprep.subr.mxu0 0.0
      %8025 = vmatpush1.msra.mxu0 0.0
      %8026 = vmatprep.subr.mxu0 0.0
      %8027 = vmatpush1.msra.mxu0 %v7998
      %8028 = vmatprep.subr.mxu0 0.0
      %8029 = vmatpush1.msra.mxu0 %v7983
      %8030 = vmatprep.subr.mxu0 0.0
      %8031 = vmatpush1.msra.mxu0 %v7982
      %8032 = vmatprep.subr.mxu0 0.0
      %8033 = vmatpush2.msra.mxu0 0.0
      %8034 = vmatprep.subr.mxu0 0.0
      %8035 = vmatpush2.msra.mxu0 0.0
      %8036 = vmatprep.subr.mxu0 0.0
      %8037 = vmatpush2.msra.mxu0 0.0
      %8038 = vmatprep.subr.mxu0 0.0
      %8039 = vmatpush2.msra.mxu0 0.0
      %8040 = vmatprep.subr.mxu0 0.0
      %8041 = vmatpush2.msra.mxu0 0.0
      %8042 = vmatprep.subr.mxu0 0.0
      %8043 = vmatpush2.msra.mxu0 0.0
      %8044 = vmatprep.subr.mxu0 0.0
      %8045 = vmatpush2.msra.mxu0 0.0
      %8046 = vmatprep.subr.mxu0 0.0
      %8047 = vmatpush2.msra.mxu0 0.0
      %8048 = vmatprep.subr.mxu0 0.0
      %8049 = vmatpush2.msra.mxu0 0.0
      %8050 = vmatprep.subr.mxu0 0.0
      %8051 = vmatpush2.msra.mxu0 0.0
      %8052 = vmatprep.subr.mxu0 0.0
      %8053 = vmatpush2.msra.mxu0 0.0
      %8054 = vmatprep.subr.mxu0 0.0
      %8055 = vmatpush2.msra.mxu0 0.0
      %8056 = vmatprep.subr.mxu0 0.0
      %8057 = vmatpush2.msra.mxu0 0.0
      %8058 = vmatprep.subr.mxu0 0.0
      %8059 = vmatpush2.msra.mxu0 0.0
      %8060 = vmatprep.subr.mxu0 0.0
      %8061 = vmatpush2.msra.mxu0 0.0
      %8062 = vmatprep.subr.mxu0 0.0
      %8063 = vmatpush2.msra.mxu0 0.0
      %8064 = vmatprep.mubr.f32.mxu0 0.0
      %8065 = vmatmul.mubr.f32.gmra.mxu0 %v7995
      %v8066 = vpop.f32.mrf.mxu0
      %v8067 = vadd.f32 0.0, %v8066
      %v8068 = vpop.f32.mrf.mxu0
      %8069 = vdwg.mxu0
      %v8070 = vadd.f32 %v7978, %v8067
      %v8071 = vld [vmem:[%s7319 + $0x4] sm:$0x3]
      %v8072 = vld [vmem:[%s7319 + $0xc] sm:$0x3]
      %s8073 = scalar_lea.vmem %s11, 192
      %v8074 = vld [vmem:[%s8073] sm:$0xff]
      %v8075 = vld [vmem:[%s8073 + $0x8] sm:$0xff]
      %v8076 = vld [vmem:[%s8073 + $0x10] sm:$0xf]
      %v8079 = vcombine.low %v8071, %v8072
      %v8081 = vunpack.c.l.s4 1983009808
      %v8082 = vunpack.c.0.s8 %v8081
      %v8083 = vlaneseq
      %v8084 = vshrl.u32 %v8083, 7
      %v8085 = vsub.s32 %v8082, %v8084
      %v8086 = vrot.slane %v8079, %v8085
      %v8087 = vsel %vm7358, %v8086, 0
      %v8090 = vsel %vm3305, %v8076, 0
      %8092 = vmatprep.subr.mxu0 0.0
      %8093 = vmatpush1.msra.mxu0 0.0
      %8094 = vmatprep.subr.mxu0 0.0
      %8095 = vmatpush1.msra.mxu0 0.0
      %8096 = vmatprep.subr.mxu0 0.0
      %8097 = vmatpush1.msra.mxu0 0.0
      %8098 = vmatprep.subr.mxu0 0.0
      %8099 = vmatpush1.msra.mxu0 0.0
      %8100 = vmatprep.subr.mxu0 0.0
      %8101 = vmatpush1.msra.mxu0 0.0
      %8102 = vmatprep.subr.mxu0 0.0
      %8103 = vmatpush1.msra.mxu0 0.0
      %8104 = vmatprep.subr.mxu0 0.0
      %8105 = vmatpush1.msra.mxu0 0.0
      %8106 = vmatprep.subr.mxu0 0.0
      %8107 = vmatpush1.msra.mxu0 0.0
      %8108 = vmatprep.subr.mxu0 0.0
      %8109 = vmatpush1.msra.mxu0 0.0
      %8110 = vmatprep.subr.mxu0 0.0
      %8111 = vmatpush1.msra.mxu0 0.0
      %8112 = vmatprep.subr.mxu0 0.0
      %8113 = vmatpush1.msra.mxu0 0.0
      %8114 = vmatprep.subr.mxu0 0.0
      %8115 = vmatpush1.msra.mxu0 0.0
      %8116 = vmatprep.subr.mxu0 0.0
      %8117 = vmatpush1.msra.mxu0 0.0
      %8118 = vmatprep.subr.mxu0 0.0
      %8119 = vmatpush1.msra.mxu0 %v8090
      %8120 = vmatprep.subr.mxu0 0.0
      %8121 = vmatpush1.msra.mxu0 %v8075
      %8122 = vmatprep.subr.mxu0 0.0
      %8123 = vmatpush1.msra.mxu0 %v8074
      %8124 = vmatprep.subr.mxu0 0.0
      %8125 = vmatpush2.msra.mxu0 0.0
      %8126 = vmatprep.subr.mxu0 0.0
      %8127 = vmatpush2.msra.mxu0 0.0
      %8128 = vmatprep.subr.mxu0 0.0
      %8129 = vmatpush2.msra.mxu0 0.0
      %8130 = vmatprep.subr.mxu0 0.0
      %8131 = vmatpush2.msra.mxu0 0.0
      %8132 = vmatprep.subr.mxu0 0.0
      %8133 = vmatpush2.msra.mxu0 0.0
      %8134 = vmatprep.subr.mxu0 0.0
      %8135 = vmatpush2.msra.mxu0 0.0
      %8136 = vmatprep.subr.mxu0 0.0
      %8137 = vmatpush2.msra.mxu0 0.0
      %8138 = vmatprep.subr.mxu0 0.0
      %8139 = vmatpush2.msra.mxu0 0.0
      %8140 = vmatprep.subr.mxu0 0.0
      %8141 = vmatpush2.msra.mxu0 0.0
      %8142 = vmatprep.subr.mxu0 0.0
      %8143 = vmatpush2.msra.mxu0 0.0
      %8144 = vmatprep.subr.mxu0 0.0
      %8145 = vmatpush2.msra.mxu0 0.0
      %8146 = vmatprep.subr.mxu0 0.0
      %8147 = vmatpush2.msra.mxu0 0.0
      %8148 = vmatprep.subr.mxu0 0.0
      %8149 = vmatpush2.msra.mxu0 0.0
      %8150 = vmatprep.subr.mxu0 0.0
      %8151 = vmatpush2.msra.mxu0 0.0
      %8152 = vmatprep.subr.mxu0 0.0
      %8153 = vmatpush2.msra.mxu0 0.0
      %8154 = vmatprep.subr.mxu0 0.0
      %8155 = vmatpush2.msra.mxu0 0.0
      %8156 = vmatprep.mubr.f32.mxu0 0.0
      %8157 = vmatmul.mubr.f32.gmra.mxu0 %v8087
      %v8158 = vpop.f32.mrf.mxu0
      %v8159 = vadd.f32 0.0, %v8158
      %v8160 = vpop.f32.mrf.mxu0
      %8161 = vdwg.mxu0
      %v8162 = vadd.f32 %v8070, %v8159
      %v8163 = vld [vmem:[%s12] sm:$0x1]
      %v8165 = vlaneseq
      %v8166 = vshrl.u32 %v8165, 7
      %v8167 = vsub.s32 0, %v8166
      %v8168 = vrot.slane %v8163, %v8167
      %v8170 = vadd.f32 %v8162, %v8168
      %v8171 = vmax.f32 %v8170, 0.0
      %v8172 = vld [vmem:[%s13] sm:$0x1]
      %v8174 = vlaneseq
      %v8175 = vshrl.u32 %v8174, 7
      %v8176 = vsub.s32 0, %v8175
      %v8177 = vrot.slane %v8172, %v8176
      %v8179 = vmul.f32 %v8171, %v8177
      %vm8180 = vcmask 76800
      %v8181 = vsel %vm8180, %v8179, 0.0
      %8182 = vadd.xlane.f32.xlu0 %v8181
      %v8183 = vpop.xlane.xlu0 %8182
      %v8184 = vld [vmem:[#allocation7] sm:$0x1]
      %v8186 = vlaneseq
      %v8187 = vshrl.u32 %v8186, 7
      %v8188 = vsub.s32 0, %v8187
      %v8189 = vrot.slane %v8184, %v8188
      %v8191 = vadd.f32 %v8183, %v8189
      %v8194 = vunpack.c.l.s4 1983009808
      %v8195 = vunpack.c.0.s8 %v8194
      %v8196 = vlaneseq
      %v8197 = vshrl.u32 %v8196, 7
      %v8198 = vsub.s32 %v8195, %v8197
      %v8199 = vrot.slane %v8191, %v8198
      %v8200 = vcombine.high %v8199, %v8199
      %vm8203 = vcmask 1024
      %8204 = vst.msk [vmem:[%s496] sm:$0x3] %vm8203, %v8199
      %8205 = vst.msk [vmem:[%s496 + $0x2] sm:$0x3] %vm8203, %v8200
      %p8206 = scmp.lt.s32.totalorder %s28, 1
      %s8207 = scalar_select %p8206, %s28, 1
      %s8208 = smul.addr %s8207, 2
      %s8209 = smul.addr %s8208, 2
      %s8210 = scalar_lea.vmem %s15, %s8209
      // Predicated region
      $region81: #{big_tail7_forward.1} parent=79 // pred_check
        %p8211 = pneg %p366
      $region82: #{big_tail7_forward.1} parent=79 // pred_check_branch
        %8213 = sbr.rel (%p8211) target = $region84
      $region83: #{big_tail7_forward.1} parent=79 // pred_region
        _
      $region84: #{big_tail7_forward.1} parent=79 // pred_fallthru
        _
    $region80: #{big_tail7_forward.1} parent=5 // pred_fallthru
      _
    %p8214 = scmp.le.s32.totalorder 2, %s23
    // Predicated region
    $region85: #{big_tail7_forward.1} parent=5 // pred_check
      %p8215 = pneg %p8214
    $region86: #{big_tail7_forward.1} parent=5 // pred_check_branch
      %8217 = sbr.rel (%p8215) target = $region88
    $region87: #{big_tail7_forward.1} parent=5 // pred_region
      %s8218 = ssub.s32 %s23, 2
      // Predicated region
      $region89: #{big_tail7_forward.1} parent=87 // pred_check
        %p8219 = pneg %p372
      $region90: #{big_tail7_forward.1} parent=87 // pred_check_branch
        %8221 = sbr.rel (%p8219) target = $region92
      $region91: #{big_tail7_forward.1} parent=87 // pred_region
        %p8222 = scmp.lt.s32.totalorder %s29, 1
        %s8223 = scalar_select %p8222, %s29, 1
        %s8224 = smul.addr %s8223, 2
        %s8225 = smul.addr %s8224, 2
        %s8226 = scalar_lea.vmem %s15, %s8225
      $region92: #{big_tail7_forward.1} parent=87 // pred_fallthru
        _
    $region88: #{big_tail7_forward.1} parent=5 // pred_fallthru
      _
  $region6: #{big_tail7_forward.1} parent=0 // loop_footer
    %s27 = sadd.s32 1, %s23
  $region7: #{big_tail7_forward.1} parent=0 // loop_footer_branch
    %22 = sbr.rel target = $region3
  $region8: #{big_tail7_forward.1} parent=0 // loop_exit
    _

</llo_original>
